<compile_context>
chip_gen: v7x
topology: tpu7x:2x2x1
jax: 0.10.0
libtpu: 0.0.40
codegen_flags: <defaults>
</compile_context>

<pallas_src>
import jax
import jax.numpy as jnp
from jax import lax
from jax.experimental import pallas as pl
from jax.experimental.pallas import tpu as pltpu

BN_EPS = 1e-5


# ----------------------------------------------------------------------------
# Fused whole-network kernel (one image per grid step)
# ----------------------------------------------------------------------------
def net8_kernel(x_ref,
                w1, b1, w2, b2, s1, t1,
                w3, b3, w4, b4, s2, t2,
                w5, b5, w6, b6, w8, b8,
                o_ref,
                a1, a2, p1, a3, a4, a5, a6):
    f32 = jnp.float32

    def conv3x3(src, dst, w, b, oh_n, ow, *, relu,
                scale=None, shift=None, pad_mat=None, dst_off=0):
        """Valid 3x3 conv on (row, Cin, W) scratch -> (row, Cout, OW) scratch."""
        cout = w.shape[1]

        def body(oh, carry):
            acc = jnp.zeros((cout, ow), f32)
            for i in range(3):
                row = src[oh + i]                                    # (cin, W_in)
                for j in range(3):
                    acc = acc + jnp.dot(w[3 * i + j], row[:, j:j + ow],
                                        preferred_element_type=f32)
            acc = acc + b[...]
            if relu:
                acc = jnp.maximum(acc, 0.0)
            if scale is not None:                                    # fused BN affine
                acc = acc * scale[...] + shift[...]
            if pad_mat is not None:                                  # lane zero-pad
                acc = jnp.dot(acc, pad_mat, preferred_element_type=f32)
            dst[oh + dst_off] = acc
            return carry

        lax.fori_loop(0, oh_n, body, 0)

    # ---- conv1 (Cin = 1): broadcast-multiply taps on the VPU ----------------
    def conv1_body(oh, carry):
        acc = jnp.zeros((16, 26), f32)
        for i in range(3):
            row = x_ref[0, pl.ds(oh + i, 1), :]                      # (1, 28)
            for j in range(3):
                acc = acc + w1[3 * i + j] * row[:, j:j + 26]         # (16,1)*(1,26)
        acc = jnp.maximum(acc + b1[...], 0.0)
        a1[oh] = acc
        return carry
    lax.fori_loop(0, 26, conv1_body, 0)

    # ---- conv2 + relu --------------------------------------------------------
    conv3x3(a1, a2, w2, b2, 24, 24, relu=True)

    # ---- maxpool 2x2 + BN1 affine (lane pooling via 0/1 selection matmuls) ---
    ii = lax.broadcasted_iota(jnp.int32, (24, 12), 0)
    jj = lax.broadcasted_iota(jnp.int32, (24, 12), 1)
    sel_e = (ii == 2 * jj).astype(f32)
    sel_o = (ii == 2 * jj + 1).astype(f32)

    def pool_body(ph, carry):
        m = jnp.maximum(a2[2 * ph], a2[2 * ph + 1])                  # (10, 24)
        pooled = jnp.maximum(
            jnp.dot(m, sel_e, preferred_element_type=f32),
            jnp.dot(m, sel_o, preferred_element_type=f32))           # (10, 12)
        p1[ph] = pooled * s1[...] + t1[...]
        return carry
    lax.fori_loop(0, 12, pool_body, 0)

    # ---- conv3 + relu, conv4 + relu + BN2 (fused epilogue) -------------------
    conv3x3(p1, a3, w3, b3, 10, 10, relu=True)
    conv3x3(a3, a4, w4, b4, 8, 8, relu=True, scale=s2, shift=t2)

    # ---- conv5 + relu, written (lane-shifted) into a zero-padded buffer ------
    pi = lax.broadcasted_iota(jnp.int32, (6, 8), 0)
    pj = lax.broadcasted_iota(jnp.int32, (6, 8), 1)
    pad_mat = (pi + 1 == pj).astype(f32)                             # (6, 8)
    a5[...] = jnp.zeros(a5.shape, f32)                               # padding rows/cols
    conv3x3(a4, a5, w5, b5, 6, 6, relu=True, pad_mat=pad_mat, dst_off=1)

    # ---- conv6 (padding=1 provided by the padded a5 buffer), no relu ---------
    conv3x3(a5, a6, w6, b6, 6, 6, relu=False)

    # ---- head: GAP(6x6) -> 1x1 conv -> log_softmax ---------------------------
    g = jnp.zeros((16, 1), f32)
    for oh in range(6):
        g = g + jnp.sum(a6[oh], axis=-1, keepdims=True)
    g = g * (1.0 / 36.0)
    logits = jnp.dot(w8[...], g, preferred_element_type=f32) + b8[...]   # (10, 1)
    mx = jnp.max(logits, axis=0, keepdims=True)
    z = logits - mx
    lse = jnp.log(jnp.sum(jnp.exp(z), axis=0, keepdims=True))
    o_ref[0] = z - lse


# ----------------------------------------------------------------------------
# Wrapper: weight layout prep + pallas_call
# ----------------------------------------------------------------------------
def net8_forward(x_nchw, p):
    B = x_nchw.shape[0]
    x = x_nchw.astype(jnp.float32).reshape(B, 28, 28)        # Cin = 1 -> drop channel

    def taps(w):                                             # (O,I,3,3) -> (9,O,I)
        cout, cin, kh, kw = w.shape
        return jnp.transpose(w, (2, 3, 0, 1)).reshape(kh * kw, cout, cin)

    def col(v):                                              # (C,) -> (C,1)
        return v.reshape(-1, 1).astype(jnp.float32)

    s1 = p["g1"] / jnp.sqrt(p["rv1"] + BN_EPS)
    t1 = p["be1"] - s1 * p["rm1"]
    s2 = p["g2"] / jnp.sqrt(p["rv2"] + BN_EPS)
    t2 = p["be2"] - s2 * p["rm2"]

    consts = (taps(p["w1"]), col(p["b1"]),
              taps(p["w2"]), col(p["b2"]), col(s1), col(t1),
              taps(p["w3"]), col(p["b3"]),
              taps(p["w4"]), col(p["b4"]), col(s2), col(t2),
              taps(p["w5"]), col(p["b5"]),
              taps(p["w6"]), col(p["b6"]),
              p["w8"].reshape(10, 16).astype(jnp.float32), col(p["b8"]))

    in_specs = [pl.BlockSpec((1, 28, 28), lambda b: (b, 0, 0))]
    for c in consts:                                         # weights: VMEM-resident
        zeros = (0,) * c.ndim
        in_specs.append(pl.BlockSpec(c.shape, lambda b, z=zeros: z))

    out = pl.pallas_call(
        net8_kernel,
        out_shape=jax.ShapeDtypeStruct((B, 10, 1), jnp.float32),
        grid_spec=pltpu.PrefetchScalarGridSpec(
            num_scalar_prefetch=0,
            grid=(B,),
            in_specs=in_specs,
            out_specs=pl.BlockSpec((1, 10, 1), lambda b: (b, 0, 0)),
            scratch_shapes=[
                pltpu.VMEM((26, 16, 26), jnp.float32),   # a1: conv1 out
                pltpu.VMEM((24, 10, 24), jnp.float32),   # a2: conv2 out
                pltpu.VMEM((12, 10, 12), jnp.float32),   # p1: pool + bn1
                pltpu.VMEM((10, 10, 10), jnp.float32),   # a3: conv3 out
                pltpu.VMEM((8, 16, 8), jnp.float32),     # a4: conv4 + bn2
                pltpu.VMEM((8, 16, 8), jnp.float32),     # a5: conv5, zero-padded
                pltpu.VMEM((6, 16, 6), jnp.float32),     # a6: conv6 out
            ]),
        compiler_params=pltpu.CompilerParams(
            dimension_semantics=("parallel",)),
    )(x, *consts)
    return out.reshape(B, 10)


# ----------------------------------------------------------------------------
# Parameter init (deterministic, shapes from Net8.__init__)
# ----------------------------------------------------------------------------
def init_params(key):
    ks = iter(jax.random.split(key, 32))

    def conv(cout, cin, kh, kw):
        fan_in = cin * kh * kw
        w = jax.random.normal(next(ks), (cout, cin, kh, kw), jnp.float32)
        w = w / jnp.sqrt(jnp.float32(fan_in))
        b = 0.01 * jax.random.normal(next(ks), (cout,), jnp.float32)
        return w, b

    def bn(c):
        gamma = 1.0 + 0.1 * jax.random.normal(next(ks), (c,), jnp.float32)
        beta = 0.1 * jax.random.normal(next(ks), (c,), jnp.float32)
        rmean = 0.1 * jax.random.normal(next(ks), (c,), jnp.float32)
        rvar = 0.9 + 0.2 * jax.random.uniform(next(ks), (c,), jnp.float32)
        return gamma, beta, rmean, rvar

    p = {}
    p["w1"], p["b1"] = conv(16, 1, 3, 3)
    p["w2"], p["b2"] = conv(10, 16, 3, 3)
    p["g1"], p["be1"], p["rm1"], p["rv1"] = bn(10)
    p["w3"], p["b3"] = conv(10, 10, 3, 3)
    p["w4"], p["b4"] = conv(16, 10, 3, 3)
    p["g2"], p["be2"], p["rm2"], p["rv2"] = bn(16)
    p["w5"], p["b5"] = conv(16, 16, 3, 3)
    p["w6"], p["b6"] = conv(16, 16, 3, 3)
    p["w8"], p["b8"] = conv(10, 16, 1, 1)
    return p


# ----------------------------------------------------------------------------
# Pure-JAX reference (eval-mode Net8) for correctness checking
# ----------------------------------------------------------------------------
def ref_forward(x, p):
    def conv(x, w, b, pad):
        out = lax.conv_general_dilated(
            x, w, (1, 1), [(pad, pad), (pad, pad)],
            dimension_numbers=("NCHW", "OIHW", "NCHW"))
        return out + b.reshape(1, -1, 1, 1)

    def bn(x, g, be, rm, rv):
        s = g / jnp.sqrt(rv + BN_EPS)
        t = be - s * rm
        return x * s.reshape(1, -1, 1, 1) + t.reshape(1, -1, 1, 1)

    x = jax.nn.relu(conv(x, p["w1"], p["b1"], 0))
    x = jax.nn.relu(conv(x, p["w2"], p["b2"], 0))
    B, C, H, W = x.shape
    x = x.reshape(B, C, H // 2, 2, W // 2, 2).max(axis=(3, 5))
    x = bn(x, p["g1"], p["be1"], p["rm1"], p["rv1"])
    x = jax.nn.relu(conv(x, p["w3"], p["b3"], 0))
    x = jax.nn.relu(conv(x, p["w4"], p["b4"], 0))
    x = bn(x, p["g2"], p["be2"], p["rm2"], p["rv2"])
    x = jax.nn.relu(conv(x, p["w5"], p["b5"], 0))
    x = conv(x, p["w6"], p["b6"], 1)
    x = x.mean(axis=(2, 3))                                   # GAP -> (B, 16)
    logits = x @ p["w8"].reshape(10, 16).T + p["b8"]
    return jax.nn.log_softmax(logits, axis=-1)


if __name__ == "__main__":
    key = jax.random.PRNGKey(0)
    x = jax.random.normal(key, (2, 1, 28, 28), jnp.float32)   # NCHW input
    params = init_params(jax.random.PRNGKey(42))

    out = jax.block_until_ready(jax.jit(net8_forward)(x, params))

    assert out.shape == (2, 10), out.shape
    # log_softmax rows must (approximately) exp-sum to 1
    assert bool(jnp.allclose(jnp.sum(jnp.exp(out), axis=-1), 1.0, atol=1e-4))

    # compare against the pure-JAX reference (loose tol: matmul precision modes)
    ref = jax.block_until_ready(jax.jit(ref_forward)(x, params))
    max_err = float(jnp.max(jnp.abs(out - ref)))
    assert max_err < 1e-1, f"mismatch vs reference: {max_err}"

    print("KERNEL_OK")
</pallas_src>

<mosaic_0001>
module attributes {stable_mosaic.version = 11 : i64} {
  func.func @net8_kernel(%arg0: i32, %arg1: memref<1x28x28xf32, #tpu.memory_space<vmem>>, %arg2: memref<9x16x1xf32, #tpu.memory_space<vmem>>, %arg3: memref<16x1xf32, #tpu.memory_space<vmem>>, %arg4: memref<9x10x16xf32, #tpu.memory_space<vmem>>, %arg5: memref<10x1xf32, #tpu.memory_space<vmem>>, %arg6: memref<10x1xf32, #tpu.memory_space<vmem>>, %arg7: memref<10x1xf32, #tpu.memory_space<vmem>>, %arg8: memref<9x10x10xf32, #tpu.memory_space<vmem>>, %arg9: memref<10x1xf32, #tpu.memory_space<vmem>>, %arg10: memref<9x16x10xf32, #tpu.memory_space<vmem>>, %arg11: memref<16x1xf32, #tpu.memory_space<vmem>>, %arg12: memref<16x1xf32, #tpu.memory_space<vmem>>, %arg13: memref<16x1xf32, #tpu.memory_space<vmem>>, %arg14: memref<9x16x16xf32, #tpu.memory_space<vmem>>, %arg15: memref<16x1xf32, #tpu.memory_space<vmem>>, %arg16: memref<9x16x16xf32, #tpu.memory_space<vmem>>, %arg17: memref<16x1xf32, #tpu.memory_space<vmem>>, %arg18: memref<10x16xf32, #tpu.memory_space<vmem>>, %arg19: memref<10x1xf32, #tpu.memory_space<vmem>>, %arg20: memref<1x10x1xf32, #tpu.memory_space<vmem>>, %arg21: memref<26x16x26xf32, #tpu.memory_space<vmem>>, %arg22: memref<24x10x24xf32, #tpu.memory_space<vmem>>, %arg23: memref<12x10x12xf32, #tpu.memory_space<vmem>>, %arg24: memref<10x10x10xf32, #tpu.memory_space<vmem>>, %arg25: memref<8x16x8xf32, #tpu.memory_space<vmem>>, %arg26: memref<8x16x8xf32, #tpu.memory_space<vmem>>, %arg27: memref<6x16x6xf32, #tpu.memory_space<vmem>>) attributes {dimension_semantics = [#tpu.dimension_semantics<parallel>], iteration_bounds = array<i64: 2>, scalar_prefetch = 0 : i64, scratch_operands = 7 : i64, tpu.core_type = #tpu.core_type<tc>, window_params = [{transform_indices = @transform_0, window_bounds = array<i64: 1, 28, 28>}, {pipeline_mode = #tpu.pipeline_mode<synchronous>, transform_indices = @transform_1, window_bounds = array<i64: 9, 16, 1>}, {pipeline_mode = #tpu.pipeline_mode<synchronous>, transform_indices = @transform_2, window_bounds = array<i64: 16, 1>}, {pipeline_mode = #tpu.pipeline_mode<synchronous>, transform_indices = @transform_3, window_bounds = array<i64: 9, 10, 16>}, {pipeline_mode = #tpu.pipeline_mode<synchronous>, transform_indices = @transform_4, window_bounds = array<i64: 10, 1>}, {pipeline_mode = #tpu.pipeline_mode<synchronous>, transform_indices = @transform_5, window_bounds = array<i64: 10, 1>}, {pipeline_mode = #tpu.pipeline_mode<synchronous>, transform_indices = @transform_6, window_bounds = array<i64: 10, 1>}, {pipeline_mode = #tpu.pipeline_mode<synchronous>, transform_indices = @transform_7, window_bounds = array<i64: 9, 10, 10>}, {pipeline_mode = #tpu.pipeline_mode<synchronous>, transform_indices = @transform_8, window_bounds = array<i64: 10, 1>}, {pipeline_mode = #tpu.pipeline_mode<synchronous>, transform_indices = @transform_9, window_bounds = array<i64: 9, 16, 10>}, {pipeline_mode = #tpu.pipeline_mode<synchronous>, transform_indices = @transform_10, window_bounds = array<i64: 16, 1>}, {pipeline_mode = #tpu.pipeline_mode<synchronous>, transform_indices = @transform_11, window_bounds = array<i64: 16, 1>}, {pipeline_mode = #tpu.pipeline_mode<synchronous>, transform_indices = @transform_12, window_bounds = array<i64: 16, 1>}, {pipeline_mode = #tpu.pipeline_mode<synchronous>, transform_indices = @transform_13, window_bounds = array<i64: 9, 16, 16>}, {pipeline_mode = #tpu.pipeline_mode<synchronous>, transform_indices = @transform_14, window_bounds = array<i64: 16, 1>}, {pipeline_mode = #tpu.pipeline_mode<synchronous>, transform_indices = @transform_15, window_bounds = array<i64: 9, 16, 16>}, {pipeline_mode = #tpu.pipeline_mode<synchronous>, transform_indices = @transform_16, window_bounds = array<i64: 16, 1>}, {pipeline_mode = #tpu.pipeline_mode<synchronous>, transform_indices = @transform_17, window_bounds = array<i64: 10, 16>}, {pipeline_mode = #tpu.pipeline_mode<synchronous>, transform_indices = @transform_18, window_bounds = array<i64: 10, 1>}, {transform_indices = @transform_19, window_bounds = array<i64: 1, 10, 1>}]} {
    %c0_i32 = arith.constant 0 : i32
    %c26_i32 = arith.constant 26 : i32
    %0 = arith.addi %c0_i32, %c26_i32 : i32
    %c1_i32 = arith.constant 1 : i32
    scf.for %arg28 = %c0_i32 to %0 step %c1_i32  : i32 {
      %cst_56 = arith.constant 0.000000e+00 : f32
      %80 = vector.broadcast %cst_56 : f32 to vector<16x26xf32>
      %c0_i32_57 = arith.constant 0 : i32
      %81 = arith.addi %arg28, %c0_i32_57 : i32
      %c0_58 = arith.constant 0 : index
      %82 = arith.index_cast %81 : i32 to index
      %c0_59 = arith.constant 0 : index
      %83 = vector.load %arg1[%c0_58, %82, %c0_59] : memref<1x28x28xf32, #tpu.memory_space<vmem>>, vector<1x1x28xf32>
      %84 = vector.shape_cast %83 : vector<1x1x28xf32> to vector<1x28xf32>
      %c0_60 = arith.constant 0 : index
      %c0_61 = arith.constant 0 : index
      %c0_62 = arith.constant 0 : index
      %85 = vector.load %arg2[%c0_60, %c0_61, %c0_62] : memref<9x16x1xf32, #tpu.memory_space<vmem>>, vector<1x16x1xf32>
      %86 = vector.shape_cast %85 : vector<1x16x1xf32> to vector<16x1xf32>
      %87 = vector.extract_strided_slice %84 {offsets = [0, 0], sizes = [1, 26], strides = [1, 1]} : vector<1x28xf32> to vector<1x26xf32>
      %88 = vector.broadcast %86 : vector<16x1xf32> to vector<16x26xf32>
      %89 = vector.broadcast %87 : vector<1x26xf32> to vector<16x26xf32>
      %90 = arith.mulf %88, %89 : vector<16x26xf32>
      %91 = arith.addf %80, %90 : vector<16x26xf32>
      %c1_63 = arith.constant 1 : index
      %c0_64 = arith.constant 0 : index
      %c0_65 = arith.constant 0 : index
      %92 = vector.load %arg2[%c1_63, %c0_64, %c0_65] : memref<9x16x1xf32, #tpu.memory_space<vmem>>, vector<1x16x1xf32>
      %93 = vector.shape_cast %92 : vector<1x16x1xf32> to vector<16x1xf32>
      %94 = vector.extract_strided_slice %84 {offsets = [0, 1], sizes = [1, 26], strides = [1, 1]} : vector<1x28xf32> to vector<1x26xf32>
      %95 = vector.broadcast %93 : vector<16x1xf32> to vector<16x26xf32>
      %96 = vector.broadcast %94 : vector<1x26xf32> to vector<16x26xf32>
      %97 = arith.mulf %95, %96 : vector<16x26xf32>
      %98 = arith.addf %91, %97 : vector<16x26xf32>
      %c2_66 = arith.constant 2 : index
      %c0_67 = arith.constant 0 : index
      %c0_68 = arith.constant 0 : index
      %99 = vector.load %arg2[%c2_66, %c0_67, %c0_68] : memref<9x16x1xf32, #tpu.memory_space<vmem>>, vector<1x16x1xf32>
      %100 = vector.shape_cast %99 : vector<1x16x1xf32> to vector<16x1xf32>
      %101 = vector.extract_strided_slice %84 {offsets = [0, 2], sizes = [1, 26], strides = [1, 1]} : vector<1x28xf32> to vector<1x26xf32>
      %102 = vector.broadcast %100 : vector<16x1xf32> to vector<16x26xf32>
      %103 = vector.broadcast %101 : vector<1x26xf32> to vector<16x26xf32>
      %104 = arith.mulf %102, %103 : vector<16x26xf32>
      %105 = arith.addf %98, %104 : vector<16x26xf32>
      %c1_i32_69 = arith.constant 1 : i32
      %106 = arith.addi %arg28, %c1_i32_69 : i32
      %c0_70 = arith.constant 0 : index
      %107 = arith.index_cast %106 : i32 to index
      %c0_71 = arith.constant 0 : index
      %108 = vector.load %arg1[%c0_70, %107, %c0_71] : memref<1x28x28xf32, #tpu.memory_space<vmem>>, vector<1x1x28xf32>
      %109 = vector.shape_cast %108 : vector<1x1x28xf32> to vector<1x28xf32>
      %c3_72 = arith.constant 3 : index
      %c0_73 = arith.constant 0 : index
      %c0_74 = arith.constant 0 : index
      %110 = vector.load %arg2[%c3_72, %c0_73, %c0_74] : memref<9x16x1xf32, #tpu.memory_space<vmem>>, vector<1x16x1xf32>
      %111 = vector.shape_cast %110 : vector<1x16x1xf32> to vector<16x1xf32>
      %112 = vector.extract_strided_slice %109 {offsets = [0, 0], sizes = [1, 26], strides = [1, 1]} : vector<1x28xf32> to vector<1x26xf32>
      %113 = vector.broadcast %111 : vector<16x1xf32> to vector<16x26xf32>
      %114 = vector.broadcast %112 : vector<1x26xf32> to vector<16x26xf32>
      %115 = arith.mulf %113, %114 : vector<16x26xf32>
      %116 = arith.addf %105, %115 : vector<16x26xf32>
      %c4_75 = arith.constant 4 : index
      %c0_76 = arith.constant 0 : index
      %c0_77 = arith.constant 0 : index
      %117 = vector.load %arg2[%c4_75, %c0_76, %c0_77] : memref<9x16x1xf32, #tpu.memory_space<vmem>>, vector<1x16x1xf32>
      %118 = vector.shape_cast %117 : vector<1x16x1xf32> to vector<16x1xf32>
      %119 = vector.extract_strided_slice %109 {offsets = [0, 1], sizes = [1, 26], strides = [1, 1]} : vector<1x28xf32> to vector<1x26xf32>
      %120 = vector.broadcast %118 : vector<16x1xf32> to vector<16x26xf32>
      %121 = vector.broadcast %119 : vector<1x26xf32> to vector<16x26xf32>
      %122 = arith.mulf %120, %121 : vector<16x26xf32>
      %123 = arith.addf %116, %122 : vector<16x26xf32>
      %c5_78 = arith.constant 5 : index
      %c0_79 = arith.constant 0 : index
      %c0_80 = arith.constant 0 : index
      %124 = vector.load %arg2[%c5_78, %c0_79, %c0_80] : memref<9x16x1xf32, #tpu.memory_space<vmem>>, vector<1x16x1xf32>
      %125 = vector.shape_cast %124 : vector<1x16x1xf32> to vector<16x1xf32>
      %126 = vector.extract_strided_slice %109 {offsets = [0, 2], sizes = [1, 26], strides = [1, 1]} : vector<1x28xf32> to vector<1x26xf32>
      %127 = vector.broadcast %125 : vector<16x1xf32> to vector<16x26xf32>
      %128 = vector.broadcast %126 : vector<1x26xf32> to vector<16x26xf32>
      %129 = arith.mulf %127, %128 : vector<16x26xf32>
      %130 = arith.addf %123, %129 : vector<16x26xf32>
      %c2_i32_81 = arith.constant 2 : i32
      %131 = arith.addi %arg28, %c2_i32_81 : i32
      %c0_82 = arith.constant 0 : index
      %132 = arith.index_cast %131 : i32 to index
      %c0_83 = arith.constant 0 : index
      %133 = vector.load %arg1[%c0_82, %132, %c0_83] : memref<1x28x28xf32, #tpu.memory_space<vmem>>, vector<1x1x28xf32>
      %134 = vector.shape_cast %133 : vector<1x1x28xf32> to vector<1x28xf32>
      %c6 = arith.constant 6 : index
      %c0_84 = arith.constant 0 : index
      %c0_85 = arith.constant 0 : index
      %135 = vector.load %arg2[%c6, %c0_84, %c0_85] : memref<9x16x1xf32, #tpu.memory_space<vmem>>, vector<1x16x1xf32>
      %136 = vector.shape_cast %135 : vector<1x16x1xf32> to vector<16x1xf32>
      %137 = vector.extract_strided_slice %134 {offsets = [0, 0], sizes = [1, 26], strides = [1, 1]} : vector<1x28xf32> to vector<1x26xf32>
      %138 = vector.broadcast %136 : vector<16x1xf32> to vector<16x26xf32>
      %139 = vector.broadcast %137 : vector<1x26xf32> to vector<16x26xf32>
      %140 = arith.mulf %138, %139 : vector<16x26xf32>
      %141 = arith.addf %130, %140 : vector<16x26xf32>
      %c7 = arith.constant 7 : index
      %c0_86 = arith.constant 0 : index
      %c0_87 = arith.constant 0 : index
      %142 = vector.load %arg2[%c7, %c0_86, %c0_87] : memref<9x16x1xf32, #tpu.memory_space<vmem>>, vector<1x16x1xf32>
      %143 = vector.shape_cast %142 : vector<1x16x1xf32> to vector<16x1xf32>
      %144 = vector.extract_strided_slice %134 {offsets = [0, 1], sizes = [1, 26], strides = [1, 1]} : vector<1x28xf32> to vector<1x26xf32>
      %145 = vector.broadcast %143 : vector<16x1xf32> to vector<16x26xf32>
      %146 = vector.broadcast %144 : vector<1x26xf32> to vector<16x26xf32>
      %147 = arith.mulf %145, %146 : vector<16x26xf32>
      %148 = arith.addf %141, %147 : vector<16x26xf32>
      %c8 = arith.constant 8 : index
      %c0_88 = arith.constant 0 : index
      %c0_89 = arith.constant 0 : index
      %149 = vector.load %arg2[%c8, %c0_88, %c0_89] : memref<9x16x1xf32, #tpu.memory_space<vmem>>, vector<1x16x1xf32>
      %150 = vector.shape_cast %149 : vector<1x16x1xf32> to vector<16x1xf32>
      %151 = vector.extract_strided_slice %134 {offsets = [0, 2], sizes = [1, 26], strides = [1, 1]} : vector<1x28xf32> to vector<1x26xf32>
      %152 = vector.broadcast %150 : vector<16x1xf32> to vector<16x26xf32>
      %153 = vector.broadcast %151 : vector<1x26xf32> to vector<16x26xf32>
      %154 = arith.mulf %152, %153 : vector<16x26xf32>
      %155 = arith.addf %148, %154 : vector<16x26xf32>
      %c0_90 = arith.constant 0 : index
      %c0_91 = arith.constant 0 : index
      %156 = vector.load %arg3[%c0_90, %c0_91] : memref<16x1xf32, #tpu.memory_space<vmem>>, vector<16x1xf32>
      %157 = vector.broadcast %156 : vector<16x1xf32> to vector<16x26xf32>
      %158 = arith.addf %155, %157 : vector<16x26xf32>
      %cst_92 = arith.constant 0.000000e+00 : f32
      %159 = vector.broadcast %cst_92 : f32 to vector<16x26xf32>
      %160 = arith.maximumf %158, %159 : vector<16x26xf32>
      %161 = arith.index_cast %arg28 : i32 to index
      %c0_93 = arith.constant 0 : index
      %c0_94 = arith.constant 0 : index
      %162 = vector.load %arg21[%161, %c0_93, %c0_94] : memref<26x16x26xf32, #tpu.memory_space<vmem>>, vector<1x16x26xf32>
      %163 = vector.shape_cast %162 : vector<1x16x26xf32> to vector<16x26xf32>
      %164 = vector.shape_cast %160 : vector<16x26xf32> to vector<1x16x26xf32>
      tpu.vector_store %arg21[%161, %c0_93, %c0_94], %164 {strides = array<i32>} : memref<26x16x26xf32, #tpu.memory_space<vmem>>, vector<1x16x26xf32>,
    }
    %c26_i32_0 = arith.constant 26 : i32
    %c0_i32_1 = arith.constant 0 : i32
    %c24_i32 = arith.constant 24 : i32
    %1 = arith.addi %c0_i32_1, %c24_i32 : i32
    %c1_i32_2 = arith.constant 1 : i32
    scf.for %arg28 = %c0_i32_1 to %1 step %c1_i32_2  : i32 {
      %cst_56 = arith.constant 0.000000e+00 : f32
      %80 = vector.broadcast %cst_56 : f32 to vector<10x24xf32>
      %c0_i32_57 = arith.constant 0 : i32
      %81 = arith.addi %arg28, %c0_i32_57 : i32
      %82 = arith.index_cast %81 : i32 to index
      %c0_58 = arith.constant 0 : index
      %c0_59 = arith.constant 0 : index
      %83 = vector.load %arg21[%82, %c0_58, %c0_59] : memref<26x16x26xf32, #tpu.memory_space<vmem>>, vector<1x16x26xf32>
      %84 = vector.shape_cast %83 : vector<1x16x26xf32> to vector<16x26xf32>
      %c0_60 = arith.constant 0 : index
      %c0_61 = arith.constant 0 : index
      %c0_62 = arith.constant 0 : index
      %85 = vector.load %arg4[%c0_60, %c0_61, %c0_62] : memref<9x10x16xf32, #tpu.memory_space<vmem>>, vector<1x10x16xf32>
      %86 = vector.shape_cast %85 : vector<1x10x16xf32> to vector<10x16xf32>
      %87 = vector.extract_strided_slice %84 {offsets = [0, 0], sizes = [16, 24], strides = [1, 1]} : vector<16x26xf32> to vector<16x24xf32>
      %cst_63 = arith.constant dense<0.000000e+00> : vector<10x24xf32>
      %88 = tpu.matmul %86, %87, %cst_63 {dimension_numbers = #tpu.dot_dimension_numbers<[1], [0], [0], [1], [0, 0, 1, 1], [], []>} : vector<10x16xf32>, vector<16x24xf32>, vector<10x24xf32> -> vector<10x24xf32>
      %89 = arith.addf %80, %88 : vector<10x24xf32>
      %c1_64 = arith.constant 1 : index
      %c0_65 = arith.constant 0 : index
      %c0_66 = arith.constant 0 : index
      %90 = vector.load %arg4[%c1_64, %c0_65, %c0_66] : memref<9x10x16xf32, #tpu.memory_space<vmem>>, vector<1x10x16xf32>
      %91 = vector.shape_cast %90 : vector<1x10x16xf32> to vector<10x16xf32>
      %92 = vector.extract_strided_slice %84 {offsets = [0, 1], sizes = [16, 24], strides = [1, 1]} : vector<16x26xf32> to vector<16x24xf32>
      %cst_67 = arith.constant dense<0.000000e+00> : vector<10x24xf32>
      %93 = tpu.matmul %91, %92, %cst_67 {dimension_numbers = #tpu.dot_dimension_numbers<[1], [0], [0], [1], [0, 0, 1, 1], [], []>} : vector<10x16xf32>, vector<16x24xf32>, vector<10x24xf32> -> vector<10x24xf32>
      %94 = arith.addf %89, %93 : vector<10x24xf32>
      %c2_68 = arith.constant 2 : index
      %c0_69 = arith.constant 0 : index
      %c0_70 = arith.constant 0 : index
      %95 = vector.load %arg4[%c2_68, %c0_69, %c0_70] : memref<9x10x16xf32, #tpu.memory_space<vmem>>, vector<1x10x16xf32>
      %96 = vector.shape_cast %95 : vector<1x10x16xf32> to vector<10x16xf32>
      %97 = vector.extract_strided_slice %84 {offsets = [0, 2], sizes = [16, 24], strides = [1, 1]} : vector<16x26xf32> to vector<16x24xf32>
      %cst_71 = arith.constant dense<0.000000e+00> : vector<10x24xf32>
      %98 = tpu.matmul %96, %97, %cst_71 {dimension_numbers = #tpu.dot_dimension_numbers<[1], [0], [0], [1], [0, 0, 1, 1], [], []>} : vector<10x16xf32>, vector<16x24xf32>, vector<10x24xf32> -> vector<10x24xf32>
      %99 = arith.addf %94, %98 : vector<10x24xf32>
      %c1_i32_72 = arith.constant 1 : i32
      %100 = arith.addi %arg28, %c1_i32_72 : i32
      %101 = arith.index_cast %100 : i32 to index
      %c0_73 = arith.constant 0 : index
      %c0_74 = arith.constant 0 : index
      %102 = vector.load %arg21[%101, %c0_73, %c0_74] : memref<26x16x26xf32, #tpu.memory_space<vmem>>, vector<1x16x26xf32>
      %103 = vector.shape_cast %102 : vector<1x16x26xf32> to vector<16x26xf32>
      %c3_75 = arith.constant 3 : index
      %c0_76 = arith.constant 0 : index
      %c0_77 = arith.constant 0 : index
      %104 = vector.load %arg4[%c3_75, %c0_76, %c0_77] : memref<9x10x16xf32, #tpu.memory_space<vmem>>, vector<1x10x16xf32>
      %105 = vector.shape_cast %104 : vector<1x10x16xf32> to vector<10x16xf32>
      %106 = vector.extract_strided_slice %103 {offsets = [0, 0], sizes = [16, 24], strides = [1, 1]} : vector<16x26xf32> to vector<16x24xf32>
      %cst_78 = arith.constant dense<0.000000e+00> : vector<10x24xf32>
      %107 = tpu.matmul %105, %106, %cst_78 {dimension_numbers = #tpu.dot_dimension_numbers<[1], [0], [0], [1], [0, 0, 1, 1], [], []>} : vector<10x16xf32>, vector<16x24xf32>, vector<10x24xf32> -> vector<10x24xf32>
      %108 = arith.addf %99, %107 : vector<10x24xf32>
      %c4_79 = arith.constant 4 : index
      %c0_80 = arith.constant 0 : index
      %c0_81 = arith.constant 0 : index
      %109 = vector.load %arg4[%c4_79, %c0_80, %c0_81] : memref<9x10x16xf32, #tpu.memory_space<vmem>>, vector<1x10x16xf32>
      %110 = vector.shape_cast %109 : vector<1x10x16xf32> to vector<10x16xf32>
      %111 = vector.extract_strided_slice %103 {offsets = [0, 1], sizes = [16, 24], strides = [1, 1]} : vector<16x26xf32> to vector<16x24xf32>
      %cst_82 = arith.constant dense<0.000000e+00> : vector<10x24xf32>
      %112 = tpu.matmul %110, %111, %cst_82 {dimension_numbers = #tpu.dot_dimension_numbers<[1], [0], [0], [1], [0, 0, 1, 1], [], []>} : vector<10x16xf32>, vector<16x24xf32>, vector<10x24xf32> -> vector<10x24xf32>
      %113 = arith.addf %108, %112 : vector<10x24xf32>
      %c5_83 = arith.constant 5 : index
      %c0_84 = arith.constant 0 : index
      %c0_85 = arith.constant 0 : index
      %114 = vector.load %arg4[%c5_83, %c0_84, %c0_85] : memref<9x10x16xf32, #tpu.memory_space<vmem>>, vector<1x10x16xf32>
      %115 = vector.shape_cast %114 : vector<1x10x16xf32> to vector<10x16xf32>
      %116 = vector.extract_strided_slice %103 {offsets = [0, 2], sizes = [16, 24], strides = [1, 1]} : vector<16x26xf32> to vector<16x24xf32>
      %cst_86 = arith.constant dense<0.000000e+00> : vector<10x24xf32>
      %117 = tpu.matmul %115, %116, %cst_86 {dimension_numbers = #tpu.dot_dimension_numbers<[1], [0], [0], [1], [0, 0, 1, 1], [], []>} : vector<10x16xf32>, vector<16x24xf32>, vector<10x24xf32> -> vector<10x24xf32>
      %118 = arith.addf %113, %117 : vector<10x24xf32>
      %c2_i32_87 = arith.constant 2 : i32
      %119 = arith.addi %arg28, %c2_i32_87 : i32
      %120 = arith.index_cast %119 : i32 to index
      %c0_88 = arith.constant 0 : index
      %c0_89 = arith.constant 0 : index
      %121 = vector.load %arg21[%120, %c0_88, %c0_89] : memref<26x16x26xf32, #tpu.memory_space<vmem>>, vector<1x16x26xf32>
      %122 = vector.shape_cast %121 : vector<1x16x26xf32> to vector<16x26xf32>
      %c6 = arith.constant 6 : index
      %c0_90 = arith.constant 0 : index
      %c0_91 = arith.constant 0 : index
      %123 = vector.load %arg4[%c6, %c0_90, %c0_91] : memref<9x10x16xf32, #tpu.memory_space<vmem>>, vector<1x10x16xf32>
      %124 = vector.shape_cast %123 : vector<1x10x16xf32> to vector<10x16xf32>
      %125 = vector.extract_strided_slice %122 {offsets = [0, 0], sizes = [16, 24], strides = [1, 1]} : vector<16x26xf32> to vector<16x24xf32>
      %cst_92 = arith.constant dense<0.000000e+00> : vector<10x24xf32>
      %126 = tpu.matmul %124, %125, %cst_92 {dimension_numbers = #tpu.dot_dimension_numbers<[1], [0], [0], [1], [0, 0, 1, 1], [], []>} : vector<10x16xf32>, vector<16x24xf32>, vector<10x24xf32> -> vector<10x24xf32>
      %127 = arith.addf %118, %126 : vector<10x24xf32>
      %c7 = arith.constant 7 : index
      %c0_93 = arith.constant 0 : index
      %c0_94 = arith.constant 0 : index
      %128 = vector.load %arg4[%c7, %c0_93, %c0_94] : memref<9x10x16xf32, #tpu.memory_space<vmem>>, vector<1x10x16xf32>
      %129 = vector.shape_cast %128 : vector<1x10x16xf32> to vector<10x16xf32>
      %130 = vector.extract_strided_slice %122 {offsets = [0, 1], sizes = [16, 24], strides = [1, 1]} : vector<16x26xf32> to vector<16x24xf32>
      %cst_95 = arith.constant dense<0.000000e+00> : vector<10x24xf32>
      %131 = tpu.matmul %129, %130, %cst_95 {dimension_numbers = #tpu.dot_dimension_numbers<[1], [0], [0], [1], [0, 0, 1, 1], [], []>} : vector<10x16xf32>, vector<16x24xf32>, vector<10x24xf32> -> vector<10x24xf32>
      %132 = arith.addf %127, %131 : vector<10x24xf32>
      %c8 = arith.constant 8 : index
      %c0_96 = arith.constant 0 : index
      %c0_97 = arith.constant 0 : index
      %133 = vector.load %arg4[%c8, %c0_96, %c0_97] : memref<9x10x16xf32, #tpu.memory_space<vmem>>, vector<1x10x16xf32>
      %134 = vector.shape_cast %133 : vector<1x10x16xf32> to vector<10x16xf32>
      %135 = vector.extract_strided_slice %122 {offsets = [0, 2], sizes = [16, 24], strides = [1, 1]} : vector<16x26xf32> to vector<16x24xf32>
      %cst_98 = arith.constant dense<0.000000e+00> : vector<10x24xf32>
      %136 = tpu.matmul %134, %135, %cst_98 {dimension_numbers = #tpu.dot_dimension_numbers<[1], [0], [0], [1], [0, 0, 1, 1], [], []>} : vector<10x16xf32>, vector<16x24xf32>, vector<10x24xf32> -> vector<10x24xf32>
      %137 = arith.addf %132, %136 : vector<10x24xf32>
      %c0_99 = arith.constant 0 : index
      %c0_100 = arith.constant 0 : index
      %138 = vector.load %arg5[%c0_99, %c0_100] : memref<10x1xf32, #tpu.memory_space<vmem>>, vector<10x1xf32>
      %139 = vector.broadcast %138 : vector<10x1xf32> to vector<10x24xf32>
      %140 = arith.addf %137, %139 : vector<10x24xf32>
      %cst_101 = arith.constant 0.000000e+00 : f32
      %141 = vector.broadcast %cst_101 : f32 to vector<10x24xf32>
      %142 = arith.maximumf %140, %141 : vector<10x24xf32>
      %c0_i32_102 = arith.constant 0 : i32
      %143 = arith.addi %arg28, %c0_i32_102 : i32
      %144 = arith.index_cast %143 : i32 to index
      %c0_103 = arith.constant 0 : index
      %c0_104 = arith.constant 0 : index
      %145 = vector.load %arg22[%144, %c0_103, %c0_104] : memref<24x10x24xf32, #tpu.memory_space<vmem>>, vector<1x10x24xf32>
      %146 = vector.shape_cast %145 : vector<1x10x24xf32> to vector<10x24xf32>
      %147 = vector.shape_cast %142 : vector<10x24xf32> to vector<1x10x24xf32>
      tpu.vector_store %arg22[%144, %c0_103, %c0_104], %147 {strides = array<i32>} : memref<24x10x24xf32, #tpu.memory_space<vmem>>, vector<1x10x24xf32>,
    }
    %c24_i32_3 = arith.constant 24 : i32
    %2 = tpu.iota {dimensions = array<i32: 0>} : vector<24x12xi32>
    %3 = tpu.iota {dimensions = array<i32: 1>} : vector<24x12xi32>
    %c2_i32 = arith.constant 2 : i32
    %4 = vector.broadcast %c2_i32 : i32 to vector<24x12xi32>
    %5 = arith.muli %4, %3 : vector<24x12xi32>
    %6 = arith.cmpi eq, %2, %5 : vector<24x12xi32>
    %7 = arith.extui %6 : vector<24x12xi1> to vector<24x12xi32>
    %8 = arith.sitofp %7 : vector<24x12xi32> to vector<24x12xf32>
    %c2_i32_4 = arith.constant 2 : i32
    %9 = vector.broadcast %c2_i32_4 : i32 to vector<24x12xi32>
    %10 = arith.muli %9, %3 : vector<24x12xi32>
    %c1_i32_5 = arith.constant 1 : i32
    %11 = vector.broadcast %c1_i32_5 : i32 to vector<24x12xi32>
    %12 = arith.addi %10, %11 : vector<24x12xi32>
    %13 = arith.cmpi eq, %2, %12 : vector<24x12xi32>
    %14 = arith.extui %13 : vector<24x12xi1> to vector<24x12xi32>
    %15 = arith.sitofp %14 : vector<24x12xi32> to vector<24x12xf32>
    %c0_i32_6 = arith.constant 0 : i32
    %c12_i32 = arith.constant 12 : i32
    %16 = arith.addi %c0_i32_6, %c12_i32 : i32
    %c1_i32_7 = arith.constant 1 : i32
    scf.for %arg28 = %c0_i32_6 to %16 step %c1_i32_7  : i32 {
      %c2_i32_56 = arith.constant 2 : i32
      %80 = arith.muli %c2_i32_56, %arg28 : i32
      %81 = arith.index_cast %80 : i32 to index
      %c0_57 = arith.constant 0 : index
      %c0_58 = arith.constant 0 : index
      %82 = vector.load %arg22[%81, %c0_57, %c0_58] : memref<24x10x24xf32, #tpu.memory_space<vmem>>, vector<1x10x24xf32>
      %83 = vector.shape_cast %82 : vector<1x10x24xf32> to vector<10x24xf32>
      %c2_i32_59 = arith.constant 2 : i32
      %84 = arith.muli %c2_i32_59, %arg28 : i32
      %c1_i32_60 = arith.constant 1 : i32
      %85 = arith.addi %84, %c1_i32_60 : i32
      %86 = arith.index_cast %85 : i32 to index
      %c0_61 = arith.constant 0 : index
      %c0_62 = arith.constant 0 : index
      %87 = vector.load %arg22[%86, %c0_61, %c0_62] : memref<24x10x24xf32, #tpu.memory_space<vmem>>, vector<1x10x24xf32>
      %88 = vector.shape_cast %87 : vector<1x10x24xf32> to vector<10x24xf32>
      %89 = arith.maximumf %83, %88 : vector<10x24xf32>
      %cst_63 = arith.constant dense<0.000000e+00> : vector<10x12xf32>
      %90 = tpu.matmul %89, %8, %cst_63 {dimension_numbers = #tpu.dot_dimension_numbers<[1], [0], [0], [1], [0, 0, 1, 1], [], []>} : vector<10x24xf32>, vector<24x12xf32>, vector<10x12xf32> -> vector<10x12xf32>
      %cst_64 = arith.constant dense<0.000000e+00> : vector<10x12xf32>
      %91 = tpu.matmul %89, %15, %cst_64 {dimension_numbers = #tpu.dot_dimension_numbers<[1], [0], [0], [1], [0, 0, 1, 1], [], []>} : vector<10x24xf32>, vector<24x12xf32>, vector<10x12xf32> -> vector<10x12xf32>
      %92 = arith.maximumf %90, %91 : vector<10x12xf32>
      %c0_65 = arith.constant 0 : index
      %c0_66 = arith.constant 0 : index
      %93 = vector.load %arg6[%c0_65, %c0_66] : memref<10x1xf32, #tpu.memory_space<vmem>>, vector<10x1xf32>
      %94 = vector.broadcast %93 : vector<10x1xf32> to vector<10x12xf32>
      %95 = arith.mulf %92, %94 : vector<10x12xf32>
      %c0_67 = arith.constant 0 : index
      %c0_68 = arith.constant 0 : index
      %96 = vector.load %arg7[%c0_67, %c0_68] : memref<10x1xf32, #tpu.memory_space<vmem>>, vector<10x1xf32>
      %97 = vector.broadcast %96 : vector<10x1xf32> to vector<10x12xf32>
      %98 = arith.addf %95, %97 : vector<10x12xf32>
      %99 = arith.index_cast %arg28 : i32 to index
      %c0_69 = arith.constant 0 : index
      %c0_70 = arith.constant 0 : index
      %100 = vector.load %arg23[%99, %c0_69, %c0_70] : memref<12x10x12xf32, #tpu.memory_space<vmem>>, vector<1x10x12xf32>
      %101 = vector.shape_cast %100 : vector<1x10x12xf32> to vector<10x12xf32>
      %102 = vector.shape_cast %98 : vector<10x12xf32> to vector<1x10x12xf32>
      tpu.vector_store %arg23[%99, %c0_69, %c0_70], %102 {strides = array<i32>} : memref<12x10x12xf32, #tpu.memory_space<vmem>>, vector<1x10x12xf32>,
    }
    %c12_i32_8 = arith.constant 12 : i32
    %c0_i32_9 = arith.constant 0 : i32
    %c10_i32 = arith.constant 10 : i32
    %17 = arith.addi %c0_i32_9, %c10_i32 : i32
    %c1_i32_10 = arith.constant 1 : i32
    scf.for %arg28 = %c0_i32_9 to %17 step %c1_i32_10  : i32 {
      %cst_56 = arith.constant 0.000000e+00 : f32
      %80 = vector.broadcast %cst_56 : f32 to vector<10x10xf32>
      %c0_i32_57 = arith.constant 0 : i32
      %81 = arith.addi %arg28, %c0_i32_57 : i32
      %82 = arith.index_cast %81 : i32 to index
      %c0_58 = arith.constant 0 : index
      %c0_59 = arith.constant 0 : index
      %83 = vector.load %arg23[%82, %c0_58, %c0_59] : memref<12x10x12xf32, #tpu.memory_space<vmem>>, vector<1x10x12xf32>
      %84 = vector.shape_cast %83 : vector<1x10x12xf32> to vector<10x12xf32>
      %c0_60 = arith.constant 0 : index
      %c0_61 = arith.constant 0 : index
      %c0_62 = arith.constant 0 : index
      %85 = vector.load %arg8[%c0_60, %c0_61, %c0_62] : memref<9x10x10xf32, #tpu.memory_space<vmem>>, vector<1x10x10xf32>
      %86 = vector.shape_cast %85 : vector<1x10x10xf32> to vector<10x10xf32>
      %87 = vector.extract_strided_slice %84 {offsets = [0, 0], sizes = [10, 10], strides = [1, 1]} : vector<10x12xf32> to vector<10x10xf32>
      %cst_63 = arith.constant dense<0.000000e+00> : vector<10x10xf32>
      %88 = tpu.matmul %86, %87, %cst_63 {dimension_numbers = #tpu.dot_dimension_numbers<[1], [0], [0], [1], [0, 0, 1, 1], [], []>} : vector<10x10xf32>, vector<10x10xf32>, vector<10x10xf32> -> vector<10x10xf32>
      %89 = arith.addf %80, %88 : vector<10x10xf32>
      %c1_64 = arith.constant 1 : index
      %c0_65 = arith.constant 0 : index
      %c0_66 = arith.constant 0 : index
      %90 = vector.load %arg8[%c1_64, %c0_65, %c0_66] : memref<9x10x10xf32, #tpu.memory_space<vmem>>, vector<1x10x10xf32>
      %91 = vector.shape_cast %90 : vector<1x10x10xf32> to vector<10x10xf32>
      %92 = vector.extract_strided_slice %84 {offsets = [0, 1], sizes = [10, 10], strides = [1, 1]} : vector<10x12xf32> to vector<10x10xf32>
      %cst_67 = arith.constant dense<0.000000e+00> : vector<10x10xf32>
      %93 = tpu.matmul %91, %92, %cst_67 {dimension_numbers = #tpu.dot_dimension_numbers<[1], [0], [0], [1], [0, 0, 1, 1], [], []>} : vector<10x10xf32>, vector<10x10xf32>, vector<10x10xf32> -> vector<10x10xf32>
      %94 = arith.addf %89, %93 : vector<10x10xf32>
      %c2_68 = arith.constant 2 : index
      %c0_69 = arith.constant 0 : index
      %c0_70 = arith.constant 0 : index
      %95 = vector.load %arg8[%c2_68, %c0_69, %c0_70] : memref<9x10x10xf32, #tpu.memory_space<vmem>>, vector<1x10x10xf32>
      %96 = vector.shape_cast %95 : vector<1x10x10xf32> to vector<10x10xf32>
      %97 = vector.extract_strided_slice %84 {offsets = [0, 2], sizes = [10, 10], strides = [1, 1]} : vector<10x12xf32> to vector<10x10xf32>
      %cst_71 = arith.constant dense<0.000000e+00> : vector<10x10xf32>
      %98 = tpu.matmul %96, %97, %cst_71 {dimension_numbers = #tpu.dot_dimension_numbers<[1], [0], [0], [1], [0, 0, 1, 1], [], []>} : vector<10x10xf32>, vector<10x10xf32>, vector<10x10xf32> -> vector<10x10xf32>
      %99 = arith.addf %94, %98 : vector<10x10xf32>
      %c1_i32_72 = arith.constant 1 : i32
      %100 = arith.addi %arg28, %c1_i32_72 : i32
      %101 = arith.index_cast %100 : i32 to index
      %c0_73 = arith.constant 0 : index
      %c0_74 = arith.constant 0 : index
      %102 = vector.load %arg23[%101, %c0_73, %c0_74] : memref<12x10x12xf32, #tpu.memory_space<vmem>>, vector<1x10x12xf32>
      %103 = vector.shape_cast %102 : vector<1x10x12xf32> to vector<10x12xf32>
      %c3_75 = arith.constant 3 : index
      %c0_76 = arith.constant 0 : index
      %c0_77 = arith.constant 0 : index
      %104 = vector.load %arg8[%c3_75, %c0_76, %c0_77] : memref<9x10x10xf32, #tpu.memory_space<vmem>>, vector<1x10x10xf32>
      %105 = vector.shape_cast %104 : vector<1x10x10xf32> to vector<10x10xf32>
      %106 = vector.extract_strided_slice %103 {offsets = [0, 0], sizes = [10, 10], strides = [1, 1]} : vector<10x12xf32> to vector<10x10xf32>
      %cst_78 = arith.constant dense<0.000000e+00> : vector<10x10xf32>
      %107 = tpu.matmul %105, %106, %cst_78 {dimension_numbers = #tpu.dot_dimension_numbers<[1], [0], [0], [1], [0, 0, 1, 1], [], []>} : vector<10x10xf32>, vector<10x10xf32>, vector<10x10xf32> -> vector<10x10xf32>
      %108 = arith.addf %99, %107 : vector<10x10xf32>
      %c4_79 = arith.constant 4 : index
      %c0_80 = arith.constant 0 : index
      %c0_81 = arith.constant 0 : index
      %109 = vector.load %arg8[%c4_79, %c0_80, %c0_81] : memref<9x10x10xf32, #tpu.memory_space<vmem>>, vector<1x10x10xf32>
      %110 = vector.shape_cast %109 : vector<1x10x10xf32> to vector<10x10xf32>
      %111 = vector.extract_strided_slice %103 {offsets = [0, 1], sizes = [10, 10], strides = [1, 1]} : vector<10x12xf32> to vector<10x10xf32>
      %cst_82 = arith.constant dense<0.000000e+00> : vector<10x10xf32>
      %112 = tpu.matmul %110, %111, %cst_82 {dimension_numbers = #tpu.dot_dimension_numbers<[1], [0], [0], [1], [0, 0, 1, 1], [], []>} : vector<10x10xf32>, vector<10x10xf32>, vector<10x10xf32> -> vector<10x10xf32>
      %113 = arith.addf %108, %112 : vector<10x10xf32>
      %c5_83 = arith.constant 5 : index
      %c0_84 = arith.constant 0 : index
      %c0_85 = arith.constant 0 : index
      %114 = vector.load %arg8[%c5_83, %c0_84, %c0_85] : memref<9x10x10xf32, #tpu.memory_space<vmem>>, vector<1x10x10xf32>
      %115 = vector.shape_cast %114 : vector<1x10x10xf32> to vector<10x10xf32>
      %116 = vector.extract_strided_slice %103 {offsets = [0, 2], sizes = [10, 10], strides = [1, 1]} : vector<10x12xf32> to vector<10x10xf32>
      %cst_86 = arith.constant dense<0.000000e+00> : vector<10x10xf32>
      %117 = tpu.matmul %115, %116, %cst_86 {dimension_numbers = #tpu.dot_dimension_numbers<[1], [0], [0], [1], [0, 0, 1, 1], [], []>} : vector<10x10xf32>, vector<10x10xf32>, vector<10x10xf32> -> vector<10x10xf32>
      %118 = arith.addf %113, %117 : vector<10x10xf32>
      %c2_i32_87 = arith.constant 2 : i32
      %119 = arith.addi %arg28, %c2_i32_87 : i32
      %120 = arith.index_cast %119 : i32 to index
      %c0_88 = arith.constant 0 : index
      %c0_89 = arith.constant 0 : index
      %121 = vector.load %arg23[%120, %c0_88, %c0_89] : memref<12x10x12xf32, #tpu.memory_space<vmem>>, vector<1x10x12xf32>
      %122 = vector.shape_cast %121 : vector<1x10x12xf32> to vector<10x12xf32>
      %c6 = arith.constant 6 : index
      %c0_90 = arith.constant 0 : index
      %c0_91 = arith.constant 0 : index
      %123 = vector.load %arg8[%c6, %c0_90, %c0_91] : memref<9x10x10xf32, #tpu.memory_space<vmem>>, vector<1x10x10xf32>
      %124 = vector.shape_cast %123 : vector<1x10x10xf32> to vector<10x10xf32>
      %125 = vector.extract_strided_slice %122 {offsets = [0, 0], sizes = [10, 10], strides = [1, 1]} : vector<10x12xf32> to vector<10x10xf32>
      %cst_92 = arith.constant dense<0.000000e+00> : vector<10x10xf32>
      %126 = tpu.matmul %124, %125, %cst_92 {dimension_numbers = #tpu.dot_dimension_numbers<[1], [0], [0], [1], [0, 0, 1, 1], [], []>} : vector<10x10xf32>, vector<10x10xf32>, vector<10x10xf32> -> vector<10x10xf32>
      %127 = arith.addf %118, %126 : vector<10x10xf32>
      %c7 = arith.constant 7 : index
      %c0_93 = arith.constant 0 : index
      %c0_94 = arith.constant 0 : index
      %128 = vector.load %arg8[%c7, %c0_93, %c0_94] : memref<9x10x10xf32, #tpu.memory_space<vmem>>, vector<1x10x10xf32>
      %129 = vector.shape_cast %128 : vector<1x10x10xf32> to vector<10x10xf32>
      %130 = vector.extract_strided_slice %122 {offsets = [0, 1], sizes = [10, 10], strides = [1, 1]} : vector<10x12xf32> to vector<10x10xf32>
      %cst_95 = arith.constant dense<0.000000e+00> : vector<10x10xf32>
      %131 = tpu.matmul %129, %130, %cst_95 {dimension_numbers = #tpu.dot_dimension_numbers<[1], [0], [0], [1], [0, 0, 1, 1], [], []>} : vector<10x10xf32>, vector<10x10xf32>, vector<10x10xf32> -> vector<10x10xf32>
      %132 = arith.addf %127, %131 : vector<10x10xf32>
      %c8 = arith.constant 8 : index
      %c0_96 = arith.constant 0 : index
      %c0_97 = arith.constant 0 : index
      %133 = vector.load %arg8[%c8, %c0_96, %c0_97] : memref<9x10x10xf32, #tpu.memory_space<vmem>>, vector<1x10x10xf32>
      %134 = vector.shape_cast %133 : vector<1x10x10xf32> to vector<10x10xf32>
      %135 = vector.extract_strided_slice %122 {offsets = [0, 2], sizes = [10, 10], strides = [1, 1]} : vector<10x12xf32> to vector<10x10xf32>
      %cst_98 = arith.constant dense<0.000000e+00> : vector<10x10xf32>
      %136 = tpu.matmul %134, %135, %cst_98 {dimension_numbers = #tpu.dot_dimension_numbers<[1], [0], [0], [1], [0, 0, 1, 1], [], []>} : vector<10x10xf32>, vector<10x10xf32>, vector<10x10xf32> -> vector<10x10xf32>
      %137 = arith.addf %132, %136 : vector<10x10xf32>
      %c0_99 = arith.constant 0 : index
      %c0_100 = arith.constant 0 : index
      %138 = vector.load %arg9[%c0_99, %c0_100] : memref<10x1xf32, #tpu.memory_space<vmem>>, vector<10x1xf32>
      %139 = vector.broadcast %138 : vector<10x1xf32> to vector<10x10xf32>
      %140 = arith.addf %137, %139 : vector<10x10xf32>
      %cst_101 = arith.constant 0.000000e+00 : f32
      %141 = vector.broadcast %cst_101 : f32 to vector<10x10xf32>
      %142 = arith.maximumf %140, %141 : vector<10x10xf32>
      %c0_i32_102 = arith.constant 0 : i32
      %143 = arith.addi %arg28, %c0_i32_102 : i32
      %144 = arith.index_cast %143 : i32 to index
      %c0_103 = arith.constant 0 : index
      %c0_104 = arith.constant 0 : index
      %145 = vector.load %arg24[%144, %c0_103, %c0_104] : memref<10x10x10xf32, #tpu.memory_space<vmem>>, vector<1x10x10xf32>
      %146 = vector.shape_cast %145 : vector<1x10x10xf32> to vector<10x10xf32>
      %147 = vector.shape_cast %142 : vector<10x10xf32> to vector<1x10x10xf32>
      tpu.vector_store %arg24[%144, %c0_103, %c0_104], %147 {strides = array<i32>} : memref<10x10x10xf32, #tpu.memory_space<vmem>>, vector<1x10x10xf32>,
    }
    %c10_i32_11 = arith.constant 10 : i32
    %c0_i32_12 = arith.constant 0 : i32
    %c8_i32 = arith.constant 8 : i32
    %18 = arith.addi %c0_i32_12, %c8_i32 : i32
    %c1_i32_13 = arith.constant 1 : i32
    scf.for %arg28 = %c0_i32_12 to %18 step %c1_i32_13  : i32 {
      %cst_56 = arith.constant 0.000000e+00 : f32
      %80 = vector.broadcast %cst_56 : f32 to vector<16x8xf32>
      %c0_i32_57 = arith.constant 0 : i32
      %81 = arith.addi %arg28, %c0_i32_57 : i32
      %82 = arith.index_cast %81 : i32 to index
      %c0_58 = arith.constant 0 : index
      %c0_59 = arith.constant 0 : index
      %83 = vector.load %arg24[%82, %c0_58, %c0_59] : memref<10x10x10xf32, #tpu.memory_space<vmem>>, vector<1x10x10xf32>
      %84 = vector.shape_cast %83 : vector<1x10x10xf32> to vector<10x10xf32>
      %c0_60 = arith.constant 0 : index
      %c0_61 = arith.constant 0 : index
      %c0_62 = arith.constant 0 : index
      %85 = vector.load %arg10[%c0_60, %c0_61, %c0_62] : memref<9x16x10xf32, #tpu.memory_space<vmem>>, vector<1x16x10xf32>
      %86 = vector.shape_cast %85 : vector<1x16x10xf32> to vector<16x10xf32>
      %87 = vector.extract_strided_slice %84 {offsets = [0, 0], sizes = [10, 8], strides = [1, 1]} : vector<10x10xf32> to vector<10x8xf32>
      %cst_63 = arith.constant dense<0.000000e+00> : vector<16x8xf32>
      %88 = tpu.matmul %86, %87, %cst_63 {dimension_numbers = #tpu.dot_dimension_numbers<[1], [0], [0], [1], [0, 0, 1, 1], [], []>} : vector<16x10xf32>, vector<10x8xf32>, vector<16x8xf32> -> vector<16x8xf32>
      %89 = arith.addf %80, %88 : vector<16x8xf32>
      %c1_64 = arith.constant 1 : index
      %c0_65 = arith.constant 0 : index
      %c0_66 = arith.constant 0 : index
      %90 = vector.load %arg10[%c1_64, %c0_65, %c0_66] : memref<9x16x10xf32, #tpu.memory_space<vmem>>, vector<1x16x10xf32>
      %91 = vector.shape_cast %90 : vector<1x16x10xf32> to vector<16x10xf32>
      %92 = vector.extract_strided_slice %84 {offsets = [0, 1], sizes = [10, 8], strides = [1, 1]} : vector<10x10xf32> to vector<10x8xf32>
      %cst_67 = arith.constant dense<0.000000e+00> : vector<16x8xf32>
      %93 = tpu.matmul %91, %92, %cst_67 {dimension_numbers = #tpu.dot_dimension_numbers<[1], [0], [0], [1], [0, 0, 1, 1], [], []>} : vector<16x10xf32>, vector<10x8xf32>, vector<16x8xf32> -> vector<16x8xf32>
      %94 = arith.addf %89, %93 : vector<16x8xf32>
      %c2_68 = arith.constant 2 : index
      %c0_69 = arith.constant 0 : index
      %c0_70 = arith.constant 0 : index
      %95 = vector.load %arg10[%c2_68, %c0_69, %c0_70] : memref<9x16x10xf32, #tpu.memory_space<vmem>>, vector<1x16x10xf32>
      %96 = vector.shape_cast %95 : vector<1x16x10xf32> to vector<16x10xf32>
      %97 = vector.extract_strided_slice %84 {offsets = [0, 2], sizes = [10, 8], strides = [1, 1]} : vector<10x10xf32> to vector<10x8xf32>
      %cst_71 = arith.constant dense<0.000000e+00> : vector<16x8xf32>
      %98 = tpu.matmul %96, %97, %cst_71 {dimension_numbers = #tpu.dot_dimension_numbers<[1], [0], [0], [1], [0, 0, 1, 1], [], []>} : vector<16x10xf32>, vector<10x8xf32>, vector<16x8xf32> -> vector<16x8xf32>
      %99 = arith.addf %94, %98 : vector<16x8xf32>
      %c1_i32_72 = arith.constant 1 : i32
      %100 = arith.addi %arg28, %c1_i32_72 : i32
      %101 = arith.index_cast %100 : i32 to index
      %c0_73 = arith.constant 0 : index
      %c0_74 = arith.constant 0 : index
      %102 = vector.load %arg24[%101, %c0_73, %c0_74] : memref<10x10x10xf32, #tpu.memory_space<vmem>>, vector<1x10x10xf32>
      %103 = vector.shape_cast %102 : vector<1x10x10xf32> to vector<10x10xf32>
      %c3_75 = arith.constant 3 : index
      %c0_76 = arith.constant 0 : index
      %c0_77 = arith.constant 0 : index
      %104 = vector.load %arg10[%c3_75, %c0_76, %c0_77] : memref<9x16x10xf32, #tpu.memory_space<vmem>>, vector<1x16x10xf32>
      %105 = vector.shape_cast %104 : vector<1x16x10xf32> to vector<16x10xf32>
      %106 = vector.extract_strided_slice %103 {offsets = [0, 0], sizes = [10, 8], strides = [1, 1]} : vector<10x10xf32> to vector<10x8xf32>
      %cst_78 = arith.constant dense<0.000000e+00> : vector<16x8xf32>
      %107 = tpu.matmul %105, %106, %cst_78 {dimension_numbers = #tpu.dot_dimension_numbers<[1], [0], [0], [1], [0, 0, 1, 1], [], []>} : vector<16x10xf32>, vector<10x8xf32>, vector<16x8xf32> -> vector<16x8xf32>
      %108 = arith.addf %99, %107 : vector<16x8xf32>
      %c4_79 = arith.constant 4 : index
      %c0_80 = arith.constant 0 : index
      %c0_81 = arith.constant 0 : index
      %109 = vector.load %arg10[%c4_79, %c0_80, %c0_81] : memref<9x16x10xf32, #tpu.memory_space<vmem>>, vector<1x16x10xf32>
      %110 = vector.shape_cast %109 : vector<1x16x10xf32> to vector<16x10xf32>
      %111 = vector.extract_strided_slice %103 {offsets = [0, 1], sizes = [10, 8], strides = [1, 1]} : vector<10x10xf32> to vector<10x8xf32>
      %cst_82 = arith.constant dense<0.000000e+00> : vector<16x8xf32>
      %112 = tpu.matmul %110, %111, %cst_82 {dimension_numbers = #tpu.dot_dimension_numbers<[1], [0], [0], [1], [0, 0, 1, 1], [], []>} : vector<16x10xf32>, vector<10x8xf32>, vector<16x8xf32> -> vector<16x8xf32>
      %113 = arith.addf %108, %112 : vector<16x8xf32>
      %c5_83 = arith.constant 5 : index
      %c0_84 = arith.constant 0 : index
      %c0_85 = arith.constant 0 : index
      %114 = vector.load %arg10[%c5_83, %c0_84, %c0_85] : memref<9x16x10xf32, #tpu.memory_space<vmem>>, vector<1x16x10xf32>
      %115 = vector.shape_cast %114 : vector<1x16x10xf32> to vector<16x10xf32>
      %116 = vector.extract_strided_slice %103 {offsets = [0, 2], sizes = [10, 8], strides = [1, 1]} : vector<10x10xf32> to vector<10x8xf32>
      %cst_86 = arith.constant dense<0.000000e+00> : vector<16x8xf32>
      %117 = tpu.matmul %115, %116, %cst_86 {dimension_numbers = #tpu.dot_dimension_numbers<[1], [0], [0], [1], [0, 0, 1, 1], [], []>} : vector<16x10xf32>, vector<10x8xf32>, vector<16x8xf32> -> vector<16x8xf32>
      %118 = arith.addf %113, %117 : vector<16x8xf32>
      %c2_i32_87 = arith.constant 2 : i32
      %119 = arith.addi %arg28, %c2_i32_87 : i32
      %120 = arith.index_cast %119 : i32 to index
      %c0_88 = arith.constant 0 : index
      %c0_89 = arith.constant 0 : index
      %121 = vector.load %arg24[%120, %c0_88, %c0_89] : memref<10x10x10xf32, #tpu.memory_space<vmem>>, vector<1x10x10xf32>
      %122 = vector.shape_cast %121 : vector<1x10x10xf32> to vector<10x10xf32>
      %c6 = arith.constant 6 : index
      %c0_90 = arith.constant 0 : index
      %c0_91 = arith.constant 0 : index
      %123 = vector.load %arg10[%c6, %c0_90, %c0_91] : memref<9x16x10xf32, #tpu.memory_space<vmem>>, vector<1x16x10xf32>
      %124 = vector.shape_cast %123 : vector<1x16x10xf32> to vector<16x10xf32>
      %125 = vector.extract_strided_slice %122 {offsets = [0, 0], sizes = [10, 8], strides = [1, 1]} : vector<10x10xf32> to vector<10x8xf32>
      %cst_92 = arith.constant dense<0.000000e+00> : vector<16x8xf32>
      %126 = tpu.matmul %124, %125, %cst_92 {dimension_numbers = #tpu.dot_dimension_numbers<[1], [0], [0], [1], [0, 0, 1, 1], [], []>} : vector<16x10xf32>, vector<10x8xf32>, vector<16x8xf32> -> vector<16x8xf32>
      %127 = arith.addf %118, %126 : vector<16x8xf32>
      %c7 = arith.constant 7 : index
      %c0_93 = arith.constant 0 : index
      %c0_94 = arith.constant 0 : index
      %128 = vector.load %arg10[%c7, %c0_93, %c0_94] : memref<9x16x10xf32, #tpu.memory_space<vmem>>, vector<1x16x10xf32>
      %129 = vector.shape_cast %128 : vector<1x16x10xf32> to vector<16x10xf32>
      %130 = vector.extract_strided_slice %122 {offsets = [0, 1], sizes = [10, 8], strides = [1, 1]} : vector<10x10xf32> to vector<10x8xf32>
      %cst_95 = arith.constant dense<0.000000e+00> : vector<16x8xf32>
      %131 = tpu.matmul %129, %130, %cst_95 {dimension_numbers = #tpu.dot_dimension_numbers<[1], [0], [0], [1], [0, 0, 1, 1], [], []>} : vector<16x10xf32>, vector<10x8xf32>, vector<16x8xf32> -> vector<16x8xf32>
      %132 = arith.addf %127, %131 : vector<16x8xf32>
      %c8 = arith.constant 8 : index
      %c0_96 = arith.constant 0 : index
      %c0_97 = arith.constant 0 : index
      %133 = vector.load %arg10[%c8, %c0_96, %c0_97] : memref<9x16x10xf32, #tpu.memory_space<vmem>>, vector<1x16x10xf32>
      %134 = vector.shape_cast %133 : vector<1x16x10xf32> to vector<16x10xf32>
      %135 = vector.extract_strided_slice %122 {offsets = [0, 2], sizes = [10, 8], strides = [1, 1]} : vector<10x10xf32> to vector<10x8xf32>
      %cst_98 = arith.constant dense<0.000000e+00> : vector<16x8xf32>
      %136 = tpu.matmul %134, %135, %cst_98 {dimension_numbers = #tpu.dot_dimension_numbers<[1], [0], [0], [1], [0, 0, 1, 1], [], []>} : vector<16x10xf32>, vector<10x8xf32>, vector<16x8xf32> -> vector<16x8xf32>
      %137 = arith.addf %132, %136 : vector<16x8xf32>
      %c0_99 = arith.constant 0 : index
      %c0_100 = arith.constant 0 : index
      %138 = vector.load %arg11[%c0_99, %c0_100] : memref<16x1xf32, #tpu.memory_space<vmem>>, vector<16x1xf32>
      %139 = vector.broadcast %138 : vector<16x1xf32> to vector<16x8xf32>
      %140 = arith.addf %137, %139 : vector<16x8xf32>
      %cst_101 = arith.constant 0.000000e+00 : f32
      %141 = vector.broadcast %cst_101 : f32 to vector<16x8xf32>
      %142 = arith.maximumf %140, %141 : vector<16x8xf32>
      %c0_102 = arith.constant 0 : index
      %c0_103 = arith.constant 0 : index
      %143 = vector.load %arg12[%c0_102, %c0_103] : memref<16x1xf32, #tpu.memory_space<vmem>>, vector<16x1xf32>
      %144 = vector.broadcast %143 : vector<16x1xf32> to vector<16x8xf32>
      %145 = arith.mulf %142, %144 : vector<16x8xf32>
      %c0_104 = arith.constant 0 : index
      %c0_105 = arith.constant 0 : index
      %146 = vector.load %arg13[%c0_104, %c0_105] : memref<16x1xf32, #tpu.memory_space<vmem>>, vector<16x1xf32>
      %147 = vector.broadcast %146 : vector<16x1xf32> to vector<16x8xf32>
      %148 = arith.addf %145, %147 : vector<16x8xf32>
      %c0_i32_106 = arith.constant 0 : i32
      %149 = arith.addi %arg28, %c0_i32_106 : i32
      %150 = arith.index_cast %149 : i32 to index
      %c0_107 = arith.constant 0 : index
      %c0_108 = arith.constant 0 : index
      %151 = vector.load %arg25[%150, %c0_107, %c0_108] : memref<8x16x8xf32, #tpu.memory_space<vmem>>, vector<1x16x8xf32>
      %152 = vector.shape_cast %151 : vector<1x16x8xf32> to vector<16x8xf32>
      %153 = vector.shape_cast %148 : vector<16x8xf32> to vector<1x16x8xf32>
      tpu.vector_store %arg25[%150, %c0_107, %c0_108], %153 {strides = array<i32>} : memref<8x16x8xf32, #tpu.memory_space<vmem>>, vector<1x16x8xf32>,
    }
    %c8_i32_14 = arith.constant 8 : i32
    %19 = tpu.iota {dimensions = array<i32: 0>} : vector<6x8xi32>
    %20 = tpu.iota {dimensions = array<i32: 1>} : vector<6x8xi32>
    %c1_i32_15 = arith.constant 1 : i32
    %21 = vector.broadcast %c1_i32_15 : i32 to vector<6x8xi32>
    %22 = arith.addi %19, %21 : vector<6x8xi32>
    %23 = arith.cmpi eq, %22, %20 : vector<6x8xi32>
    %24 = arith.extui %23 : vector<6x8xi1> to vector<6x8xi32>
    %25 = arith.sitofp %24 : vector<6x8xi32> to vector<6x8xf32>
    %cst = arith.constant 0.000000e+00 : f32
    %26 = vector.broadcast %cst : f32 to vector<8x16x8xf32>
    %c0 = arith.constant 0 : index
    %c0_16 = arith.constant 0 : index
    %c0_17 = arith.constant 0 : index
    %27 = vector.load %arg26[%c0, %c0_16, %c0_17] : memref<8x16x8xf32, #tpu.memory_space<vmem>>, vector<8x16x8xf32>
    tpu.vector_store %arg26[%c0, %c0_16, %c0_17], %26 {strides = array<i32>} : memref<8x16x8xf32, #tpu.memory_space<vmem>>, vector<8x16x8xf32>,
    %c0_i32_18 = arith.constant 0 : i32
    %c6_i32 = arith.constant 6 : i32
    %28 = arith.addi %c0_i32_18, %c6_i32 : i32
    %c1_i32_19 = arith.constant 1 : i32
    scf.for %arg28 = %c0_i32_18 to %28 step %c1_i32_19  : i32 {
      %cst_56 = arith.constant 0.000000e+00 : f32
      %80 = vector.broadcast %cst_56 : f32 to vector<16x6xf32>
      %c0_i32_57 = arith.constant 0 : i32
      %81 = arith.addi %arg28, %c0_i32_57 : i32
      %82 = arith.index_cast %81 : i32 to index
      %c0_58 = arith.constant 0 : index
      %c0_59 = arith.constant 0 : index
      %83 = vector.load %arg25[%82, %c0_58, %c0_59] : memref<8x16x8xf32, #tpu.memory_space<vmem>>, vector<1x16x8xf32>
      %84 = vector.shape_cast %83 : vector<1x16x8xf32> to vector<16x8xf32>
      %c0_60 = arith.constant 0 : index
      %c0_61 = arith.constant 0 : index
      %c0_62 = arith.constant 0 : index
      %85 = vector.load %arg14[%c0_60, %c0_61, %c0_62] : memref<9x16x16xf32, #tpu.memory_space<vmem>>, vector<1x16x16xf32>
      %86 = vector.shape_cast %85 : vector<1x16x16xf32> to vector<16x16xf32>
      %87 = vector.extract_strided_slice %84 {offsets = [0, 0], sizes = [16, 6], strides = [1, 1]} : vector<16x8xf32> to vector<16x6xf32>
      %cst_63 = arith.constant dense<0.000000e+00> : vector<16x6xf32>
      %88 = tpu.matmul %86, %87, %cst_63 {dimension_numbers = #tpu.dot_dimension_numbers<[1], [0], [0], [1], [0, 0, 1, 1], [], []>} : vector<16x16xf32>, vector<16x6xf32>, vector<16x6xf32> -> vector<16x6xf32>
      %89 = arith.addf %80, %88 : vector<16x6xf32>
      %c1_64 = arith.constant 1 : index
      %c0_65 = arith.constant 0 : index
      %c0_66 = arith.constant 0 : index
      %90 = vector.load %arg14[%c1_64, %c0_65, %c0_66] : memref<9x16x16xf32, #tpu.memory_space<vmem>>, vector<1x16x16xf32>
      %91 = vector.shape_cast %90 : vector<1x16x16xf32> to vector<16x16xf32>
      %92 = vector.extract_strided_slice %84 {offsets = [0, 1], sizes = [16, 6], strides = [1, 1]} : vector<16x8xf32> to vector<16x6xf32>
      %cst_67 = arith.constant dense<0.000000e+00> : vector<16x6xf32>
      %93 = tpu.matmul %91, %92, %cst_67 {dimension_numbers = #tpu.dot_dimension_numbers<[1], [0], [0], [1], [0, 0, 1, 1], [], []>} : vector<16x16xf32>, vector<16x6xf32>, vector<16x6xf32> -> vector<16x6xf32>
      %94 = arith.addf %89, %93 : vector<16x6xf32>
      %c2_68 = arith.constant 2 : index
      %c0_69 = arith.constant 0 : index
      %c0_70 = arith.constant 0 : index
      %95 = vector.load %arg14[%c2_68, %c0_69, %c0_70] : memref<9x16x16xf32, #tpu.memory_space<vmem>>, vector<1x16x16xf32>
      %96 = vector.shape_cast %95 : vector<1x16x16xf32> to vector<16x16xf32>
      %97 = vector.extract_strided_slice %84 {offsets = [0, 2], sizes = [16, 6], strides = [1, 1]} : vector<16x8xf32> to vector<16x6xf32>
      %cst_71 = arith.constant dense<0.000000e+00> : vector<16x6xf32>
      %98 = tpu.matmul %96, %97, %cst_71 {dimension_numbers = #tpu.dot_dimension_numbers<[1], [0], [0], [1], [0, 0, 1, 1], [], []>} : vector<16x16xf32>, vector<16x6xf32>, vector<16x6xf32> -> vector<16x6xf32>
      %99 = arith.addf %94, %98 : vector<16x6xf32>
      %c1_i32_72 = arith.constant 1 : i32
      %100 = arith.addi %arg28, %c1_i32_72 : i32
      %101 = arith.index_cast %100 : i32 to index
      %c0_73 = arith.constant 0 : index
      %c0_74 = arith.constant 0 : index
      %102 = vector.load %arg25[%101, %c0_73, %c0_74] : memref<8x16x8xf32, #tpu.memory_space<vmem>>, vector<1x16x8xf32>
      %103 = vector.shape_cast %102 : vector<1x16x8xf32> to vector<16x8xf32>
      %c3_75 = arith.constant 3 : index
      %c0_76 = arith.constant 0 : index
      %c0_77 = arith.constant 0 : index
      %104 = vector.load %arg14[%c3_75, %c0_76, %c0_77] : memref<9x16x16xf32, #tpu.memory_space<vmem>>, vector<1x16x16xf32>
      %105 = vector.shape_cast %104 : vector<1x16x16xf32> to vector<16x16xf32>
      %106 = vector.extract_strided_slice %103 {offsets = [0, 0], sizes = [16, 6], strides = [1, 1]} : vector<16x8xf32> to vector<16x6xf32>
      %cst_78 = arith.constant dense<0.000000e+00> : vector<16x6xf32>
      %107 = tpu.matmul %105, %106, %cst_78 {dimension_numbers = #tpu.dot_dimension_numbers<[1], [0], [0], [1], [0, 0, 1, 1], [], []>} : vector<16x16xf32>, vector<16x6xf32>, vector<16x6xf32> -> vector<16x6xf32>
      %108 = arith.addf %99, %107 : vector<16x6xf32>
      %c4_79 = arith.constant 4 : index
      %c0_80 = arith.constant 0 : index
      %c0_81 = arith.constant 0 : index
      %109 = vector.load %arg14[%c4_79, %c0_80, %c0_81] : memref<9x16x16xf32, #tpu.memory_space<vmem>>, vector<1x16x16xf32>
      %110 = vector.shape_cast %109 : vector<1x16x16xf32> to vector<16x16xf32>
      %111 = vector.extract_strided_slice %103 {offsets = [0, 1], sizes = [16, 6], strides = [1, 1]} : vector<16x8xf32> to vector<16x6xf32>
      %cst_82 = arith.constant dense<0.000000e+00> : vector<16x6xf32>
      %112 = tpu.matmul %110, %111, %cst_82 {dimension_numbers = #tpu.dot_dimension_numbers<[1], [0], [0], [1], [0, 0, 1, 1], [], []>} : vector<16x16xf32>, vector<16x6xf32>, vector<16x6xf32> -> vector<16x6xf32>
      %113 = arith.addf %108, %112 : vector<16x6xf32>
      %c5_83 = arith.constant 5 : index
      %c0_84 = arith.constant 0 : index
      %c0_85 = arith.constant 0 : index
      %114 = vector.load %arg14[%c5_83, %c0_84, %c0_85] : memref<9x16x16xf32, #tpu.memory_space<vmem>>, vector<1x16x16xf32>
      %115 = vector.shape_cast %114 : vector<1x16x16xf32> to vector<16x16xf32>
      %116 = vector.extract_strided_slice %103 {offsets = [0, 2], sizes = [16, 6], strides = [1, 1]} : vector<16x8xf32> to vector<16x6xf32>
      %cst_86 = arith.constant dense<0.000000e+00> : vector<16x6xf32>
      %117 = tpu.matmul %115, %116, %cst_86 {dimension_numbers = #tpu.dot_dimension_numbers<[1], [0], [0], [1], [0, 0, 1, 1], [], []>} : vector<16x16xf32>, vector<16x6xf32>, vector<16x6xf32> -> vector<16x6xf32>
      %118 = arith.addf %113, %117 : vector<16x6xf32>
      %c2_i32_87 = arith.constant 2 : i32
      %119 = arith.addi %arg28, %c2_i32_87 : i32
      %120 = arith.index_cast %119 : i32 to index
      %c0_88 = arith.constant 0 : index
      %c0_89 = arith.constant 0 : index
      %121 = vector.load %arg25[%120, %c0_88, %c0_89] : memref<8x16x8xf32, #tpu.memory_space<vmem>>, vector<1x16x8xf32>
      %122 = vector.shape_cast %121 : vector<1x16x8xf32> to vector<16x8xf32>
      %c6 = arith.constant 6 : index
      %c0_90 = arith.constant 0 : index
      %c0_91 = arith.constant 0 : index
      %123 = vector.load %arg14[%c6, %c0_90, %c0_91] : memref<9x16x16xf32, #tpu.memory_space<vmem>>, vector<1x16x16xf32>
      %124 = vector.shape_cast %123 : vector<1x16x16xf32> to vector<16x16xf32>
      %125 = vector.extract_strided_slice %122 {offsets = [0, 0], sizes = [16, 6], strides = [1, 1]} : vector<16x8xf32> to vector<16x6xf32>
      %cst_92 = arith.constant dense<0.000000e+00> : vector<16x6xf32>
      %126 = tpu.matmul %124, %125, %cst_92 {dimension_numbers = #tpu.dot_dimension_numbers<[1], [0], [0], [1], [0, 0, 1, 1], [], []>} : vector<16x16xf32>, vector<16x6xf32>, vector<16x6xf32> -> vector<16x6xf32>
      %127 = arith.addf %118, %126 : vector<16x6xf32>
      %c7 = arith.constant 7 : index
      %c0_93 = arith.constant 0 : index
      %c0_94 = arith.constant 0 : index
      %128 = vector.load %arg14[%c7, %c0_93, %c0_94] : memref<9x16x16xf32, #tpu.memory_space<vmem>>, vector<1x16x16xf32>
      %129 = vector.shape_cast %128 : vector<1x16x16xf32> to vector<16x16xf32>
      %130 = vector.extract_strided_slice %122 {offsets = [0, 1], sizes = [16, 6], strides = [1, 1]} : vector<16x8xf32> to vector<16x6xf32>
      %cst_95 = arith.constant dense<0.000000e+00> : vector<16x6xf32>
      %131 = tpu.matmul %129, %130, %cst_95 {dimension_numbers = #tpu.dot_dimension_numbers<[1], [0], [0], [1], [0, 0, 1, 1], [], []>} : vector<16x16xf32>, vector<16x6xf32>, vector<16x6xf32> -> vector<16x6xf32>
      %132 = arith.addf %127, %131 : vector<16x6xf32>
      %c8 = arith.constant 8 : index
      %c0_96 = arith.constant 0 : index
      %c0_97 = arith.constant 0 : index
      %133 = vector.load %arg14[%c8, %c0_96, %c0_97] : memref<9x16x16xf32, #tpu.memory_space<vmem>>, vector<1x16x16xf32>
      %134 = vector.shape_cast %133 : vector<1x16x16xf32> to vector<16x16xf32>
      %135 = vector.extract_strided_slice %122 {offsets = [0, 2], sizes = [16, 6], strides = [1, 1]} : vector<16x8xf32> to vector<16x6xf32>
      %cst_98 = arith.constant dense<0.000000e+00> : vector<16x6xf32>
      %136 = tpu.matmul %134, %135, %cst_98 {dimension_numbers = #tpu.dot_dimension_numbers<[1], [0], [0], [1], [0, 0, 1, 1], [], []>} : vector<16x16xf32>, vector<16x6xf32>, vector<16x6xf32> -> vector<16x6xf32>
      %137 = arith.addf %132, %136 : vector<16x6xf32>
      %c0_99 = arith.constant 0 : index
      %c0_100 = arith.constant 0 : index
      %138 = vector.load %arg15[%c0_99, %c0_100] : memref<16x1xf32, #tpu.memory_space<vmem>>, vector<16x1xf32>
      %139 = vector.broadcast %138 : vector<16x1xf32> to vector<16x6xf32>
      %140 = arith.addf %137, %139 : vector<16x6xf32>
      %cst_101 = arith.constant 0.000000e+00 : f32
      %141 = vector.broadcast %cst_101 : f32 to vector<16x6xf32>
      %142 = arith.maximumf %140, %141 : vector<16x6xf32>
      %cst_102 = arith.constant dense<0.000000e+00> : vector<16x8xf32>
      %143 = tpu.matmul %142, %25, %cst_102 {dimension_numbers = #tpu.dot_dimension_numbers<[1], [0], [0], [1], [0, 0, 1, 1], [], []>} : vector<16x6xf32>, vector<6x8xf32>, vector<16x8xf32> -> vector<16x8xf32>
      %c1_i32_103 = arith.constant 1 : i32
      %144 = arith.addi %arg28, %c1_i32_103 : i32
      %145 = arith.index_cast %144 : i32 to index
      %c0_104 = arith.constant 0 : index
      %c0_105 = arith.constant 0 : index
      %146 = vector.load %arg26[%145, %c0_104, %c0_105] : memref<8x16x8xf32, #tpu.memory_space<vmem>>, vector<1x16x8xf32>
      %147 = vector.shape_cast %146 : vector<1x16x8xf32> to vector<16x8xf32>
      %148 = vector.shape_cast %143 : vector<16x8xf32> to vector<1x16x8xf32>
      tpu.vector_store %arg26[%145, %c0_104, %c0_105], %148 {strides = array<i32>} : memref<8x16x8xf32, #tpu.memory_space<vmem>>, vector<1x16x8xf32>,
    }
    %c6_i32_20 = arith.constant 6 : i32
    %c0_i32_21 = arith.constant 0 : i32
    %c6_i32_22 = arith.constant 6 : i32
    %29 = arith.addi %c0_i32_21, %c6_i32_22 : i32
    %c1_i32_23 = arith.constant 1 : i32
    scf.for %arg28 = %c0_i32_21 to %29 step %c1_i32_23  : i32 {
      %cst_56 = arith.constant 0.000000e+00 : f32
      %80 = vector.broadcast %cst_56 : f32 to vector<16x6xf32>
      %c0_i32_57 = arith.constant 0 : i32
      %81 = arith.addi %arg28, %c0_i32_57 : i32
      %82 = arith.index_cast %81 : i32 to index
      %c0_58 = arith.constant 0 : index
      %c0_59 = arith.constant 0 : index
      %83 = vector.load %arg26[%82, %c0_58, %c0_59] : memref<8x16x8xf32, #tpu.memory_space<vmem>>, vector<1x16x8xf32>
      %84 = vector.shape_cast %83 : vector<1x16x8xf32> to vector<16x8xf32>
      %c0_60 = arith.constant 0 : index
      %c0_61 = arith.constant 0 : index
      %c0_62 = arith.constant 0 : index
      %85 = vector.load %arg16[%c0_60, %c0_61, %c0_62] : memref<9x16x16xf32, #tpu.memory_space<vmem>>, vector<1x16x16xf32>
      %86 = vector.shape_cast %85 : vector<1x16x16xf32> to vector<16x16xf32>
      %87 = vector.extract_strided_slice %84 {offsets = [0, 0], sizes = [16, 6], strides = [1, 1]} : vector<16x8xf32> to vector<16x6xf32>
      %cst_63 = arith.constant dense<0.000000e+00> : vector<16x6xf32>
      %88 = tpu.matmul %86, %87, %cst_63 {dimension_numbers = #tpu.dot_dimension_numbers<[1], [0], [0], [1], [0, 0, 1, 1], [], []>} : vector<16x16xf32>, vector<16x6xf32>, vector<16x6xf32> -> vector<16x6xf32>
      %89 = arith.addf %80, %88 : vector<16x6xf32>
      %c1_64 = arith.constant 1 : index
      %c0_65 = arith.constant 0 : index
      %c0_66 = arith.constant 0 : index
      %90 = vector.load %arg16[%c1_64, %c0_65, %c0_66] : memref<9x16x16xf32, #tpu.memory_space<vmem>>, vector<1x16x16xf32>
      %91 = vector.shape_cast %90 : vector<1x16x16xf32> to vector<16x16xf32>
      %92 = vector.extract_strided_slice %84 {offsets = [0, 1], sizes = [16, 6], strides = [1, 1]} : vector<16x8xf32> to vector<16x6xf32>
      %cst_67 = arith.constant dense<0.000000e+00> : vector<16x6xf32>
      %93 = tpu.matmul %91, %92, %cst_67 {dimension_numbers = #tpu.dot_dimension_numbers<[1], [0], [0], [1], [0, 0, 1, 1], [], []>} : vector<16x16xf32>, vector<16x6xf32>, vector<16x6xf32> -> vector<16x6xf32>
      %94 = arith.addf %89, %93 : vector<16x6xf32>
      %c2_68 = arith.constant 2 : index
      %c0_69 = arith.constant 0 : index
      %c0_70 = arith.constant 0 : index
      %95 = vector.load %arg16[%c2_68, %c0_69, %c0_70] : memref<9x16x16xf32, #tpu.memory_space<vmem>>, vector<1x16x16xf32>
      %96 = vector.shape_cast %95 : vector<1x16x16xf32> to vector<16x16xf32>
      %97 = vector.extract_strided_slice %84 {offsets = [0, 2], sizes = [16, 6], strides = [1, 1]} : vector<16x8xf32> to vector<16x6xf32>
      %cst_71 = arith.constant dense<0.000000e+00> : vector<16x6xf32>
      %98 = tpu.matmul %96, %97, %cst_71 {dimension_numbers = #tpu.dot_dimension_numbers<[1], [0], [0], [1], [0, 0, 1, 1], [], []>} : vector<16x16xf32>, vector<16x6xf32>, vector<16x6xf32> -> vector<16x6xf32>
      %99 = arith.addf %94, %98 : vector<16x6xf32>
      %c1_i32_72 = arith.constant 1 : i32
      %100 = arith.addi %arg28, %c1_i32_72 : i32
      %101 = arith.index_cast %100 : i32 to index
      %c0_73 = arith.constant 0 : index
      %c0_74 = arith.constant 0 : index
      %102 = vector.load %arg26[%101, %c0_73, %c0_74] : memref<8x16x8xf32, #tpu.memory_space<vmem>>, vector<1x16x8xf32>
      %103 = vector.shape_cast %102 : vector<1x16x8xf32> to vector<16x8xf32>
      %c3_75 = arith.constant 3 : index
      %c0_76 = arith.constant 0 : index
      %c0_77 = arith.constant 0 : index
      %104 = vector.load %arg16[%c3_75, %c0_76, %c0_77] : memref<9x16x16xf32, #tpu.memory_space<vmem>>, vector<1x16x16xf32>
      %105 = vector.shape_cast %104 : vector<1x16x16xf32> to vector<16x16xf32>
      %106 = vector.extract_strided_slice %103 {offsets = [0, 0], sizes = [16, 6], strides = [1, 1]} : vector<16x8xf32> to vector<16x6xf32>
      %cst_78 = arith.constant dense<0.000000e+00> : vector<16x6xf32>
      %107 = tpu.matmul %105, %106, %cst_78 {dimension_numbers = #tpu.dot_dimension_numbers<[1], [0], [0], [1], [0, 0, 1, 1], [], []>} : vector<16x16xf32>, vector<16x6xf32>, vector<16x6xf32> -> vector<16x6xf32>
      %108 = arith.addf %99, %107 : vector<16x6xf32>
      %c4_79 = arith.constant 4 : index
      %c0_80 = arith.constant 0 : index
      %c0_81 = arith.constant 0 : index
      %109 = vector.load %arg16[%c4_79, %c0_80, %c0_81] : memref<9x16x16xf32, #tpu.memory_space<vmem>>, vector<1x16x16xf32>
      %110 = vector.shape_cast %109 : vector<1x16x16xf32> to vector<16x16xf32>
      %111 = vector.extract_strided_slice %103 {offsets = [0, 1], sizes = [16, 6], strides = [1, 1]} : vector<16x8xf32> to vector<16x6xf32>
      %cst_82 = arith.constant dense<0.000000e+00> : vector<16x6xf32>
      %112 = tpu.matmul %110, %111, %cst_82 {dimension_numbers = #tpu.dot_dimension_numbers<[1], [0], [0], [1], [0, 0, 1, 1], [], []>} : vector<16x16xf32>, vector<16x6xf32>, vector<16x6xf32> -> vector<16x6xf32>
      %113 = arith.addf %108, %112 : vector<16x6xf32>
      %c5_83 = arith.constant 5 : index
      %c0_84 = arith.constant 0 : index
      %c0_85 = arith.constant 0 : index
      %114 = vector.load %arg16[%c5_83, %c0_84, %c0_85] : memref<9x16x16xf32, #tpu.memory_space<vmem>>, vector<1x16x16xf32>
      %115 = vector.shape_cast %114 : vector<1x16x16xf32> to vector<16x16xf32>
      %116 = vector.extract_strided_slice %103 {offsets = [0, 2], sizes = [16, 6], strides = [1, 1]} : vector<16x8xf32> to vector<16x6xf32>
      %cst_86 = arith.constant dense<0.000000e+00> : vector<16x6xf32>
      %117 = tpu.matmul %115, %116, %cst_86 {dimension_numbers = #tpu.dot_dimension_numbers<[1], [0], [0], [1], [0, 0, 1, 1], [], []>} : vector<16x16xf32>, vector<16x6xf32>, vector<16x6xf32> -> vector<16x6xf32>
      %118 = arith.addf %113, %117 : vector<16x6xf32>
      %c2_i32_87 = arith.constant 2 : i32
      %119 = arith.addi %arg28, %c2_i32_87 : i32
      %120 = arith.index_cast %119 : i32 to index
      %c0_88 = arith.constant 0 : index
      %c0_89 = arith.constant 0 : index
      %121 = vector.load %arg26[%120, %c0_88, %c0_89] : memref<8x16x8xf32, #tpu.memory_space<vmem>>, vector<1x16x8xf32>
      %122 = vector.shape_cast %121 : vector<1x16x8xf32> to vector<16x8xf32>
      %c6 = arith.constant 6 : index
      %c0_90 = arith.constant 0 : index
      %c0_91 = arith.constant 0 : index
      %123 = vector.load %arg16[%c6, %c0_90, %c0_91] : memref<9x16x16xf32, #tpu.memory_space<vmem>>, vector<1x16x16xf32>
      %124 = vector.shape_cast %123 : vector<1x16x16xf32> to vector<16x16xf32>
      %125 = vector.extract_strided_slice %122 {offsets = [0, 0], sizes = [16, 6], strides = [1, 1]} : vector<16x8xf32> to vector<16x6xf32>
      %cst_92 = arith.constant dense<0.000000e+00> : vector<16x6xf32>
      %126 = tpu.matmul %124, %125, %cst_92 {dimension_numbers = #tpu.dot_dimension_numbers<[1], [0], [0], [1], [0, 0, 1, 1], [], []>} : vector<16x16xf32>, vector<16x6xf32>, vector<16x6xf32> -> vector<16x6xf32>
      %127 = arith.addf %118, %126 : vector<16x6xf32>
      %c7 = arith.constant 7 : index
      %c0_93 = arith.constant 0 : index
      %c0_94 = arith.constant 0 : index
      %128 = vector.load %arg16[%c7, %c0_93, %c0_94] : memref<9x16x16xf32, #tpu.memory_space<vmem>>, vector<1x16x16xf32>
      %129 = vector.shape_cast %128 : vector<1x16x16xf32> to vector<16x16xf32>
      %130 = vector.extract_strided_slice %122 {offsets = [0, 1], sizes = [16, 6], strides = [1, 1]} : vector<16x8xf32> to vector<16x6xf32>
      %cst_95 = arith.constant dense<0.000000e+00> : vector<16x6xf32>
      %131 = tpu.matmul %129, %130, %cst_95 {dimension_numbers = #tpu.dot_dimension_numbers<[1], [0], [0], [1], [0, 0, 1, 1], [], []>} : vector<16x16xf32>, vector<16x6xf32>, vector<16x6xf32> -> vector<16x6xf32>
      %132 = arith.addf %127, %131 : vector<16x6xf32>
      %c8 = arith.constant 8 : index
      %c0_96 = arith.constant 0 : index
      %c0_97 = arith.constant 0 : index
      %133 = vector.load %arg16[%c8, %c0_96, %c0_97] : memref<9x16x16xf32, #tpu.memory_space<vmem>>, vector<1x16x16xf32>
      %134 = vector.shape_cast %133 : vector<1x16x16xf32> to vector<16x16xf32>
      %135 = vector.extract_strided_slice %122 {offsets = [0, 2], sizes = [16, 6], strides = [1, 1]} : vector<16x8xf32> to vector<16x6xf32>
      %cst_98 = arith.constant dense<0.000000e+00> : vector<16x6xf32>
      %136 = tpu.matmul %134, %135, %cst_98 {dimension_numbers = #tpu.dot_dimension_numbers<[1], [0], [0], [1], [0, 0, 1, 1], [], []>} : vector<16x16xf32>, vector<16x6xf32>, vector<16x6xf32> -> vector<16x6xf32>
      %137 = arith.addf %132, %136 : vector<16x6xf32>
      %c0_99 = arith.constant 0 : index
      %c0_100 = arith.constant 0 : index
      %138 = vector.load %arg17[%c0_99, %c0_100] : memref<16x1xf32, #tpu.memory_space<vmem>>, vector<16x1xf32>
      %139 = vector.broadcast %138 : vector<16x1xf32> to vector<16x6xf32>
      %140 = arith.addf %137, %139 : vector<16x6xf32>
      %c0_i32_101 = arith.constant 0 : i32
      %141 = arith.addi %arg28, %c0_i32_101 : i32
      %142 = arith.index_cast %141 : i32 to index
      %c0_102 = arith.constant 0 : index
      %c0_103 = arith.constant 0 : index
      %143 = vector.load %arg27[%142, %c0_102, %c0_103] : memref<6x16x6xf32, #tpu.memory_space<vmem>>, vector<1x16x6xf32>
      %144 = vector.shape_cast %143 : vector<1x16x6xf32> to vector<16x6xf32>
      %145 = vector.shape_cast %140 : vector<16x6xf32> to vector<1x16x6xf32>
      tpu.vector_store %arg27[%142, %c0_102, %c0_103], %145 {strides = array<i32>} : memref<6x16x6xf32, #tpu.memory_space<vmem>>, vector<1x16x6xf32>,
    }
    %c6_i32_24 = arith.constant 6 : i32
    %cst_25 = arith.constant 0.000000e+00 : f32
    %30 = vector.broadcast %cst_25 : f32 to vector<16x1xf32>
    %c0_26 = arith.constant 0 : index
    %c0_27 = arith.constant 0 : index
    %c0_28 = arith.constant 0 : index
    %31 = vector.load %arg27[%c0_26, %c0_27, %c0_28] : memref<6x16x6xf32, #tpu.memory_space<vmem>>, vector<1x16x6xf32>
    %32 = vector.shape_cast %31 : vector<1x16x6xf32> to vector<16x6xf32>
    %cst_29 = arith.constant dense<0.000000e+00> : vector<16xf32>
    %33 = vector.multi_reduction <add>, %32, %cst_29 [1] : vector<16x6xf32> to vector<16xf32>
    %34 = vector.shape_cast %33 : vector<16xf32> to vector<16x1xf32>
    %35 = arith.addf %30, %34 : vector<16x1xf32>
    %c1 = arith.constant 1 : index
    %c0_30 = arith.constant 0 : index
    %c0_31 = arith.constant 0 : index
    %36 = vector.load %arg27[%c1, %c0_30, %c0_31] : memref<6x16x6xf32, #tpu.memory_space<vmem>>, vector<1x16x6xf32>
    %37 = vector.shape_cast %36 : vector<1x16x6xf32> to vector<16x6xf32>
    %cst_32 = arith.constant dense<0.000000e+00> : vector<16xf32>
    %38 = vector.multi_reduction <add>, %37, %cst_32 [1] : vector<16x6xf32> to vector<16xf32>
    %39 = vector.shape_cast %38 : vector<16xf32> to vector<16x1xf32>
    %40 = arith.addf %35, %39 : vector<16x1xf32>
    %c2 = arith.constant 2 : index
    %c0_33 = arith.constant 0 : index
    %c0_34 = arith.constant 0 : index
    %41 = vector.load %arg27[%c2, %c0_33, %c0_34] : memref<6x16x6xf32, #tpu.memory_space<vmem>>, vector<1x16x6xf32>
    %42 = vector.shape_cast %41 : vector<1x16x6xf32> to vector<16x6xf32>
    %cst_35 = arith.constant dense<0.000000e+00> : vector<16xf32>
    %43 = vector.multi_reduction <add>, %42, %cst_35 [1] : vector<16x6xf32> to vector<16xf32>
    %44 = vector.shape_cast %43 : vector<16xf32> to vector<16x1xf32>
    %45 = arith.addf %40, %44 : vector<16x1xf32>
    %c3 = arith.constant 3 : index
    %c0_36 = arith.constant 0 : index
    %c0_37 = arith.constant 0 : index
    %46 = vector.load %arg27[%c3, %c0_36, %c0_37] : memref<6x16x6xf32, #tpu.memory_space<vmem>>, vector<1x16x6xf32>
    %47 = vector.shape_cast %46 : vector<1x16x6xf32> to vector<16x6xf32>
    %cst_38 = arith.constant dense<0.000000e+00> : vector<16xf32>
    %48 = vector.multi_reduction <add>, %47, %cst_38 [1] : vector<16x6xf32> to vector<16xf32>
    %49 = vector.shape_cast %48 : vector<16xf32> to vector<16x1xf32>
    %50 = arith.addf %45, %49 : vector<16x1xf32>
    %c4 = arith.constant 4 : index
    %c0_39 = arith.constant 0 : index
    %c0_40 = arith.constant 0 : index
    %51 = vector.load %arg27[%c4, %c0_39, %c0_40] : memref<6x16x6xf32, #tpu.memory_space<vmem>>, vector<1x16x6xf32>
    %52 = vector.shape_cast %51 : vector<1x16x6xf32> to vector<16x6xf32>
    %cst_41 = arith.constant dense<0.000000e+00> : vector<16xf32>
    %53 = vector.multi_reduction <add>, %52, %cst_41 [1] : vector<16x6xf32> to vector<16xf32>
    %54 = vector.shape_cast %53 : vector<16xf32> to vector<16x1xf32>
    %55 = arith.addf %50, %54 : vector<16x1xf32>
    %c5 = arith.constant 5 : index
    %c0_42 = arith.constant 0 : index
    %c0_43 = arith.constant 0 : index
    %56 = vector.load %arg27[%c5, %c0_42, %c0_43] : memref<6x16x6xf32, #tpu.memory_space<vmem>>, vector<1x16x6xf32>
    %57 = vector.shape_cast %56 : vector<1x16x6xf32> to vector<16x6xf32>
    %cst_44 = arith.constant dense<0.000000e+00> : vector<16xf32>
    %58 = vector.multi_reduction <add>, %57, %cst_44 [1] : vector<16x6xf32> to vector<16xf32>
    %59 = vector.shape_cast %58 : vector<16xf32> to vector<16x1xf32>
    %60 = arith.addf %55, %59 : vector<16x1xf32>
    %cst_45 = arith.constant 0.027777778 : f32
    %61 = vector.broadcast %cst_45 : f32 to vector<16x1xf32>
    %62 = arith.mulf %60, %61 : vector<16x1xf32>
    %c0_46 = arith.constant 0 : index
    %c0_47 = arith.constant 0 : index
    %63 = vector.load %arg18[%c0_46, %c0_47] : memref<10x16xf32, #tpu.memory_space<vmem>>, vector<10x16xf32>
    %cst_48 = arith.constant dense<0.000000e+00> : vector<10x1xf32>
    %64 = tpu.matmul %63, %62, %cst_48 {dimension_numbers = #tpu.dot_dimension_numbers<[1], [0], [0], [1], [0, 0, 1, 1], [], []>} : vector<10x16xf32>, vector<16x1xf32>, vector<10x1xf32> -> vector<10x1xf32>
    %c0_49 = arith.constant 0 : index
    %c0_50 = arith.constant 0 : index
    %65 = vector.load %arg19[%c0_49, %c0_50] : memref<10x1xf32, #tpu.memory_space<vmem>>, vector<10x1xf32>
    %66 = arith.addf %64, %65 : vector<10x1xf32>
    %cst_51 = arith.constant dense<0xFF800000> : vector<1xf32>
    %67 = vector.multi_reduction <maximumf>, %66, %cst_51 [0] : vector<10x1xf32> to vector<1xf32>
    %68 = vector.shape_cast %67 : vector<1xf32> to vector<1x1xf32>
    %69 = vector.broadcast %68 : vector<1x1xf32> to vector<10x1xf32>
    %70 = arith.subf %66, %69 : vector<10x1xf32>
    %71 = math.exp %70 : vector<10x1xf32>
    %cst_52 = arith.constant dense<0.000000e+00> : vector<1xf32>
    %72 = vector.multi_reduction <add>, %71, %cst_52 [0] : vector<10x1xf32> to vector<1xf32>
    %73 = vector.shape_cast %72 : vector<1xf32> to vector<1x1xf32>
    %74 = math.log %73 : vector<1x1xf32>
    %75 = vector.broadcast %74 : vector<1x1xf32> to vector<10x1xf32>
    %76 = arith.subf %70, %75 : vector<10x1xf32>
    %c0_53 = arith.constant 0 : index
    %c0_54 = arith.constant 0 : index
    %c0_55 = arith.constant 0 : index
    %77 = vector.load %arg20[%c0_53, %c0_54, %c0_55] : memref<1x10x1xf32, #tpu.memory_space<vmem>>, vector<1x10x1xf32>
    %78 = vector.shape_cast %77 : vector<1x10x1xf32> to vector<10x1xf32>
    %79 = vector.shape_cast %76 : vector<10x1xf32> to vector<1x10x1xf32>
    tpu.vector_store %arg20[%c0_53, %c0_54, %c0_55], %79 {strides = array<i32>} : memref<1x10x1xf32, #tpu.memory_space<vmem>>, vector<1x10x1xf32>,
    return
  }
  func.func @transform_0(%arg0: i32) -> (i32, i32, i32) {
    %c0_i32 = arith.constant 0 : i32
    %c0_i32_0 = arith.constant 0 : i32
    %c0_i32_1 = arith.constant 0 : i32
    return %arg0, %c0_i32, %c0_i32_0 : i32, i32, i32
  }
  func.func @transform_1(%arg0: i32) -> (i32, i32, i32) {
    %c0_i32 = arith.constant 0 : i32
    %c0_i32_0 = arith.constant 0 : i32
    %c0_i32_1 = arith.constant 0 : i32
    %c0_i32_2 = arith.constant 0 : i32
    return %c0_i32, %c0_i32_0, %c0_i32_1 : i32, i32, i32
  }
  func.func @transform_2(%arg0: i32) -> (i32, i32) {
    %c0_i32 = arith.constant 0 : i32
    %c0_i32_0 = arith.constant 0 : i32
    %c0_i32_1 = arith.constant 0 : i32
    return %c0_i32, %c0_i32_0 : i32, i32
  }
  func.func @transform_3(%arg0: i32) -> (i32, i32, i32) {
    %c0_i32 = arith.constant 0 : i32
    %c0_i32_0 = arith.constant 0 : i32
    %c0_i32_1 = arith.constant 0 : i32
    %c0_i32_2 = arith.constant 0 : i32
    return %c0_i32, %c0_i32_0, %c0_i32_1 : i32, i32, i32
  }
  func.func @transform_4(%arg0: i32) -> (i32, i32) {
    %c0_i32 = arith.constant 0 : i32
    %c0_i32_0 = arith.constant 0 : i32
    %c0_i32_1 = arith.constant 0 : i32
    return %c0_i32, %c0_i32_0 : i32, i32
  }
  func.func @transform_5(%arg0: i32) -> (i32, i32) {
    %c0_i32 = arith.constant 0 : i32
    %c0_i32_0 = arith.constant 0 : i32
    %c0_i32_1 = arith.constant 0 : i32
    return %c0_i32, %c0_i32_0 : i32, i32
  }
  func.func @transform_6(%arg0: i32) -> (i32, i32) {
    %c0_i32 = arith.constant 0 : i32
    %c0_i32_0 = arith.constant 0 : i32
    %c0_i32_1 = arith.constant 0 : i32
    return %c0_i32, %c0_i32_0 : i32, i32
  }
  func.func @transform_7(%arg0: i32) -> (i32, i32, i32) {
    %c0_i32 = arith.constant 0 : i32
    %c0_i32_0 = arith.constant 0 : i32
    %c0_i32_1 = arith.constant 0 : i32
    %c0_i32_2 = arith.constant 0 : i32
    return %c0_i32, %c0_i32_0, %c0_i32_1 : i32, i32, i32
  }
  func.func @transform_8(%arg0: i32) -> (i32, i32) {
    %c0_i32 = arith.constant 0 : i32
    %c0_i32_0 = arith.constant 0 : i32
    %c0_i32_1 = arith.constant 0 : i32
    return %c0_i32, %c0_i32_0 : i32, i32
  }
  func.func @transform_9(%arg0: i32) -> (i32, i32, i32) {
    %c0_i32 = arith.constant 0 : i32
    %c0_i32_0 = arith.constant 0 : i32
    %c0_i32_1 = arith.constant 0 : i32
    %c0_i32_2 = arith.constant 0 : i32
    return %c0_i32, %c0_i32_0, %c0_i32_1 : i32, i32, i32
  }
  func.func @transform_10(%arg0: i32) -> (i32, i32) {
    %c0_i32 = arith.constant 0 : i32
    %c0_i32_0 = arith.constant 0 : i32
    %c0_i32_1 = arith.constant 0 : i32
    return %c0_i32, %c0_i32_0 : i32, i32
  }
  func.func @transform_11(%arg0: i32) -> (i32, i32) {
    %c0_i32 = arith.constant 0 : i32
    %c0_i32_0 = arith.constant 0 : i32
    %c0_i32_1 = arith.constant 0 : i32
    return %c0_i32, %c0_i32_0 : i32, i32
  }
  func.func @transform_12(%arg0: i32) -> (i32, i32) {
    %c0_i32 = arith.constant 0 : i32
    %c0_i32_0 = arith.constant 0 : i32
    %c0_i32_1 = arith.constant 0 : i32
    return %c0_i32, %c0_i32_0 : i32, i32
  }
  func.func @transform_13(%arg0: i32) -> (i32, i32, i32) {
    %c0_i32 = arith.constant 0 : i32
    %c0_i32_0 = arith.constant 0 : i32
    %c0_i32_1 = arith.constant 0 : i32
    %c0_i32_2 = arith.constant 0 : i32
    return %c0_i32, %c0_i32_0, %c0_i32_1 : i32, i32, i32
  }
  func.func @transform_14(%arg0: i32) -> (i32, i32) {
    %c0_i32 = arith.constant 0 : i32
    %c0_i32_0 = arith.constant 0 : i32
    %c0_i32_1 = arith.constant 0 : i32
    return %c0_i32, %c0_i32_0 : i32, i32
  }
  func.func @transform_15(%arg0: i32) -> (i32, i32, i32) {
    %c0_i32 = arith.constant 0 : i32
    %c0_i32_0 = arith.constant 0 : i32
    %c0_i32_1 = arith.constant 0 : i32
    %c0_i32_2 = arith.constant 0 : i32
    return %c0_i32, %c0_i32_0, %c0_i32_1 : i32, i32, i32
  }
  func.func @transform_16(%arg0: i32) -> (i32, i32) {
    %c0_i32 = arith.constant 0 : i32
    %c0_i32_0 = arith.constant 0 : i32
    %c0_i32_1 = arith.constant 0 : i32
    return %c0_i32, %c0_i32_0 : i32, i32
  }
  func.func @transform_17(%arg0: i32) -> (i32, i32) {
    %c0_i32 = arith.constant 0 : i32
    %c0_i32_0 = arith.constant 0 : i32
    %c0_i32_1 = arith.constant 0 : i32
    return %c0_i32, %c0_i32_0 : i32, i32
  }
  func.func @transform_18(%arg0: i32) -> (i32, i32) {
    %c0_i32 = arith.constant 0 : i32
    %c0_i32_0 = arith.constant 0 : i32
    %c0_i32_1 = arith.constant 0 : i32
    return %c0_i32, %c0_i32_0 : i32, i32
  }
  func.func @transform_19(%arg0: i32) -> (i32, i32, i32) {
    %c0_i32 = arith.constant 0 : i32
    %c0_i32_0 = arith.constant 0 : i32
    %c0_i32_1 = arith.constant 0 : i32
    return %arg0, %c0_i32, %c0_i32_0 : i32, i32, i32
  }
}

</mosaic_0001>

<llo_original>
// kernel: net8_forward.1
$region0: #{net8_forward.1}
  #allocation0 [shape = 'u32[]', space=smem, size = 0x4, offset = 0x4, fixed_abs, tag = 'smem constant byte address 0x4 - core index']
  #allocation1 [shape = 'u32[144,128]{1,0:T(1,128)}', space=vmem, size = 0x12000, scoped, tag = 'internal scratch']
  #allocation2 [shape = 'f32[26,16,26]{2,1,0:T(8,128)}', space=vmem, size = 0x34000, scoped, tag = 'scratch operand']
  #allocation3 [shape = 'f32[24,10,24]{2,1,0:T(8,128)}', space=vmem, size = 0x30000, scoped, tag = 'scratch operand']
  #allocation4 [shape = 'f32[12,10,12]{2,1,0:T(8,128)}', space=vmem, size = 0x18000, scoped, tag = 'scratch operand']
  #allocation5 [shape = 'f32[10,10,10]{2,1,0:T(8,128)}', space=vmem, size = 0x14000, scoped, tag = 'scratch operand']
  #allocation6 [shape = 'f32[8,16,8]{2,1,0:T(8,128)}', space=vmem, size = 0x10000, scoped, tag = 'scratch operand']
  #allocation7 [shape = 'f32[8,16,8]{2,1,0:T(8,128)}', space=vmem, size = 0x10000, scoped, tag = 'scratch operand']
  #allocation8 [shape = 'f32[6,16,6]{2,1,0:T(8,128)}', space=vmem, size = 0xc000, scoped, tag = 'scratch operand']
  %s0 = inlined_call_operand.vmem [shape: f32[2,28,28], index: 0, kind: input, shape index: {}]
  %s1 = inlined_call_operand.vmem [shape: f32[9,16,1], index: 1, kind: input, shape index: {}]
  %s2 = inlined_call_operand.vmem [shape: f32[16,1], index: 2, kind: input, shape index: {}]
  %s3 = inlined_call_operand.vmem [shape: f32[9,10,16], index: 3, kind: input, shape index: {}]
  %s4 = inlined_call_operand.vmem [shape: f32[10,1], index: 4, kind: input, shape index: {}]
  %s5 = inlined_call_operand.vmem [shape: f32[10,1], index: 5, kind: input, shape index: {}]
  %s6 = inlined_call_operand.vmem [shape: f32[10,1], index: 6, kind: input, shape index: {}]
  %s7 = inlined_call_operand.vmem [shape: f32[9,10,10], index: 7, kind: input, shape index: {}]
  %s8 = inlined_call_operand.vmem [shape: f32[10,1], index: 8, kind: input, shape index: {}]
  %s9 = inlined_call_operand.vmem [shape: f32[9,16,10], index: 9, kind: input, shape index: {}]
  %s10 = inlined_call_operand.vmem [shape: f32[16,1], index: 10, kind: input, shape index: {}]
  %s11 = inlined_call_operand.vmem [shape: f32[16,1], index: 11, kind: input, shape index: {}]
  %s12 = inlined_call_operand.vmem [shape: f32[16,1], index: 12, kind: input, shape index: {}]
  %s13 = inlined_call_operand.vmem [shape: f32[9,16,16], index: 13, kind: input, shape index: {}]
  %s14 = inlined_call_operand.vmem [shape: f32[16,1], index: 14, kind: input, shape index: {}]
  %s15 = inlined_call_operand.vmem [shape: f32[9,16,16], index: 15, kind: input, shape index: {}]
  %s16 = inlined_call_operand.vmem [shape: f32[16,1], index: 16, kind: input, shape index: {}]
  %s17 = inlined_call_operand.vmem [shape: f32[10,16], index: 17, kind: input, shape index: {}]
  %s18 = inlined_call_operand.vmem [shape: f32[10,1], index: 18, kind: input, shape index: {}]
  %s19 = inlined_call_operand.vmem [shape: f32[2,10,1], index: 19, kind: output, shape index: {}]
  %s20 = sld [smem:[#allocation0]]
  $region158: #{net8_forward.1} parent=0
    _
  %s22 = ssub.s32 1, %s20
  %s23 = scalar_select 0, %s22, %s20
  loop: start=0, step=1, limit=4
  $region2: #{net8_forward.1} parent=0 // loop_pre_header
    _
  $region3: #{net8_forward.1} parent=0 // loop_header
    %s25 = sphi 0, %s29
    %p26 = scmp.ge.s32.totalorder %s25, 4
    %s35 = sphi 0, %s37
    %s38 = sphi 0, %s35
    %s39 = sphi 0, %s38
    %s55 = sphi 0, %s39
    %s59 = sphi 0, %s59
    %s61 = sphi 0, %s59
    %s62 = sphi 0, %s61
    %s76 = sphi 0, %s62
    %s80 = sphi 0, %s80
    %s82 = sphi 0, %s80
    %s83 = sphi 0, %s82
    %s97 = sphi 0, %s83
    %s101 = sphi 0, %s101
    %s103 = sphi 0, %s101
    %s104 = sphi 0, %s103
    %s118 = sphi 0, %s104
    %s122 = sphi 0, %s122
    %s124 = sphi 0, %s122
    %s125 = sphi 0, %s124
    %s139 = sphi 0, %s125
    %s143 = sphi 0, %s143
    %s145 = sphi 0, %s143
    %s146 = sphi 0, %s145
    %s160 = sphi 0, %s146
    %s164 = sphi 0, %s164
    %s166 = sphi 0, %s164
    %s167 = sphi 0, %s166
    %s181 = sphi 0, %s167
    %s185 = sphi 0, %s185
    %s187 = sphi 0, %s185
    %s188 = sphi 0, %s187
    %s202 = sphi 0, %s188
    %s206 = sphi 0, %s206
    %s208 = sphi 0, %s206
    %s209 = sphi 0, %s208
    %s223 = sphi 0, %s209
    %s227 = sphi 0, %s227
    %s229 = sphi 0, %s227
    %s230 = sphi 0, %s229
    %s244 = sphi 0, %s230
    %s248 = sphi 0, %s248
    %s250 = sphi 0, %s248
    %s251 = sphi 0, %s250
    %s265 = sphi 0, %s251
    %s269 = sphi 0, %s269
    %s271 = sphi 0, %s269
    %s272 = sphi 0, %s271
    %s286 = sphi 0, %s272
    %s290 = sphi 0, %s290
    %s292 = sphi 0, %s290
    %s293 = sphi 0, %s292
    %s307 = sphi 0, %s293
    %s311 = sphi 0, %s311
    %s313 = sphi 0, %s311
    %s314 = sphi 0, %s313
    %s328 = sphi 0, %s314
    %s332 = sphi 0, %s332
    %s334 = sphi 0, %s332
    %s335 = sphi 0, %s334
    %s349 = sphi 0, %s335
    %s353 = sphi 0, %s353
    %s355 = sphi 0, %s353
    %s356 = sphi 0, %s355
    %s370 = sphi 0, %s356
    %s374 = sphi 0, %s374
    %s376 = sphi 0, %s374
    %s377 = sphi 0, %s376
    %s391 = sphi 0, %s377
    %s395 = sphi 0, %s395
    %s397 = sphi 0, %s395
    %s398 = sphi 0, %s397
    %s412 = sphi 0, %s398
    %s416 = sphi 0, %s416
    %s418 = sphi 0, %s416
    %s419 = sphi 0, %s418
    %s433 = sphi 0, %s419
    %s439 = sphi 0, %s441
    %s442 = sphi 0, %s439
    %s443 = sphi 0, %s442
    %s459 = sphi 0, %s443
  $region4: #{net8_forward.1} parent=0 // loop_header_branch
    %28 = sbr.rel (%p26) target = $region8
  $region5: #{net8_forward.1} parent=0 // loop_body
    %s30 = ssub.s32 %s25, 1
    %s31 = ssub.s32 %s25, 2
    %s32 = sadd.s32 %s25, 1
    %s33 = ssub.s32 %s25, %s32
    %p34 = scmp.eq.s32.totalorder %s33, 0
    %s36 = sadd.s32 %s35, 1
    %s37 = scalar_select %p34, %s35, %s36
    %p40 = pneg %p34
    %p41 = scmp.eq.s32.totalorder %s25, 1
    %p42 = por %p40, %p41
    %p43 = scmp.ne.s32.totalorder %s35, %s38
    %p44 = scmp.eq.s32.totalorder %s25, 0
    %p45 = por %p43, %p44
    %p46 = scmp.ne.s32.totalorder %s35, %s38
    %p47 = scmp.eq.s32.totalorder %s30, 1
    %p48 = por %p46, %p47
    %p49 = scmp.ne.s32.totalorder %s38, %s39
    %p50 = scmp.eq.s32.totalorder %s30, 0
    %p51 = por %p49, %p50
    %p52 = scmp.ne.s32.totalorder %s38, %s39
    %p53 = scmp.eq.s32.totalorder %s31, 1
    %p54 = por %p52, %p53
    %p56 = scmp.ne.s32.totalorder %s39, %s55
    %p57 = scmp.eq.s32.totalorder %s31, 0
    %p58 = por %p56, %p57
    %s60 = sadd.s32 %s59, 1
    %p63 = scmp.eq.s32.totalorder %s25, 1
    %p64 = scmp.ne.s32.totalorder %s59, %s61
    %p65 = scmp.eq.s32.totalorder %s25, 0
    %p66 = por %p64, %p65
    %p67 = scmp.ne.s32.totalorder %s59, %s61
    %p68 = scmp.eq.s32.totalorder %s30, 1
    %p69 = por %p67, %p68
    %p70 = scmp.ne.s32.totalorder %s61, %s62
    %p71 = scmp.eq.s32.totalorder %s30, 0
    %p72 = por %p70, %p71
    %p73 = scmp.ne.s32.totalorder %s61, %s62
    %p74 = scmp.eq.s32.totalorder %s31, 1
    %p75 = por %p73, %p74
    %p77 = scmp.ne.s32.totalorder %s62, %s76
    %p78 = scmp.eq.s32.totalorder %s31, 0
    %p79 = por %p77, %p78
    %s81 = sadd.s32 %s80, 1
    %p84 = scmp.eq.s32.totalorder %s25, 1
    %p85 = scmp.ne.s32.totalorder %s80, %s82
    %p86 = scmp.eq.s32.totalorder %s25, 0
    %p87 = por %p85, %p86
    %p88 = scmp.ne.s32.totalorder %s80, %s82
    %p89 = scmp.eq.s32.totalorder %s30, 1
    %p90 = por %p88, %p89
    %p91 = scmp.ne.s32.totalorder %s82, %s83
    %p92 = scmp.eq.s32.totalorder %s30, 0
    %p93 = por %p91, %p92
    %p94 = scmp.ne.s32.totalorder %s82, %s83
    %p95 = scmp.eq.s32.totalorder %s31, 1
    %p96 = por %p94, %p95
    %p98 = scmp.ne.s32.totalorder %s83, %s97
    %p99 = scmp.eq.s32.totalorder %s31, 0
    %p100 = por %p98, %p99
    %s102 = sadd.s32 %s101, 1
    %p105 = scmp.eq.s32.totalorder %s25, 1
    %p106 = scmp.ne.s32.totalorder %s101, %s103
    %p107 = scmp.eq.s32.totalorder %s25, 0
    %p108 = por %p106, %p107
    %p109 = scmp.ne.s32.totalorder %s101, %s103
    %p110 = scmp.eq.s32.totalorder %s30, 1
    %p111 = por %p109, %p110
    %p112 = scmp.ne.s32.totalorder %s103, %s104
    %p113 = scmp.eq.s32.totalorder %s30, 0
    %p114 = por %p112, %p113
    %p115 = scmp.ne.s32.totalorder %s103, %s104
    %p116 = scmp.eq.s32.totalorder %s31, 1
    %p117 = por %p115, %p116
    %p119 = scmp.ne.s32.totalorder %s104, %s118
    %p120 = scmp.eq.s32.totalorder %s31, 0
    %p121 = por %p119, %p120
    %s123 = sadd.s32 %s122, 1
    %p126 = scmp.eq.s32.totalorder %s25, 1
    %p127 = scmp.ne.s32.totalorder %s122, %s124
    %p128 = scmp.eq.s32.totalorder %s25, 0
    %p129 = por %p127, %p128
    %p130 = scmp.ne.s32.totalorder %s122, %s124
    %p131 = scmp.eq.s32.totalorder %s30, 1
    %p132 = por %p130, %p131
    %p133 = scmp.ne.s32.totalorder %s124, %s125
    %p134 = scmp.eq.s32.totalorder %s30, 0
    %p135 = por %p133, %p134
    %p136 = scmp.ne.s32.totalorder %s124, %s125
    %p137 = scmp.eq.s32.totalorder %s31, 1
    %p138 = por %p136, %p137
    %p140 = scmp.ne.s32.totalorder %s125, %s139
    %p141 = scmp.eq.s32.totalorder %s31, 0
    %p142 = por %p140, %p141
    %s144 = sadd.s32 %s143, 1
    %p147 = scmp.eq.s32.totalorder %s25, 1
    %p148 = scmp.ne.s32.totalorder %s143, %s145
    %p149 = scmp.eq.s32.totalorder %s25, 0
    %p150 = por %p148, %p149
    %p151 = scmp.ne.s32.totalorder %s143, %s145
    %p152 = scmp.eq.s32.totalorder %s30, 1
    %p153 = por %p151, %p152
    %p154 = scmp.ne.s32.totalorder %s145, %s146
    %p155 = scmp.eq.s32.totalorder %s30, 0
    %p156 = por %p154, %p155
    %p157 = scmp.ne.s32.totalorder %s145, %s146
    %p158 = scmp.eq.s32.totalorder %s31, 1
    %p159 = por %p157, %p158
    %p161 = scmp.ne.s32.totalorder %s146, %s160
    %p162 = scmp.eq.s32.totalorder %s31, 0
    %p163 = por %p161, %p162
    %s165 = sadd.s32 %s164, 1
    %p168 = scmp.eq.s32.totalorder %s25, 1
    %p169 = scmp.ne.s32.totalorder %s164, %s166
    %p170 = scmp.eq.s32.totalorder %s25, 0
    %p171 = por %p169, %p170
    %p172 = scmp.ne.s32.totalorder %s164, %s166
    %p173 = scmp.eq.s32.totalorder %s30, 1
    %p174 = por %p172, %p173
    %p175 = scmp.ne.s32.totalorder %s166, %s167
    %p176 = scmp.eq.s32.totalorder %s30, 0
    %p177 = por %p175, %p176
    %p178 = scmp.ne.s32.totalorder %s166, %s167
    %p179 = scmp.eq.s32.totalorder %s31, 1
    %p180 = por %p178, %p179
    %p182 = scmp.ne.s32.totalorder %s167, %s181
    %p183 = scmp.eq.s32.totalorder %s31, 0
    %p184 = por %p182, %p183
    %s186 = sadd.s32 %s185, 1
    %p189 = scmp.eq.s32.totalorder %s25, 1
    %p190 = scmp.ne.s32.totalorder %s185, %s187
    %p191 = scmp.eq.s32.totalorder %s25, 0
    %p192 = por %p190, %p191
    %p193 = scmp.ne.s32.totalorder %s185, %s187
    %p194 = scmp.eq.s32.totalorder %s30, 1
    %p195 = por %p193, %p194
    %p196 = scmp.ne.s32.totalorder %s187, %s188
    %p197 = scmp.eq.s32.totalorder %s30, 0
    %p198 = por %p196, %p197
    %p199 = scmp.ne.s32.totalorder %s187, %s188
    %p200 = scmp.eq.s32.totalorder %s31, 1
    %p201 = por %p199, %p200
    %p203 = scmp.ne.s32.totalorder %s188, %s202
    %p204 = scmp.eq.s32.totalorder %s31, 0
    %p205 = por %p203, %p204
    %s207 = sadd.s32 %s206, 1
    %p210 = scmp.eq.s32.totalorder %s25, 1
    %p211 = scmp.ne.s32.totalorder %s206, %s208
    %p212 = scmp.eq.s32.totalorder %s25, 0
    %p213 = por %p211, %p212
    %p214 = scmp.ne.s32.totalorder %s206, %s208
    %p215 = scmp.eq.s32.totalorder %s30, 1
    %p216 = por %p214, %p215
    %p217 = scmp.ne.s32.totalorder %s208, %s209
    %p218 = scmp.eq.s32.totalorder %s30, 0
    %p219 = por %p217, %p218
    %p220 = scmp.ne.s32.totalorder %s208, %s209
    %p221 = scmp.eq.s32.totalorder %s31, 1
    %p222 = por %p220, %p221
    %p224 = scmp.ne.s32.totalorder %s209, %s223
    %p225 = scmp.eq.s32.totalorder %s31, 0
    %p226 = por %p224, %p225
    %s228 = sadd.s32 %s227, 1
    %p231 = scmp.eq.s32.totalorder %s25, 1
    %p232 = scmp.ne.s32.totalorder %s227, %s229
    %p233 = scmp.eq.s32.totalorder %s25, 0
    %p234 = por %p232, %p233
    %p235 = scmp.ne.s32.totalorder %s227, %s229
    %p236 = scmp.eq.s32.totalorder %s30, 1
    %p237 = por %p235, %p236
    %p238 = scmp.ne.s32.totalorder %s229, %s230
    %p239 = scmp.eq.s32.totalorder %s30, 0
    %p240 = por %p238, %p239
    %p241 = scmp.ne.s32.totalorder %s229, %s230
    %p242 = scmp.eq.s32.totalorder %s31, 1
    %p243 = por %p241, %p242
    %p245 = scmp.ne.s32.totalorder %s230, %s244
    %p246 = scmp.eq.s32.totalorder %s31, 0
    %p247 = por %p245, %p246
    %s249 = sadd.s32 %s248, 1
    %p252 = scmp.eq.s32.totalorder %s25, 1
    %p253 = scmp.ne.s32.totalorder %s248, %s250
    %p254 = scmp.eq.s32.totalorder %s25, 0
    %p255 = por %p253, %p254
    %p256 = scmp.ne.s32.totalorder %s248, %s250
    %p257 = scmp.eq.s32.totalorder %s30, 1
    %p258 = por %p256, %p257
    %p259 = scmp.ne.s32.totalorder %s250, %s251
    %p260 = scmp.eq.s32.totalorder %s30, 0
    %p261 = por %p259, %p260
    %p262 = scmp.ne.s32.totalorder %s250, %s251
    %p263 = scmp.eq.s32.totalorder %s31, 1
    %p264 = por %p262, %p263
    %p266 = scmp.ne.s32.totalorder %s251, %s265
    %p267 = scmp.eq.s32.totalorder %s31, 0
    %p268 = por %p266, %p267
    %s270 = sadd.s32 %s269, 1
    %p273 = scmp.eq.s32.totalorder %s25, 1
    %p274 = scmp.ne.s32.totalorder %s269, %s271
    %p275 = scmp.eq.s32.totalorder %s25, 0
    %p276 = por %p274, %p275
    %p277 = scmp.ne.s32.totalorder %s269, %s271
    %p278 = scmp.eq.s32.totalorder %s30, 1
    %p279 = por %p277, %p278
    %p280 = scmp.ne.s32.totalorder %s271, %s272
    %p281 = scmp.eq.s32.totalorder %s30, 0
    %p282 = por %p280, %p281
    %p283 = scmp.ne.s32.totalorder %s271, %s272
    %p284 = scmp.eq.s32.totalorder %s31, 1
    %p285 = por %p283, %p284
    %p287 = scmp.ne.s32.totalorder %s272, %s286
    %p288 = scmp.eq.s32.totalorder %s31, 0
    %p289 = por %p287, %p288
    %s291 = sadd.s32 %s290, 1
    %p294 = scmp.eq.s32.totalorder %s25, 1
    %p295 = scmp.ne.s32.totalorder %s290, %s292
    %p296 = scmp.eq.s32.totalorder %s25, 0
    %p297 = por %p295, %p296
    %p298 = scmp.ne.s32.totalorder %s290, %s292
    %p299 = scmp.eq.s32.totalorder %s30, 1
    %p300 = por %p298, %p299
    %p301 = scmp.ne.s32.totalorder %s292, %s293
    %p302 = scmp.eq.s32.totalorder %s30, 0
    %p303 = por %p301, %p302
    %p304 = scmp.ne.s32.totalorder %s292, %s293
    %p305 = scmp.eq.s32.totalorder %s31, 1
    %p306 = por %p304, %p305
    %p308 = scmp.ne.s32.totalorder %s293, %s307
    %p309 = scmp.eq.s32.totalorder %s31, 0
    %p310 = por %p308, %p309
    %s312 = sadd.s32 %s311, 1
    %p315 = scmp.eq.s32.totalorder %s25, 1
    %p316 = scmp.ne.s32.totalorder %s311, %s313
    %p317 = scmp.eq.s32.totalorder %s25, 0
    %p318 = por %p316, %p317
    %p319 = scmp.ne.s32.totalorder %s311, %s313
    %p320 = scmp.eq.s32.totalorder %s30, 1
    %p321 = por %p319, %p320
    %p322 = scmp.ne.s32.totalorder %s313, %s314
    %p323 = scmp.eq.s32.totalorder %s30, 0
    %p324 = por %p322, %p323
    %p325 = scmp.ne.s32.totalorder %s313, %s314
    %p326 = scmp.eq.s32.totalorder %s31, 1
    %p327 = por %p325, %p326
    %p329 = scmp.ne.s32.totalorder %s314, %s328
    %p330 = scmp.eq.s32.totalorder %s31, 0
    %p331 = por %p329, %p330
    %s333 = sadd.s32 %s332, 1
    %p336 = scmp.eq.s32.totalorder %s25, 1
    %p337 = scmp.ne.s32.totalorder %s332, %s334
    %p338 = scmp.eq.s32.totalorder %s25, 0
    %p339 = por %p337, %p338
    %p340 = scmp.ne.s32.totalorder %s332, %s334
    %p341 = scmp.eq.s32.totalorder %s30, 1
    %p342 = por %p340, %p341
    %p343 = scmp.ne.s32.totalorder %s334, %s335
    %p344 = scmp.eq.s32.totalorder %s30, 0
    %p345 = por %p343, %p344
    %p346 = scmp.ne.s32.totalorder %s334, %s335
    %p347 = scmp.eq.s32.totalorder %s31, 1
    %p348 = por %p346, %p347
    %p350 = scmp.ne.s32.totalorder %s335, %s349
    %p351 = scmp.eq.s32.totalorder %s31, 0
    %p352 = por %p350, %p351
    %s354 = sadd.s32 %s353, 1
    %p357 = scmp.eq.s32.totalorder %s25, 1
    %p358 = scmp.ne.s32.totalorder %s353, %s355
    %p359 = scmp.eq.s32.totalorder %s25, 0
    %p360 = por %p358, %p359
    %p361 = scmp.ne.s32.totalorder %s353, %s355
    %p362 = scmp.eq.s32.totalorder %s30, 1
    %p363 = por %p361, %p362
    %p364 = scmp.ne.s32.totalorder %s355, %s356
    %p365 = scmp.eq.s32.totalorder %s30, 0
    %p366 = por %p364, %p365
    %p367 = scmp.ne.s32.totalorder %s355, %s356
    %p368 = scmp.eq.s32.totalorder %s31, 1
    %p369 = por %p367, %p368
    %p371 = scmp.ne.s32.totalorder %s356, %s370
    %p372 = scmp.eq.s32.totalorder %s31, 0
    %p373 = por %p371, %p372
    %s375 = sadd.s32 %s374, 1
    %p378 = scmp.eq.s32.totalorder %s25, 1
    %p379 = scmp.ne.s32.totalorder %s374, %s376
    %p380 = scmp.eq.s32.totalorder %s25, 0
    %p381 = por %p379, %p380
    %p382 = scmp.ne.s32.totalorder %s374, %s376
    %p383 = scmp.eq.s32.totalorder %s30, 1
    %p384 = por %p382, %p383
    %p385 = scmp.ne.s32.totalorder %s376, %s377
    %p386 = scmp.eq.s32.totalorder %s30, 0
    %p387 = por %p385, %p386
    %p388 = scmp.ne.s32.totalorder %s376, %s377
    %p389 = scmp.eq.s32.totalorder %s31, 1
    %p390 = por %p388, %p389
    %p392 = scmp.ne.s32.totalorder %s377, %s391
    %p393 = scmp.eq.s32.totalorder %s31, 0
    %p394 = por %p392, %p393
    %s396 = sadd.s32 %s395, 1
    %p399 = scmp.eq.s32.totalorder %s25, 1
    %p400 = scmp.ne.s32.totalorder %s395, %s397
    %p401 = scmp.eq.s32.totalorder %s25, 0
    %p402 = por %p400, %p401
    %p403 = scmp.ne.s32.totalorder %s395, %s397
    %p404 = scmp.eq.s32.totalorder %s30, 1
    %p405 = por %p403, %p404
    %p406 = scmp.ne.s32.totalorder %s397, %s398
    %p407 = scmp.eq.s32.totalorder %s30, 0
    %p408 = por %p406, %p407
    %p409 = scmp.ne.s32.totalorder %s397, %s398
    %p410 = scmp.eq.s32.totalorder %s31, 1
    %p411 = por %p409, %p410
    %p413 = scmp.ne.s32.totalorder %s398, %s412
    %p414 = scmp.eq.s32.totalorder %s31, 0
    %p415 = por %p413, %p414
    %s417 = sadd.s32 %s416, 1
    %p420 = scmp.eq.s32.totalorder %s25, 1
    %p421 = scmp.ne.s32.totalorder %s416, %s418
    %p422 = scmp.eq.s32.totalorder %s25, 0
    %p423 = por %p421, %p422
    %p424 = scmp.ne.s32.totalorder %s416, %s418
    %p425 = scmp.eq.s32.totalorder %s30, 1
    %p426 = por %p424, %p425
    %p427 = scmp.ne.s32.totalorder %s418, %s419
    %p428 = scmp.eq.s32.totalorder %s30, 0
    %p429 = por %p427, %p428
    %p430 = scmp.ne.s32.totalorder %s418, %s419
    %p431 = scmp.eq.s32.totalorder %s31, 1
    %p432 = por %p430, %p431
    %p434 = scmp.ne.s32.totalorder %s419, %s433
    %p435 = scmp.eq.s32.totalorder %s31, 0
    %p436 = por %p434, %p435
    %s437 = ssub.s32 %s25, %s32
    %p438 = scmp.eq.s32.totalorder %s437, 0
    %s440 = sadd.s32 %s439, 1
    %s441 = scalar_select %p438, %s439, %s440
    %p444 = pneg %p438
    %p445 = scmp.eq.s32.totalorder %s25, 1
    %p446 = por %p444, %p445
    %p447 = scmp.ne.s32.totalorder %s439, %s442
    %p448 = scmp.eq.s32.totalorder %s25, 0
    %p449 = por %p447, %p448
    %p450 = scmp.ne.s32.totalorder %s439, %s442
    %p451 = scmp.eq.s32.totalorder %s30, 1
    %p452 = por %p450, %p451
    %p453 = scmp.ne.s32.totalorder %s442, %s443
    %p454 = scmp.eq.s32.totalorder %s30, 0
    %p455 = por %p453, %p454
    %p456 = scmp.ne.s32.totalorder %s442, %s443
    %p457 = scmp.eq.s32.totalorder %s31, 1
    %p458 = por %p456, %p457
    %p460 = scmp.ne.s32.totalorder %s443, %s459
    %p461 = scmp.eq.s32.totalorder %s31, 0
    %p462 = por %p460, %p461
    %p463 = scmp.le.s32.totalorder 1, %s25
    %p464 = scmp.lt.s32.totalorder %s25, 3
    %p465 = pnand %p463, %p464
    %p466 = pneg %p465
    // Predicated region
    $region9: #{net8_forward.1} parent=5 // pred_check
      _
    $region10: #{net8_forward.1} parent=5 // pred_check_branch
      %468 = sbr.rel (%p465) target = $region12
    $region11: #{net8_forward.1} parent=5 // pred_region
      %s469 = ssub.s32 %s25, 1
      // Predicated region
      $region13: #{net8_forward.1} parent=11 // pred_check
        %p470 = pneg %p72
      $region14: #{net8_forward.1} parent=11 // pred_check_branch
        %472 = sbr.rel (%p470) target = $region16
      $region15: #{net8_forward.1} parent=11 // pred_region
        _
      $region16: #{net8_forward.1} parent=11 // pred_fallthru
        _
      // Predicated region
      $region17: #{net8_forward.1} parent=11 // pred_check
        %p473 = pneg %p93
      $region18: #{net8_forward.1} parent=11 // pred_check_branch
        %475 = sbr.rel (%p473) target = $region20
      $region19: #{net8_forward.1} parent=11 // pred_region
        _
      $region20: #{net8_forward.1} parent=11 // pred_fallthru
        _
      // Predicated region
      $region21: #{net8_forward.1} parent=11 // pred_check
        %p476 = pneg %p114
      $region22: #{net8_forward.1} parent=11 // pred_check_branch
        %478 = sbr.rel (%p476) target = $region24
      $region23: #{net8_forward.1} parent=11 // pred_region
        _
      $region24: #{net8_forward.1} parent=11 // pred_fallthru
        _
      // Predicated region
      $region25: #{net8_forward.1} parent=11 // pred_check
        %p479 = pneg %p135
      $region26: #{net8_forward.1} parent=11 // pred_check_branch
        %481 = sbr.rel (%p479) target = $region28
      $region27: #{net8_forward.1} parent=11 // pred_region
        _
      $region28: #{net8_forward.1} parent=11 // pred_fallthru
        _
      // Predicated region
      $region29: #{net8_forward.1} parent=11 // pred_check
        %p482 = pneg %p156
      $region30: #{net8_forward.1} parent=11 // pred_check_branch
        %484 = sbr.rel (%p482) target = $region32
      $region31: #{net8_forward.1} parent=11 // pred_region
        _
      $region32: #{net8_forward.1} parent=11 // pred_fallthru
        _
      // Predicated region
      $region33: #{net8_forward.1} parent=11 // pred_check
        %p485 = pneg %p177
      $region34: #{net8_forward.1} parent=11 // pred_check_branch
        %487 = sbr.rel (%p485) target = $region36
      $region35: #{net8_forward.1} parent=11 // pred_region
        _
      $region36: #{net8_forward.1} parent=11 // pred_fallthru
        _
      // Predicated region
      $region37: #{net8_forward.1} parent=11 // pred_check
        %p488 = pneg %p198
      $region38: #{net8_forward.1} parent=11 // pred_check_branch
        %490 = sbr.rel (%p488) target = $region40
      $region39: #{net8_forward.1} parent=11 // pred_region
        _
      $region40: #{net8_forward.1} parent=11 // pred_fallthru
        _
      // Predicated region
      $region41: #{net8_forward.1} parent=11 // pred_check
        %p491 = pneg %p219
      $region42: #{net8_forward.1} parent=11 // pred_check_branch
        %493 = sbr.rel (%p491) target = $region44
      $region43: #{net8_forward.1} parent=11 // pred_region
        _
      $region44: #{net8_forward.1} parent=11 // pred_fallthru
        _
      // Predicated region
      $region45: #{net8_forward.1} parent=11 // pred_check
        %p494 = pneg %p240
      $region46: #{net8_forward.1} parent=11 // pred_check_branch
        %496 = sbr.rel (%p494) target = $region48
      $region47: #{net8_forward.1} parent=11 // pred_region
        _
      $region48: #{net8_forward.1} parent=11 // pred_fallthru
        _
      // Predicated region
      $region49: #{net8_forward.1} parent=11 // pred_check
        %p497 = pneg %p261
      $region50: #{net8_forward.1} parent=11 // pred_check_branch
        %499 = sbr.rel (%p497) target = $region52
      $region51: #{net8_forward.1} parent=11 // pred_region
        _
      $region52: #{net8_forward.1} parent=11 // pred_fallthru
        _
      // Predicated region
      $region53: #{net8_forward.1} parent=11 // pred_check
        %p500 = pneg %p282
      $region54: #{net8_forward.1} parent=11 // pred_check_branch
        %502 = sbr.rel (%p500) target = $region56
      $region55: #{net8_forward.1} parent=11 // pred_region
        _
      $region56: #{net8_forward.1} parent=11 // pred_fallthru
        _
      // Predicated region
      $region57: #{net8_forward.1} parent=11 // pred_check
        %p503 = pneg %p303
      $region58: #{net8_forward.1} parent=11 // pred_check_branch
        %505 = sbr.rel (%p503) target = $region60
      $region59: #{net8_forward.1} parent=11 // pred_region
        _
      $region60: #{net8_forward.1} parent=11 // pred_fallthru
        _
      // Predicated region
      $region61: #{net8_forward.1} parent=11 // pred_check
        %p506 = pneg %p324
      $region62: #{net8_forward.1} parent=11 // pred_check_branch
        %508 = sbr.rel (%p506) target = $region64
      $region63: #{net8_forward.1} parent=11 // pred_region
        _
      $region64: #{net8_forward.1} parent=11 // pred_fallthru
        _
      // Predicated region
      $region65: #{net8_forward.1} parent=11 // pred_check
        %p509 = pneg %p345
      $region66: #{net8_forward.1} parent=11 // pred_check_branch
        %511 = sbr.rel (%p509) target = $region68
      $region67: #{net8_forward.1} parent=11 // pred_region
        _
      $region68: #{net8_forward.1} parent=11 // pred_fallthru
        _
      // Predicated region
      $region69: #{net8_forward.1} parent=11 // pred_check
        %p512 = pneg %p366
      $region70: #{net8_forward.1} parent=11 // pred_check_branch
        %514 = sbr.rel (%p512) target = $region72
      $region71: #{net8_forward.1} parent=11 // pred_region
        _
      $region72: #{net8_forward.1} parent=11 // pred_fallthru
        _
      // Predicated region
      $region73: #{net8_forward.1} parent=11 // pred_check
        %p515 = pneg %p387
      $region74: #{net8_forward.1} parent=11 // pred_check_branch
        %517 = sbr.rel (%p515) target = $region76
      $region75: #{net8_forward.1} parent=11 // pred_region
        _
      $region76: #{net8_forward.1} parent=11 // pred_fallthru
        _
      // Predicated region
      $region77: #{net8_forward.1} parent=11 // pred_check
        %p518 = pneg %p408
      $region78: #{net8_forward.1} parent=11 // pred_check_branch
        %520 = sbr.rel (%p518) target = $region80
      $region79: #{net8_forward.1} parent=11 // pred_region
        _
      $region80: #{net8_forward.1} parent=11 // pred_fallthru
        _
      // Predicated region
      $region81: #{net8_forward.1} parent=11 // pred_check
        %p521 = pneg %p429
      $region82: #{net8_forward.1} parent=11 // pred_check_branch
        %523 = sbr.rel (%p521) target = $region84
      $region83: #{net8_forward.1} parent=11 // pred_region
        _
      $region84: #{net8_forward.1} parent=11 // pred_fallthru
        _
    $region12: #{net8_forward.1} parent=5 // pred_fallthru
      _
    %p524 = scmp.lt.s32.totalorder %s25, 2
    // Predicated region
    $region85: #{net8_forward.1} parent=5 // pred_check
      %p525 = pneg %p524
    $region86: #{net8_forward.1} parent=5 // pred_check_branch
      %527 = sbr.rel (%p525) target = $region88
    $region87: #{net8_forward.1} parent=5 // pred_region
      // Predicated region
      $region89: #{net8_forward.1} parent=87 // pred_check
        %p528 = pneg %p45
      $region90: #{net8_forward.1} parent=87 // pred_check_branch
        %530 = sbr.rel (%p528) target = $region92
      $region91: #{net8_forward.1} parent=87 // pred_region
        %p531 = scmp.lt.s32.totalorder %s25, 1
        %s532 = scalar_select %p531, %s25, 1
        %s533 = smul.addr %s532, 4
        %s534 = smul.addr %s533, 8
        %s535 = scalar_lea.vmem %s0, %s534
      $region92: #{net8_forward.1} parent=87 // pred_fallthru
        _
    $region88: #{net8_forward.1} parent=5 // pred_fallthru
      _
    %p536 = scmp.le.s32.totalorder 1, %s25
    %p537 = scmp.lt.s32.totalorder %s25, 3
    %p538 = pnand %p536, %p537
    %p539 = pneg %p538
    // Predicated region
    $region93: #{net8_forward.1} parent=5 // pred_check
      _
    $region94: #{net8_forward.1} parent=5 // pred_check_branch
      %541 = sbr.rel (%p538) target = $region96
    $region95: #{net8_forward.1} parent=5 // pred_region
      %s542 = ssub.s32 %s25, 1
      %p543 = scmp.lt.s32.totalorder %s30, 1
      %s544 = scalar_select %p543, %s30, 1
      %s545 = smul.addr %s544, 4
      %s546 = smul.addr %s545, 8
      %s547 = scalar_lea.vmem %s0, %s546
      %p548 = pneg %p51
      %p549 = pneg %p48
      %p550 = pneg %p72
      %p551 = pneg %p69
      %p552 = pneg %p93
      %p553 = pneg %p90
      %p554 = pneg %p114
      %p555 = pneg %p111
      %p556 = pneg %p135
      %p557 = pneg %p132
      %p558 = pneg %p156
      %p559 = pneg %p153
      %p560 = pneg %p177
      %p561 = pneg %p174
      %p562 = pneg %p198
      %p563 = pneg %p195
      %p564 = pneg %p219
      %p565 = pneg %p216
      %p566 = pneg %p240
      %p567 = pneg %p237
      %p568 = pneg %p261
      %p569 = pneg %p258
      %p570 = pneg %p282
      %p571 = pneg %p279
      %p572 = pneg %p303
      %p573 = pneg %p300
      %p574 = pneg %p324
      %p575 = pneg %p321
      %p576 = pneg %p345
      %p577 = pneg %p342
      %p578 = pneg %p366
      %p579 = pneg %p363
      %p580 = pneg %p387
      %p581 = pneg %p384
      %p582 = pneg %p408
      %p583 = pneg %p405
      %p584 = pneg %p429
      %p585 = pneg %p426
      %p586 = pneg %p455
      %p587 = pneg %p452
      %p588 = scmp.lt.s32.totalorder %s30, 1
      %s589 = scalar_select %p588, %s30, 1
      %s590 = smul.addr %s589, 2
      %s591 = smul.addr %s590, 8
      %s592 = scalar_lea.vmem %s19, %s591
      %p593 = scmp.lt.s32.totalorder %s30, 1
      %s594 = scalar_select %p593, %s30, 1
      %s595 = smul.addr %s594, 4
      %s596 = smul.addr %s595, 8
      %s597 = scalar_lea.vmem %s0, %s596
      %p598 = scmp.lt.s32.totalorder %s30, 1
      %s599 = scalar_select %p598, %s30, 1
      %s600 = smul.addr %s599, 2
      %s601 = smul.addr %s600, 8
      %s602 = scalar_lea.vmem %s19, %s601
      loop: start=0, step=1, limit=26
      $region97: #{net8_forward.1} parent=95 // loop_pre_header
        _
      $region98: #{net8_forward.1} parent=95 // loop_header
        %s604 = sphi 0, %s608
        %p605 = scmp.ge.s32.totalorder %s604, 26
      $region99: #{net8_forward.1} parent=95 // loop_header_branch
        %607 = sbr.rel (%p605) target = $region103
      $region100: #{net8_forward.1} parent=95 // loop_body
        %s609 = scalar_lea.vmem %s597, %s604
        %v610 = vld [vmem:[%s609] sm:$0x1]
        %v611 = vld [vmem:[%s1] sm:$0xff]
        %v612 = vld [vmem:[%s1 + $0x8] sm:$0xff]
        %614 = vset.pattern.permute.xlu0 0
        %615 = vperm.xlu0 %614, %v611
        %v616 = vpop.permute.xlu0 %615
        %619 = vset.pattern.permute.xlu0 0
        %620 = vperm.xlu0 %619, %v612
        %v621 = vpop.permute.xlu0 %620
        %v623 = vlaneseq
        %v624 = vshrl.u32 %v623, 7
        %v625 = vsub.s32 0, %v624
        %v626 = vrot.slane %v610, %v625
        %v627 = vmul.f32 %v616, %v626
        %v628 = vmul.f32 %v621, %v626
        %v629 = vadd.f32 %v627, 0.0
        %v630 = vadd.f32 %v628, 0.0
        %s631 = scalar_lea.vmem %s1, 16
        %v632 = vld [vmem:[%s631] sm:$0xff]
        %v633 = vld [vmem:[%s631 + $0x8] sm:$0xff]
        %635 = vset.pattern.permute.xlu0 0
        %636 = vperm.xlu0 %635, %v632
        %v637 = vpop.permute.xlu0 %636
        %640 = vset.pattern.permute.xlu0 0
        %641 = vperm.xlu0 %640, %v633
        %v642 = vpop.permute.xlu0 %641
        %v644 = vmul.f32 %v637, %v626
        %v645 = vmul.f32 %v642, %v626
        %648 = vrot.lane.b32.xlu0 %v644, 127
        %v649 = vpop.permute.xlu0 %648
        %650 = vrot.lane.b32.xlu0 %v645, 127
        %v651 = vpop.permute.xlu0 %650
        %v654 = vadd.f32 %v629, %v649
        %v655 = vadd.f32 %v630, %v651
        %s656 = scalar_lea.vmem %s1, 32
        %v657 = vld [vmem:[%s656] sm:$0xff]
        %v658 = vld [vmem:[%s656 + $0x8] sm:$0xff]
        %660 = vset.pattern.permute.xlu0 0
        %661 = vperm.xlu0 %660, %v657
        %v662 = vpop.permute.xlu0 %661
        %665 = vset.pattern.permute.xlu0 0
        %666 = vperm.xlu0 %665, %v658
        %v667 = vpop.permute.xlu0 %666
        %v669 = vmul.f32 %v662, %v626
        %v670 = vmul.f32 %v667, %v626
        %673 = vrot.lane.b32.xlu0 %v669, 126
        %v674 = vpop.permute.xlu0 %673
        %675 = vrot.lane.b32.xlu0 %v670, 126
        %v676 = vpop.permute.xlu0 %675
        %v679 = vadd.f32 %v654, %v674
        %v680 = vadd.f32 %v655, %v676
        %s681 = sadd.s32 %s604, 1
        %s682 = scalar_lea.vmem %s597, %s681
        %v683 = vld [vmem:[%s682] sm:$0x1]
        %s684 = scalar_lea.vmem %s1, 48
        %v685 = vld [vmem:[%s684] sm:$0xff]
        %v686 = vld [vmem:[%s684 + $0x8] sm:$0xff]
        %688 = vset.pattern.permute.xlu0 0
        %689 = vperm.xlu0 %688, %v685
        %v690 = vpop.permute.xlu0 %689
        %693 = vset.pattern.permute.xlu0 0
        %694 = vperm.xlu0 %693, %v686
        %v695 = vpop.permute.xlu0 %694
        %v697 = vlaneseq
        %v698 = vshrl.u32 %v697, 7
        %v699 = vsub.s32 0, %v698
        %v700 = vrot.slane %v683, %v699
        %v701 = vmul.f32 %v690, %v700
        %v702 = vmul.f32 %v695, %v700
        %v703 = vadd.f32 %v679, %v701
        %v704 = vadd.f32 %v680, %v702
        %s705 = scalar_lea.vmem %s1, 64
        %v706 = vld [vmem:[%s705] sm:$0xff]
        %v707 = vld [vmem:[%s705 + $0x8] sm:$0xff]
        %709 = vset.pattern.permute.xlu0 0
        %710 = vperm.xlu0 %709, %v706
        %v711 = vpop.permute.xlu0 %710
        %714 = vset.pattern.permute.xlu0 0
        %715 = vperm.xlu0 %714, %v707
        %v716 = vpop.permute.xlu0 %715
        %v718 = vmul.f32 %v711, %v700
        %v719 = vmul.f32 %v716, %v700
        %722 = vrot.lane.b32.xlu0 %v718, 127
        %v723 = vpop.permute.xlu0 %722
        %724 = vrot.lane.b32.xlu0 %v719, 127
        %v725 = vpop.permute.xlu0 %724
        %v728 = vadd.f32 %v703, %v723
        %v729 = vadd.f32 %v704, %v725
        %s730 = scalar_lea.vmem %s1, 80
        %v731 = vld [vmem:[%s730] sm:$0xff]
        %v732 = vld [vmem:[%s730 + $0x8] sm:$0xff]
        %734 = vset.pattern.permute.xlu0 0
        %735 = vperm.xlu0 %734, %v731
        %v736 = vpop.permute.xlu0 %735
        %739 = vset.pattern.permute.xlu0 0
        %740 = vperm.xlu0 %739, %v732
        %v741 = vpop.permute.xlu0 %740
        %v743 = vmul.f32 %v736, %v700
        %v744 = vmul.f32 %v741, %v700
        %747 = vrot.lane.b32.xlu0 %v743, 126
        %v748 = vpop.permute.xlu0 %747
        %749 = vrot.lane.b32.xlu0 %v744, 126
        %v750 = vpop.permute.xlu0 %749
        %v753 = vadd.f32 %v728, %v748
        %v754 = vadd.f32 %v729, %v750
        %s755 = sadd.s32 %s604, 2
        %s756 = scalar_lea.vmem %s597, %s755
        %v757 = vld [vmem:[%s756] sm:$0x1]
        %s758 = scalar_lea.vmem %s1, 96
        %v759 = vld [vmem:[%s758] sm:$0xff]
        %v760 = vld [vmem:[%s758 + $0x8] sm:$0xff]
        %762 = vset.pattern.permute.xlu0 0
        %763 = vperm.xlu0 %762, %v759
        %v764 = vpop.permute.xlu0 %763
        %767 = vset.pattern.permute.xlu0 0
        %768 = vperm.xlu0 %767, %v760
        %v769 = vpop.permute.xlu0 %768
        %v771 = vlaneseq
        %v772 = vshrl.u32 %v771, 7
        %v773 = vsub.s32 0, %v772
        %v774 = vrot.slane %v757, %v773
        %v775 = vmul.f32 %v764, %v774
        %v776 = vmul.f32 %v769, %v774
        %v777 = vadd.f32 %v753, %v775
        %v778 = vadd.f32 %v754, %v776
        %s779 = scalar_lea.vmem %s1, 112
        %v780 = vld [vmem:[%s779] sm:$0xff]
        %v781 = vld [vmem:[%s779 + $0x8] sm:$0xff]
        %783 = vset.pattern.permute.xlu0 0
        %784 = vperm.xlu0 %783, %v780
        %v785 = vpop.permute.xlu0 %784
        %788 = vset.pattern.permute.xlu0 0
        %789 = vperm.xlu0 %788, %v781
        %v790 = vpop.permute.xlu0 %789
        %v792 = vmul.f32 %v785, %v774
        %v793 = vmul.f32 %v790, %v774
        %796 = vrot.lane.b32.xlu0 %v792, 127
        %v797 = vpop.permute.xlu0 %796
        %798 = vrot.lane.b32.xlu0 %v793, 127
        %v799 = vpop.permute.xlu0 %798
        %v802 = vadd.f32 %v777, %v797
        %v803 = vadd.f32 %v778, %v799
        %s804 = scalar_lea.vmem %s1, 128
        %v805 = vld [vmem:[%s804] sm:$0xff]
        %v806 = vld [vmem:[%s804 + $0x8] sm:$0xff]
        %808 = vset.pattern.permute.xlu0 0
        %809 = vperm.xlu0 %808, %v805
        %v810 = vpop.permute.xlu0 %809
        %813 = vset.pattern.permute.xlu0 0
        %814 = vperm.xlu0 %813, %v806
        %v815 = vpop.permute.xlu0 %814
        %v817 = vmul.f32 %v810, %v774
        %v818 = vmul.f32 %v815, %v774
        %821 = vrot.lane.b32.xlu0 %v817, 126
        %v822 = vpop.permute.xlu0 %821
        %823 = vrot.lane.b32.xlu0 %v818, 126
        %v824 = vpop.permute.xlu0 %823
        %v827 = vadd.f32 %v802, %v822
        %v828 = vadd.f32 %v803, %v824
        %v829 = vld [vmem:[%s2] sm:$0xff]
        %v830 = vld [vmem:[%s2 + $0x8] sm:$0xff]
        %832 = vset.pattern.permute.xlu0 0
        %833 = vperm.xlu0 %832, %v829
        %v834 = vpop.permute.xlu0 %833
        %837 = vset.pattern.permute.xlu0 0
        %838 = vperm.xlu0 %837, %v830
        %v839 = vpop.permute.xlu0 %838
        %v841 = vadd.f32 %v827, %v834
        %v842 = vadd.f32 %v828, %v839
        %v843 = vmax.f32 %v841, 0.0
        %v844 = vmax.f32 %v842, 0.0
        %s845 = smul.u32 %s604, 16
        %s846 = scalar_lea.vmem [#allocation2], %s845
        %vm847 = vcmask 211968
        %848 = vst.msk [vmem:[%s846] sm:$0xff] %vm847, %v843
        %849 = vst.msk [vmem:[%s846 + $0x8] sm:$0xff] %vm847, %v844
      $region101: #{net8_forward.1} parent=95 // loop_footer
        %s608 = sadd.s32 1, %s604
      $region102: #{net8_forward.1} parent=95 // loop_footer_branch
        %603 = sbr.rel target = $region98
      $region103: #{net8_forward.1} parent=95 // loop_exit
        _
      loop: start=0, step=1, limit=24
      $region104: #{net8_forward.1} parent=95 // loop_pre_header
        _
      $region105: #{net8_forward.1} parent=95 // loop_header
        %s851 = sphi 0, %s855
        %p852 = scmp.ge.s32.totalorder %s851, 24
      $region106: #{net8_forward.1} parent=95 // loop_header_branch
        %854 = sbr.rel (%p852) target = $region110
      $region107: #{net8_forward.1} parent=95 // loop_body
        %s856 = smul.u32 %s851, 16
        %s857 = scalar_lea.vmem [#allocation2], %s856
        %v858 = vld [vmem:[%s857] sm:$0xff]
        %v859 = vld [vmem:[%s857 + $0x8] sm:$0xff]
        %v860 = vld [vmem:[%s3] sm:$0xff]
        %v861 = vld [vmem:[%s3 + $0x8] sm:$0x3]
        %s862 = scalar_lea.vmem %s3, 16
        %v863 = vld [vmem:[%s862] sm:$0xff]
        %v864 = vld [vmem:[%s862 + $0x8] sm:$0x3]
        %867 = vrot.lane.b32.xlu0 %v858, 127
        %v868 = vpop.permute.xlu0 %867
        %869 = vrot.lane.b32.xlu0 %v859, 127
        %v870 = vpop.permute.xlu0 %869
        %vm873 = vcmask 130048
        %v875 = vsel %vm873, %v863, 0
        %v878 = vsel %vm873, %v864, 0
        %880 = vmatprep.subr.mxu0 0.0
        %881 = vmatpush1.msra.mxu0 %v868
        %882 = vmatprep.subr.mxu0 0.0
        %883 = vmatpush1.msra.mxu0 %v870
        %884 = vmatprep.subr.mxu0 0.0
        %885 = vmatpush1.msra.mxu0 0.0
        %886 = vmatprep.subr.mxu0 0.0
        %887 = vmatpush1.msra.mxu0 0.0
        %888 = vmatprep.subr.mxu0 0.0
        %889 = vmatpush1.msra.mxu0 0.0
        %890 = vmatprep.subr.mxu0 0.0
        %891 = vmatpush1.msra.mxu0 0.0
        %892 = vmatprep.subr.mxu0 0.0
        %893 = vmatpush1.msra.mxu0 0.0
        %894 = vmatprep.subr.mxu0 0.0
        %895 = vmatpush1.msra.mxu0 0.0
        %896 = vmatprep.subr.mxu0 0.0
        %897 = vmatpush1.msra.mxu0 0.0
        %898 = vmatprep.subr.mxu0 0.0
        %899 = vmatpush1.msra.mxu0 0.0
        %900 = vmatprep.subr.mxu0 0.0
        %901 = vmatpush1.msra.mxu0 0.0
        %902 = vmatprep.subr.mxu0 0.0
        %903 = vmatpush1.msra.mxu0 0.0
        %904 = vmatprep.subr.mxu0 0.0
        %905 = vmatpush1.msra.mxu0 0.0
        %906 = vmatprep.subr.mxu0 0.0
        %907 = vmatpush1.msra.mxu0 0.0
        %908 = vmatprep.subr.mxu0 0.0
        %909 = vmatpush1.msra.mxu0 0.0
        %910 = vmatprep.subr.mxu0 0.0
        %911 = vmatpush1.msra.mxu0 0.0
        %912 = vmatprep.subr.mxu0 0.0
        %913 = vmatpush1.msra.mxu0 0.0
        %914 = vmatprep.subr.mxu0 0.0
        %915 = vmatpush1.msra.mxu0 0.0
        %916 = vmatprep.subr.mxu0 0.0
        %917 = vmatpush1.msra.mxu0 0.0
        %918 = vmatprep.subr.mxu0 0.0
        %919 = vmatpush1.msra.mxu0 0.0
        %920 = vmatprep.subr.mxu0 0.0
        %921 = vmatpush1.msra.mxu0 0.0
        %922 = vmatprep.subr.mxu0 0.0
        %923 = vmatpush1.msra.mxu0 0.0
        %924 = vmatprep.subr.mxu0 0.0
        %925 = vmatpush1.msra.mxu0 0.0
        %926 = vmatprep.subr.mxu0 0.0
        %927 = vmatpush1.msra.mxu0 0.0
        %928 = vmatprep.subr.mxu0 0.0
        %929 = vmatpush1.msra.mxu0 0.0
        %930 = vmatprep.subr.mxu0 0.0
        %931 = vmatpush1.msra.mxu0 0.0
        %932 = vmatprep.subr.mxu0 0.0
        %933 = vmatpush1.msra.mxu0 0.0
        %934 = vmatprep.subr.mxu0 0.0
        %935 = vmatpush1.msra.mxu0 0.0
        %936 = vmatprep.subr.mxu0 0.0
        %937 = vmatpush1.msra.mxu0 0.0
        %938 = vmatprep.subr.mxu0 0.0
        %939 = vmatpush1.msra.mxu0 0.0
        %940 = vmatprep.subr.mxu0 0.0
        %941 = vmatpush1.msra.mxu0 0.0
        %942 = vmatprep.subr.mxu0 0.0
        %943 = vmatpush1.msra.mxu0 0.0
        %944 = vmatprep.mubr.f32.mxu0 0.0
        %945 = vmatmul.mubr.f32.gmra.mrb[0].mxu0 %v875
        %v946 = vpop.f32.mrb[0].mxu0
        %v947 = vadd.f32 0.0, %v946
        %v948 = vpop.f32.mrb[0].mxu0
        %949 = vmatprep.mubr.f32.mxu0 0.0
        %950 = vmatmul.mubr.f32.gmra.mrb[0].mxu0 %v878
        %v951 = vpop.f32.mrb[0].mxu0
        %v952 = vadd.f32 0.0, %v951
        %v953 = vpop.f32.mrb[0].mxu0
        %954 = vdwg.mxu0
        %v956 = vsel %vm873, %v860, 0
        %v959 = vsel %vm873, %v861, 0
        %961 = vmatprep.subr.mxu0 0.0
        %962 = vmatpush1.msra.mxu0 %v858
        %963 = vmatprep.subr.mxu0 0.0
        %964 = vmatpush1.msra.mxu0 %v859
        %965 = vmatprep.subr.mxu0 0.0
        %966 = vmatpush1.msra.mxu0 0.0
        %967 = vmatprep.subr.mxu0 0.0
        %968 = vmatpush1.msra.mxu0 0.0
        %969 = vmatprep.subr.mxu0 0.0
        %970 = vmatpush1.msra.mxu0 0.0
        %971 = vmatprep.subr.mxu0 0.0
        %972 = vmatpush1.msra.mxu0 0.0
        %973 = vmatprep.subr.mxu0 0.0
        %974 = vmatpush1.msra.mxu0 0.0
        %975 = vmatprep.subr.mxu0 0.0
        %976 = vmatpush1.msra.mxu0 0.0
        %977 = vmatprep.subr.mxu0 0.0
        %978 = vmatpush1.msra.mxu0 0.0
        %979 = vmatprep.subr.mxu0 0.0
        %980 = vmatpush1.msra.mxu0 0.0
        %981 = vmatprep.subr.mxu0 0.0
        %982 = vmatpush1.msra.mxu0 0.0
        %983 = vmatprep.subr.mxu0 0.0
        %984 = vmatpush1.msra.mxu0 0.0
        %985 = vmatprep.subr.mxu0 0.0
        %986 = vmatpush1.msra.mxu0 0.0
        %987 = vmatprep.subr.mxu0 0.0
        %988 = vmatpush1.msra.mxu0 0.0
        %989 = vmatprep.subr.mxu0 0.0
        %990 = vmatpush1.msra.mxu0 0.0
        %991 = vmatprep.subr.mxu0 0.0
        %992 = vmatpush1.msra.mxu0 0.0
        %993 = vmatprep.subr.mxu0 0.0
        %994 = vmatpush1.msra.mxu0 0.0
        %995 = vmatprep.subr.mxu0 0.0
        %996 = vmatpush1.msra.mxu0 0.0
        %997 = vmatprep.subr.mxu0 0.0
        %998 = vmatpush1.msra.mxu0 0.0
        %999 = vmatprep.subr.mxu0 0.0
        %1000 = vmatpush1.msra.mxu0 0.0
        %1001 = vmatprep.subr.mxu0 0.0
        %1002 = vmatpush1.msra.mxu0 0.0
        %1003 = vmatprep.subr.mxu0 0.0
        %1004 = vmatpush1.msra.mxu0 0.0
        %1005 = vmatprep.subr.mxu0 0.0
        %1006 = vmatpush1.msra.mxu0 0.0
        %1007 = vmatprep.subr.mxu0 0.0
        %1008 = vmatpush1.msra.mxu0 0.0
        %1009 = vmatprep.subr.mxu0 0.0
        %1010 = vmatpush1.msra.mxu0 0.0
        %1011 = vmatprep.subr.mxu0 0.0
        %1012 = vmatpush1.msra.mxu0 0.0
        %1013 = vmatprep.subr.mxu0 0.0
        %1014 = vmatpush1.msra.mxu0 0.0
        %1015 = vmatprep.subr.mxu0 0.0
        %1016 = vmatpush1.msra.mxu0 0.0
        %1017 = vmatprep.subr.mxu0 0.0
        %1018 = vmatpush1.msra.mxu0 0.0
        %1019 = vmatprep.subr.mxu0 0.0
        %1020 = vmatpush1.msra.mxu0 0.0
        %1021 = vmatprep.subr.mxu0 0.0
        %1022 = vmatpush1.msra.mxu0 0.0
        %1023 = vmatprep.subr.mxu0 0.0
        %1024 = vmatpush1.msra.mxu0 0.0
        %1025 = vmatprep.mubr.f32.mxu0 0.0
        %1026 = vmatmul.mubr.f32.gmra.mrb[0].mxu0 %v956
        %v1027 = vpop.f32.mrb[0].mxu0
        %v1028 = vadd.f32 %v947, %v1027
        %v1029 = vpop.f32.mrb[0].mxu0
        %1030 = vmatprep.mubr.f32.mxu0 0.0
        %1031 = vmatmul.mubr.f32.gmra.mrb[0].mxu0 %v959
        %v1032 = vpop.f32.mrb[0].mxu0
        %v1033 = vadd.f32 %v952, %v1032
        %v1034 = vpop.f32.mrb[0].mxu0
        %1035 = vdwg.mxu0
        %s1036 = scalar_lea.vmem %s3, 32
        %v1037 = vld [vmem:[%s1036] sm:$0xff]
        %v1038 = vld [vmem:[%s1036 + $0x8] sm:$0x3]
        %1039 = vrot.lane.b32.xlu0 %v858, 126
        %v1040 = vpop.permute.xlu0 %1039
        %1041 = vrot.lane.b32.xlu0 %v859, 126
        %v1042 = vpop.permute.xlu0 %1041
        %v1046 = vsel %vm873, %v1037, 0
        %v1049 = vsel %vm873, %v1038, 0
        %1051 = vmatprep.subr.mxu0 0.0
        %1052 = vmatpush1.msra.mxu0 %v1040
        %1053 = vmatprep.subr.mxu0 0.0
        %1054 = vmatpush1.msra.mxu0 %v1042
        %1055 = vmatprep.subr.mxu0 0.0
        %1056 = vmatpush1.msra.mxu0 0.0
        %1057 = vmatprep.subr.mxu0 0.0
        %1058 = vmatpush1.msra.mxu0 0.0
        %1059 = vmatprep.subr.mxu0 0.0
        %1060 = vmatpush1.msra.mxu0 0.0
        %1061 = vmatprep.subr.mxu0 0.0
        %1062 = vmatpush1.msra.mxu0 0.0
        %1063 = vmatprep.subr.mxu0 0.0
        %1064 = vmatpush1.msra.mxu0 0.0
        %1065 = vmatprep.subr.mxu0 0.0
        %1066 = vmatpush1.msra.mxu0 0.0
        %1067 = vmatprep.subr.mxu0 0.0
        %1068 = vmatpush1.msra.mxu0 0.0
        %1069 = vmatprep.subr.mxu0 0.0
        %1070 = vmatpush1.msra.mxu0 0.0
        %1071 = vmatprep.subr.mxu0 0.0
        %1072 = vmatpush1.msra.mxu0 0.0
        %1073 = vmatprep.subr.mxu0 0.0
        %1074 = vmatpush1.msra.mxu0 0.0
        %1075 = vmatprep.subr.mxu0 0.0
        %1076 = vmatpush1.msra.mxu0 0.0
        %1077 = vmatprep.subr.mxu0 0.0
        %1078 = vmatpush1.msra.mxu0 0.0
        %1079 = vmatprep.subr.mxu0 0.0
        %1080 = vmatpush1.msra.mxu0 0.0
        %1081 = vmatprep.subr.mxu0 0.0
        %1082 = vmatpush1.msra.mxu0 0.0
        %1083 = vmatprep.subr.mxu0 0.0
        %1084 = vmatpush1.msra.mxu0 0.0
        %1085 = vmatprep.subr.mxu0 0.0
        %1086 = vmatpush1.msra.mxu0 0.0
        %1087 = vmatprep.subr.mxu0 0.0
        %1088 = vmatpush1.msra.mxu0 0.0
        %1089 = vmatprep.subr.mxu0 0.0
        %1090 = vmatpush1.msra.mxu0 0.0
        %1091 = vmatprep.subr.mxu0 0.0
        %1092 = vmatpush1.msra.mxu0 0.0
        %1093 = vmatprep.subr.mxu0 0.0
        %1094 = vmatpush1.msra.mxu0 0.0
        %1095 = vmatprep.subr.mxu0 0.0
        %1096 = vmatpush1.msra.mxu0 0.0
        %1097 = vmatprep.subr.mxu0 0.0
        %1098 = vmatpush1.msra.mxu0 0.0
        %1099 = vmatprep.subr.mxu0 0.0
        %1100 = vmatpush1.msra.mxu0 0.0
        %1101 = vmatprep.subr.mxu0 0.0
        %1102 = vmatpush1.msra.mxu0 0.0
        %1103 = vmatprep.subr.mxu0 0.0
        %1104 = vmatpush1.msra.mxu0 0.0
        %1105 = vmatprep.subr.mxu0 0.0
        %1106 = vmatpush1.msra.mxu0 0.0
        %1107 = vmatprep.subr.mxu0 0.0
        %1108 = vmatpush1.msra.mxu0 0.0
        %1109 = vmatprep.subr.mxu0 0.0
        %1110 = vmatpush1.msra.mxu0 0.0
        %1111 = vmatprep.subr.mxu0 0.0
        %1112 = vmatpush1.msra.mxu0 0.0
        %1113 = vmatprep.subr.mxu0 0.0
        %1114 = vmatpush1.msra.mxu0 0.0
        %1115 = vmatprep.mubr.f32.mxu0 0.0
        %1116 = vmatmul.mubr.f32.gmra.mrb[0].mxu0 %v1046
        %v1117 = vpop.f32.mrb[0].mxu0
        %v1118 = vadd.f32 0.0, %v1117
        %v1119 = vpop.f32.mrb[0].mxu0
        %1120 = vmatprep.mubr.f32.mxu0 0.0
        %1121 = vmatmul.mubr.f32.gmra.mrb[0].mxu0 %v1049
        %v1122 = vpop.f32.mrb[0].mxu0
        %v1123 = vadd.f32 0.0, %v1122
        %v1124 = vpop.f32.mrb[0].mxu0
        %1125 = vdwg.mxu0
        %v1126 = vadd.f32 %v1028, %v1118
        %v1127 = vadd.f32 %v1033, %v1123
        %s1128 = sadd.s32 %s851, 1
        %s1129 = smul.u32 %s1128, 16
        %s1130 = scalar_lea.vmem [#allocation2], %s1129
        %v1131 = vld [vmem:[%s1130] sm:$0xff]
        %v1132 = vld [vmem:[%s1130 + $0x8] sm:$0xff]
        %s1133 = scalar_lea.vmem %s3, 48
        %v1134 = vld [vmem:[%s1133] sm:$0xff]
        %v1135 = vld [vmem:[%s1133 + $0x8] sm:$0x3]
        %v1137 = vsel %vm873, %v1134, 0
        %v1140 = vsel %vm873, %v1135, 0
        %1142 = vmatprep.subr.mxu0 0.0
        %1143 = vmatpush1.msra.mxu0 %v1131
        %1144 = vmatprep.subr.mxu0 0.0
        %1145 = vmatpush1.msra.mxu0 %v1132
        %1146 = vmatprep.subr.mxu0 0.0
        %1147 = vmatpush1.msra.mxu0 0.0
        %1148 = vmatprep.subr.mxu0 0.0
        %1149 = vmatpush1.msra.mxu0 0.0
        %1150 = vmatprep.subr.mxu0 0.0
        %1151 = vmatpush1.msra.mxu0 0.0
        %1152 = vmatprep.subr.mxu0 0.0
        %1153 = vmatpush1.msra.mxu0 0.0
        %1154 = vmatprep.subr.mxu0 0.0
        %1155 = vmatpush1.msra.mxu0 0.0
        %1156 = vmatprep.subr.mxu0 0.0
        %1157 = vmatpush1.msra.mxu0 0.0
        %1158 = vmatprep.subr.mxu0 0.0
        %1159 = vmatpush1.msra.mxu0 0.0
        %1160 = vmatprep.subr.mxu0 0.0
        %1161 = vmatpush1.msra.mxu0 0.0
        %1162 = vmatprep.subr.mxu0 0.0
        %1163 = vmatpush1.msra.mxu0 0.0
        %1164 = vmatprep.subr.mxu0 0.0
        %1165 = vmatpush1.msra.mxu0 0.0
        %1166 = vmatprep.subr.mxu0 0.0
        %1167 = vmatpush1.msra.mxu0 0.0
        %1168 = vmatprep.subr.mxu0 0.0
        %1169 = vmatpush1.msra.mxu0 0.0
        %1170 = vmatprep.subr.mxu0 0.0
        %1171 = vmatpush1.msra.mxu0 0.0
        %1172 = vmatprep.subr.mxu0 0.0
        %1173 = vmatpush1.msra.mxu0 0.0
        %1174 = vmatprep.subr.mxu0 0.0
        %1175 = vmatpush1.msra.mxu0 0.0
        %1176 = vmatprep.subr.mxu0 0.0
        %1177 = vmatpush1.msra.mxu0 0.0
        %1178 = vmatprep.subr.mxu0 0.0
        %1179 = vmatpush1.msra.mxu0 0.0
        %1180 = vmatprep.subr.mxu0 0.0
        %1181 = vmatpush1.msra.mxu0 0.0
        %1182 = vmatprep.subr.mxu0 0.0
        %1183 = vmatpush1.msra.mxu0 0.0
        %1184 = vmatprep.subr.mxu0 0.0
        %1185 = vmatpush1.msra.mxu0 0.0
        %1186 = vmatprep.subr.mxu0 0.0
        %1187 = vmatpush1.msra.mxu0 0.0
        %1188 = vmatprep.subr.mxu0 0.0
        %1189 = vmatpush1.msra.mxu0 0.0
        %1190 = vmatprep.subr.mxu0 0.0
        %1191 = vmatpush1.msra.mxu0 0.0
        %1192 = vmatprep.subr.mxu0 0.0
        %1193 = vmatpush1.msra.mxu0 0.0
        %1194 = vmatprep.subr.mxu0 0.0
        %1195 = vmatpush1.msra.mxu0 0.0
        %1196 = vmatprep.subr.mxu0 0.0
        %1197 = vmatpush1.msra.mxu0 0.0
        %1198 = vmatprep.subr.mxu0 0.0
        %1199 = vmatpush1.msra.mxu0 0.0
        %1200 = vmatprep.subr.mxu0 0.0
        %1201 = vmatpush1.msra.mxu0 0.0
        %1202 = vmatprep.subr.mxu0 0.0
        %1203 = vmatpush1.msra.mxu0 0.0
        %1204 = vmatprep.subr.mxu0 0.0
        %1205 = vmatpush1.msra.mxu0 0.0
        %1206 = vmatprep.mubr.f32.mxu0 0.0
        %1207 = vmatmul.mubr.f32.gmra.mrb[0].mxu0 %v1137
        %v1208 = vpop.f32.mrb[0].mxu0
        %v1209 = vadd.f32 0.0, %v1208
        %v1210 = vpop.f32.mrb[0].mxu0
        %1211 = vmatprep.mubr.f32.mxu0 0.0
        %1212 = vmatmul.mubr.f32.gmra.mrb[0].mxu0 %v1140
        %v1213 = vpop.f32.mrb[0].mxu0
        %v1214 = vadd.f32 0.0, %v1213
        %v1215 = vpop.f32.mrb[0].mxu0
        %1216 = vdwg.mxu0
        %v1217 = vadd.f32 %v1126, %v1209
        %v1218 = vadd.f32 %v1127, %v1214
        %s1219 = scalar_lea.vmem %s3, 64
        %v1220 = vld [vmem:[%s1219] sm:$0xff]
        %v1221 = vld [vmem:[%s1219 + $0x8] sm:$0x3]
        %1224 = vrot.lane.b32.xlu0 %v1131, 127
        %v1225 = vpop.permute.xlu0 %1224
        %1226 = vrot.lane.b32.xlu0 %v1132, 127
        %v1227 = vpop.permute.xlu0 %1226
        %v1231 = vsel %vm873, %v1220, 0
        %v1234 = vsel %vm873, %v1221, 0
        %1236 = vmatprep.subr.mxu0 0.0
        %1237 = vmatpush1.msra.mxu0 %v1225
        %1238 = vmatprep.subr.mxu0 0.0
        %1239 = vmatpush1.msra.mxu0 %v1227
        %1240 = vmatprep.subr.mxu0 0.0
        %1241 = vmatpush1.msra.mxu0 0.0
        %1242 = vmatprep.subr.mxu0 0.0
        %1243 = vmatpush1.msra.mxu0 0.0
        %1244 = vmatprep.subr.mxu0 0.0
        %1245 = vmatpush1.msra.mxu0 0.0
        %1246 = vmatprep.subr.mxu0 0.0
        %1247 = vmatpush1.msra.mxu0 0.0
        %1248 = vmatprep.subr.mxu0 0.0
        %1249 = vmatpush1.msra.mxu0 0.0
        %1250 = vmatprep.subr.mxu0 0.0
        %1251 = vmatpush1.msra.mxu0 0.0
        %1252 = vmatprep.subr.mxu0 0.0
        %1253 = vmatpush1.msra.mxu0 0.0
        %1254 = vmatprep.subr.mxu0 0.0
        %1255 = vmatpush1.msra.mxu0 0.0
        %1256 = vmatprep.subr.mxu0 0.0
        %1257 = vmatpush1.msra.mxu0 0.0
        %1258 = vmatprep.subr.mxu0 0.0
        %1259 = vmatpush1.msra.mxu0 0.0
        %1260 = vmatprep.subr.mxu0 0.0
        %1261 = vmatpush1.msra.mxu0 0.0
        %1262 = vmatprep.subr.mxu0 0.0
        %1263 = vmatpush1.msra.mxu0 0.0
        %1264 = vmatprep.subr.mxu0 0.0
        %1265 = vmatpush1.msra.mxu0 0.0
        %1266 = vmatprep.subr.mxu0 0.0
        %1267 = vmatpush1.msra.mxu0 0.0
        %1268 = vmatprep.subr.mxu0 0.0
        %1269 = vmatpush1.msra.mxu0 0.0
        %1270 = vmatprep.subr.mxu0 0.0
        %1271 = vmatpush1.msra.mxu0 0.0
        %1272 = vmatprep.subr.mxu0 0.0
        %1273 = vmatpush1.msra.mxu0 0.0
        %1274 = vmatprep.subr.mxu0 0.0
        %1275 = vmatpush1.msra.mxu0 0.0
        %1276 = vmatprep.subr.mxu0 0.0
        %1277 = vmatpush1.msra.mxu0 0.0
        %1278 = vmatprep.subr.mxu0 0.0
        %1279 = vmatpush1.msra.mxu0 0.0
        %1280 = vmatprep.subr.mxu0 0.0
        %1281 = vmatpush1.msra.mxu0 0.0
        %1282 = vmatprep.subr.mxu0 0.0
        %1283 = vmatpush1.msra.mxu0 0.0
        %1284 = vmatprep.subr.mxu0 0.0
        %1285 = vmatpush1.msra.mxu0 0.0
        %1286 = vmatprep.subr.mxu0 0.0
        %1287 = vmatpush1.msra.mxu0 0.0
        %1288 = vmatprep.subr.mxu0 0.0
        %1289 = vmatpush1.msra.mxu0 0.0
        %1290 = vmatprep.subr.mxu0 0.0
        %1291 = vmatpush1.msra.mxu0 0.0
        %1292 = vmatprep.subr.mxu0 0.0
        %1293 = vmatpush1.msra.mxu0 0.0
        %1294 = vmatprep.subr.mxu0 0.0
        %1295 = vmatpush1.msra.mxu0 0.0
        %1296 = vmatprep.subr.mxu0 0.0
        %1297 = vmatpush1.msra.mxu0 0.0
        %1298 = vmatprep.subr.mxu0 0.0
        %1299 = vmatpush1.msra.mxu0 0.0
        %1300 = vmatprep.mubr.f32.mxu0 0.0
        %1301 = vmatmul.mubr.f32.gmra.mrb[0].mxu0 %v1231
        %v1302 = vpop.f32.mrb[0].mxu0
        %v1303 = vadd.f32 0.0, %v1302
        %v1304 = vpop.f32.mrb[0].mxu0
        %1305 = vmatprep.mubr.f32.mxu0 0.0
        %1306 = vmatmul.mubr.f32.gmra.mrb[0].mxu0 %v1234
        %v1307 = vpop.f32.mrb[0].mxu0
        %v1308 = vadd.f32 0.0, %v1307
        %v1309 = vpop.f32.mrb[0].mxu0
        %1310 = vdwg.mxu0
        %v1311 = vadd.f32 %v1217, %v1303
        %v1312 = vadd.f32 %v1218, %v1308
        %s1313 = scalar_lea.vmem %s3, 80
        %v1314 = vld [vmem:[%s1313] sm:$0xff]
        %v1315 = vld [vmem:[%s1313 + $0x8] sm:$0x3]
        %1316 = vrot.lane.b32.xlu0 %v1131, 126
        %v1317 = vpop.permute.xlu0 %1316
        %1318 = vrot.lane.b32.xlu0 %v1132, 126
        %v1319 = vpop.permute.xlu0 %1318
        %v1323 = vsel %vm873, %v1314, 0
        %v1326 = vsel %vm873, %v1315, 0
        %1328 = vmatprep.subr.mxu0 0.0
        %1329 = vmatpush1.msra.mxu0 %v1317
        %1330 = vmatprep.subr.mxu0 0.0
        %1331 = vmatpush1.msra.mxu0 %v1319
        %1332 = vmatprep.subr.mxu0 0.0
        %1333 = vmatpush1.msra.mxu0 0.0
        %1334 = vmatprep.subr.mxu0 0.0
        %1335 = vmatpush1.msra.mxu0 0.0
        %1336 = vmatprep.subr.mxu0 0.0
        %1337 = vmatpush1.msra.mxu0 0.0
        %1338 = vmatprep.subr.mxu0 0.0
        %1339 = vmatpush1.msra.mxu0 0.0
        %1340 = vmatprep.subr.mxu0 0.0
        %1341 = vmatpush1.msra.mxu0 0.0
        %1342 = vmatprep.subr.mxu0 0.0
        %1343 = vmatpush1.msra.mxu0 0.0
        %1344 = vmatprep.subr.mxu0 0.0
        %1345 = vmatpush1.msra.mxu0 0.0
        %1346 = vmatprep.subr.mxu0 0.0
        %1347 = vmatpush1.msra.mxu0 0.0
        %1348 = vmatprep.subr.mxu0 0.0
        %1349 = vmatpush1.msra.mxu0 0.0
        %1350 = vmatprep.subr.mxu0 0.0
        %1351 = vmatpush1.msra.mxu0 0.0
        %1352 = vmatprep.subr.mxu0 0.0
        %1353 = vmatpush1.msra.mxu0 0.0
        %1354 = vmatprep.subr.mxu0 0.0
        %1355 = vmatpush1.msra.mxu0 0.0
        %1356 = vmatprep.subr.mxu0 0.0
        %1357 = vmatpush1.msra.mxu0 0.0
        %1358 = vmatprep.subr.mxu0 0.0
        %1359 = vmatpush1.msra.mxu0 0.0
        %1360 = vmatprep.subr.mxu0 0.0
        %1361 = vmatpush1.msra.mxu0 0.0
        %1362 = vmatprep.subr.mxu0 0.0
        %1363 = vmatpush1.msra.mxu0 0.0
        %1364 = vmatprep.subr.mxu0 0.0
        %1365 = vmatpush1.msra.mxu0 0.0
        %1366 = vmatprep.subr.mxu0 0.0
        %1367 = vmatpush1.msra.mxu0 0.0
        %1368 = vmatprep.subr.mxu0 0.0
        %1369 = vmatpush1.msra.mxu0 0.0
        %1370 = vmatprep.subr.mxu0 0.0
        %1371 = vmatpush1.msra.mxu0 0.0
        %1372 = vmatprep.subr.mxu0 0.0
        %1373 = vmatpush1.msra.mxu0 0.0
        %1374 = vmatprep.subr.mxu0 0.0
        %1375 = vmatpush1.msra.mxu0 0.0
        %1376 = vmatprep.subr.mxu0 0.0
        %1377 = vmatpush1.msra.mxu0 0.0
        %1378 = vmatprep.subr.mxu0 0.0
        %1379 = vmatpush1.msra.mxu0 0.0
        %1380 = vmatprep.subr.mxu0 0.0
        %1381 = vmatpush1.msra.mxu0 0.0
        %1382 = vmatprep.subr.mxu0 0.0
        %1383 = vmatpush1.msra.mxu0 0.0
        %1384 = vmatprep.subr.mxu0 0.0
        %1385 = vmatpush1.msra.mxu0 0.0
        %1386 = vmatprep.subr.mxu0 0.0
        %1387 = vmatpush1.msra.mxu0 0.0
        %1388 = vmatprep.subr.mxu0 0.0
        %1389 = vmatpush1.msra.mxu0 0.0
        %1390 = vmatprep.subr.mxu0 0.0
        %1391 = vmatpush1.msra.mxu0 0.0
        %1392 = vmatprep.mubr.f32.mxu0 0.0
        %1393 = vmatmul.mubr.f32.gmra.mrb[0].mxu0 %v1323
        %v1394 = vpop.f32.mrb[0].mxu0
        %v1395 = vadd.f32 0.0, %v1394
        %v1396 = vpop.f32.mrb[0].mxu0
        %1397 = vmatprep.mubr.f32.mxu0 0.0
        %1398 = vmatmul.mubr.f32.gmra.mrb[0].mxu0 %v1326
        %v1399 = vpop.f32.mrb[0].mxu0
        %v1400 = vadd.f32 0.0, %v1399
        %v1401 = vpop.f32.mrb[0].mxu0
        %1402 = vdwg.mxu0
        %v1403 = vadd.f32 %v1311, %v1395
        %v1404 = vadd.f32 %v1312, %v1400
        %s1405 = sadd.s32 %s851, 2
        %s1406 = smul.u32 %s1405, 16
        %s1407 = scalar_lea.vmem [#allocation2], %s1406
        %v1408 = vld [vmem:[%s1407] sm:$0xff]
        %v1409 = vld [vmem:[%s1407 + $0x8] sm:$0xff]
        %s1410 = scalar_lea.vmem %s3, 96
        %v1411 = vld [vmem:[%s1410] sm:$0xff]
        %v1412 = vld [vmem:[%s1410 + $0x8] sm:$0x3]
        %v1414 = vsel %vm873, %v1411, 0
        %v1417 = vsel %vm873, %v1412, 0
        %1419 = vmatprep.subr.mxu0 0.0
        %1420 = vmatpush1.msra.mxu0 %v1408
        %1421 = vmatprep.subr.mxu0 0.0
        %1422 = vmatpush1.msra.mxu0 %v1409
        %1423 = vmatprep.subr.mxu0 0.0
        %1424 = vmatpush1.msra.mxu0 0.0
        %1425 = vmatprep.subr.mxu0 0.0
        %1426 = vmatpush1.msra.mxu0 0.0
        %1427 = vmatprep.subr.mxu0 0.0
        %1428 = vmatpush1.msra.mxu0 0.0
        %1429 = vmatprep.subr.mxu0 0.0
        %1430 = vmatpush1.msra.mxu0 0.0
        %1431 = vmatprep.subr.mxu0 0.0
        %1432 = vmatpush1.msra.mxu0 0.0
        %1433 = vmatprep.subr.mxu0 0.0
        %1434 = vmatpush1.msra.mxu0 0.0
        %1435 = vmatprep.subr.mxu0 0.0
        %1436 = vmatpush1.msra.mxu0 0.0
        %1437 = vmatprep.subr.mxu0 0.0
        %1438 = vmatpush1.msra.mxu0 0.0
        %1439 = vmatprep.subr.mxu0 0.0
        %1440 = vmatpush1.msra.mxu0 0.0
        %1441 = vmatprep.subr.mxu0 0.0
        %1442 = vmatpush1.msra.mxu0 0.0
        %1443 = vmatprep.subr.mxu0 0.0
        %1444 = vmatpush1.msra.mxu0 0.0
        %1445 = vmatprep.subr.mxu0 0.0
        %1446 = vmatpush1.msra.mxu0 0.0
        %1447 = vmatprep.subr.mxu0 0.0
        %1448 = vmatpush1.msra.mxu0 0.0
        %1449 = vmatprep.subr.mxu0 0.0
        %1450 = vmatpush1.msra.mxu0 0.0
        %1451 = vmatprep.subr.mxu0 0.0
        %1452 = vmatpush1.msra.mxu0 0.0
        %1453 = vmatprep.subr.mxu0 0.0
        %1454 = vmatpush1.msra.mxu0 0.0
        %1455 = vmatprep.subr.mxu0 0.0
        %1456 = vmatpush1.msra.mxu0 0.0
        %1457 = vmatprep.subr.mxu0 0.0
        %1458 = vmatpush1.msra.mxu0 0.0
        %1459 = vmatprep.subr.mxu0 0.0
        %1460 = vmatpush1.msra.mxu0 0.0
        %1461 = vmatprep.subr.mxu0 0.0
        %1462 = vmatpush1.msra.mxu0 0.0
        %1463 = vmatprep.subr.mxu0 0.0
        %1464 = vmatpush1.msra.mxu0 0.0
        %1465 = vmatprep.subr.mxu0 0.0
        %1466 = vmatpush1.msra.mxu0 0.0
        %1467 = vmatprep.subr.mxu0 0.0
        %1468 = vmatpush1.msra.mxu0 0.0
        %1469 = vmatprep.subr.mxu0 0.0
        %1470 = vmatpush1.msra.mxu0 0.0
        %1471 = vmatprep.subr.mxu0 0.0
        %1472 = vmatpush1.msra.mxu0 0.0
        %1473 = vmatprep.subr.mxu0 0.0
        %1474 = vmatpush1.msra.mxu0 0.0
        %1475 = vmatprep.subr.mxu0 0.0
        %1476 = vmatpush1.msra.mxu0 0.0
        %1477 = vmatprep.subr.mxu0 0.0
        %1478 = vmatpush1.msra.mxu0 0.0
        %1479 = vmatprep.subr.mxu0 0.0
        %1480 = vmatpush1.msra.mxu0 0.0
        %1481 = vmatprep.subr.mxu0 0.0
        %1482 = vmatpush1.msra.mxu0 0.0
        %1483 = vmatprep.mubr.f32.mxu0 0.0
        %1484 = vmatmul.mubr.f32.gmra.mrb[0].mxu0 %v1414
        %v1485 = vpop.f32.mrb[0].mxu0
        %v1486 = vadd.f32 0.0, %v1485
        %v1487 = vpop.f32.mrb[0].mxu0
        %1488 = vmatprep.mubr.f32.mxu0 0.0
        %1489 = vmatmul.mubr.f32.gmra.mrb[0].mxu0 %v1417
        %v1490 = vpop.f32.mrb[0].mxu0
        %v1491 = vadd.f32 0.0, %v1490
        %v1492 = vpop.f32.mrb[0].mxu0
        %1493 = vdwg.mxu0
        %v1494 = vadd.f32 %v1403, %v1486
        %v1495 = vadd.f32 %v1404, %v1491
        %s1496 = scalar_lea.vmem %s3, 112
        %v1497 = vld [vmem:[%s1496] sm:$0xff]
        %v1498 = vld [vmem:[%s1496 + $0x8] sm:$0x3]
        %1501 = vrot.lane.b32.xlu0 %v1408, 127
        %v1502 = vpop.permute.xlu0 %1501
        %1503 = vrot.lane.b32.xlu0 %v1409, 127
        %v1504 = vpop.permute.xlu0 %1503
        %v1508 = vsel %vm873, %v1497, 0
        %v1511 = vsel %vm873, %v1498, 0
        %1513 = vmatprep.subr.mxu0 0.0
        %1514 = vmatpush1.msra.mxu0 %v1502
        %1515 = vmatprep.subr.mxu0 0.0
        %1516 = vmatpush1.msra.mxu0 %v1504
        %1517 = vmatprep.subr.mxu0 0.0
        %1518 = vmatpush1.msra.mxu0 0.0
        %1519 = vmatprep.subr.mxu0 0.0
        %1520 = vmatpush1.msra.mxu0 0.0
        %1521 = vmatprep.subr.mxu0 0.0
        %1522 = vmatpush1.msra.mxu0 0.0
        %1523 = vmatprep.subr.mxu0 0.0
        %1524 = vmatpush1.msra.mxu0 0.0
        %1525 = vmatprep.subr.mxu0 0.0
        %1526 = vmatpush1.msra.mxu0 0.0
        %1527 = vmatprep.subr.mxu0 0.0
        %1528 = vmatpush1.msra.mxu0 0.0
        %1529 = vmatprep.subr.mxu0 0.0
        %1530 = vmatpush1.msra.mxu0 0.0
        %1531 = vmatprep.subr.mxu0 0.0
        %1532 = vmatpush1.msra.mxu0 0.0
        %1533 = vmatprep.subr.mxu0 0.0
        %1534 = vmatpush1.msra.mxu0 0.0
        %1535 = vmatprep.subr.mxu0 0.0
        %1536 = vmatpush1.msra.mxu0 0.0
        %1537 = vmatprep.subr.mxu0 0.0
        %1538 = vmatpush1.msra.mxu0 0.0
        %1539 = vmatprep.subr.mxu0 0.0
        %1540 = vmatpush1.msra.mxu0 0.0
        %1541 = vmatprep.subr.mxu0 0.0
        %1542 = vmatpush1.msra.mxu0 0.0
        %1543 = vmatprep.subr.mxu0 0.0
        %1544 = vmatpush1.msra.mxu0 0.0
        %1545 = vmatprep.subr.mxu0 0.0
        %1546 = vmatpush1.msra.mxu0 0.0
        %1547 = vmatprep.subr.mxu0 0.0
        %1548 = vmatpush1.msra.mxu0 0.0
        %1549 = vmatprep.subr.mxu0 0.0
        %1550 = vmatpush1.msra.mxu0 0.0
        %1551 = vmatprep.subr.mxu0 0.0
        %1552 = vmatpush1.msra.mxu0 0.0
        %1553 = vmatprep.subr.mxu0 0.0
        %1554 = vmatpush1.msra.mxu0 0.0
        %1555 = vmatprep.subr.mxu0 0.0
        %1556 = vmatpush1.msra.mxu0 0.0
        %1557 = vmatprep.subr.mxu0 0.0
        %1558 = vmatpush1.msra.mxu0 0.0
        %1559 = vmatprep.subr.mxu0 0.0
        %1560 = vmatpush1.msra.mxu0 0.0
        %1561 = vmatprep.subr.mxu0 0.0
        %1562 = vmatpush1.msra.mxu0 0.0
        %1563 = vmatprep.subr.mxu0 0.0
        %1564 = vmatpush1.msra.mxu0 0.0
        %1565 = vmatprep.subr.mxu0 0.0
        %1566 = vmatpush1.msra.mxu0 0.0
        %1567 = vmatprep.subr.mxu0 0.0
        %1568 = vmatpush1.msra.mxu0 0.0
        %1569 = vmatprep.subr.mxu0 0.0
        %1570 = vmatpush1.msra.mxu0 0.0
        %1571 = vmatprep.subr.mxu0 0.0
        %1572 = vmatpush1.msra.mxu0 0.0
        %1573 = vmatprep.subr.mxu0 0.0
        %1574 = vmatpush1.msra.mxu0 0.0
        %1575 = vmatprep.subr.mxu0 0.0
        %1576 = vmatpush1.msra.mxu0 0.0
        %1577 = vmatprep.mubr.f32.mxu0 0.0
        %1578 = vmatmul.mubr.f32.gmra.mrb[0].mxu0 %v1508
        %v1579 = vpop.f32.mrb[0].mxu0
        %v1580 = vadd.f32 0.0, %v1579
        %v1581 = vpop.f32.mrb[0].mxu0
        %1582 = vmatprep.mubr.f32.mxu0 0.0
        %1583 = vmatmul.mubr.f32.gmra.mrb[0].mxu0 %v1511
        %v1584 = vpop.f32.mrb[0].mxu0
        %v1585 = vadd.f32 0.0, %v1584
        %v1586 = vpop.f32.mrb[0].mxu0
        %1587 = vdwg.mxu0
        %v1588 = vadd.f32 %v1494, %v1580
        %v1589 = vadd.f32 %v1495, %v1585
        %s1590 = scalar_lea.vmem %s3, 128
        %v1591 = vld [vmem:[%s1590] sm:$0xff]
        %v1592 = vld [vmem:[%s1590 + $0x8] sm:$0x3]
        %1593 = vrot.lane.b32.xlu0 %v1408, 126
        %v1594 = vpop.permute.xlu0 %1593
        %1595 = vrot.lane.b32.xlu0 %v1409, 126
        %v1596 = vpop.permute.xlu0 %1595
        %v1600 = vsel %vm873, %v1591, 0
        %v1603 = vsel %vm873, %v1592, 0
        %1605 = vmatprep.subr.mxu0 0.0
        %1606 = vmatpush1.msra.mxu0 %v1594
        %1607 = vmatprep.subr.mxu0 0.0
        %1608 = vmatpush1.msra.mxu0 %v1596
        %1609 = vmatprep.subr.mxu0 0.0
        %1610 = vmatpush1.msra.mxu0 0.0
        %1611 = vmatprep.subr.mxu0 0.0
        %1612 = vmatpush1.msra.mxu0 0.0
        %1613 = vmatprep.subr.mxu0 0.0
        %1614 = vmatpush1.msra.mxu0 0.0
        %1615 = vmatprep.subr.mxu0 0.0
        %1616 = vmatpush1.msra.mxu0 0.0
        %1617 = vmatprep.subr.mxu0 0.0
        %1618 = vmatpush1.msra.mxu0 0.0
        %1619 = vmatprep.subr.mxu0 0.0
        %1620 = vmatpush1.msra.mxu0 0.0
        %1621 = vmatprep.subr.mxu0 0.0
        %1622 = vmatpush1.msra.mxu0 0.0
        %1623 = vmatprep.subr.mxu0 0.0
        %1624 = vmatpush1.msra.mxu0 0.0
        %1625 = vmatprep.subr.mxu0 0.0
        %1626 = vmatpush1.msra.mxu0 0.0
        %1627 = vmatprep.subr.mxu0 0.0
        %1628 = vmatpush1.msra.mxu0 0.0
        %1629 = vmatprep.subr.mxu0 0.0
        %1630 = vmatpush1.msra.mxu0 0.0
        %1631 = vmatprep.subr.mxu0 0.0
        %1632 = vmatpush1.msra.mxu0 0.0
        %1633 = vmatprep.subr.mxu0 0.0
        %1634 = vmatpush1.msra.mxu0 0.0
        %1635 = vmatprep.subr.mxu0 0.0
        %1636 = vmatpush1.msra.mxu0 0.0
        %1637 = vmatprep.subr.mxu0 0.0
        %1638 = vmatpush1.msra.mxu0 0.0
        %1639 = vmatprep.subr.mxu0 0.0
        %1640 = vmatpush1.msra.mxu0 0.0
        %1641 = vmatprep.subr.mxu0 0.0
        %1642 = vmatpush1.msra.mxu0 0.0
        %1643 = vmatprep.subr.mxu0 0.0
        %1644 = vmatpush1.msra.mxu0 0.0
        %1645 = vmatprep.subr.mxu0 0.0
        %1646 = vmatpush1.msra.mxu0 0.0
        %1647 = vmatprep.subr.mxu0 0.0
        %1648 = vmatpush1.msra.mxu0 0.0
        %1649 = vmatprep.subr.mxu0 0.0
        %1650 = vmatpush1.msra.mxu0 0.0
        %1651 = vmatprep.subr.mxu0 0.0
        %1652 = vmatpush1.msra.mxu0 0.0
        %1653 = vmatprep.subr.mxu0 0.0
        %1654 = vmatpush1.msra.mxu0 0.0
        %1655 = vmatprep.subr.mxu0 0.0
        %1656 = vmatpush1.msra.mxu0 0.0
        %1657 = vmatprep.subr.mxu0 0.0
        %1658 = vmatpush1.msra.mxu0 0.0
        %1659 = vmatprep.subr.mxu0 0.0
        %1660 = vmatpush1.msra.mxu0 0.0
        %1661 = vmatprep.subr.mxu0 0.0
        %1662 = vmatpush1.msra.mxu0 0.0
        %1663 = vmatprep.subr.mxu0 0.0
        %1664 = vmatpush1.msra.mxu0 0.0
        %1665 = vmatprep.subr.mxu0 0.0
        %1666 = vmatpush1.msra.mxu0 0.0
        %1667 = vmatprep.subr.mxu0 0.0
        %1668 = vmatpush1.msra.mxu0 0.0
        %1669 = vmatprep.mubr.f32.mxu0 0.0
        %1670 = vmatmul.mubr.f32.gmra.mrb[0].mxu0 %v1600
        %v1671 = vpop.f32.mrb[0].mxu0
        %v1672 = vadd.f32 0.0, %v1671
        %v1673 = vpop.f32.mrb[0].mxu0
        %1674 = vmatprep.mubr.f32.mxu0 0.0
        %1675 = vmatmul.mubr.f32.gmra.mrb[0].mxu0 %v1603
        %v1676 = vpop.f32.mrb[0].mxu0
        %v1677 = vadd.f32 0.0, %v1676
        %v1678 = vpop.f32.mrb[0].mxu0
        %1679 = vdwg.mxu0
        %v1680 = vadd.f32 %v1588, %v1672
        %v1681 = vadd.f32 %v1589, %v1677
        %v1682 = vld [vmem:[%s4] sm:$0xff]
        %v1683 = vld [vmem:[%s4 + $0x8] sm:$0x3]
        %1685 = vset.pattern.permute.xlu0 0
        %1686 = vperm.xlu0 %1685, %v1682
        %v1687 = vpop.permute.xlu0 %1686
        %1690 = vset.pattern.permute.xlu0 0
        %1691 = vperm.xlu0 %1690, %v1683
        %v1692 = vpop.permute.xlu0 %1691
        %v1694 = vadd.f32 %v1680, %v1687
        %v1695 = vadd.f32 %v1681, %v1692
        %v1696 = vmax.f32 %v1694, 0.0
        %v1697 = vmax.f32 %v1695, 0.0
        %s1698 = scalar_lea.vmem [#allocation3], %s856
        %vm1699 = vcmask 195584
        %1700 = vst.msk [vmem:[%s1698] sm:$0xff] %vm1699, %v1696
        %vm1701 = vcmask 189440
        %1702 = vst.msk [vmem:[%s1698 + $0x8] sm:$0x3] %vm1701, %v1697
      $region108: #{net8_forward.1} parent=95 // loop_footer
        %s855 = sadd.s32 1, %s851
      $region109: #{net8_forward.1} parent=95 // loop_footer_branch
        %850 = sbr.rel target = $region105
      $region110: #{net8_forward.1} parent=95 // loop_exit
        _
      %v1703 = vlaneseq
      %v1704 = vshrl.u32 %v1703, 7
      %v1705 = vadd.s32 %v1704, 8
      %v1706 = vadd.s32 %v1704, 16
      %v1707 = vlaneseq
      %v1708 = vand.u32 %v1707, 127
      %v1709 = vmul.u32 %v1708, 2
      %vm1710 = vcmp.eq.s32.totalorder %v1704, %v1709
      %vm1711 = vcmp.eq.s32.totalorder %v1705, %v1709
      %vm1712 = vcmp.eq.s32.totalorder %v1706, %v1709
      %v1713 = vsel %vm1710, 1, 0
      %v1714 = vsel %vm1711, 1, 0
      %v1715 = vsel %vm1712, 1, 0
      %v1716 = vcvt.s32.f32 %v1713
      %v1717 = vcvt.s32.f32 %v1714
      %v1718 = vcvt.s32.f32 %v1715
      %v1719 = vadd.s32 %v1709, 1
      %vm1720 = vcmp.eq.s32.totalorder %v1704, %v1719
      %vm1721 = vcmp.eq.s32.totalorder %v1705, %v1719
      %vm1722 = vcmp.eq.s32.totalorder %v1706, %v1719
      %v1723 = vsel %vm1720, 1, 0
      %v1724 = vsel %vm1721, 1, 0
      %v1725 = vsel %vm1722, 1, 0
      %v1726 = vcvt.s32.f32 %v1723
      %v1727 = vcvt.s32.f32 %v1724
      %v1728 = vcvt.s32.f32 %v1725
      loop: start=0, step=1, limit=12
      $region111: #{net8_forward.1} parent=95 // loop_pre_header
        _
      $region112: #{net8_forward.1} parent=95 // loop_header
        %s1730 = sphi 0, %s1734
        %p1731 = scmp.ge.s32.totalorder %s1730, 12
      $region113: #{net8_forward.1} parent=95 // loop_header_branch
        %1733 = sbr.rel (%p1731) target = $region117
      $region114: #{net8_forward.1} parent=95 // loop_body
        %s1735 = smul.u32 %s1730, 2
        %s1736 = smul.u32 %s1735, 16
        %s1737 = scalar_lea.vmem [#allocation3], %s1736
        %v1738 = vld [vmem:[%s1737] sm:$0xff]
        %v1739 = vld [vmem:[%s1737 + $0x8] sm:$0x3]
        %s1740 = sadd.s32 %s1735, 1
        %s1741 = smul.u32 %s1740, 16
        %s1742 = scalar_lea.vmem [#allocation3], %s1741
        %v1743 = vld [vmem:[%s1742] sm:$0xff]
        %v1744 = vld [vmem:[%s1742 + $0x8] sm:$0x3]
        %v1745 = vmax.f32 %v1738, %v1743
        %v1746 = vmax.f32 %v1739, %v1744
        %vm1747 = vcmask 195584
        %v1749 = vsel %vm1747, %v1745, 0
        %v1752 = vsel %vm1747, %v1746, 0
        %1754 = vmatprep.subr.mxu0 0.0
        %1755 = vmatpush1.msra.mxu0 %v1716
        %1756 = vmatprep.subr.mxu0 0.0
        %1757 = vmatpush1.msra.mxu0 %v1717
        %1758 = vmatprep.subr.mxu0 0.0
        %1759 = vmatpush1.msra.mxu0 %v1718
        %1760 = vmatprep.subr.mxu0 0.0
        %1761 = vmatpush1.msra.mxu0 0.0
        %1762 = vmatprep.subr.mxu0 0.0
        %1763 = vmatpush1.msra.mxu0 0.0
        %1764 = vmatprep.subr.mxu0 0.0
        %1765 = vmatpush1.msra.mxu0 0.0
        %1766 = vmatprep.subr.mxu0 0.0
        %1767 = vmatpush1.msra.mxu0 0.0
        %1768 = vmatprep.subr.mxu0 0.0
        %1769 = vmatpush1.msra.mxu0 0.0
        %1770 = vmatprep.subr.mxu0 0.0
        %1771 = vmatpush1.msra.mxu0 0.0
        %1772 = vmatprep.subr.mxu0 0.0
        %1773 = vmatpush1.msra.mxu0 0.0
        %1774 = vmatprep.subr.mxu0 0.0
        %1775 = vmatpush1.msra.mxu0 0.0
        %1776 = vmatprep.subr.mxu0 0.0
        %1777 = vmatpush1.msra.mxu0 0.0
        %1778 = vmatprep.subr.mxu0 0.0
        %1779 = vmatpush1.msra.mxu0 0.0
        %1780 = vmatprep.subr.mxu0 0.0
        %1781 = vmatpush1.msra.mxu0 0.0
        %1782 = vmatprep.subr.mxu0 0.0
        %1783 = vmatpush1.msra.mxu0 0.0
        %1784 = vmatprep.subr.mxu0 0.0
        %1785 = vmatpush1.msra.mxu0 0.0
        %1786 = vmatprep.subr.mxu0 0.0
        %1787 = vmatpush1.msra.mxu0 0.0
        %1788 = vmatprep.subr.mxu0 0.0
        %1789 = vmatpush1.msra.mxu0 0.0
        %1790 = vmatprep.subr.mxu0 0.0
        %1791 = vmatpush1.msra.mxu0 0.0
        %1792 = vmatprep.subr.mxu0 0.0
        %1793 = vmatpush1.msra.mxu0 0.0
        %1794 = vmatprep.subr.mxu0 0.0
        %1795 = vmatpush1.msra.mxu0 0.0
        %1796 = vmatprep.subr.mxu0 0.0
        %1797 = vmatpush1.msra.mxu0 0.0
        %1798 = vmatprep.subr.mxu0 0.0
        %1799 = vmatpush1.msra.mxu0 0.0
        %1800 = vmatprep.subr.mxu0 0.0
        %1801 = vmatpush1.msra.mxu0 0.0
        %1802 = vmatprep.subr.mxu0 0.0
        %1803 = vmatpush1.msra.mxu0 0.0
        %1804 = vmatprep.subr.mxu0 0.0
        %1805 = vmatpush1.msra.mxu0 0.0
        %1806 = vmatprep.subr.mxu0 0.0
        %1807 = vmatpush1.msra.mxu0 0.0
        %1808 = vmatprep.subr.mxu0 0.0
        %1809 = vmatpush1.msra.mxu0 0.0
        %1810 = vmatprep.subr.mxu0 0.0
        %1811 = vmatpush1.msra.mxu0 0.0
        %1812 = vmatprep.subr.mxu0 0.0
        %1813 = vmatpush1.msra.mxu0 0.0
        %1814 = vmatprep.subr.mxu0 0.0
        %1815 = vmatpush1.msra.mxu0 0.0
        %1816 = vmatprep.subr.mxu0 0.0
        %1817 = vmatpush1.msra.mxu0 0.0
        %1818 = vmatprep.mubr.f32.mxu0 0.0
        %1819 = vmatmul.mubr.f32.gmra.mrb[0].mxu0 %v1749
        %v1820 = vpop.f32.mrb[0].mxu0
        %v1821 = vadd.f32 0.0, %v1820
        %v1822 = vpop.f32.mrb[0].mxu0
        %1823 = vmatprep.mubr.f32.mxu0 0.0
        %1824 = vmatmul.mubr.f32.gmra.mrb[0].mxu0 %v1752
        %v1825 = vpop.f32.mrb[0].mxu0
        %v1826 = vadd.f32 0.0, %v1825
        %v1827 = vpop.f32.mrb[0].mxu0
        %1828 = vdwg.mxu0
        %1829 = vmatprep.subr.mxu0 0.0
        %1830 = vmatpush1.msra.mxu0 %v1726
        %1831 = vmatprep.subr.mxu0 0.0
        %1832 = vmatpush1.msra.mxu0 %v1727
        %1833 = vmatprep.subr.mxu0 0.0
        %1834 = vmatpush1.msra.mxu0 %v1728
        %1835 = vmatprep.subr.mxu0 0.0
        %1836 = vmatpush1.msra.mxu0 0.0
        %1837 = vmatprep.subr.mxu0 0.0
        %1838 = vmatpush1.msra.mxu0 0.0
        %1839 = vmatprep.subr.mxu0 0.0
        %1840 = vmatpush1.msra.mxu0 0.0
        %1841 = vmatprep.subr.mxu0 0.0
        %1842 = vmatpush1.msra.mxu0 0.0
        %1843 = vmatprep.subr.mxu0 0.0
        %1844 = vmatpush1.msra.mxu0 0.0
        %1845 = vmatprep.subr.mxu0 0.0
        %1846 = vmatpush1.msra.mxu0 0.0
        %1847 = vmatprep.subr.mxu0 0.0
        %1848 = vmatpush1.msra.mxu0 0.0
        %1849 = vmatprep.subr.mxu0 0.0
        %1850 = vmatpush1.msra.mxu0 0.0
        %1851 = vmatprep.subr.mxu0 0.0
        %1852 = vmatpush1.msra.mxu0 0.0
        %1853 = vmatprep.subr.mxu0 0.0
        %1854 = vmatpush1.msra.mxu0 0.0
        %1855 = vmatprep.subr.mxu0 0.0
        %1856 = vmatpush1.msra.mxu0 0.0
        %1857 = vmatprep.subr.mxu0 0.0
        %1858 = vmatpush1.msra.mxu0 0.0
        %1859 = vmatprep.subr.mxu0 0.0
        %1860 = vmatpush1.msra.mxu0 0.0
        %1861 = vmatprep.subr.mxu0 0.0
        %1862 = vmatpush1.msra.mxu0 0.0
        %1863 = vmatprep.subr.mxu0 0.0
        %1864 = vmatpush1.msra.mxu0 0.0
        %1865 = vmatprep.subr.mxu0 0.0
        %1866 = vmatpush1.msra.mxu0 0.0
        %1867 = vmatprep.subr.mxu0 0.0
        %1868 = vmatpush1.msra.mxu0 0.0
        %1869 = vmatprep.subr.mxu0 0.0
        %1870 = vmatpush1.msra.mxu0 0.0
        %1871 = vmatprep.subr.mxu0 0.0
        %1872 = vmatpush1.msra.mxu0 0.0
        %1873 = vmatprep.subr.mxu0 0.0
        %1874 = vmatpush1.msra.mxu0 0.0
        %1875 = vmatprep.subr.mxu0 0.0
        %1876 = vmatpush1.msra.mxu0 0.0
        %1877 = vmatprep.subr.mxu0 0.0
        %1878 = vmatpush1.msra.mxu0 0.0
        %1879 = vmatprep.subr.mxu0 0.0
        %1880 = vmatpush1.msra.mxu0 0.0
        %1881 = vmatprep.subr.mxu0 0.0
        %1882 = vmatpush1.msra.mxu0 0.0
        %1883 = vmatprep.subr.mxu0 0.0
        %1884 = vmatpush1.msra.mxu0 0.0
        %1885 = vmatprep.subr.mxu0 0.0
        %1886 = vmatpush1.msra.mxu0 0.0
        %1887 = vmatprep.subr.mxu0 0.0
        %1888 = vmatpush1.msra.mxu0 0.0
        %1889 = vmatprep.subr.mxu0 0.0
        %1890 = vmatpush1.msra.mxu0 0.0
        %1891 = vmatprep.subr.mxu0 0.0
        %1892 = vmatpush1.msra.mxu0 0.0
        %1893 = vmatprep.mubr.f32.mxu0 0.0
        %1894 = vmatmul.mubr.f32.gmra.mrb[0].mxu0 %v1749
        %v1895 = vpop.f32.mrb[0].mxu0
        %v1896 = vadd.f32 0.0, %v1895
        %v1897 = vpop.f32.mrb[0].mxu0
        %1898 = vmatprep.mubr.f32.mxu0 0.0
        %1899 = vmatmul.mubr.f32.gmra.mrb[0].mxu0 %v1752
        %v1900 = vpop.f32.mrb[0].mxu0
        %v1901 = vadd.f32 0.0, %v1900
        %v1902 = vpop.f32.mrb[0].mxu0
        %1903 = vdwg.mxu0
        %v1904 = vmax.f32 %v1821, %v1896
        %v1905 = vmax.f32 %v1826, %v1901
        %v1906 = vld [vmem:[%s5] sm:$0xff]
        %v1907 = vld [vmem:[%s5 + $0x8] sm:$0x3]
        %1909 = vset.pattern.permute.xlu0 0
        %1910 = vperm.xlu0 %1909, %v1906
        %v1911 = vpop.permute.xlu0 %1910
        %1914 = vset.pattern.permute.xlu0 0
        %1915 = vperm.xlu0 %1914, %v1907
        %v1916 = vpop.permute.xlu0 %1915
        %v1918 = vmul.f32 %v1904, %v1911
        %v1919 = vmul.f32 %v1905, %v1916
        %v1920 = vld [vmem:[%s6] sm:$0xff]
        %v1921 = vld [vmem:[%s6 + $0x8] sm:$0x3]
        %1923 = vset.pattern.permute.xlu0 0
        %1924 = vperm.xlu0 %1923, %v1920
        %v1925 = vpop.permute.xlu0 %1924
        %1928 = vset.pattern.permute.xlu0 0
        %1929 = vperm.xlu0 %1928, %v1921
        %v1930 = vpop.permute.xlu0 %1929
        %v1932 = vadd.f32 %v1918, %v1925
        %v1933 = vadd.f32 %v1919, %v1930
        %s1934 = smul.u32 %s1730, 16
        %s1935 = scalar_lea.vmem [#allocation4], %s1934
        %vm1936 = vcmask 97280
        %1937 = vst.msk [vmem:[%s1935] sm:$0xff] %vm1936, %v1932
        %vm1938 = vcmask 91136
        %1939 = vst.msk [vmem:[%s1935 + $0x8] sm:$0x3] %vm1938, %v1933
      $region115: #{net8_forward.1} parent=95 // loop_footer
        %s1734 = sadd.s32 1, %s1730
      $region116: #{net8_forward.1} parent=95 // loop_footer_branch
        %1729 = sbr.rel target = $region112
      $region117: #{net8_forward.1} parent=95 // loop_exit
        _
      loop: start=0, step=1, limit=10
      $region118: #{net8_forward.1} parent=95 // loop_pre_header
        _
      $region119: #{net8_forward.1} parent=95 // loop_header
        %s1941 = sphi 0, %s1945
        %p1942 = scmp.ge.s32.totalorder %s1941, 10
      $region120: #{net8_forward.1} parent=95 // loop_header_branch
        %1944 = sbr.rel (%p1942) target = $region124
      $region121: #{net8_forward.1} parent=95 // loop_body
        %s1946 = smul.u32 %s1941, 16
        %s1947 = scalar_lea.vmem [#allocation4], %s1946
        %v1948 = vld [vmem:[%s1947] sm:$0xff]
        %v1949 = vld [vmem:[%s1947 + $0x8] sm:$0x3]
        %v1950 = vld [vmem:[%s7] sm:$0xff]
        %v1951 = vld [vmem:[%s7 + $0x8] sm:$0x3]
        %s1952 = scalar_lea.vmem %s7, 16
        %v1953 = vld [vmem:[%s1952] sm:$0xff]
        %v1954 = vld [vmem:[%s1952 + $0x8] sm:$0x3]
        %1957 = vrot.lane.b32.xlu0 %v1948, 127
        %v1958 = vpop.permute.xlu0 %1957
        %1959 = vrot.lane.b32.xlu0 %v1949, 127
        %v1960 = vpop.permute.xlu0 %1959
        %vm1962 = vcmask 80896
        %v1964 = vsel %vm1962, %v1953, 0
        %v1967 = vsel %vm1962, %v1954, 0
        %vm1969 = vcmask 1041408
        %v1970 = vsel %vm1969, %v1960, 0
        %1972 = vmatprep.subr.mxu0 0.0
        %1973 = vmatpush1.msra.mxu0 %v1958
        %1974 = vmatprep.subr.mxu0 0.0
        %1975 = vmatpush1.msra.mxu0 %v1970
        %1976 = vmatprep.subr.mxu0 0.0
        %1977 = vmatpush1.msra.mxu0 0.0
        %1978 = vmatprep.subr.mxu0 0.0
        %1979 = vmatpush1.msra.mxu0 0.0
        %1980 = vmatprep.subr.mxu0 0.0
        %1981 = vmatpush1.msra.mxu0 0.0
        %1982 = vmatprep.subr.mxu0 0.0
        %1983 = vmatpush1.msra.mxu0 0.0
        %1984 = vmatprep.subr.mxu0 0.0
        %1985 = vmatpush1.msra.mxu0 0.0
        %1986 = vmatprep.subr.mxu0 0.0
        %1987 = vmatpush1.msra.mxu0 0.0
        %1988 = vmatprep.subr.mxu0 0.0
        %1989 = vmatpush1.msra.mxu0 0.0
        %1990 = vmatprep.subr.mxu0 0.0
        %1991 = vmatpush1.msra.mxu0 0.0
        %1992 = vmatprep.subr.mxu0 0.0
        %1993 = vmatpush1.msra.mxu0 0.0
        %1994 = vmatprep.subr.mxu0 0.0
        %1995 = vmatpush1.msra.mxu0 0.0
        %1996 = vmatprep.subr.mxu0 0.0
        %1997 = vmatpush1.msra.mxu0 0.0
        %1998 = vmatprep.subr.mxu0 0.0
        %1999 = vmatpush1.msra.mxu0 0.0
        %2000 = vmatprep.subr.mxu0 0.0
        %2001 = vmatpush1.msra.mxu0 0.0
        %2002 = vmatprep.subr.mxu0 0.0
        %2003 = vmatpush1.msra.mxu0 0.0
        %2004 = vmatprep.subr.mxu0 0.0
        %2005 = vmatpush1.msra.mxu0 0.0
        %2006 = vmatprep.subr.mxu0 0.0
        %2007 = vmatpush1.msra.mxu0 0.0
        %2008 = vmatprep.subr.mxu0 0.0
        %2009 = vmatpush1.msra.mxu0 0.0
        %2010 = vmatprep.subr.mxu0 0.0
        %2011 = vmatpush1.msra.mxu0 0.0
        %2012 = vmatprep.subr.mxu0 0.0
        %2013 = vmatpush1.msra.mxu0 0.0
        %2014 = vmatprep.subr.mxu0 0.0
        %2015 = vmatpush1.msra.mxu0 0.0
        %2016 = vmatprep.subr.mxu0 0.0
        %2017 = vmatpush1.msra.mxu0 0.0
        %2018 = vmatprep.subr.mxu0 0.0
        %2019 = vmatpush1.msra.mxu0 0.0
        %2020 = vmatprep.subr.mxu0 0.0
        %2021 = vmatpush1.msra.mxu0 0.0
        %2022 = vmatprep.subr.mxu0 0.0
        %2023 = vmatpush1.msra.mxu0 0.0
        %2024 = vmatprep.subr.mxu0 0.0
        %2025 = vmatpush1.msra.mxu0 0.0
        %2026 = vmatprep.subr.mxu0 0.0
        %2027 = vmatpush1.msra.mxu0 0.0
        %2028 = vmatprep.subr.mxu0 0.0
        %2029 = vmatpush1.msra.mxu0 0.0
        %2030 = vmatprep.subr.mxu0 0.0
        %2031 = vmatpush1.msra.mxu0 0.0
        %2032 = vmatprep.subr.mxu0 0.0
        %2033 = vmatpush1.msra.mxu0 0.0
        %2034 = vmatprep.subr.mxu0 0.0
        %2035 = vmatpush1.msra.mxu0 0.0
        %2036 = vmatprep.mubr.f32.mxu0 0.0
        %2037 = vmatmul.mubr.f32.gmra.mrb[0].mxu0 %v1964
        %v2038 = vpop.f32.mrb[0].mxu0
        %v2039 = vadd.f32 0.0, %v2038
        %v2040 = vpop.f32.mrb[0].mxu0
        %2041 = vmatprep.mubr.f32.mxu0 0.0
        %2042 = vmatmul.mubr.f32.gmra.mrb[0].mxu0 %v1967
        %v2043 = vpop.f32.mrb[0].mxu0
        %v2044 = vadd.f32 0.0, %v2043
        %v2045 = vpop.f32.mrb[0].mxu0
        %2046 = vdwg.mxu0
        %v2048 = vsel %vm1962, %v1950, 0
        %v2051 = vsel %vm1962, %v1951, 0
        %v2053 = vsel %vm1969, %v1949, 0
        %2055 = vmatprep.subr.mxu0 0.0
        %2056 = vmatpush1.msra.mxu0 %v1948
        %2057 = vmatprep.subr.mxu0 0.0
        %2058 = vmatpush1.msra.mxu0 %v2053
        %2059 = vmatprep.subr.mxu0 0.0
        %2060 = vmatpush1.msra.mxu0 0.0
        %2061 = vmatprep.subr.mxu0 0.0
        %2062 = vmatpush1.msra.mxu0 0.0
        %2063 = vmatprep.subr.mxu0 0.0
        %2064 = vmatpush1.msra.mxu0 0.0
        %2065 = vmatprep.subr.mxu0 0.0
        %2066 = vmatpush1.msra.mxu0 0.0
        %2067 = vmatprep.subr.mxu0 0.0
        %2068 = vmatpush1.msra.mxu0 0.0
        %2069 = vmatprep.subr.mxu0 0.0
        %2070 = vmatpush1.msra.mxu0 0.0
        %2071 = vmatprep.subr.mxu0 0.0
        %2072 = vmatpush1.msra.mxu0 0.0
        %2073 = vmatprep.subr.mxu0 0.0
        %2074 = vmatpush1.msra.mxu0 0.0
        %2075 = vmatprep.subr.mxu0 0.0
        %2076 = vmatpush1.msra.mxu0 0.0
        %2077 = vmatprep.subr.mxu0 0.0
        %2078 = vmatpush1.msra.mxu0 0.0
        %2079 = vmatprep.subr.mxu0 0.0
        %2080 = vmatpush1.msra.mxu0 0.0
        %2081 = vmatprep.subr.mxu0 0.0
        %2082 = vmatpush1.msra.mxu0 0.0
        %2083 = vmatprep.subr.mxu0 0.0
        %2084 = vmatpush1.msra.mxu0 0.0
        %2085 = vmatprep.subr.mxu0 0.0
        %2086 = vmatpush1.msra.mxu0 0.0
        %2087 = vmatprep.subr.mxu0 0.0
        %2088 = vmatpush1.msra.mxu0 0.0
        %2089 = vmatprep.subr.mxu0 0.0
        %2090 = vmatpush1.msra.mxu0 0.0
        %2091 = vmatprep.subr.mxu0 0.0
        %2092 = vmatpush1.msra.mxu0 0.0
        %2093 = vmatprep.subr.mxu0 0.0
        %2094 = vmatpush1.msra.mxu0 0.0
        %2095 = vmatprep.subr.mxu0 0.0
        %2096 = vmatpush1.msra.mxu0 0.0
        %2097 = vmatprep.subr.mxu0 0.0
        %2098 = vmatpush1.msra.mxu0 0.0
        %2099 = vmatprep.subr.mxu0 0.0
        %2100 = vmatpush1.msra.mxu0 0.0
        %2101 = vmatprep.subr.mxu0 0.0
        %2102 = vmatpush1.msra.mxu0 0.0
        %2103 = vmatprep.subr.mxu0 0.0
        %2104 = vmatpush1.msra.mxu0 0.0
        %2105 = vmatprep.subr.mxu0 0.0
        %2106 = vmatpush1.msra.mxu0 0.0
        %2107 = vmatprep.subr.mxu0 0.0
        %2108 = vmatpush1.msra.mxu0 0.0
        %2109 = vmatprep.subr.mxu0 0.0
        %2110 = vmatpush1.msra.mxu0 0.0
        %2111 = vmatprep.subr.mxu0 0.0
        %2112 = vmatpush1.msra.mxu0 0.0
        %2113 = vmatprep.subr.mxu0 0.0
        %2114 = vmatpush1.msra.mxu0 0.0
        %2115 = vmatprep.subr.mxu0 0.0
        %2116 = vmatpush1.msra.mxu0 0.0
        %2117 = vmatprep.subr.mxu0 0.0
        %2118 = vmatpush1.msra.mxu0 0.0
        %2119 = vmatprep.mubr.f32.mxu0 0.0
        %2120 = vmatmul.mubr.f32.gmra.mrb[0].mxu0 %v2048
        %v2121 = vpop.f32.mrb[0].mxu0
        %v2122 = vadd.f32 %v2039, %v2121
        %v2123 = vpop.f32.mrb[0].mxu0
        %2124 = vmatprep.mubr.f32.mxu0 0.0
        %2125 = vmatmul.mubr.f32.gmra.mrb[0].mxu0 %v2051
        %v2126 = vpop.f32.mrb[0].mxu0
        %v2127 = vadd.f32 %v2044, %v2126
        %v2128 = vpop.f32.mrb[0].mxu0
        %2129 = vdwg.mxu0
        %s2130 = scalar_lea.vmem %s7, 32
        %v2131 = vld [vmem:[%s2130] sm:$0xff]
        %v2132 = vld [vmem:[%s2130 + $0x8] sm:$0x3]
        %2133 = vrot.lane.b32.xlu0 %v1948, 126
        %v2134 = vpop.permute.xlu0 %2133
        %2135 = vrot.lane.b32.xlu0 %v1949, 126
        %v2136 = vpop.permute.xlu0 %2135
        %v2139 = vsel %vm1962, %v2131, 0
        %v2142 = vsel %vm1962, %v2132, 0
        %v2144 = vsel %vm1969, %v2136, 0
        %2146 = vmatprep.subr.mxu0 0.0
        %2147 = vmatpush1.msra.mxu0 %v2134
        %2148 = vmatprep.subr.mxu0 0.0
        %2149 = vmatpush1.msra.mxu0 %v2144
        %2150 = vmatprep.subr.mxu0 0.0
        %2151 = vmatpush1.msra.mxu0 0.0
        %2152 = vmatprep.subr.mxu0 0.0
        %2153 = vmatpush1.msra.mxu0 0.0
        %2154 = vmatprep.subr.mxu0 0.0
        %2155 = vmatpush1.msra.mxu0 0.0
        %2156 = vmatprep.subr.mxu0 0.0
        %2157 = vmatpush1.msra.mxu0 0.0
        %2158 = vmatprep.subr.mxu0 0.0
        %2159 = vmatpush1.msra.mxu0 0.0
        %2160 = vmatprep.subr.mxu0 0.0
        %2161 = vmatpush1.msra.mxu0 0.0
        %2162 = vmatprep.subr.mxu0 0.0
        %2163 = vmatpush1.msra.mxu0 0.0
        %2164 = vmatprep.subr.mxu0 0.0
        %2165 = vmatpush1.msra.mxu0 0.0
        %2166 = vmatprep.subr.mxu0 0.0
        %2167 = vmatpush1.msra.mxu0 0.0
        %2168 = vmatprep.subr.mxu0 0.0
        %2169 = vmatpush1.msra.mxu0 0.0
        %2170 = vmatprep.subr.mxu0 0.0
        %2171 = vmatpush1.msra.mxu0 0.0
        %2172 = vmatprep.subr.mxu0 0.0
        %2173 = vmatpush1.msra.mxu0 0.0
        %2174 = vmatprep.subr.mxu0 0.0
        %2175 = vmatpush1.msra.mxu0 0.0
        %2176 = vmatprep.subr.mxu0 0.0
        %2177 = vmatpush1.msra.mxu0 0.0
        %2178 = vmatprep.subr.mxu0 0.0
        %2179 = vmatpush1.msra.mxu0 0.0
        %2180 = vmatprep.subr.mxu0 0.0
        %2181 = vmatpush1.msra.mxu0 0.0
        %2182 = vmatprep.subr.mxu0 0.0
        %2183 = vmatpush1.msra.mxu0 0.0
        %2184 = vmatprep.subr.mxu0 0.0
        %2185 = vmatpush1.msra.mxu0 0.0
        %2186 = vmatprep.subr.mxu0 0.0
        %2187 = vmatpush1.msra.mxu0 0.0
        %2188 = vmatprep.subr.mxu0 0.0
        %2189 = vmatpush1.msra.mxu0 0.0
        %2190 = vmatprep.subr.mxu0 0.0
        %2191 = vmatpush1.msra.mxu0 0.0
        %2192 = vmatprep.subr.mxu0 0.0
        %2193 = vmatpush1.msra.mxu0 0.0
        %2194 = vmatprep.subr.mxu0 0.0
        %2195 = vmatpush1.msra.mxu0 0.0
        %2196 = vmatprep.subr.mxu0 0.0
        %2197 = vmatpush1.msra.mxu0 0.0
        %2198 = vmatprep.subr.mxu0 0.0
        %2199 = vmatpush1.msra.mxu0 0.0
        %2200 = vmatprep.subr.mxu0 0.0
        %2201 = vmatpush1.msra.mxu0 0.0
        %2202 = vmatprep.subr.mxu0 0.0
        %2203 = vmatpush1.msra.mxu0 0.0
        %2204 = vmatprep.subr.mxu0 0.0
        %2205 = vmatpush1.msra.mxu0 0.0
        %2206 = vmatprep.subr.mxu0 0.0
        %2207 = vmatpush1.msra.mxu0 0.0
        %2208 = vmatprep.subr.mxu0 0.0
        %2209 = vmatpush1.msra.mxu0 0.0
        %2210 = vmatprep.mubr.f32.mxu0 0.0
        %2211 = vmatmul.mubr.f32.gmra.mrb[0].mxu0 %v2139
        %v2212 = vpop.f32.mrb[0].mxu0
        %v2213 = vadd.f32 0.0, %v2212
        %v2214 = vpop.f32.mrb[0].mxu0
        %2215 = vmatprep.mubr.f32.mxu0 0.0
        %2216 = vmatmul.mubr.f32.gmra.mrb[0].mxu0 %v2142
        %v2217 = vpop.f32.mrb[0].mxu0
        %v2218 = vadd.f32 0.0, %v2217
        %v2219 = vpop.f32.mrb[0].mxu0
        %2220 = vdwg.mxu0
        %v2221 = vadd.f32 %v2122, %v2213
        %v2222 = vadd.f32 %v2127, %v2218
        %s2223 = sadd.s32 %s1941, 1
        %s2224 = smul.u32 %s2223, 16
        %s2225 = scalar_lea.vmem [#allocation4], %s2224
        %v2226 = vld [vmem:[%s2225] sm:$0xff]
        %v2227 = vld [vmem:[%s2225 + $0x8] sm:$0x3]
        %s2228 = scalar_lea.vmem %s7, 48
        %v2229 = vld [vmem:[%s2228] sm:$0xff]
        %v2230 = vld [vmem:[%s2228 + $0x8] sm:$0x3]
        %v2232 = vsel %vm1962, %v2229, 0
        %v2235 = vsel %vm1962, %v2230, 0
        %v2238 = vsel %vm1969, %v2227, 0
        %2240 = vmatprep.subr.mxu0 0.0
        %2241 = vmatpush1.msra.mxu0 %v2226
        %2242 = vmatprep.subr.mxu0 0.0
        %2243 = vmatpush1.msra.mxu0 %v2238
        %2244 = vmatprep.subr.mxu0 0.0
        %2245 = vmatpush1.msra.mxu0 0.0
        %2246 = vmatprep.subr.mxu0 0.0
        %2247 = vmatpush1.msra.mxu0 0.0
        %2248 = vmatprep.subr.mxu0 0.0
        %2249 = vmatpush1.msra.mxu0 0.0
        %2250 = vmatprep.subr.mxu0 0.0
        %2251 = vmatpush1.msra.mxu0 0.0
        %2252 = vmatprep.subr.mxu0 0.0
        %2253 = vmatpush1.msra.mxu0 0.0
        %2254 = vmatprep.subr.mxu0 0.0
        %2255 = vmatpush1.msra.mxu0 0.0
        %2256 = vmatprep.subr.mxu0 0.0
        %2257 = vmatpush1.msra.mxu0 0.0
        %2258 = vmatprep.subr.mxu0 0.0
        %2259 = vmatpush1.msra.mxu0 0.0
        %2260 = vmatprep.subr.mxu0 0.0
        %2261 = vmatpush1.msra.mxu0 0.0
        %2262 = vmatprep.subr.mxu0 0.0
        %2263 = vmatpush1.msra.mxu0 0.0
        %2264 = vmatprep.subr.mxu0 0.0
        %2265 = vmatpush1.msra.mxu0 0.0
        %2266 = vmatprep.subr.mxu0 0.0
        %2267 = vmatpush1.msra.mxu0 0.0
        %2268 = vmatprep.subr.mxu0 0.0
        %2269 = vmatpush1.msra.mxu0 0.0
        %2270 = vmatprep.subr.mxu0 0.0
        %2271 = vmatpush1.msra.mxu0 0.0
        %2272 = vmatprep.subr.mxu0 0.0
        %2273 = vmatpush1.msra.mxu0 0.0
        %2274 = vmatprep.subr.mxu0 0.0
        %2275 = vmatpush1.msra.mxu0 0.0
        %2276 = vmatprep.subr.mxu0 0.0
        %2277 = vmatpush1.msra.mxu0 0.0
        %2278 = vmatprep.subr.mxu0 0.0
        %2279 = vmatpush1.msra.mxu0 0.0
        %2280 = vmatprep.subr.mxu0 0.0
        %2281 = vmatpush1.msra.mxu0 0.0
        %2282 = vmatprep.subr.mxu0 0.0
        %2283 = vmatpush1.msra.mxu0 0.0
        %2284 = vmatprep.subr.mxu0 0.0
        %2285 = vmatpush1.msra.mxu0 0.0
        %2286 = vmatprep.subr.mxu0 0.0
        %2287 = vmatpush1.msra.mxu0 0.0
        %2288 = vmatprep.subr.mxu0 0.0
        %2289 = vmatpush1.msra.mxu0 0.0
        %2290 = vmatprep.subr.mxu0 0.0
        %2291 = vmatpush1.msra.mxu0 0.0
        %2292 = vmatprep.subr.mxu0 0.0
        %2293 = vmatpush1.msra.mxu0 0.0
        %2294 = vmatprep.subr.mxu0 0.0
        %2295 = vmatpush1.msra.mxu0 0.0
        %2296 = vmatprep.subr.mxu0 0.0
        %2297 = vmatpush1.msra.mxu0 0.0
        %2298 = vmatprep.subr.mxu0 0.0
        %2299 = vmatpush1.msra.mxu0 0.0
        %2300 = vmatprep.subr.mxu0 0.0
        %2301 = vmatpush1.msra.mxu0 0.0
        %2302 = vmatprep.subr.mxu0 0.0
        %2303 = vmatpush1.msra.mxu0 0.0
        %2304 = vmatprep.mubr.f32.mxu0 0.0
        %2305 = vmatmul.mubr.f32.gmra.mrb[0].mxu0 %v2232
        %v2306 = vpop.f32.mrb[0].mxu0
        %v2307 = vadd.f32 0.0, %v2306
        %v2308 = vpop.f32.mrb[0].mxu0
        %2309 = vmatprep.mubr.f32.mxu0 0.0
        %2310 = vmatmul.mubr.f32.gmra.mrb[0].mxu0 %v2235
        %v2311 = vpop.f32.mrb[0].mxu0
        %v2312 = vadd.f32 0.0, %v2311
        %v2313 = vpop.f32.mrb[0].mxu0
        %2314 = vdwg.mxu0
        %v2315 = vadd.f32 %v2221, %v2307
        %v2316 = vadd.f32 %v2222, %v2312
        %s2317 = scalar_lea.vmem %s7, 64
        %v2318 = vld [vmem:[%s2317] sm:$0xff]
        %v2319 = vld [vmem:[%s2317 + $0x8] sm:$0x3]
        %2321 = vrot.lane.b32.xlu0 %v2226, 127
        %v2322 = vpop.permute.xlu0 %2321
        %2323 = vrot.lane.b32.xlu0 %v2227, 127
        %v2324 = vpop.permute.xlu0 %2323
        %v2327 = vsel %vm1962, %v2318, 0
        %v2330 = vsel %vm1962, %v2319, 0
        %v2332 = vsel %vm1969, %v2324, 0
        %2334 = vmatprep.subr.mxu0 0.0
        %2335 = vmatpush1.msra.mxu0 %v2322
        %2336 = vmatprep.subr.mxu0 0.0
        %2337 = vmatpush1.msra.mxu0 %v2332
        %2338 = vmatprep.subr.mxu0 0.0
        %2339 = vmatpush1.msra.mxu0 0.0
        %2340 = vmatprep.subr.mxu0 0.0
        %2341 = vmatpush1.msra.mxu0 0.0
        %2342 = vmatprep.subr.mxu0 0.0
        %2343 = vmatpush1.msra.mxu0 0.0
        %2344 = vmatprep.subr.mxu0 0.0
        %2345 = vmatpush1.msra.mxu0 0.0
        %2346 = vmatprep.subr.mxu0 0.0
        %2347 = vmatpush1.msra.mxu0 0.0
        %2348 = vmatprep.subr.mxu0 0.0
        %2349 = vmatpush1.msra.mxu0 0.0
        %2350 = vmatprep.subr.mxu0 0.0
        %2351 = vmatpush1.msra.mxu0 0.0
        %2352 = vmatprep.subr.mxu0 0.0
        %2353 = vmatpush1.msra.mxu0 0.0
        %2354 = vmatprep.subr.mxu0 0.0
        %2355 = vmatpush1.msra.mxu0 0.0
        %2356 = vmatprep.subr.mxu0 0.0
        %2357 = vmatpush1.msra.mxu0 0.0
        %2358 = vmatprep.subr.mxu0 0.0
        %2359 = vmatpush1.msra.mxu0 0.0
        %2360 = vmatprep.subr.mxu0 0.0
        %2361 = vmatpush1.msra.mxu0 0.0
        %2362 = vmatprep.subr.mxu0 0.0
        %2363 = vmatpush1.msra.mxu0 0.0
        %2364 = vmatprep.subr.mxu0 0.0
        %2365 = vmatpush1.msra.mxu0 0.0
        %2366 = vmatprep.subr.mxu0 0.0
        %2367 = vmatpush1.msra.mxu0 0.0
        %2368 = vmatprep.subr.mxu0 0.0
        %2369 = vmatpush1.msra.mxu0 0.0
        %2370 = vmatprep.subr.mxu0 0.0
        %2371 = vmatpush1.msra.mxu0 0.0
        %2372 = vmatprep.subr.mxu0 0.0
        %2373 = vmatpush1.msra.mxu0 0.0
        %2374 = vmatprep.subr.mxu0 0.0
        %2375 = vmatpush1.msra.mxu0 0.0
        %2376 = vmatprep.subr.mxu0 0.0
        %2377 = vmatpush1.msra.mxu0 0.0
        %2378 = vmatprep.subr.mxu0 0.0
        %2379 = vmatpush1.msra.mxu0 0.0
        %2380 = vmatprep.subr.mxu0 0.0
        %2381 = vmatpush1.msra.mxu0 0.0
        %2382 = vmatprep.subr.mxu0 0.0
        %2383 = vmatpush1.msra.mxu0 0.0
        %2384 = vmatprep.subr.mxu0 0.0
        %2385 = vmatpush1.msra.mxu0 0.0
        %2386 = vmatprep.subr.mxu0 0.0
        %2387 = vmatpush1.msra.mxu0 0.0
        %2388 = vmatprep.subr.mxu0 0.0
        %2389 = vmatpush1.msra.mxu0 0.0
        %2390 = vmatprep.subr.mxu0 0.0
        %2391 = vmatpush1.msra.mxu0 0.0
        %2392 = vmatprep.subr.mxu0 0.0
        %2393 = vmatpush1.msra.mxu0 0.0
        %2394 = vmatprep.subr.mxu0 0.0
        %2395 = vmatpush1.msra.mxu0 0.0
        %2396 = vmatprep.subr.mxu0 0.0
        %2397 = vmatpush1.msra.mxu0 0.0
        %2398 = vmatprep.mubr.f32.mxu0 0.0
        %2399 = vmatmul.mubr.f32.gmra.mrb[0].mxu0 %v2327
        %v2400 = vpop.f32.mrb[0].mxu0
        %v2401 = vadd.f32 0.0, %v2400
        %v2402 = vpop.f32.mrb[0].mxu0
        %2403 = vmatprep.mubr.f32.mxu0 0.0
        %2404 = vmatmul.mubr.f32.gmra.mrb[0].mxu0 %v2330
        %v2405 = vpop.f32.mrb[0].mxu0
        %v2406 = vadd.f32 0.0, %v2405
        %v2407 = vpop.f32.mrb[0].mxu0
        %2408 = vdwg.mxu0
        %v2409 = vadd.f32 %v2315, %v2401
        %v2410 = vadd.f32 %v2316, %v2406
        %s2411 = scalar_lea.vmem %s7, 80
        %v2412 = vld [vmem:[%s2411] sm:$0xff]
        %v2413 = vld [vmem:[%s2411 + $0x8] sm:$0x3]
        %2414 = vrot.lane.b32.xlu0 %v2226, 126
        %v2415 = vpop.permute.xlu0 %2414
        %2416 = vrot.lane.b32.xlu0 %v2227, 126
        %v2417 = vpop.permute.xlu0 %2416
        %v2420 = vsel %vm1962, %v2412, 0
        %v2423 = vsel %vm1962, %v2413, 0
        %v2425 = vsel %vm1969, %v2417, 0
        %2427 = vmatprep.subr.mxu0 0.0
        %2428 = vmatpush1.msra.mxu0 %v2415
        %2429 = vmatprep.subr.mxu0 0.0
        %2430 = vmatpush1.msra.mxu0 %v2425
        %2431 = vmatprep.subr.mxu0 0.0
        %2432 = vmatpush1.msra.mxu0 0.0
        %2433 = vmatprep.subr.mxu0 0.0
        %2434 = vmatpush1.msra.mxu0 0.0
        %2435 = vmatprep.subr.mxu0 0.0
        %2436 = vmatpush1.msra.mxu0 0.0
        %2437 = vmatprep.subr.mxu0 0.0
        %2438 = vmatpush1.msra.mxu0 0.0
        %2439 = vmatprep.subr.mxu0 0.0
        %2440 = vmatpush1.msra.mxu0 0.0
        %2441 = vmatprep.subr.mxu0 0.0
        %2442 = vmatpush1.msra.mxu0 0.0
        %2443 = vmatprep.subr.mxu0 0.0
        %2444 = vmatpush1.msra.mxu0 0.0
        %2445 = vmatprep.subr.mxu0 0.0
        %2446 = vmatpush1.msra.mxu0 0.0
        %2447 = vmatprep.subr.mxu0 0.0
        %2448 = vmatpush1.msra.mxu0 0.0
        %2449 = vmatprep.subr.mxu0 0.0
        %2450 = vmatpush1.msra.mxu0 0.0
        %2451 = vmatprep.subr.mxu0 0.0
        %2452 = vmatpush1.msra.mxu0 0.0
        %2453 = vmatprep.subr.mxu0 0.0
        %2454 = vmatpush1.msra.mxu0 0.0
        %2455 = vmatprep.subr.mxu0 0.0
        %2456 = vmatpush1.msra.mxu0 0.0
        %2457 = vmatprep.subr.mxu0 0.0
        %2458 = vmatpush1.msra.mxu0 0.0
        %2459 = vmatprep.subr.mxu0 0.0
        %2460 = vmatpush1.msra.mxu0 0.0
        %2461 = vmatprep.subr.mxu0 0.0
        %2462 = vmatpush1.msra.mxu0 0.0
        %2463 = vmatprep.subr.mxu0 0.0
        %2464 = vmatpush1.msra.mxu0 0.0
        %2465 = vmatprep.subr.mxu0 0.0
        %2466 = vmatpush1.msra.mxu0 0.0
        %2467 = vmatprep.subr.mxu0 0.0
        %2468 = vmatpush1.msra.mxu0 0.0
        %2469 = vmatprep.subr.mxu0 0.0
        %2470 = vmatpush1.msra.mxu0 0.0
        %2471 = vmatprep.subr.mxu0 0.0
        %2472 = vmatpush1.msra.mxu0 0.0
        %2473 = vmatprep.subr.mxu0 0.0
        %2474 = vmatpush1.msra.mxu0 0.0
        %2475 = vmatprep.subr.mxu0 0.0
        %2476 = vmatpush1.msra.mxu0 0.0
        %2477 = vmatprep.subr.mxu0 0.0
        %2478 = vmatpush1.msra.mxu0 0.0
        %2479 = vmatprep.subr.mxu0 0.0
        %2480 = vmatpush1.msra.mxu0 0.0
        %2481 = vmatprep.subr.mxu0 0.0
        %2482 = vmatpush1.msra.mxu0 0.0
        %2483 = vmatprep.subr.mxu0 0.0
        %2484 = vmatpush1.msra.mxu0 0.0
        %2485 = vmatprep.subr.mxu0 0.0
        %2486 = vmatpush1.msra.mxu0 0.0
        %2487 = vmatprep.subr.mxu0 0.0
        %2488 = vmatpush1.msra.mxu0 0.0
        %2489 = vmatprep.subr.mxu0 0.0
        %2490 = vmatpush1.msra.mxu0 0.0
        %2491 = vmatprep.mubr.f32.mxu0 0.0
        %2492 = vmatmul.mubr.f32.gmra.mrb[0].mxu0 %v2420
        %v2493 = vpop.f32.mrb[0].mxu0
        %v2494 = vadd.f32 0.0, %v2493
        %v2495 = vpop.f32.mrb[0].mxu0
        %2496 = vmatprep.mubr.f32.mxu0 0.0
        %2497 = vmatmul.mubr.f32.gmra.mrb[0].mxu0 %v2423
        %v2498 = vpop.f32.mrb[0].mxu0
        %v2499 = vadd.f32 0.0, %v2498
        %v2500 = vpop.f32.mrb[0].mxu0
        %2501 = vdwg.mxu0
        %v2502 = vadd.f32 %v2409, %v2494
        %v2503 = vadd.f32 %v2410, %v2499
        %s2504 = sadd.s32 %s1941, 2
        %s2505 = smul.u32 %s2504, 16
        %s2506 = scalar_lea.vmem [#allocation4], %s2505
        %v2507 = vld [vmem:[%s2506] sm:$0xff]
        %v2508 = vld [vmem:[%s2506 + $0x8] sm:$0x3]
        %s2509 = scalar_lea.vmem %s7, 96
        %v2510 = vld [vmem:[%s2509] sm:$0xff]
        %v2511 = vld [vmem:[%s2509 + $0x8] sm:$0x3]
        %v2513 = vsel %vm1962, %v2510, 0
        %v2516 = vsel %vm1962, %v2511, 0
        %v2519 = vsel %vm1969, %v2508, 0
        %2521 = vmatprep.subr.mxu0 0.0
        %2522 = vmatpush1.msra.mxu0 %v2507
        %2523 = vmatprep.subr.mxu0 0.0
        %2524 = vmatpush1.msra.mxu0 %v2519
        %2525 = vmatprep.subr.mxu0 0.0
        %2526 = vmatpush1.msra.mxu0 0.0
        %2527 = vmatprep.subr.mxu0 0.0
        %2528 = vmatpush1.msra.mxu0 0.0
        %2529 = vmatprep.subr.mxu0 0.0
        %2530 = vmatpush1.msra.mxu0 0.0
        %2531 = vmatprep.subr.mxu0 0.0
        %2532 = vmatpush1.msra.mxu0 0.0
        %2533 = vmatprep.subr.mxu0 0.0
        %2534 = vmatpush1.msra.mxu0 0.0
        %2535 = vmatprep.subr.mxu0 0.0
        %2536 = vmatpush1.msra.mxu0 0.0
        %2537 = vmatprep.subr.mxu0 0.0
        %2538 = vmatpush1.msra.mxu0 0.0
        %2539 = vmatprep.subr.mxu0 0.0
        %2540 = vmatpush1.msra.mxu0 0.0
        %2541 = vmatprep.subr.mxu0 0.0
        %2542 = vmatpush1.msra.mxu0 0.0
        %2543 = vmatprep.subr.mxu0 0.0
        %2544 = vmatpush1.msra.mxu0 0.0
        %2545 = vmatprep.subr.mxu0 0.0
        %2546 = vmatpush1.msra.mxu0 0.0
        %2547 = vmatprep.subr.mxu0 0.0
        %2548 = vmatpush1.msra.mxu0 0.0
        %2549 = vmatprep.subr.mxu0 0.0
        %2550 = vmatpush1.msra.mxu0 0.0
        %2551 = vmatprep.subr.mxu0 0.0
        %2552 = vmatpush1.msra.mxu0 0.0
        %2553 = vmatprep.subr.mxu0 0.0
        %2554 = vmatpush1.msra.mxu0 0.0
        %2555 = vmatprep.subr.mxu0 0.0
        %2556 = vmatpush1.msra.mxu0 0.0
        %2557 = vmatprep.subr.mxu0 0.0
        %2558 = vmatpush1.msra.mxu0 0.0
        %2559 = vmatprep.subr.mxu0 0.0
        %2560 = vmatpush1.msra.mxu0 0.0
        %2561 = vmatprep.subr.mxu0 0.0
        %2562 = vmatpush1.msra.mxu0 0.0
        %2563 = vmatprep.subr.mxu0 0.0
        %2564 = vmatpush1.msra.mxu0 0.0
        %2565 = vmatprep.subr.mxu0 0.0
        %2566 = vmatpush1.msra.mxu0 0.0
        %2567 = vmatprep.subr.mxu0 0.0
        %2568 = vmatpush1.msra.mxu0 0.0
        %2569 = vmatprep.subr.mxu0 0.0
        %2570 = vmatpush1.msra.mxu0 0.0
        %2571 = vmatprep.subr.mxu0 0.0
        %2572 = vmatpush1.msra.mxu0 0.0
        %2573 = vmatprep.subr.mxu0 0.0
        %2574 = vmatpush1.msra.mxu0 0.0
        %2575 = vmatprep.subr.mxu0 0.0
        %2576 = vmatpush1.msra.mxu0 0.0
        %2577 = vmatprep.subr.mxu0 0.0
        %2578 = vmatpush1.msra.mxu0 0.0
        %2579 = vmatprep.subr.mxu0 0.0
        %2580 = vmatpush1.msra.mxu0 0.0
        %2581 = vmatprep.subr.mxu0 0.0
        %2582 = vmatpush1.msra.mxu0 0.0
        %2583 = vmatprep.subr.mxu0 0.0
        %2584 = vmatpush1.msra.mxu0 0.0
        %2585 = vmatprep.mubr.f32.mxu0 0.0
        %2586 = vmatmul.mubr.f32.gmra.mrb[0].mxu0 %v2513
        %v2587 = vpop.f32.mrb[0].mxu0
        %v2588 = vadd.f32 0.0, %v2587
        %v2589 = vpop.f32.mrb[0].mxu0
        %2590 = vmatprep.mubr.f32.mxu0 0.0
        %2591 = vmatmul.mubr.f32.gmra.mrb[0].mxu0 %v2516
        %v2592 = vpop.f32.mrb[0].mxu0
        %v2593 = vadd.f32 0.0, %v2592
        %v2594 = vpop.f32.mrb[0].mxu0
        %2595 = vdwg.mxu0
        %v2596 = vadd.f32 %v2502, %v2588
        %v2597 = vadd.f32 %v2503, %v2593
        %s2598 = scalar_lea.vmem %s7, 112
        %v2599 = vld [vmem:[%s2598] sm:$0xff]
        %v2600 = vld [vmem:[%s2598 + $0x8] sm:$0x3]
        %2602 = vrot.lane.b32.xlu0 %v2507, 127
        %v2603 = vpop.permute.xlu0 %2602
        %2604 = vrot.lane.b32.xlu0 %v2508, 127
        %v2605 = vpop.permute.xlu0 %2604
        %v2608 = vsel %vm1962, %v2599, 0
        %v2611 = vsel %vm1962, %v2600, 0
        %v2613 = vsel %vm1969, %v2605, 0
        %2615 = vmatprep.subr.mxu0 0.0
        %2616 = vmatpush1.msra.mxu0 %v2603
        %2617 = vmatprep.subr.mxu0 0.0
        %2618 = vmatpush1.msra.mxu0 %v2613
        %2619 = vmatprep.subr.mxu0 0.0
        %2620 = vmatpush1.msra.mxu0 0.0
        %2621 = vmatprep.subr.mxu0 0.0
        %2622 = vmatpush1.msra.mxu0 0.0
        %2623 = vmatprep.subr.mxu0 0.0
        %2624 = vmatpush1.msra.mxu0 0.0
        %2625 = vmatprep.subr.mxu0 0.0
        %2626 = vmatpush1.msra.mxu0 0.0
        %2627 = vmatprep.subr.mxu0 0.0
        %2628 = vmatpush1.msra.mxu0 0.0
        %2629 = vmatprep.subr.mxu0 0.0
        %2630 = vmatpush1.msra.mxu0 0.0
        %2631 = vmatprep.subr.mxu0 0.0
        %2632 = vmatpush1.msra.mxu0 0.0
        %2633 = vmatprep.subr.mxu0 0.0
        %2634 = vmatpush1.msra.mxu0 0.0
        %2635 = vmatprep.subr.mxu0 0.0
        %2636 = vmatpush1.msra.mxu0 0.0
        %2637 = vmatprep.subr.mxu0 0.0
        %2638 = vmatpush1.msra.mxu0 0.0
        %2639 = vmatprep.subr.mxu0 0.0
        %2640 = vmatpush1.msra.mxu0 0.0
        %2641 = vmatprep.subr.mxu0 0.0
        %2642 = vmatpush1.msra.mxu0 0.0
        %2643 = vmatprep.subr.mxu0 0.0
        %2644 = vmatpush1.msra.mxu0 0.0
        %2645 = vmatprep.subr.mxu0 0.0
        %2646 = vmatpush1.msra.mxu0 0.0
        %2647 = vmatprep.subr.mxu0 0.0
        %2648 = vmatpush1.msra.mxu0 0.0
        %2649 = vmatprep.subr.mxu0 0.0
        %2650 = vmatpush1.msra.mxu0 0.0
        %2651 = vmatprep.subr.mxu0 0.0
        %2652 = vmatpush1.msra.mxu0 0.0
        %2653 = vmatprep.subr.mxu0 0.0
        %2654 = vmatpush1.msra.mxu0 0.0
        %2655 = vmatprep.subr.mxu0 0.0
        %2656 = vmatpush1.msra.mxu0 0.0
        %2657 = vmatprep.subr.mxu0 0.0
        %2658 = vmatpush1.msra.mxu0 0.0
        %2659 = vmatprep.subr.mxu0 0.0
        %2660 = vmatpush1.msra.mxu0 0.0
        %2661 = vmatprep.subr.mxu0 0.0
        %2662 = vmatpush1.msra.mxu0 0.0
        %2663 = vmatprep.subr.mxu0 0.0
        %2664 = vmatpush1.msra.mxu0 0.0
        %2665 = vmatprep.subr.mxu0 0.0
        %2666 = vmatpush1.msra.mxu0 0.0
        %2667 = vmatprep.subr.mxu0 0.0
        %2668 = vmatpush1.msra.mxu0 0.0
        %2669 = vmatprep.subr.mxu0 0.0
        %2670 = vmatpush1.msra.mxu0 0.0
        %2671 = vmatprep.subr.mxu0 0.0
        %2672 = vmatpush1.msra.mxu0 0.0
        %2673 = vmatprep.subr.mxu0 0.0
        %2674 = vmatpush1.msra.mxu0 0.0
        %2675 = vmatprep.subr.mxu0 0.0
        %2676 = vmatpush1.msra.mxu0 0.0
        %2677 = vmatprep.subr.mxu0 0.0
        %2678 = vmatpush1.msra.mxu0 0.0
        %2679 = vmatprep.mubr.f32.mxu0 0.0
        %2680 = vmatmul.mubr.f32.gmra.mrb[0].mxu0 %v2608
        %v2681 = vpop.f32.mrb[0].mxu0
        %v2682 = vadd.f32 0.0, %v2681
        %v2683 = vpop.f32.mrb[0].mxu0
        %2684 = vmatprep.mubr.f32.mxu0 0.0
        %2685 = vmatmul.mubr.f32.gmra.mrb[0].mxu0 %v2611
        %v2686 = vpop.f32.mrb[0].mxu0
        %v2687 = vadd.f32 0.0, %v2686
        %v2688 = vpop.f32.mrb[0].mxu0
        %2689 = vdwg.mxu0
        %v2690 = vadd.f32 %v2596, %v2682
        %v2691 = vadd.f32 %v2597, %v2687
        %s2692 = scalar_lea.vmem %s7, 128
        %v2693 = vld [vmem:[%s2692] sm:$0xff]
        %v2694 = vld [vmem:[%s2692 + $0x8] sm:$0x3]
        %2695 = vrot.lane.b32.xlu0 %v2507, 126
        %v2696 = vpop.permute.xlu0 %2695
        %2697 = vrot.lane.b32.xlu0 %v2508, 126
        %v2698 = vpop.permute.xlu0 %2697
        %v2701 = vsel %vm1962, %v2693, 0
        %v2704 = vsel %vm1962, %v2694, 0
        %v2706 = vsel %vm1969, %v2698, 0
        %2708 = vmatprep.subr.mxu0 0.0
        %2709 = vmatpush1.msra.mxu0 %v2696
        %2710 = vmatprep.subr.mxu0 0.0
        %2711 = vmatpush1.msra.mxu0 %v2706
        %2712 = vmatprep.subr.mxu0 0.0
        %2713 = vmatpush1.msra.mxu0 0.0
        %2714 = vmatprep.subr.mxu0 0.0
        %2715 = vmatpush1.msra.mxu0 0.0
        %2716 = vmatprep.subr.mxu0 0.0
        %2717 = vmatpush1.msra.mxu0 0.0
        %2718 = vmatprep.subr.mxu0 0.0
        %2719 = vmatpush1.msra.mxu0 0.0
        %2720 = vmatprep.subr.mxu0 0.0
        %2721 = vmatpush1.msra.mxu0 0.0
        %2722 = vmatprep.subr.mxu0 0.0
        %2723 = vmatpush1.msra.mxu0 0.0
        %2724 = vmatprep.subr.mxu0 0.0
        %2725 = vmatpush1.msra.mxu0 0.0
        %2726 = vmatprep.subr.mxu0 0.0
        %2727 = vmatpush1.msra.mxu0 0.0
        %2728 = vmatprep.subr.mxu0 0.0
        %2729 = vmatpush1.msra.mxu0 0.0
        %2730 = vmatprep.subr.mxu0 0.0
        %2731 = vmatpush1.msra.mxu0 0.0
        %2732 = vmatprep.subr.mxu0 0.0
        %2733 = vmatpush1.msra.mxu0 0.0
        %2734 = vmatprep.subr.mxu0 0.0
        %2735 = vmatpush1.msra.mxu0 0.0
        %2736 = vmatprep.subr.mxu0 0.0
        %2737 = vmatpush1.msra.mxu0 0.0
        %2738 = vmatprep.subr.mxu0 0.0
        %2739 = vmatpush1.msra.mxu0 0.0
        %2740 = vmatprep.subr.mxu0 0.0
        %2741 = vmatpush1.msra.mxu0 0.0
        %2742 = vmatprep.subr.mxu0 0.0
        %2743 = vmatpush1.msra.mxu0 0.0
        %2744 = vmatprep.subr.mxu0 0.0
        %2745 = vmatpush1.msra.mxu0 0.0
        %2746 = vmatprep.subr.mxu0 0.0
        %2747 = vmatpush1.msra.mxu0 0.0
        %2748 = vmatprep.subr.mxu0 0.0
        %2749 = vmatpush1.msra.mxu0 0.0
        %2750 = vmatprep.subr.mxu0 0.0
        %2751 = vmatpush1.msra.mxu0 0.0
        %2752 = vmatprep.subr.mxu0 0.0
        %2753 = vmatpush1.msra.mxu0 0.0
        %2754 = vmatprep.subr.mxu0 0.0
        %2755 = vmatpush1.msra.mxu0 0.0
        %2756 = vmatprep.subr.mxu0 0.0
        %2757 = vmatpush1.msra.mxu0 0.0
        %2758 = vmatprep.subr.mxu0 0.0
        %2759 = vmatpush1.msra.mxu0 0.0
        %2760 = vmatprep.subr.mxu0 0.0
        %2761 = vmatpush1.msra.mxu0 0.0
        %2762 = vmatprep.subr.mxu0 0.0
        %2763 = vmatpush1.msra.mxu0 0.0
        %2764 = vmatprep.subr.mxu0 0.0
        %2765 = vmatpush1.msra.mxu0 0.0
        %2766 = vmatprep.subr.mxu0 0.0
        %2767 = vmatpush1.msra.mxu0 0.0
        %2768 = vmatprep.subr.mxu0 0.0
        %2769 = vmatpush1.msra.mxu0 0.0
        %2770 = vmatprep.subr.mxu0 0.0
        %2771 = vmatpush1.msra.mxu0 0.0
        %2772 = vmatprep.mubr.f32.mxu0 0.0
        %2773 = vmatmul.mubr.f32.gmra.mrb[0].mxu0 %v2701
        %v2774 = vpop.f32.mrb[0].mxu0
        %v2775 = vadd.f32 0.0, %v2774
        %v2776 = vpop.f32.mrb[0].mxu0
        %2777 = vmatprep.mubr.f32.mxu0 0.0
        %2778 = vmatmul.mubr.f32.gmra.mrb[0].mxu0 %v2704
        %v2779 = vpop.f32.mrb[0].mxu0
        %v2780 = vadd.f32 0.0, %v2779
        %v2781 = vpop.f32.mrb[0].mxu0
        %2782 = vdwg.mxu0
        %v2783 = vadd.f32 %v2690, %v2775
        %v2784 = vadd.f32 %v2691, %v2780
        %v2785 = vld [vmem:[%s8] sm:$0xff]
        %v2786 = vld [vmem:[%s8 + $0x8] sm:$0x3]
        %2788 = vset.pattern.permute.xlu0 0
        %2789 = vperm.xlu0 %2788, %v2785
        %v2790 = vpop.permute.xlu0 %2789
        %2793 = vset.pattern.permute.xlu0 0
        %2794 = vperm.xlu0 %2793, %v2786
        %v2795 = vpop.permute.xlu0 %2794
        %v2797 = vadd.f32 %v2783, %v2790
        %v2798 = vadd.f32 %v2784, %v2795
        %v2799 = vmax.f32 %v2797, 0.0
        %v2800 = vmax.f32 %v2798, 0.0
        %s2801 = scalar_lea.vmem [#allocation5], %s1946
        %2802 = vst.msk [vmem:[%s2801] sm:$0xff] %vm1962, %v2799
        %vm2803 = vcmask 74752
        %2804 = vst.msk [vmem:[%s2801 + $0x8] sm:$0x3] %vm2803, %v2800
      $region122: #{net8_forward.1} parent=95 // loop_footer
        %s1945 = sadd.s32 1, %s1941
      $region123: #{net8_forward.1} parent=95 // loop_footer_branch
        %1940 = sbr.rel target = $region119
      $region124: #{net8_forward.1} parent=95 // loop_exit
        _
      loop: start=0, step=1, limit=8
      $region125: #{net8_forward.1} parent=95 // loop_pre_header
        _
      $region126: #{net8_forward.1} parent=95 // loop_header
        %s2806 = sphi 0, %s2810
        %p2807 = scmp.ge.s32.totalorder %s2806, 8
      $region127: #{net8_forward.1} parent=95 // loop_header_branch
        %2809 = sbr.rel (%p2807) target = $region131
      $region128: #{net8_forward.1} parent=95 // loop_body
        %s2811 = smul.u32 %s2806, 16
        %s2812 = scalar_lea.vmem [#allocation5], %s2811
        %v2813 = vld [vmem:[%s2812] sm:$0xff]
        %v2814 = vld [vmem:[%s2812 + $0x8] sm:$0x3]
        %v2815 = vld [vmem:[%s9] sm:$0xff]
        %v2816 = vld [vmem:[%s9 + $0x8] sm:$0xff]
        %s2817 = scalar_lea.vmem %s9, 16
        %v2818 = vld [vmem:[%s2817] sm:$0xff]
        %v2819 = vld [vmem:[%s2817 + $0x8] sm:$0xff]
        %2822 = vrot.lane.b32.xlu0 %v2813, 127
        %v2823 = vpop.permute.xlu0 %2822
        %2824 = vrot.lane.b32.xlu0 %v2814, 127
        %v2825 = vpop.permute.xlu0 %2824
        %vm2827 = vcmask 80896
        %v2829 = vsel %vm2827, %v2818, 0
        %v2832 = vsel %vm2827, %v2819, 0
        %vm2834 = vcmask 1041408
        %v2835 = vsel %vm2834, %v2825, 0
        %2837 = vmatprep.subr.mxu0 0.0
        %2838 = vmatpush1.msra.mxu0 %v2823
        %2839 = vmatprep.subr.mxu0 0.0
        %2840 = vmatpush1.msra.mxu0 %v2835
        %2841 = vmatprep.subr.mxu0 0.0
        %2842 = vmatpush1.msra.mxu0 0.0
        %2843 = vmatprep.subr.mxu0 0.0
        %2844 = vmatpush1.msra.mxu0 0.0
        %2845 = vmatprep.subr.mxu0 0.0
        %2846 = vmatpush1.msra.mxu0 0.0
        %2847 = vmatprep.subr.mxu0 0.0
        %2848 = vmatpush1.msra.mxu0 0.0
        %2849 = vmatprep.subr.mxu0 0.0
        %2850 = vmatpush1.msra.mxu0 0.0
        %2851 = vmatprep.subr.mxu0 0.0
        %2852 = vmatpush1.msra.mxu0 0.0
        %2853 = vmatprep.subr.mxu0 0.0
        %2854 = vmatpush1.msra.mxu0 0.0
        %2855 = vmatprep.subr.mxu0 0.0
        %2856 = vmatpush1.msra.mxu0 0.0
        %2857 = vmatprep.subr.mxu0 0.0
        %2858 = vmatpush1.msra.mxu0 0.0
        %2859 = vmatprep.subr.mxu0 0.0
        %2860 = vmatpush1.msra.mxu0 0.0
        %2861 = vmatprep.subr.mxu0 0.0
        %2862 = vmatpush1.msra.mxu0 0.0
        %2863 = vmatprep.subr.mxu0 0.0
        %2864 = vmatpush1.msra.mxu0 0.0
        %2865 = vmatprep.subr.mxu0 0.0
        %2866 = vmatpush1.msra.mxu0 0.0
        %2867 = vmatprep.subr.mxu0 0.0
        %2868 = vmatpush1.msra.mxu0 0.0
        %2869 = vmatprep.subr.mxu0 0.0
        %2870 = vmatpush1.msra.mxu0 0.0
        %2871 = vmatprep.subr.mxu0 0.0
        %2872 = vmatpush1.msra.mxu0 0.0
        %2873 = vmatprep.subr.mxu0 0.0
        %2874 = vmatpush1.msra.mxu0 0.0
        %2875 = vmatprep.subr.mxu0 0.0
        %2876 = vmatpush1.msra.mxu0 0.0
        %2877 = vmatprep.subr.mxu0 0.0
        %2878 = vmatpush1.msra.mxu0 0.0
        %2879 = vmatprep.subr.mxu0 0.0
        %2880 = vmatpush1.msra.mxu0 0.0
        %2881 = vmatprep.subr.mxu0 0.0
        %2882 = vmatpush1.msra.mxu0 0.0
        %2883 = vmatprep.subr.mxu0 0.0
        %2884 = vmatpush1.msra.mxu0 0.0
        %2885 = vmatprep.subr.mxu0 0.0
        %2886 = vmatpush1.msra.mxu0 0.0
        %2887 = vmatprep.subr.mxu0 0.0
        %2888 = vmatpush1.msra.mxu0 0.0
        %2889 = vmatprep.subr.mxu0 0.0
        %2890 = vmatpush1.msra.mxu0 0.0
        %2891 = vmatprep.subr.mxu0 0.0
        %2892 = vmatpush1.msra.mxu0 0.0
        %2893 = vmatprep.subr.mxu0 0.0
        %2894 = vmatpush1.msra.mxu0 0.0
        %2895 = vmatprep.subr.mxu0 0.0
        %2896 = vmatpush1.msra.mxu0 0.0
        %2897 = vmatprep.subr.mxu0 0.0
        %2898 = vmatpush1.msra.mxu0 0.0
        %2899 = vmatprep.subr.mxu0 0.0
        %2900 = vmatpush1.msra.mxu0 0.0
        %2901 = vmatprep.mubr.f32.mxu0 0.0
        %2902 = vmatmul.mubr.f32.gmra.mrb[0].mxu0 %v2829
        %v2903 = vpop.f32.mrb[0].mxu0
        %v2904 = vadd.f32 0.0, %v2903
        %v2905 = vpop.f32.mrb[0].mxu0
        %2906 = vmatprep.mubr.f32.mxu0 0.0
        %2907 = vmatmul.mubr.f32.gmra.mrb[0].mxu0 %v2832
        %v2908 = vpop.f32.mrb[0].mxu0
        %v2909 = vadd.f32 0.0, %v2908
        %v2910 = vpop.f32.mrb[0].mxu0
        %2911 = vdwg.mxu0
        %v2913 = vsel %vm2827, %v2815, 0
        %v2916 = vsel %vm2827, %v2816, 0
        %v2918 = vsel %vm2834, %v2814, 0
        %2920 = vmatprep.subr.mxu0 0.0
        %2921 = vmatpush1.msra.mxu0 %v2813
        %2922 = vmatprep.subr.mxu0 0.0
        %2923 = vmatpush1.msra.mxu0 %v2918
        %2924 = vmatprep.subr.mxu0 0.0
        %2925 = vmatpush1.msra.mxu0 0.0
        %2926 = vmatprep.subr.mxu0 0.0
        %2927 = vmatpush1.msra.mxu0 0.0
        %2928 = vmatprep.subr.mxu0 0.0
        %2929 = vmatpush1.msra.mxu0 0.0
        %2930 = vmatprep.subr.mxu0 0.0
        %2931 = vmatpush1.msra.mxu0 0.0
        %2932 = vmatprep.subr.mxu0 0.0
        %2933 = vmatpush1.msra.mxu0 0.0
        %2934 = vmatprep.subr.mxu0 0.0
        %2935 = vmatpush1.msra.mxu0 0.0
        %2936 = vmatprep.subr.mxu0 0.0
        %2937 = vmatpush1.msra.mxu0 0.0
        %2938 = vmatprep.subr.mxu0 0.0
        %2939 = vmatpush1.msra.mxu0 0.0
        %2940 = vmatprep.subr.mxu0 0.0
        %2941 = vmatpush1.msra.mxu0 0.0
        %2942 = vmatprep.subr.mxu0 0.0
        %2943 = vmatpush1.msra.mxu0 0.0
        %2944 = vmatprep.subr.mxu0 0.0
        %2945 = vmatpush1.msra.mxu0 0.0
        %2946 = vmatprep.subr.mxu0 0.0
        %2947 = vmatpush1.msra.mxu0 0.0
        %2948 = vmatprep.subr.mxu0 0.0
        %2949 = vmatpush1.msra.mxu0 0.0
        %2950 = vmatprep.subr.mxu0 0.0
        %2951 = vmatpush1.msra.mxu0 0.0
        %2952 = vmatprep.subr.mxu0 0.0
        %2953 = vmatpush1.msra.mxu0 0.0
        %2954 = vmatprep.subr.mxu0 0.0
        %2955 = vmatpush1.msra.mxu0 0.0
        %2956 = vmatprep.subr.mxu0 0.0
        %2957 = vmatpush1.msra.mxu0 0.0
        %2958 = vmatprep.subr.mxu0 0.0
        %2959 = vmatpush1.msra.mxu0 0.0
        %2960 = vmatprep.subr.mxu0 0.0
        %2961 = vmatpush1.msra.mxu0 0.0
        %2962 = vmatprep.subr.mxu0 0.0
        %2963 = vmatpush1.msra.mxu0 0.0
        %2964 = vmatprep.subr.mxu0 0.0
        %2965 = vmatpush1.msra.mxu0 0.0
        %2966 = vmatprep.subr.mxu0 0.0
        %2967 = vmatpush1.msra.mxu0 0.0
        %2968 = vmatprep.subr.mxu0 0.0
        %2969 = vmatpush1.msra.mxu0 0.0
        %2970 = vmatprep.subr.mxu0 0.0
        %2971 = vmatpush1.msra.mxu0 0.0
        %2972 = vmatprep.subr.mxu0 0.0
        %2973 = vmatpush1.msra.mxu0 0.0
        %2974 = vmatprep.subr.mxu0 0.0
        %2975 = vmatpush1.msra.mxu0 0.0
        %2976 = vmatprep.subr.mxu0 0.0
        %2977 = vmatpush1.msra.mxu0 0.0
        %2978 = vmatprep.subr.mxu0 0.0
        %2979 = vmatpush1.msra.mxu0 0.0
        %2980 = vmatprep.subr.mxu0 0.0
        %2981 = vmatpush1.msra.mxu0 0.0
        %2982 = vmatprep.subr.mxu0 0.0
        %2983 = vmatpush1.msra.mxu0 0.0
        %2984 = vmatprep.mubr.f32.mxu0 0.0
        %2985 = vmatmul.mubr.f32.gmra.mrb[0].mxu0 %v2913
        %v2986 = vpop.f32.mrb[0].mxu0
        %v2987 = vadd.f32 %v2904, %v2986
        %v2988 = vpop.f32.mrb[0].mxu0
        %2989 = vmatprep.mubr.f32.mxu0 0.0
        %2990 = vmatmul.mubr.f32.gmra.mrb[0].mxu0 %v2916
        %v2991 = vpop.f32.mrb[0].mxu0
        %v2992 = vadd.f32 %v2909, %v2991
        %v2993 = vpop.f32.mrb[0].mxu0
        %2994 = vdwg.mxu0
        %s2995 = scalar_lea.vmem %s9, 32
        %v2996 = vld [vmem:[%s2995] sm:$0xff]
        %v2997 = vld [vmem:[%s2995 + $0x8] sm:$0xff]
        %2998 = vrot.lane.b32.xlu0 %v2813, 126
        %v2999 = vpop.permute.xlu0 %2998
        %3000 = vrot.lane.b32.xlu0 %v2814, 126
        %v3001 = vpop.permute.xlu0 %3000
        %v3004 = vsel %vm2827, %v2996, 0
        %v3007 = vsel %vm2827, %v2997, 0
        %v3009 = vsel %vm2834, %v3001, 0
        %3011 = vmatprep.subr.mxu0 0.0
        %3012 = vmatpush1.msra.mxu0 %v2999
        %3013 = vmatprep.subr.mxu0 0.0
        %3014 = vmatpush1.msra.mxu0 %v3009
        %3015 = vmatprep.subr.mxu0 0.0
        %3016 = vmatpush1.msra.mxu0 0.0
        %3017 = vmatprep.subr.mxu0 0.0
        %3018 = vmatpush1.msra.mxu0 0.0
        %3019 = vmatprep.subr.mxu0 0.0
        %3020 = vmatpush1.msra.mxu0 0.0
        %3021 = vmatprep.subr.mxu0 0.0
        %3022 = vmatpush1.msra.mxu0 0.0
        %3023 = vmatprep.subr.mxu0 0.0
        %3024 = vmatpush1.msra.mxu0 0.0
        %3025 = vmatprep.subr.mxu0 0.0
        %3026 = vmatpush1.msra.mxu0 0.0
        %3027 = vmatprep.subr.mxu0 0.0
        %3028 = vmatpush1.msra.mxu0 0.0
        %3029 = vmatprep.subr.mxu0 0.0
        %3030 = vmatpush1.msra.mxu0 0.0
        %3031 = vmatprep.subr.mxu0 0.0
        %3032 = vmatpush1.msra.mxu0 0.0
        %3033 = vmatprep.subr.mxu0 0.0
        %3034 = vmatpush1.msra.mxu0 0.0
        %3035 = vmatprep.subr.mxu0 0.0
        %3036 = vmatpush1.msra.mxu0 0.0
        %3037 = vmatprep.subr.mxu0 0.0
        %3038 = vmatpush1.msra.mxu0 0.0
        %3039 = vmatprep.subr.mxu0 0.0
        %3040 = vmatpush1.msra.mxu0 0.0
        %3041 = vmatprep.subr.mxu0 0.0
        %3042 = vmatpush1.msra.mxu0 0.0
        %3043 = vmatprep.subr.mxu0 0.0
        %3044 = vmatpush1.msra.mxu0 0.0
        %3045 = vmatprep.subr.mxu0 0.0
        %3046 = vmatpush1.msra.mxu0 0.0
        %3047 = vmatprep.subr.mxu0 0.0
        %3048 = vmatpush1.msra.mxu0 0.0
        %3049 = vmatprep.subr.mxu0 0.0
        %3050 = vmatpush1.msra.mxu0 0.0
        %3051 = vmatprep.subr.mxu0 0.0
        %3052 = vmatpush1.msra.mxu0 0.0
        %3053 = vmatprep.subr.mxu0 0.0
        %3054 = vmatpush1.msra.mxu0 0.0
        %3055 = vmatprep.subr.mxu0 0.0
        %3056 = vmatpush1.msra.mxu0 0.0
        %3057 = vmatprep.subr.mxu0 0.0
        %3058 = vmatpush1.msra.mxu0 0.0
        %3059 = vmatprep.subr.mxu0 0.0
        %3060 = vmatpush1.msra.mxu0 0.0
        %3061 = vmatprep.subr.mxu0 0.0
        %3062 = vmatpush1.msra.mxu0 0.0
        %3063 = vmatprep.subr.mxu0 0.0
        %3064 = vmatpush1.msra.mxu0 0.0
        %3065 = vmatprep.subr.mxu0 0.0
        %3066 = vmatpush1.msra.mxu0 0.0
        %3067 = vmatprep.subr.mxu0 0.0
        %3068 = vmatpush1.msra.mxu0 0.0
        %3069 = vmatprep.subr.mxu0 0.0
        %3070 = vmatpush1.msra.mxu0 0.0
        %3071 = vmatprep.subr.mxu0 0.0
        %3072 = vmatpush1.msra.mxu0 0.0
        %3073 = vmatprep.subr.mxu0 0.0
        %3074 = vmatpush1.msra.mxu0 0.0
        %3075 = vmatprep.mubr.f32.mxu0 0.0
        %3076 = vmatmul.mubr.f32.gmra.mrb[0].mxu0 %v3004
        %v3077 = vpop.f32.mrb[0].mxu0
        %v3078 = vadd.f32 0.0, %v3077
        %v3079 = vpop.f32.mrb[0].mxu0
        %3080 = vmatprep.mubr.f32.mxu0 0.0
        %3081 = vmatmul.mubr.f32.gmra.mrb[0].mxu0 %v3007
        %v3082 = vpop.f32.mrb[0].mxu0
        %v3083 = vadd.f32 0.0, %v3082
        %v3084 = vpop.f32.mrb[0].mxu0
        %3085 = vdwg.mxu0
        %v3086 = vadd.f32 %v2987, %v3078
        %v3087 = vadd.f32 %v2992, %v3083
        %s3088 = sadd.s32 %s2806, 1
        %s3089 = smul.u32 %s3088, 16
        %s3090 = scalar_lea.vmem [#allocation5], %s3089
        %v3091 = vld [vmem:[%s3090] sm:$0xff]
        %v3092 = vld [vmem:[%s3090 + $0x8] sm:$0x3]
        %s3093 = scalar_lea.vmem %s9, 48
        %v3094 = vld [vmem:[%s3093] sm:$0xff]
        %v3095 = vld [vmem:[%s3093 + $0x8] sm:$0xff]
        %v3097 = vsel %vm2827, %v3094, 0
        %v3100 = vsel %vm2827, %v3095, 0
        %v3103 = vsel %vm2834, %v3092, 0
        %3105 = vmatprep.subr.mxu0 0.0
        %3106 = vmatpush1.msra.mxu0 %v3091
        %3107 = vmatprep.subr.mxu0 0.0
        %3108 = vmatpush1.msra.mxu0 %v3103
        %3109 = vmatprep.subr.mxu0 0.0
        %3110 = vmatpush1.msra.mxu0 0.0
        %3111 = vmatprep.subr.mxu0 0.0
        %3112 = vmatpush1.msra.mxu0 0.0
        %3113 = vmatprep.subr.mxu0 0.0
        %3114 = vmatpush1.msra.mxu0 0.0
        %3115 = vmatprep.subr.mxu0 0.0
        %3116 = vmatpush1.msra.mxu0 0.0
        %3117 = vmatprep.subr.mxu0 0.0
        %3118 = vmatpush1.msra.mxu0 0.0
        %3119 = vmatprep.subr.mxu0 0.0
        %3120 = vmatpush1.msra.mxu0 0.0
        %3121 = vmatprep.subr.mxu0 0.0
        %3122 = vmatpush1.msra.mxu0 0.0
        %3123 = vmatprep.subr.mxu0 0.0
        %3124 = vmatpush1.msra.mxu0 0.0
        %3125 = vmatprep.subr.mxu0 0.0
        %3126 = vmatpush1.msra.mxu0 0.0
        %3127 = vmatprep.subr.mxu0 0.0
        %3128 = vmatpush1.msra.mxu0 0.0
        %3129 = vmatprep.subr.mxu0 0.0
        %3130 = vmatpush1.msra.mxu0 0.0
        %3131 = vmatprep.subr.mxu0 0.0
        %3132 = vmatpush1.msra.mxu0 0.0
        %3133 = vmatprep.subr.mxu0 0.0
        %3134 = vmatpush1.msra.mxu0 0.0
        %3135 = vmatprep.subr.mxu0 0.0
        %3136 = vmatpush1.msra.mxu0 0.0
        %3137 = vmatprep.subr.mxu0 0.0
        %3138 = vmatpush1.msra.mxu0 0.0
        %3139 = vmatprep.subr.mxu0 0.0
        %3140 = vmatpush1.msra.mxu0 0.0
        %3141 = vmatprep.subr.mxu0 0.0
        %3142 = vmatpush1.msra.mxu0 0.0
        %3143 = vmatprep.subr.mxu0 0.0
        %3144 = vmatpush1.msra.mxu0 0.0
        %3145 = vmatprep.subr.mxu0 0.0
        %3146 = vmatpush1.msra.mxu0 0.0
        %3147 = vmatprep.subr.mxu0 0.0
        %3148 = vmatpush1.msra.mxu0 0.0
        %3149 = vmatprep.subr.mxu0 0.0
        %3150 = vmatpush1.msra.mxu0 0.0
        %3151 = vmatprep.subr.mxu0 0.0
        %3152 = vmatpush1.msra.mxu0 0.0
        %3153 = vmatprep.subr.mxu0 0.0
        %3154 = vmatpush1.msra.mxu0 0.0
        %3155 = vmatprep.subr.mxu0 0.0
        %3156 = vmatpush1.msra.mxu0 0.0
        %3157 = vmatprep.subr.mxu0 0.0
        %3158 = vmatpush1.msra.mxu0 0.0
        %3159 = vmatprep.subr.mxu0 0.0
        %3160 = vmatpush1.msra.mxu0 0.0
        %3161 = vmatprep.subr.mxu0 0.0
        %3162 = vmatpush1.msra.mxu0 0.0
        %3163 = vmatprep.subr.mxu0 0.0
        %3164 = vmatpush1.msra.mxu0 0.0
        %3165 = vmatprep.subr.mxu0 0.0
        %3166 = vmatpush1.msra.mxu0 0.0
        %3167 = vmatprep.subr.mxu0 0.0
        %3168 = vmatpush1.msra.mxu0 0.0
        %3169 = vmatprep.mubr.f32.mxu0 0.0
        %3170 = vmatmul.mubr.f32.gmra.mrb[0].mxu0 %v3097
        %v3171 = vpop.f32.mrb[0].mxu0
        %v3172 = vadd.f32 0.0, %v3171
        %v3173 = vpop.f32.mrb[0].mxu0
        %3174 = vmatprep.mubr.f32.mxu0 0.0
        %3175 = vmatmul.mubr.f32.gmra.mrb[0].mxu0 %v3100
        %v3176 = vpop.f32.mrb[0].mxu0
        %v3177 = vadd.f32 0.0, %v3176
        %v3178 = vpop.f32.mrb[0].mxu0
        %3179 = vdwg.mxu0
        %v3180 = vadd.f32 %v3086, %v3172
        %v3181 = vadd.f32 %v3087, %v3177
        %s3182 = scalar_lea.vmem %s9, 64
        %v3183 = vld [vmem:[%s3182] sm:$0xff]
        %v3184 = vld [vmem:[%s3182 + $0x8] sm:$0xff]
        %3186 = vrot.lane.b32.xlu0 %v3091, 127
        %v3187 = vpop.permute.xlu0 %3186
        %3188 = vrot.lane.b32.xlu0 %v3092, 127
        %v3189 = vpop.permute.xlu0 %3188
        %v3192 = vsel %vm2827, %v3183, 0
        %v3195 = vsel %vm2827, %v3184, 0
        %v3197 = vsel %vm2834, %v3189, 0
        %3199 = vmatprep.subr.mxu0 0.0
        %3200 = vmatpush1.msra.mxu0 %v3187
        %3201 = vmatprep.subr.mxu0 0.0
        %3202 = vmatpush1.msra.mxu0 %v3197
        %3203 = vmatprep.subr.mxu0 0.0
        %3204 = vmatpush1.msra.mxu0 0.0
        %3205 = vmatprep.subr.mxu0 0.0
        %3206 = vmatpush1.msra.mxu0 0.0
        %3207 = vmatprep.subr.mxu0 0.0
        %3208 = vmatpush1.msra.mxu0 0.0
        %3209 = vmatprep.subr.mxu0 0.0
        %3210 = vmatpush1.msra.mxu0 0.0
        %3211 = vmatprep.subr.mxu0 0.0
        %3212 = vmatpush1.msra.mxu0 0.0
        %3213 = vmatprep.subr.mxu0 0.0
        %3214 = vmatpush1.msra.mxu0 0.0
        %3215 = vmatprep.subr.mxu0 0.0
        %3216 = vmatpush1.msra.mxu0 0.0
        %3217 = vmatprep.subr.mxu0 0.0
        %3218 = vmatpush1.msra.mxu0 0.0
        %3219 = vmatprep.subr.mxu0 0.0
        %3220 = vmatpush1.msra.mxu0 0.0
        %3221 = vmatprep.subr.mxu0 0.0
        %3222 = vmatpush1.msra.mxu0 0.0
        %3223 = vmatprep.subr.mxu0 0.0
        %3224 = vmatpush1.msra.mxu0 0.0
        %3225 = vmatprep.subr.mxu0 0.0
        %3226 = vmatpush1.msra.mxu0 0.0
        %3227 = vmatprep.subr.mxu0 0.0
        %3228 = vmatpush1.msra.mxu0 0.0
        %3229 = vmatprep.subr.mxu0 0.0
        %3230 = vmatpush1.msra.mxu0 0.0
        %3231 = vmatprep.subr.mxu0 0.0
        %3232 = vmatpush1.msra.mxu0 0.0
        %3233 = vmatprep.subr.mxu0 0.0
        %3234 = vmatpush1.msra.mxu0 0.0
        %3235 = vmatprep.subr.mxu0 0.0
        %3236 = vmatpush1.msra.mxu0 0.0
        %3237 = vmatprep.subr.mxu0 0.0
        %3238 = vmatpush1.msra.mxu0 0.0
        %3239 = vmatprep.subr.mxu0 0.0
        %3240 = vmatpush1.msra.mxu0 0.0
        %3241 = vmatprep.subr.mxu0 0.0
        %3242 = vmatpush1.msra.mxu0 0.0
        %3243 = vmatprep.subr.mxu0 0.0
        %3244 = vmatpush1.msra.mxu0 0.0
        %3245 = vmatprep.subr.mxu0 0.0
        %3246 = vmatpush1.msra.mxu0 0.0
        %3247 = vmatprep.subr.mxu0 0.0
        %3248 = vmatpush1.msra.mxu0 0.0
        %3249 = vmatprep.subr.mxu0 0.0
        %3250 = vmatpush1.msra.mxu0 0.0
        %3251 = vmatprep.subr.mxu0 0.0
        %3252 = vmatpush1.msra.mxu0 0.0
        %3253 = vmatprep.subr.mxu0 0.0
        %3254 = vmatpush1.msra.mxu0 0.0
        %3255 = vmatprep.subr.mxu0 0.0
        %3256 = vmatpush1.msra.mxu0 0.0
        %3257 = vmatprep.subr.mxu0 0.0
        %3258 = vmatpush1.msra.mxu0 0.0
        %3259 = vmatprep.subr.mxu0 0.0
        %3260 = vmatpush1.msra.mxu0 0.0
        %3261 = vmatprep.subr.mxu0 0.0
        %3262 = vmatpush1.msra.mxu0 0.0
        %3263 = vmatprep.mubr.f32.mxu0 0.0
        %3264 = vmatmul.mubr.f32.gmra.mrb[0].mxu0 %v3192
        %v3265 = vpop.f32.mrb[0].mxu0
        %v3266 = vadd.f32 0.0, %v3265
        %v3267 = vpop.f32.mrb[0].mxu0
        %3268 = vmatprep.mubr.f32.mxu0 0.0
        %3269 = vmatmul.mubr.f32.gmra.mrb[0].mxu0 %v3195
        %v3270 = vpop.f32.mrb[0].mxu0
        %v3271 = vadd.f32 0.0, %v3270
        %v3272 = vpop.f32.mrb[0].mxu0
        %3273 = vdwg.mxu0
        %v3274 = vadd.f32 %v3180, %v3266
        %v3275 = vadd.f32 %v3181, %v3271
        %s3276 = scalar_lea.vmem %s9, 80
        %v3277 = vld [vmem:[%s3276] sm:$0xff]
        %v3278 = vld [vmem:[%s3276 + $0x8] sm:$0xff]
        %3279 = vrot.lane.b32.xlu0 %v3091, 126
        %v3280 = vpop.permute.xlu0 %3279
        %3281 = vrot.lane.b32.xlu0 %v3092, 126
        %v3282 = vpop.permute.xlu0 %3281
        %v3285 = vsel %vm2827, %v3277, 0
        %v3288 = vsel %vm2827, %v3278, 0
        %v3290 = vsel %vm2834, %v3282, 0
        %3292 = vmatprep.subr.mxu0 0.0
        %3293 = vmatpush1.msra.mxu0 %v3280
        %3294 = vmatprep.subr.mxu0 0.0
        %3295 = vmatpush1.msra.mxu0 %v3290
        %3296 = vmatprep.subr.mxu0 0.0
        %3297 = vmatpush1.msra.mxu0 0.0
        %3298 = vmatprep.subr.mxu0 0.0
        %3299 = vmatpush1.msra.mxu0 0.0
        %3300 = vmatprep.subr.mxu0 0.0
        %3301 = vmatpush1.msra.mxu0 0.0
        %3302 = vmatprep.subr.mxu0 0.0
        %3303 = vmatpush1.msra.mxu0 0.0
        %3304 = vmatprep.subr.mxu0 0.0
        %3305 = vmatpush1.msra.mxu0 0.0
        %3306 = vmatprep.subr.mxu0 0.0
        %3307 = vmatpush1.msra.mxu0 0.0
        %3308 = vmatprep.subr.mxu0 0.0
        %3309 = vmatpush1.msra.mxu0 0.0
        %3310 = vmatprep.subr.mxu0 0.0
        %3311 = vmatpush1.msra.mxu0 0.0
        %3312 = vmatprep.subr.mxu0 0.0
        %3313 = vmatpush1.msra.mxu0 0.0
        %3314 = vmatprep.subr.mxu0 0.0
        %3315 = vmatpush1.msra.mxu0 0.0
        %3316 = vmatprep.subr.mxu0 0.0
        %3317 = vmatpush1.msra.mxu0 0.0
        %3318 = vmatprep.subr.mxu0 0.0
        %3319 = vmatpush1.msra.mxu0 0.0
        %3320 = vmatprep.subr.mxu0 0.0
        %3321 = vmatpush1.msra.mxu0 0.0
        %3322 = vmatprep.subr.mxu0 0.0
        %3323 = vmatpush1.msra.mxu0 0.0
        %3324 = vmatprep.subr.mxu0 0.0
        %3325 = vmatpush1.msra.mxu0 0.0
        %3326 = vmatprep.subr.mxu0 0.0
        %3327 = vmatpush1.msra.mxu0 0.0
        %3328 = vmatprep.subr.mxu0 0.0
        %3329 = vmatpush1.msra.mxu0 0.0
        %3330 = vmatprep.subr.mxu0 0.0
        %3331 = vmatpush1.msra.mxu0 0.0
        %3332 = vmatprep.subr.mxu0 0.0
        %3333 = vmatpush1.msra.mxu0 0.0
        %3334 = vmatprep.subr.mxu0 0.0
        %3335 = vmatpush1.msra.mxu0 0.0
        %3336 = vmatprep.subr.mxu0 0.0
        %3337 = vmatpush1.msra.mxu0 0.0
        %3338 = vmatprep.subr.mxu0 0.0
        %3339 = vmatpush1.msra.mxu0 0.0
        %3340 = vmatprep.subr.mxu0 0.0
        %3341 = vmatpush1.msra.mxu0 0.0
        %3342 = vmatprep.subr.mxu0 0.0
        %3343 = vmatpush1.msra.mxu0 0.0
        %3344 = vmatprep.subr.mxu0 0.0
        %3345 = vmatpush1.msra.mxu0 0.0
        %3346 = vmatprep.subr.mxu0 0.0
        %3347 = vmatpush1.msra.mxu0 0.0
        %3348 = vmatprep.subr.mxu0 0.0
        %3349 = vmatpush1.msra.mxu0 0.0
        %3350 = vmatprep.subr.mxu0 0.0
        %3351 = vmatpush1.msra.mxu0 0.0
        %3352 = vmatprep.subr.mxu0 0.0
        %3353 = vmatpush1.msra.mxu0 0.0
        %3354 = vmatprep.subr.mxu0 0.0
        %3355 = vmatpush1.msra.mxu0 0.0
        %3356 = vmatprep.mubr.f32.mxu0 0.0
        %3357 = vmatmul.mubr.f32.gmra.mrb[0].mxu0 %v3285
        %v3358 = vpop.f32.mrb[0].mxu0
        %v3359 = vadd.f32 0.0, %v3358
        %v3360 = vpop.f32.mrb[0].mxu0
        %3361 = vmatprep.mubr.f32.mxu0 0.0
        %3362 = vmatmul.mubr.f32.gmra.mrb[0].mxu0 %v3288
        %v3363 = vpop.f32.mrb[0].mxu0
        %v3364 = vadd.f32 0.0, %v3363
        %v3365 = vpop.f32.mrb[0].mxu0
        %3366 = vdwg.mxu0
        %v3367 = vadd.f32 %v3274, %v3359
        %v3368 = vadd.f32 %v3275, %v3364
        %s3369 = sadd.s32 %s2806, 2
        %s3370 = smul.u32 %s3369, 16
        %s3371 = scalar_lea.vmem [#allocation5], %s3370
        %v3372 = vld [vmem:[%s3371] sm:$0xff]
        %v3373 = vld [vmem:[%s3371 + $0x8] sm:$0x3]
        %s3374 = scalar_lea.vmem %s9, 96
        %v3375 = vld [vmem:[%s3374] sm:$0xff]
        %v3376 = vld [vmem:[%s3374 + $0x8] sm:$0xff]
        %v3378 = vsel %vm2827, %v3375, 0
        %v3381 = vsel %vm2827, %v3376, 0
        %v3384 = vsel %vm2834, %v3373, 0
        %3386 = vmatprep.subr.mxu0 0.0
        %3387 = vmatpush1.msra.mxu0 %v3372
        %3388 = vmatprep.subr.mxu0 0.0
        %3389 = vmatpush1.msra.mxu0 %v3384
        %3390 = vmatprep.subr.mxu0 0.0
        %3391 = vmatpush1.msra.mxu0 0.0
        %3392 = vmatprep.subr.mxu0 0.0
        %3393 = vmatpush1.msra.mxu0 0.0
        %3394 = vmatprep.subr.mxu0 0.0
        %3395 = vmatpush1.msra.mxu0 0.0
        %3396 = vmatprep.subr.mxu0 0.0
        %3397 = vmatpush1.msra.mxu0 0.0
        %3398 = vmatprep.subr.mxu0 0.0
        %3399 = vmatpush1.msra.mxu0 0.0
        %3400 = vmatprep.subr.mxu0 0.0
        %3401 = vmatpush1.msra.mxu0 0.0
        %3402 = vmatprep.subr.mxu0 0.0
        %3403 = vmatpush1.msra.mxu0 0.0
        %3404 = vmatprep.subr.mxu0 0.0
        %3405 = vmatpush1.msra.mxu0 0.0
        %3406 = vmatprep.subr.mxu0 0.0
        %3407 = vmatpush1.msra.mxu0 0.0
        %3408 = vmatprep.subr.mxu0 0.0
        %3409 = vmatpush1.msra.mxu0 0.0
        %3410 = vmatprep.subr.mxu0 0.0
        %3411 = vmatpush1.msra.mxu0 0.0
        %3412 = vmatprep.subr.mxu0 0.0
        %3413 = vmatpush1.msra.mxu0 0.0
        %3414 = vmatprep.subr.mxu0 0.0
        %3415 = vmatpush1.msra.mxu0 0.0
        %3416 = vmatprep.subr.mxu0 0.0
        %3417 = vmatpush1.msra.mxu0 0.0
        %3418 = vmatprep.subr.mxu0 0.0
        %3419 = vmatpush1.msra.mxu0 0.0
        %3420 = vmatprep.subr.mxu0 0.0
        %3421 = vmatpush1.msra.mxu0 0.0
        %3422 = vmatprep.subr.mxu0 0.0
        %3423 = vmatpush1.msra.mxu0 0.0
        %3424 = vmatprep.subr.mxu0 0.0
        %3425 = vmatpush1.msra.mxu0 0.0
        %3426 = vmatprep.subr.mxu0 0.0
        %3427 = vmatpush1.msra.mxu0 0.0
        %3428 = vmatprep.subr.mxu0 0.0
        %3429 = vmatpush1.msra.mxu0 0.0
        %3430 = vmatprep.subr.mxu0 0.0
        %3431 = vmatpush1.msra.mxu0 0.0
        %3432 = vmatprep.subr.mxu0 0.0
        %3433 = vmatpush1.msra.mxu0 0.0
        %3434 = vmatprep.subr.mxu0 0.0
        %3435 = vmatpush1.msra.mxu0 0.0
        %3436 = vmatprep.subr.mxu0 0.0
        %3437 = vmatpush1.msra.mxu0 0.0
        %3438 = vmatprep.subr.mxu0 0.0
        %3439 = vmatpush1.msra.mxu0 0.0
        %3440 = vmatprep.subr.mxu0 0.0
        %3441 = vmatpush1.msra.mxu0 0.0
        %3442 = vmatprep.subr.mxu0 0.0
        %3443 = vmatpush1.msra.mxu0 0.0
        %3444 = vmatprep.subr.mxu0 0.0
        %3445 = vmatpush1.msra.mxu0 0.0
        %3446 = vmatprep.subr.mxu0 0.0
        %3447 = vmatpush1.msra.mxu0 0.0
        %3448 = vmatprep.subr.mxu0 0.0
        %3449 = vmatpush1.msra.mxu0 0.0
        %3450 = vmatprep.mubr.f32.mxu0 0.0
        %3451 = vmatmul.mubr.f32.gmra.mrb[0].mxu0 %v3378
        %v3452 = vpop.f32.mrb[0].mxu0
        %v3453 = vadd.f32 0.0, %v3452
        %v3454 = vpop.f32.mrb[0].mxu0
        %3455 = vmatprep.mubr.f32.mxu0 0.0
        %3456 = vmatmul.mubr.f32.gmra.mrb[0].mxu0 %v3381
        %v3457 = vpop.f32.mrb[0].mxu0
        %v3458 = vadd.f32 0.0, %v3457
        %v3459 = vpop.f32.mrb[0].mxu0
        %3460 = vdwg.mxu0
        %v3461 = vadd.f32 %v3367, %v3453
        %v3462 = vadd.f32 %v3368, %v3458
        %s3463 = scalar_lea.vmem %s9, 112
        %v3464 = vld [vmem:[%s3463] sm:$0xff]
        %v3465 = vld [vmem:[%s3463 + $0x8] sm:$0xff]
        %3467 = vrot.lane.b32.xlu0 %v3372, 127
        %v3468 = vpop.permute.xlu0 %3467
        %3469 = vrot.lane.b32.xlu0 %v3373, 127
        %v3470 = vpop.permute.xlu0 %3469
        %v3473 = vsel %vm2827, %v3464, 0
        %v3476 = vsel %vm2827, %v3465, 0
        %v3478 = vsel %vm2834, %v3470, 0
        %3480 = vmatprep.subr.mxu0 0.0
        %3481 = vmatpush1.msra.mxu0 %v3468
        %3482 = vmatprep.subr.mxu0 0.0
        %3483 = vmatpush1.msra.mxu0 %v3478
        %3484 = vmatprep.subr.mxu0 0.0
        %3485 = vmatpush1.msra.mxu0 0.0
        %3486 = vmatprep.subr.mxu0 0.0
        %3487 = vmatpush1.msra.mxu0 0.0
        %3488 = vmatprep.subr.mxu0 0.0
        %3489 = vmatpush1.msra.mxu0 0.0
        %3490 = vmatprep.subr.mxu0 0.0
        %3491 = vmatpush1.msra.mxu0 0.0
        %3492 = vmatprep.subr.mxu0 0.0
        %3493 = vmatpush1.msra.mxu0 0.0
        %3494 = vmatprep.subr.mxu0 0.0
        %3495 = vmatpush1.msra.mxu0 0.0
        %3496 = vmatprep.subr.mxu0 0.0
        %3497 = vmatpush1.msra.mxu0 0.0
        %3498 = vmatprep.subr.mxu0 0.0
        %3499 = vmatpush1.msra.mxu0 0.0
        %3500 = vmatprep.subr.mxu0 0.0
        %3501 = vmatpush1.msra.mxu0 0.0
        %3502 = vmatprep.subr.mxu0 0.0
        %3503 = vmatpush1.msra.mxu0 0.0
        %3504 = vmatprep.subr.mxu0 0.0
        %3505 = vmatpush1.msra.mxu0 0.0
        %3506 = vmatprep.subr.mxu0 0.0
        %3507 = vmatpush1.msra.mxu0 0.0
        %3508 = vmatprep.subr.mxu0 0.0
        %3509 = vmatpush1.msra.mxu0 0.0
        %3510 = vmatprep.subr.mxu0 0.0
        %3511 = vmatpush1.msra.mxu0 0.0
        %3512 = vmatprep.subr.mxu0 0.0
        %3513 = vmatpush1.msra.mxu0 0.0
        %3514 = vmatprep.subr.mxu0 0.0
        %3515 = vmatpush1.msra.mxu0 0.0
        %3516 = vmatprep.subr.mxu0 0.0
        %3517 = vmatpush1.msra.mxu0 0.0
        %3518 = vmatprep.subr.mxu0 0.0
        %3519 = vmatpush1.msra.mxu0 0.0
        %3520 = vmatprep.subr.mxu0 0.0
        %3521 = vmatpush1.msra.mxu0 0.0
        %3522 = vmatprep.subr.mxu0 0.0
        %3523 = vmatpush1.msra.mxu0 0.0
        %3524 = vmatprep.subr.mxu0 0.0
        %3525 = vmatpush1.msra.mxu0 0.0
        %3526 = vmatprep.subr.mxu0 0.0
        %3527 = vmatpush1.msra.mxu0 0.0
        %3528 = vmatprep.subr.mxu0 0.0
        %3529 = vmatpush1.msra.mxu0 0.0
        %3530 = vmatprep.subr.mxu0 0.0
        %3531 = vmatpush1.msra.mxu0 0.0
        %3532 = vmatprep.subr.mxu0 0.0
        %3533 = vmatpush1.msra.mxu0 0.0
        %3534 = vmatprep.subr.mxu0 0.0
        %3535 = vmatpush1.msra.mxu0 0.0
        %3536 = vmatprep.subr.mxu0 0.0
        %3537 = vmatpush1.msra.mxu0 0.0
        %3538 = vmatprep.subr.mxu0 0.0
        %3539 = vmatpush1.msra.mxu0 0.0
        %3540 = vmatprep.subr.mxu0 0.0
        %3541 = vmatpush1.msra.mxu0 0.0
        %3542 = vmatprep.subr.mxu0 0.0
        %3543 = vmatpush1.msra.mxu0 0.0
        %3544 = vmatprep.mubr.f32.mxu0 0.0
        %3545 = vmatmul.mubr.f32.gmra.mrb[0].mxu0 %v3473
        %v3546 = vpop.f32.mrb[0].mxu0
        %v3547 = vadd.f32 0.0, %v3546
        %v3548 = vpop.f32.mrb[0].mxu0
        %3549 = vmatprep.mubr.f32.mxu0 0.0
        %3550 = vmatmul.mubr.f32.gmra.mrb[0].mxu0 %v3476
        %v3551 = vpop.f32.mrb[0].mxu0
        %v3552 = vadd.f32 0.0, %v3551
        %v3553 = vpop.f32.mrb[0].mxu0
        %3554 = vdwg.mxu0
        %v3555 = vadd.f32 %v3461, %v3547
        %v3556 = vadd.f32 %v3462, %v3552
        %s3557 = scalar_lea.vmem %s9, 128
        %v3558 = vld [vmem:[%s3557] sm:$0xff]
        %v3559 = vld [vmem:[%s3557 + $0x8] sm:$0xff]
        %3560 = vrot.lane.b32.xlu0 %v3372, 126
        %v3561 = vpop.permute.xlu0 %3560
        %3562 = vrot.lane.b32.xlu0 %v3373, 126
        %v3563 = vpop.permute.xlu0 %3562
        %v3566 = vsel %vm2827, %v3558, 0
        %v3569 = vsel %vm2827, %v3559, 0
        %v3571 = vsel %vm2834, %v3563, 0
        %3573 = vmatprep.subr.mxu0 0.0
        %3574 = vmatpush1.msra.mxu0 %v3561
        %3575 = vmatprep.subr.mxu0 0.0
        %3576 = vmatpush1.msra.mxu0 %v3571
        %3577 = vmatprep.subr.mxu0 0.0
        %3578 = vmatpush1.msra.mxu0 0.0
        %3579 = vmatprep.subr.mxu0 0.0
        %3580 = vmatpush1.msra.mxu0 0.0
        %3581 = vmatprep.subr.mxu0 0.0
        %3582 = vmatpush1.msra.mxu0 0.0
        %3583 = vmatprep.subr.mxu0 0.0
        %3584 = vmatpush1.msra.mxu0 0.0
        %3585 = vmatprep.subr.mxu0 0.0
        %3586 = vmatpush1.msra.mxu0 0.0
        %3587 = vmatprep.subr.mxu0 0.0
        %3588 = vmatpush1.msra.mxu0 0.0
        %3589 = vmatprep.subr.mxu0 0.0
        %3590 = vmatpush1.msra.mxu0 0.0
        %3591 = vmatprep.subr.mxu0 0.0
        %3592 = vmatpush1.msra.mxu0 0.0
        %3593 = vmatprep.subr.mxu0 0.0
        %3594 = vmatpush1.msra.mxu0 0.0
        %3595 = vmatprep.subr.mxu0 0.0
        %3596 = vmatpush1.msra.mxu0 0.0
        %3597 = vmatprep.subr.mxu0 0.0
        %3598 = vmatpush1.msra.mxu0 0.0
        %3599 = vmatprep.subr.mxu0 0.0
        %3600 = vmatpush1.msra.mxu0 0.0
        %3601 = vmatprep.subr.mxu0 0.0
        %3602 = vmatpush1.msra.mxu0 0.0
        %3603 = vmatprep.subr.mxu0 0.0
        %3604 = vmatpush1.msra.mxu0 0.0
        %3605 = vmatprep.subr.mxu0 0.0
        %3606 = vmatpush1.msra.mxu0 0.0
        %3607 = vmatprep.subr.mxu0 0.0
        %3608 = vmatpush1.msra.mxu0 0.0
        %3609 = vmatprep.subr.mxu0 0.0
        %3610 = vmatpush1.msra.mxu0 0.0
        %3611 = vmatprep.subr.mxu0 0.0
        %3612 = vmatpush1.msra.mxu0 0.0
        %3613 = vmatprep.subr.mxu0 0.0
        %3614 = vmatpush1.msra.mxu0 0.0
        %3615 = vmatprep.subr.mxu0 0.0
        %3616 = vmatpush1.msra.mxu0 0.0
        %3617 = vmatprep.subr.mxu0 0.0
        %3618 = vmatpush1.msra.mxu0 0.0
        %3619 = vmatprep.subr.mxu0 0.0
        %3620 = vmatpush1.msra.mxu0 0.0
        %3621 = vmatprep.subr.mxu0 0.0
        %3622 = vmatpush1.msra.mxu0 0.0
        %3623 = vmatprep.subr.mxu0 0.0
        %3624 = vmatpush1.msra.mxu0 0.0
        %3625 = vmatprep.subr.mxu0 0.0
        %3626 = vmatpush1.msra.mxu0 0.0
        %3627 = vmatprep.subr.mxu0 0.0
        %3628 = vmatpush1.msra.mxu0 0.0
        %3629 = vmatprep.subr.mxu0 0.0
        %3630 = vmatpush1.msra.mxu0 0.0
        %3631 = vmatprep.subr.mxu0 0.0
        %3632 = vmatpush1.msra.mxu0 0.0
        %3633 = vmatprep.subr.mxu0 0.0
        %3634 = vmatpush1.msra.mxu0 0.0
        %3635 = vmatprep.subr.mxu0 0.0
        %3636 = vmatpush1.msra.mxu0 0.0
        %3637 = vmatprep.mubr.f32.mxu0 0.0
        %3638 = vmatmul.mubr.f32.gmra.mrb[0].mxu0 %v3566
        %v3639 = vpop.f32.mrb[0].mxu0
        %v3640 = vadd.f32 0.0, %v3639
        %v3641 = vpop.f32.mrb[0].mxu0
        %3642 = vmatprep.mubr.f32.mxu0 0.0
        %3643 = vmatmul.mubr.f32.gmra.mrb[0].mxu0 %v3569
        %v3644 = vpop.f32.mrb[0].mxu0
        %v3645 = vadd.f32 0.0, %v3644
        %v3646 = vpop.f32.mrb[0].mxu0
        %3647 = vdwg.mxu0
        %v3648 = vadd.f32 %v3555, %v3640
        %v3649 = vadd.f32 %v3556, %v3645
        %v3650 = vld [vmem:[%s10] sm:$0xff]
        %v3651 = vld [vmem:[%s10 + $0x8] sm:$0xff]
        %3653 = vset.pattern.permute.xlu0 0
        %3654 = vperm.xlu0 %3653, %v3650
        %v3655 = vpop.permute.xlu0 %3654
        %3658 = vset.pattern.permute.xlu0 0
        %3659 = vperm.xlu0 %3658, %v3651
        %v3660 = vpop.permute.xlu0 %3659
        %v3662 = vadd.f32 %v3648, %v3655
        %v3663 = vadd.f32 %v3649, %v3660
        %v3664 = vmax.f32 %v3662, 0.0
        %v3665 = vmax.f32 %v3663, 0.0
        %v3666 = vld [vmem:[%s11] sm:$0xff]
        %v3667 = vld [vmem:[%s11 + $0x8] sm:$0xff]
        %3669 = vset.pattern.permute.xlu0 0
        %3670 = vperm.xlu0 %3669, %v3666
        %v3671 = vpop.permute.xlu0 %3670
        %3674 = vset.pattern.permute.xlu0 0
        %3675 = vperm.xlu0 %3674, %v3667
        %v3676 = vpop.permute.xlu0 %3675
        %v3678 = vmul.f32 %v3664, %v3671
        %v3679 = vmul.f32 %v3665, %v3676
        %v3680 = vld [vmem:[%s12] sm:$0xff]
        %v3681 = vld [vmem:[%s12 + $0x8] sm:$0xff]
        %3683 = vset.pattern.permute.xlu0 0
        %3684 = vperm.xlu0 %3683, %v3680
        %v3685 = vpop.permute.xlu0 %3684
        %3688 = vset.pattern.permute.xlu0 0
        %3689 = vperm.xlu0 %3688, %v3681
        %v3690 = vpop.permute.xlu0 %3689
        %v3692 = vadd.f32 %v3678, %v3685
        %v3693 = vadd.f32 %v3679, %v3690
        %s3694 = scalar_lea.vmem [#allocation6], %s2811
        %vm3695 = vcmask 64512
        %3696 = vst.msk [vmem:[%s3694] sm:$0xff] %vm3695, %v3692
        %3697 = vst.msk [vmem:[%s3694 + $0x8] sm:$0xff] %vm3695, %v3693
      $region129: #{net8_forward.1} parent=95 // loop_footer
        %s2810 = sadd.s32 1, %s2806
      $region130: #{net8_forward.1} parent=95 // loop_footer_branch
        %2805 = sbr.rel target = $region126
      $region131: #{net8_forward.1} parent=95 // loop_exit
        _
      %v3698 = vadd.s32 %v1704, 1
      %vm3699 = vcmp.eq.s32.totalorder %v3698, %v1708
      %v3700 = vsel %vm3699, 1, 0
      %v3701 = vcvt.s32.f32 %v3700
      %vm3702 = vcmask 64512
      %3703 = vst.msk [vmem:[#allocation7] sm:$0xff] %vm3702, 0.0
      %3704 = vst.msk [vmem:[#allocation7 + $0x8] sm:$0xff] %vm3702, 0.0
      %3705 = vst.msk [vmem:[#allocation7 + $0x10] sm:$0xff] %vm3702, 0.0
      %3706 = vst.msk [vmem:[#allocation7 + $0x18] sm:$0xff] %vm3702, 0.0
      %3707 = vst.msk [vmem:[#allocation7 + $0x20] sm:$0xff] %vm3702, 0.0
      %3708 = vst.msk [vmem:[#allocation7 + $0x28] sm:$0xff] %vm3702, 0.0
      %3709 = vst.msk [vmem:[#allocation7 + $0x30] sm:$0xff] %vm3702, 0.0
      %3710 = vst.msk [vmem:[#allocation7 + $0x38] sm:$0xff] %vm3702, 0.0
      %3711 = vst.msk [vmem:[#allocation7 + $0x40] sm:$0xff] %vm3702, 0.0
      %3712 = vst.msk [vmem:[#allocation7 + $0x48] sm:$0xff] %vm3702, 0.0
      %3713 = vst.msk [vmem:[#allocation7 + $0x50] sm:$0xff] %vm3702, 0.0
      %3714 = vst.msk [vmem:[#allocation7 + $0x58] sm:$0xff] %vm3702, 0.0
      %3715 = vst.msk [vmem:[#allocation7 + $0x60] sm:$0xff] %vm3702, 0.0
      %3716 = vst.msk [vmem:[#allocation7 + $0x68] sm:$0xff] %vm3702, 0.0
      %3717 = vst.msk [vmem:[#allocation7 + $0x70] sm:$0xff] %vm3702, 0.0
      %3718 = vst.msk [vmem:[#allocation7 + $0x78] sm:$0xff] %vm3702, 0.0
      loop: start=0, step=1, limit=6
      $region132: #{net8_forward.1} parent=95 // loop_pre_header
        _
      $region133: #{net8_forward.1} parent=95 // loop_header
        %s3720 = sphi 0, %s3724
        %p3721 = scmp.ge.s32.totalorder %s3720, 6
      $region134: #{net8_forward.1} parent=95 // loop_header_branch
        %3723 = sbr.rel (%p3721) target = $region138
      $region135: #{net8_forward.1} parent=95 // loop_body
        %s3725 = smul.u32 %s3720, 16
        %s3726 = scalar_lea.vmem [#allocation6], %s3725
        %v3727 = vld [vmem:[%s3726] sm:$0xff]
        %v3728 = vld [vmem:[%s3726 + $0x8] sm:$0xff]
        %v3729 = vld [vmem:[%s13] sm:$0xff]
        %v3730 = vld [vmem:[%s13 + $0x8] sm:$0xff]
        %s3731 = scalar_lea.vmem %s13, 16
        %v3732 = vld [vmem:[%s3731] sm:$0xff]
        %v3733 = vld [vmem:[%s3731 + $0x8] sm:$0xff]
        %3736 = vrot.lane.b32.xlu0 %v3727, 127
        %v3737 = vpop.permute.xlu0 %3736
        %3738 = vrot.lane.b32.xlu0 %v3728, 127
        %v3739 = vpop.permute.xlu0 %3738
        %vm3742 = vcmask 130048
        %v3744 = vsel %vm3742, %v3732, 0
        %v3747 = vsel %vm3742, %v3733, 0
        %3749 = vmatprep.subr.mxu0 0.0
        %3750 = vmatpush1.msra.mxu0 %v3737
        %3751 = vmatprep.subr.mxu0 0.0
        %3752 = vmatpush1.msra.mxu0 %v3739
        %3753 = vmatprep.subr.mxu0 0.0
        %3754 = vmatpush1.msra.mxu0 0.0
        %3755 = vmatprep.subr.mxu0 0.0
        %3756 = vmatpush1.msra.mxu0 0.0
        %3757 = vmatprep.subr.mxu0 0.0
        %3758 = vmatpush1.msra.mxu0 0.0
        %3759 = vmatprep.subr.mxu0 0.0
        %3760 = vmatpush1.msra.mxu0 0.0
        %3761 = vmatprep.subr.mxu0 0.0
        %3762 = vmatpush1.msra.mxu0 0.0
        %3763 = vmatprep.subr.mxu0 0.0
        %3764 = vmatpush1.msra.mxu0 0.0
        %3765 = vmatprep.subr.mxu0 0.0
        %3766 = vmatpush1.msra.mxu0 0.0
        %3767 = vmatprep.subr.mxu0 0.0
        %3768 = vmatpush1.msra.mxu0 0.0
        %3769 = vmatprep.subr.mxu0 0.0
        %3770 = vmatpush1.msra.mxu0 0.0
        %3771 = vmatprep.subr.mxu0 0.0
        %3772 = vmatpush1.msra.mxu0 0.0
        %3773 = vmatprep.subr.mxu0 0.0
        %3774 = vmatpush1.msra.mxu0 0.0
        %3775 = vmatprep.subr.mxu0 0.0
        %3776 = vmatpush1.msra.mxu0 0.0
        %3777 = vmatprep.subr.mxu0 0.0
        %3778 = vmatpush1.msra.mxu0 0.0
        %3779 = vmatprep.subr.mxu0 0.0
        %3780 = vmatpush1.msra.mxu0 0.0
        %3781 = vmatprep.subr.mxu0 0.0
        %3782 = vmatpush1.msra.mxu0 0.0
        %3783 = vmatprep.subr.mxu0 0.0
        %3784 = vmatpush1.msra.mxu0 0.0
        %3785 = vmatprep.subr.mxu0 0.0
        %3786 = vmatpush1.msra.mxu0 0.0
        %3787 = vmatprep.subr.mxu0 0.0
        %3788 = vmatpush1.msra.mxu0 0.0
        %3789 = vmatprep.subr.mxu0 0.0
        %3790 = vmatpush1.msra.mxu0 0.0
        %3791 = vmatprep.subr.mxu0 0.0
        %3792 = vmatpush1.msra.mxu0 0.0
        %3793 = vmatprep.subr.mxu0 0.0
        %3794 = vmatpush1.msra.mxu0 0.0
        %3795 = vmatprep.subr.mxu0 0.0
        %3796 = vmatpush1.msra.mxu0 0.0
        %3797 = vmatprep.subr.mxu0 0.0
        %3798 = vmatpush1.msra.mxu0 0.0
        %3799 = vmatprep.subr.mxu0 0.0
        %3800 = vmatpush1.msra.mxu0 0.0
        %3801 = vmatprep.subr.mxu0 0.0
        %3802 = vmatpush1.msra.mxu0 0.0
        %3803 = vmatprep.subr.mxu0 0.0
        %3804 = vmatpush1.msra.mxu0 0.0
        %3805 = vmatprep.subr.mxu0 0.0
        %3806 = vmatpush1.msra.mxu0 0.0
        %3807 = vmatprep.subr.mxu0 0.0
        %3808 = vmatpush1.msra.mxu0 0.0
        %3809 = vmatprep.subr.mxu0 0.0
        %3810 = vmatpush1.msra.mxu0 0.0
        %3811 = vmatprep.subr.mxu0 0.0
        %3812 = vmatpush1.msra.mxu0 0.0
        %3813 = vmatprep.mubr.f32.mxu0 0.0
        %3814 = vmatmul.mubr.f32.gmra.mrb[0].mxu0 %v3744
        %v3815 = vpop.f32.mrb[0].mxu0
        %v3816 = vadd.f32 0.0, %v3815
        %v3817 = vpop.f32.mrb[0].mxu0
        %3818 = vmatprep.mubr.f32.mxu0 0.0
        %3819 = vmatmul.mubr.f32.gmra.mrb[0].mxu0 %v3747
        %v3820 = vpop.f32.mrb[0].mxu0
        %v3821 = vadd.f32 0.0, %v3820
        %v3822 = vpop.f32.mrb[0].mxu0
        %3823 = vdwg.mxu0
        %v3825 = vsel %vm3742, %v3729, 0
        %v3828 = vsel %vm3742, %v3730, 0
        %3830 = vmatprep.subr.mxu0 0.0
        %3831 = vmatpush1.msra.mxu0 %v3727
        %3832 = vmatprep.subr.mxu0 0.0
        %3833 = vmatpush1.msra.mxu0 %v3728
        %3834 = vmatprep.subr.mxu0 0.0
        %3835 = vmatpush1.msra.mxu0 0.0
        %3836 = vmatprep.subr.mxu0 0.0
        %3837 = vmatpush1.msra.mxu0 0.0
        %3838 = vmatprep.subr.mxu0 0.0
        %3839 = vmatpush1.msra.mxu0 0.0
        %3840 = vmatprep.subr.mxu0 0.0
        %3841 = vmatpush1.msra.mxu0 0.0
        %3842 = vmatprep.subr.mxu0 0.0
        %3843 = vmatpush1.msra.mxu0 0.0
        %3844 = vmatprep.subr.mxu0 0.0
        %3845 = vmatpush1.msra.mxu0 0.0
        %3846 = vmatprep.subr.mxu0 0.0
        %3847 = vmatpush1.msra.mxu0 0.0
        %3848 = vmatprep.subr.mxu0 0.0
        %3849 = vmatpush1.msra.mxu0 0.0
        %3850 = vmatprep.subr.mxu0 0.0
        %3851 = vmatpush1.msra.mxu0 0.0
        %3852 = vmatprep.subr.mxu0 0.0
        %3853 = vmatpush1.msra.mxu0 0.0
        %3854 = vmatprep.subr.mxu0 0.0
        %3855 = vmatpush1.msra.mxu0 0.0
        %3856 = vmatprep.subr.mxu0 0.0
        %3857 = vmatpush1.msra.mxu0 0.0
        %3858 = vmatprep.subr.mxu0 0.0
        %3859 = vmatpush1.msra.mxu0 0.0
        %3860 = vmatprep.subr.mxu0 0.0
        %3861 = vmatpush1.msra.mxu0 0.0
        %3862 = vmatprep.subr.mxu0 0.0
        %3863 = vmatpush1.msra.mxu0 0.0
        %3864 = vmatprep.subr.mxu0 0.0
        %3865 = vmatpush1.msra.mxu0 0.0
        %3866 = vmatprep.subr.mxu0 0.0
        %3867 = vmatpush1.msra.mxu0 0.0
        %3868 = vmatprep.subr.mxu0 0.0
        %3869 = vmatpush1.msra.mxu0 0.0
        %3870 = vmatprep.subr.mxu0 0.0
        %3871 = vmatpush1.msra.mxu0 0.0
        %3872 = vmatprep.subr.mxu0 0.0
        %3873 = vmatpush1.msra.mxu0 0.0
        %3874 = vmatprep.subr.mxu0 0.0
        %3875 = vmatpush1.msra.mxu0 0.0
        %3876 = vmatprep.subr.mxu0 0.0
        %3877 = vmatpush1.msra.mxu0 0.0
        %3878 = vmatprep.subr.mxu0 0.0
        %3879 = vmatpush1.msra.mxu0 0.0
        %3880 = vmatprep.subr.mxu0 0.0
        %3881 = vmatpush1.msra.mxu0 0.0
        %3882 = vmatprep.subr.mxu0 0.0
        %3883 = vmatpush1.msra.mxu0 0.0
        %3884 = vmatprep.subr.mxu0 0.0
        %3885 = vmatpush1.msra.mxu0 0.0
        %3886 = vmatprep.subr.mxu0 0.0
        %3887 = vmatpush1.msra.mxu0 0.0
        %3888 = vmatprep.subr.mxu0 0.0
        %3889 = vmatpush1.msra.mxu0 0.0
        %3890 = vmatprep.subr.mxu0 0.0
        %3891 = vmatpush1.msra.mxu0 0.0
        %3892 = vmatprep.subr.mxu0 0.0
        %3893 = vmatpush1.msra.mxu0 0.0
        %3894 = vmatprep.mubr.f32.mxu0 0.0
        %3895 = vmatmul.mubr.f32.gmra.mrb[0].mxu0 %v3825
        %v3896 = vpop.f32.mrb[0].mxu0
        %v3897 = vadd.f32 %v3816, %v3896
        %v3898 = vpop.f32.mrb[0].mxu0
        %3899 = vmatprep.mubr.f32.mxu0 0.0
        %3900 = vmatmul.mubr.f32.gmra.mrb[0].mxu0 %v3828
        %v3901 = vpop.f32.mrb[0].mxu0
        %v3902 = vadd.f32 %v3821, %v3901
        %v3903 = vpop.f32.mrb[0].mxu0
        %3904 = vdwg.mxu0
        %s3905 = scalar_lea.vmem %s13, 32
        %v3906 = vld [vmem:[%s3905] sm:$0xff]
        %v3907 = vld [vmem:[%s3905 + $0x8] sm:$0xff]
        %3908 = vrot.lane.b32.xlu0 %v3727, 126
        %v3909 = vpop.permute.xlu0 %3908
        %3910 = vrot.lane.b32.xlu0 %v3728, 126
        %v3911 = vpop.permute.xlu0 %3910
        %v3915 = vsel %vm3742, %v3906, 0
        %v3918 = vsel %vm3742, %v3907, 0
        %3920 = vmatprep.subr.mxu0 0.0
        %3921 = vmatpush1.msra.mxu0 %v3909
        %3922 = vmatprep.subr.mxu0 0.0
        %3923 = vmatpush1.msra.mxu0 %v3911
        %3924 = vmatprep.subr.mxu0 0.0
        %3925 = vmatpush1.msra.mxu0 0.0
        %3926 = vmatprep.subr.mxu0 0.0
        %3927 = vmatpush1.msra.mxu0 0.0
        %3928 = vmatprep.subr.mxu0 0.0
        %3929 = vmatpush1.msra.mxu0 0.0
        %3930 = vmatprep.subr.mxu0 0.0
        %3931 = vmatpush1.msra.mxu0 0.0
        %3932 = vmatprep.subr.mxu0 0.0
        %3933 = vmatpush1.msra.mxu0 0.0
        %3934 = vmatprep.subr.mxu0 0.0
        %3935 = vmatpush1.msra.mxu0 0.0
        %3936 = vmatprep.subr.mxu0 0.0
        %3937 = vmatpush1.msra.mxu0 0.0
        %3938 = vmatprep.subr.mxu0 0.0
        %3939 = vmatpush1.msra.mxu0 0.0
        %3940 = vmatprep.subr.mxu0 0.0
        %3941 = vmatpush1.msra.mxu0 0.0
        %3942 = vmatprep.subr.mxu0 0.0
        %3943 = vmatpush1.msra.mxu0 0.0
        %3944 = vmatprep.subr.mxu0 0.0
        %3945 = vmatpush1.msra.mxu0 0.0
        %3946 = vmatprep.subr.mxu0 0.0
        %3947 = vmatpush1.msra.mxu0 0.0
        %3948 = vmatprep.subr.mxu0 0.0
        %3949 = vmatpush1.msra.mxu0 0.0
        %3950 = vmatprep.subr.mxu0 0.0
        %3951 = vmatpush1.msra.mxu0 0.0
        %3952 = vmatprep.subr.mxu0 0.0
        %3953 = vmatpush1.msra.mxu0 0.0
        %3954 = vmatprep.subr.mxu0 0.0
        %3955 = vmatpush1.msra.mxu0 0.0
        %3956 = vmatprep.subr.mxu0 0.0
        %3957 = vmatpush1.msra.mxu0 0.0
        %3958 = vmatprep.subr.mxu0 0.0
        %3959 = vmatpush1.msra.mxu0 0.0
        %3960 = vmatprep.subr.mxu0 0.0
        %3961 = vmatpush1.msra.mxu0 0.0
        %3962 = vmatprep.subr.mxu0 0.0
        %3963 = vmatpush1.msra.mxu0 0.0
        %3964 = vmatprep.subr.mxu0 0.0
        %3965 = vmatpush1.msra.mxu0 0.0
        %3966 = vmatprep.subr.mxu0 0.0
        %3967 = vmatpush1.msra.mxu0 0.0
        %3968 = vmatprep.subr.mxu0 0.0
        %3969 = vmatpush1.msra.mxu0 0.0
        %3970 = vmatprep.subr.mxu0 0.0
        %3971 = vmatpush1.msra.mxu0 0.0
        %3972 = vmatprep.subr.mxu0 0.0
        %3973 = vmatpush1.msra.mxu0 0.0
        %3974 = vmatprep.subr.mxu0 0.0
        %3975 = vmatpush1.msra.mxu0 0.0
        %3976 = vmatprep.subr.mxu0 0.0
        %3977 = vmatpush1.msra.mxu0 0.0
        %3978 = vmatprep.subr.mxu0 0.0
        %3979 = vmatpush1.msra.mxu0 0.0
        %3980 = vmatprep.subr.mxu0 0.0
        %3981 = vmatpush1.msra.mxu0 0.0
        %3982 = vmatprep.subr.mxu0 0.0
        %3983 = vmatpush1.msra.mxu0 0.0
        %3984 = vmatprep.mubr.f32.mxu0 0.0
        %3985 = vmatmul.mubr.f32.gmra.mrb[0].mxu0 %v3915
        %v3986 = vpop.f32.mrb[0].mxu0
        %v3987 = vadd.f32 0.0, %v3986
        %v3988 = vpop.f32.mrb[0].mxu0
        %3989 = vmatprep.mubr.f32.mxu0 0.0
        %3990 = vmatmul.mubr.f32.gmra.mrb[0].mxu0 %v3918
        %v3991 = vpop.f32.mrb[0].mxu0
        %v3992 = vadd.f32 0.0, %v3991
        %v3993 = vpop.f32.mrb[0].mxu0
        %3994 = vdwg.mxu0
        %v3995 = vadd.f32 %v3897, %v3987
        %v3996 = vadd.f32 %v3902, %v3992
        %s3997 = sadd.s32 %s3720, 1
        %s3998 = smul.u32 %s3997, 16
        %s3999 = scalar_lea.vmem [#allocation6], %s3998
        %v4000 = vld [vmem:[%s3999] sm:$0xff]
        %v4001 = vld [vmem:[%s3999 + $0x8] sm:$0xff]
        %s4002 = scalar_lea.vmem %s13, 48
        %v4003 = vld [vmem:[%s4002] sm:$0xff]
        %v4004 = vld [vmem:[%s4002 + $0x8] sm:$0xff]
        %v4006 = vsel %vm3742, %v4003, 0
        %v4009 = vsel %vm3742, %v4004, 0
        %4011 = vmatprep.subr.mxu0 0.0
        %4012 = vmatpush1.msra.mxu0 %v4000
        %4013 = vmatprep.subr.mxu0 0.0
        %4014 = vmatpush1.msra.mxu0 %v4001
        %4015 = vmatprep.subr.mxu0 0.0
        %4016 = vmatpush1.msra.mxu0 0.0
        %4017 = vmatprep.subr.mxu0 0.0
        %4018 = vmatpush1.msra.mxu0 0.0
        %4019 = vmatprep.subr.mxu0 0.0
        %4020 = vmatpush1.msra.mxu0 0.0
        %4021 = vmatprep.subr.mxu0 0.0
        %4022 = vmatpush1.msra.mxu0 0.0
        %4023 = vmatprep.subr.mxu0 0.0
        %4024 = vmatpush1.msra.mxu0 0.0
        %4025 = vmatprep.subr.mxu0 0.0
        %4026 = vmatpush1.msra.mxu0 0.0
        %4027 = vmatprep.subr.mxu0 0.0
        %4028 = vmatpush1.msra.mxu0 0.0
        %4029 = vmatprep.subr.mxu0 0.0
        %4030 = vmatpush1.msra.mxu0 0.0
        %4031 = vmatprep.subr.mxu0 0.0
        %4032 = vmatpush1.msra.mxu0 0.0
        %4033 = vmatprep.subr.mxu0 0.0
        %4034 = vmatpush1.msra.mxu0 0.0
        %4035 = vmatprep.subr.mxu0 0.0
        %4036 = vmatpush1.msra.mxu0 0.0
        %4037 = vmatprep.subr.mxu0 0.0
        %4038 = vmatpush1.msra.mxu0 0.0
        %4039 = vmatprep.subr.mxu0 0.0
        %4040 = vmatpush1.msra.mxu0 0.0
        %4041 = vmatprep.subr.mxu0 0.0
        %4042 = vmatpush1.msra.mxu0 0.0
        %4043 = vmatprep.subr.mxu0 0.0
        %4044 = vmatpush1.msra.mxu0 0.0
        %4045 = vmatprep.subr.mxu0 0.0
        %4046 = vmatpush1.msra.mxu0 0.0
        %4047 = vmatprep.subr.mxu0 0.0
        %4048 = vmatpush1.msra.mxu0 0.0
        %4049 = vmatprep.subr.mxu0 0.0
        %4050 = vmatpush1.msra.mxu0 0.0
        %4051 = vmatprep.subr.mxu0 0.0
        %4052 = vmatpush1.msra.mxu0 0.0
        %4053 = vmatprep.subr.mxu0 0.0
        %4054 = vmatpush1.msra.mxu0 0.0
        %4055 = vmatprep.subr.mxu0 0.0
        %4056 = vmatpush1.msra.mxu0 0.0
        %4057 = vmatprep.subr.mxu0 0.0
        %4058 = vmatpush1.msra.mxu0 0.0
        %4059 = vmatprep.subr.mxu0 0.0
        %4060 = vmatpush1.msra.mxu0 0.0
        %4061 = vmatprep.subr.mxu0 0.0
        %4062 = vmatpush1.msra.mxu0 0.0
        %4063 = vmatprep.subr.mxu0 0.0
        %4064 = vmatpush1.msra.mxu0 0.0
        %4065 = vmatprep.subr.mxu0 0.0
        %4066 = vmatpush1.msra.mxu0 0.0
        %4067 = vmatprep.subr.mxu0 0.0
        %4068 = vmatpush1.msra.mxu0 0.0
        %4069 = vmatprep.subr.mxu0 0.0
        %4070 = vmatpush1.msra.mxu0 0.0
        %4071 = vmatprep.subr.mxu0 0.0
        %4072 = vmatpush1.msra.mxu0 0.0
        %4073 = vmatprep.subr.mxu0 0.0
        %4074 = vmatpush1.msra.mxu0 0.0
        %4075 = vmatprep.mubr.f32.mxu0 0.0
        %4076 = vmatmul.mubr.f32.gmra.mrb[0].mxu0 %v4006
        %v4077 = vpop.f32.mrb[0].mxu0
        %v4078 = vadd.f32 0.0, %v4077
        %v4079 = vpop.f32.mrb[0].mxu0
        %4080 = vmatprep.mubr.f32.mxu0 0.0
        %4081 = vmatmul.mubr.f32.gmra.mrb[0].mxu0 %v4009
        %v4082 = vpop.f32.mrb[0].mxu0
        %v4083 = vadd.f32 0.0, %v4082
        %v4084 = vpop.f32.mrb[0].mxu0
        %4085 = vdwg.mxu0
        %v4086 = vadd.f32 %v3995, %v4078
        %v4087 = vadd.f32 %v3996, %v4083
        %s4088 = scalar_lea.vmem %s13, 64
        %v4089 = vld [vmem:[%s4088] sm:$0xff]
        %v4090 = vld [vmem:[%s4088 + $0x8] sm:$0xff]
        %4093 = vrot.lane.b32.xlu0 %v4000, 127
        %v4094 = vpop.permute.xlu0 %4093
        %4095 = vrot.lane.b32.xlu0 %v4001, 127
        %v4096 = vpop.permute.xlu0 %4095
        %v4100 = vsel %vm3742, %v4089, 0
        %v4103 = vsel %vm3742, %v4090, 0
        %4105 = vmatprep.subr.mxu0 0.0
        %4106 = vmatpush1.msra.mxu0 %v4094
        %4107 = vmatprep.subr.mxu0 0.0
        %4108 = vmatpush1.msra.mxu0 %v4096
        %4109 = vmatprep.subr.mxu0 0.0
        %4110 = vmatpush1.msra.mxu0 0.0
        %4111 = vmatprep.subr.mxu0 0.0
        %4112 = vmatpush1.msra.mxu0 0.0
        %4113 = vmatprep.subr.mxu0 0.0
        %4114 = vmatpush1.msra.mxu0 0.0
        %4115 = vmatprep.subr.mxu0 0.0
        %4116 = vmatpush1.msra.mxu0 0.0
        %4117 = vmatprep.subr.mxu0 0.0
        %4118 = vmatpush1.msra.mxu0 0.0
        %4119 = vmatprep.subr.mxu0 0.0
        %4120 = vmatpush1.msra.mxu0 0.0
        %4121 = vmatprep.subr.mxu0 0.0
        %4122 = vmatpush1.msra.mxu0 0.0
        %4123 = vmatprep.subr.mxu0 0.0
        %4124 = vmatpush1.msra.mxu0 0.0
        %4125 = vmatprep.subr.mxu0 0.0
        %4126 = vmatpush1.msra.mxu0 0.0
        %4127 = vmatprep.subr.mxu0 0.0
        %4128 = vmatpush1.msra.mxu0 0.0
        %4129 = vmatprep.subr.mxu0 0.0
        %4130 = vmatpush1.msra.mxu0 0.0
        %4131 = vmatprep.subr.mxu0 0.0
        %4132 = vmatpush1.msra.mxu0 0.0
        %4133 = vmatprep.subr.mxu0 0.0
        %4134 = vmatpush1.msra.mxu0 0.0
        %4135 = vmatprep.subr.mxu0 0.0
        %4136 = vmatpush1.msra.mxu0 0.0
        %4137 = vmatprep.subr.mxu0 0.0
        %4138 = vmatpush1.msra.mxu0 0.0
        %4139 = vmatprep.subr.mxu0 0.0
        %4140 = vmatpush1.msra.mxu0 0.0
        %4141 = vmatprep.subr.mxu0 0.0
        %4142 = vmatpush1.msra.mxu0 0.0
        %4143 = vmatprep.subr.mxu0 0.0
        %4144 = vmatpush1.msra.mxu0 0.0
        %4145 = vmatprep.subr.mxu0 0.0
        %4146 = vmatpush1.msra.mxu0 0.0
        %4147 = vmatprep.subr.mxu0 0.0
        %4148 = vmatpush1.msra.mxu0 0.0
        %4149 = vmatprep.subr.mxu0 0.0
        %4150 = vmatpush1.msra.mxu0 0.0
        %4151 = vmatprep.subr.mxu0 0.0
        %4152 = vmatpush1.msra.mxu0 0.0
        %4153 = vmatprep.subr.mxu0 0.0
        %4154 = vmatpush1.msra.mxu0 0.0
        %4155 = vmatprep.subr.mxu0 0.0
        %4156 = vmatpush1.msra.mxu0 0.0
        %4157 = vmatprep.subr.mxu0 0.0
        %4158 = vmatpush1.msra.mxu0 0.0
        %4159 = vmatprep.subr.mxu0 0.0
        %4160 = vmatpush1.msra.mxu0 0.0
        %4161 = vmatprep.subr.mxu0 0.0
        %4162 = vmatpush1.msra.mxu0 0.0
        %4163 = vmatprep.subr.mxu0 0.0
        %4164 = vmatpush1.msra.mxu0 0.0
        %4165 = vmatprep.subr.mxu0 0.0
        %4166 = vmatpush1.msra.mxu0 0.0
        %4167 = vmatprep.subr.mxu0 0.0
        %4168 = vmatpush1.msra.mxu0 0.0
        %4169 = vmatprep.mubr.f32.mxu0 0.0
        %4170 = vmatmul.mubr.f32.gmra.mrb[0].mxu0 %v4100
        %v4171 = vpop.f32.mrb[0].mxu0
        %v4172 = vadd.f32 0.0, %v4171
        %v4173 = vpop.f32.mrb[0].mxu0
        %4174 = vmatprep.mubr.f32.mxu0 0.0
        %4175 = vmatmul.mubr.f32.gmra.mrb[0].mxu0 %v4103
        %v4176 = vpop.f32.mrb[0].mxu0
        %v4177 = vadd.f32 0.0, %v4176
        %v4178 = vpop.f32.mrb[0].mxu0
        %4179 = vdwg.mxu0
        %v4180 = vadd.f32 %v4086, %v4172
        %v4181 = vadd.f32 %v4087, %v4177
        %s4182 = scalar_lea.vmem %s13, 80
        %v4183 = vld [vmem:[%s4182] sm:$0xff]
        %v4184 = vld [vmem:[%s4182 + $0x8] sm:$0xff]
        %4185 = vrot.lane.b32.xlu0 %v4000, 126
        %v4186 = vpop.permute.xlu0 %4185
        %4187 = vrot.lane.b32.xlu0 %v4001, 126
        %v4188 = vpop.permute.xlu0 %4187
        %v4192 = vsel %vm3742, %v4183, 0
        %v4195 = vsel %vm3742, %v4184, 0
        %4197 = vmatprep.subr.mxu0 0.0
        %4198 = vmatpush1.msra.mxu0 %v4186
        %4199 = vmatprep.subr.mxu0 0.0
        %4200 = vmatpush1.msra.mxu0 %v4188
        %4201 = vmatprep.subr.mxu0 0.0
        %4202 = vmatpush1.msra.mxu0 0.0
        %4203 = vmatprep.subr.mxu0 0.0
        %4204 = vmatpush1.msra.mxu0 0.0
        %4205 = vmatprep.subr.mxu0 0.0
        %4206 = vmatpush1.msra.mxu0 0.0
        %4207 = vmatprep.subr.mxu0 0.0
        %4208 = vmatpush1.msra.mxu0 0.0
        %4209 = vmatprep.subr.mxu0 0.0
        %4210 = vmatpush1.msra.mxu0 0.0
        %4211 = vmatprep.subr.mxu0 0.0
        %4212 = vmatpush1.msra.mxu0 0.0
        %4213 = vmatprep.subr.mxu0 0.0
        %4214 = vmatpush1.msra.mxu0 0.0
        %4215 = vmatprep.subr.mxu0 0.0
        %4216 = vmatpush1.msra.mxu0 0.0
        %4217 = vmatprep.subr.mxu0 0.0
        %4218 = vmatpush1.msra.mxu0 0.0
        %4219 = vmatprep.subr.mxu0 0.0
        %4220 = vmatpush1.msra.mxu0 0.0
        %4221 = vmatprep.subr.mxu0 0.0
        %4222 = vmatpush1.msra.mxu0 0.0
        %4223 = vmatprep.subr.mxu0 0.0
        %4224 = vmatpush1.msra.mxu0 0.0
        %4225 = vmatprep.subr.mxu0 0.0
        %4226 = vmatpush1.msra.mxu0 0.0
        %4227 = vmatprep.subr.mxu0 0.0
        %4228 = vmatpush1.msra.mxu0 0.0
        %4229 = vmatprep.subr.mxu0 0.0
        %4230 = vmatpush1.msra.mxu0 0.0
        %4231 = vmatprep.subr.mxu0 0.0
        %4232 = vmatpush1.msra.mxu0 0.0
        %4233 = vmatprep.subr.mxu0 0.0
        %4234 = vmatpush1.msra.mxu0 0.0
        %4235 = vmatprep.subr.mxu0 0.0
        %4236 = vmatpush1.msra.mxu0 0.0
        %4237 = vmatprep.subr.mxu0 0.0
        %4238 = vmatpush1.msra.mxu0 0.0
        %4239 = vmatprep.subr.mxu0 0.0
        %4240 = vmatpush1.msra.mxu0 0.0
        %4241 = vmatprep.subr.mxu0 0.0
        %4242 = vmatpush1.msra.mxu0 0.0
        %4243 = vmatprep.subr.mxu0 0.0
        %4244 = vmatpush1.msra.mxu0 0.0
        %4245 = vmatprep.subr.mxu0 0.0
        %4246 = vmatpush1.msra.mxu0 0.0
        %4247 = vmatprep.subr.mxu0 0.0
        %4248 = vmatpush1.msra.mxu0 0.0
        %4249 = vmatprep.subr.mxu0 0.0
        %4250 = vmatpush1.msra.mxu0 0.0
        %4251 = vmatprep.subr.mxu0 0.0
        %4252 = vmatpush1.msra.mxu0 0.0
        %4253 = vmatprep.subr.mxu0 0.0
        %4254 = vmatpush1.msra.mxu0 0.0
        %4255 = vmatprep.subr.mxu0 0.0
        %4256 = vmatpush1.msra.mxu0 0.0
        %4257 = vmatprep.subr.mxu0 0.0
        %4258 = vmatpush1.msra.mxu0 0.0
        %4259 = vmatprep.subr.mxu0 0.0
        %4260 = vmatpush1.msra.mxu0 0.0
        %4261 = vmatprep.mubr.f32.mxu0 0.0
        %4262 = vmatmul.mubr.f32.gmra.mrb[0].mxu0 %v4192
        %v4263 = vpop.f32.mrb[0].mxu0
        %v4264 = vadd.f32 0.0, %v4263
        %v4265 = vpop.f32.mrb[0].mxu0
        %4266 = vmatprep.mubr.f32.mxu0 0.0
        %4267 = vmatmul.mubr.f32.gmra.mrb[0].mxu0 %v4195
        %v4268 = vpop.f32.mrb[0].mxu0
        %v4269 = vadd.f32 0.0, %v4268
        %v4270 = vpop.f32.mrb[0].mxu0
        %4271 = vdwg.mxu0
        %v4272 = vadd.f32 %v4180, %v4264
        %v4273 = vadd.f32 %v4181, %v4269
        %s4274 = sadd.s32 %s3720, 2
        %s4275 = smul.u32 %s4274, 16
        %s4276 = scalar_lea.vmem [#allocation6], %s4275
        %v4277 = vld [vmem:[%s4276] sm:$0xff]
        %v4278 = vld [vmem:[%s4276 + $0x8] sm:$0xff]
        %s4279 = scalar_lea.vmem %s13, 96
        %v4280 = vld [vmem:[%s4279] sm:$0xff]
        %v4281 = vld [vmem:[%s4279 + $0x8] sm:$0xff]
        %v4283 = vsel %vm3742, %v4280, 0
        %v4286 = vsel %vm3742, %v4281, 0
        %4288 = vmatprep.subr.mxu0 0.0
        %4289 = vmatpush1.msra.mxu0 %v4277
        %4290 = vmatprep.subr.mxu0 0.0
        %4291 = vmatpush1.msra.mxu0 %v4278
        %4292 = vmatprep.subr.mxu0 0.0
        %4293 = vmatpush1.msra.mxu0 0.0
        %4294 = vmatprep.subr.mxu0 0.0
        %4295 = vmatpush1.msra.mxu0 0.0
        %4296 = vmatprep.subr.mxu0 0.0
        %4297 = vmatpush1.msra.mxu0 0.0
        %4298 = vmatprep.subr.mxu0 0.0
        %4299 = vmatpush1.msra.mxu0 0.0
        %4300 = vmatprep.subr.mxu0 0.0
        %4301 = vmatpush1.msra.mxu0 0.0
        %4302 = vmatprep.subr.mxu0 0.0
        %4303 = vmatpush1.msra.mxu0 0.0
        %4304 = vmatprep.subr.mxu0 0.0
        %4305 = vmatpush1.msra.mxu0 0.0
        %4306 = vmatprep.subr.mxu0 0.0
        %4307 = vmatpush1.msra.mxu0 0.0
        %4308 = vmatprep.subr.mxu0 0.0
        %4309 = vmatpush1.msra.mxu0 0.0
        %4310 = vmatprep.subr.mxu0 0.0
        %4311 = vmatpush1.msra.mxu0 0.0
        %4312 = vmatprep.subr.mxu0 0.0
        %4313 = vmatpush1.msra.mxu0 0.0
        %4314 = vmatprep.subr.mxu0 0.0
        %4315 = vmatpush1.msra.mxu0 0.0
        %4316 = vmatprep.subr.mxu0 0.0
        %4317 = vmatpush1.msra.mxu0 0.0
        %4318 = vmatprep.subr.mxu0 0.0
        %4319 = vmatpush1.msra.mxu0 0.0
        %4320 = vmatprep.subr.mxu0 0.0
        %4321 = vmatpush1.msra.mxu0 0.0
        %4322 = vmatprep.subr.mxu0 0.0
        %4323 = vmatpush1.msra.mxu0 0.0
        %4324 = vmatprep.subr.mxu0 0.0
        %4325 = vmatpush1.msra.mxu0 0.0
        %4326 = vmatprep.subr.mxu0 0.0
        %4327 = vmatpush1.msra.mxu0 0.0
        %4328 = vmatprep.subr.mxu0 0.0
        %4329 = vmatpush1.msra.mxu0 0.0
        %4330 = vmatprep.subr.mxu0 0.0
        %4331 = vmatpush1.msra.mxu0 0.0
        %4332 = vmatprep.subr.mxu0 0.0
        %4333 = vmatpush1.msra.mxu0 0.0
        %4334 = vmatprep.subr.mxu0 0.0
        %4335 = vmatpush1.msra.mxu0 0.0
        %4336 = vmatprep.subr.mxu0 0.0
        %4337 = vmatpush1.msra.mxu0 0.0
        %4338 = vmatprep.subr.mxu0 0.0
        %4339 = vmatpush1.msra.mxu0 0.0
        %4340 = vmatprep.subr.mxu0 0.0
        %4341 = vmatpush1.msra.mxu0 0.0
        %4342 = vmatprep.subr.mxu0 0.0
        %4343 = vmatpush1.msra.mxu0 0.0
        %4344 = vmatprep.subr.mxu0 0.0
        %4345 = vmatpush1.msra.mxu0 0.0
        %4346 = vmatprep.subr.mxu0 0.0
        %4347 = vmatpush1.msra.mxu0 0.0
        %4348 = vmatprep.subr.mxu0 0.0
        %4349 = vmatpush1.msra.mxu0 0.0
        %4350 = vmatprep.subr.mxu0 0.0
        %4351 = vmatpush1.msra.mxu0 0.0
        %4352 = vmatprep.mubr.f32.mxu0 0.0
        %4353 = vmatmul.mubr.f32.gmra.mrb[0].mxu0 %v4283
        %v4354 = vpop.f32.mrb[0].mxu0
        %v4355 = vadd.f32 0.0, %v4354
        %v4356 = vpop.f32.mrb[0].mxu0
        %4357 = vmatprep.mubr.f32.mxu0 0.0
        %4358 = vmatmul.mubr.f32.gmra.mrb[0].mxu0 %v4286
        %v4359 = vpop.f32.mrb[0].mxu0
        %v4360 = vadd.f32 0.0, %v4359
        %v4361 = vpop.f32.mrb[0].mxu0
        %4362 = vdwg.mxu0
        %v4363 = vadd.f32 %v4272, %v4355
        %v4364 = vadd.f32 %v4273, %v4360
        %s4365 = scalar_lea.vmem %s13, 112
        %v4366 = vld [vmem:[%s4365] sm:$0xff]
        %v4367 = vld [vmem:[%s4365 + $0x8] sm:$0xff]
        %4370 = vrot.lane.b32.xlu0 %v4277, 127
        %v4371 = vpop.permute.xlu0 %4370
        %4372 = vrot.lane.b32.xlu0 %v4278, 127
        %v4373 = vpop.permute.xlu0 %4372
        %v4377 = vsel %vm3742, %v4366, 0
        %v4380 = vsel %vm3742, %v4367, 0
        %4382 = vmatprep.subr.mxu0 0.0
        %4383 = vmatpush1.msra.mxu0 %v4371
        %4384 = vmatprep.subr.mxu0 0.0
        %4385 = vmatpush1.msra.mxu0 %v4373
        %4386 = vmatprep.subr.mxu0 0.0
        %4387 = vmatpush1.msra.mxu0 0.0
        %4388 = vmatprep.subr.mxu0 0.0
        %4389 = vmatpush1.msra.mxu0 0.0
        %4390 = vmatprep.subr.mxu0 0.0
        %4391 = vmatpush1.msra.mxu0 0.0
        %4392 = vmatprep.subr.mxu0 0.0
        %4393 = vmatpush1.msra.mxu0 0.0
        %4394 = vmatprep.subr.mxu0 0.0
        %4395 = vmatpush1.msra.mxu0 0.0
        %4396 = vmatprep.subr.mxu0 0.0
        %4397 = vmatpush1.msra.mxu0 0.0
        %4398 = vmatprep.subr.mxu0 0.0
        %4399 = vmatpush1.msra.mxu0 0.0
        %4400 = vmatprep.subr.mxu0 0.0
        %4401 = vmatpush1.msra.mxu0 0.0
        %4402 = vmatprep.subr.mxu0 0.0
        %4403 = vmatpush1.msra.mxu0 0.0
        %4404 = vmatprep.subr.mxu0 0.0
        %4405 = vmatpush1.msra.mxu0 0.0
        %4406 = vmatprep.subr.mxu0 0.0
        %4407 = vmatpush1.msra.mxu0 0.0
        %4408 = vmatprep.subr.mxu0 0.0
        %4409 = vmatpush1.msra.mxu0 0.0
        %4410 = vmatprep.subr.mxu0 0.0
        %4411 = vmatpush1.msra.mxu0 0.0
        %4412 = vmatprep.subr.mxu0 0.0
        %4413 = vmatpush1.msra.mxu0 0.0
        %4414 = vmatprep.subr.mxu0 0.0
        %4415 = vmatpush1.msra.mxu0 0.0
        %4416 = vmatprep.subr.mxu0 0.0
        %4417 = vmatpush1.msra.mxu0 0.0
        %4418 = vmatprep.subr.mxu0 0.0
        %4419 = vmatpush1.msra.mxu0 0.0
        %4420 = vmatprep.subr.mxu0 0.0
        %4421 = vmatpush1.msra.mxu0 0.0
        %4422 = vmatprep.subr.mxu0 0.0
        %4423 = vmatpush1.msra.mxu0 0.0
        %4424 = vmatprep.subr.mxu0 0.0
        %4425 = vmatpush1.msra.mxu0 0.0
        %4426 = vmatprep.subr.mxu0 0.0
        %4427 = vmatpush1.msra.mxu0 0.0
        %4428 = vmatprep.subr.mxu0 0.0
        %4429 = vmatpush1.msra.mxu0 0.0
        %4430 = vmatprep.subr.mxu0 0.0
        %4431 = vmatpush1.msra.mxu0 0.0
        %4432 = vmatprep.subr.mxu0 0.0
        %4433 = vmatpush1.msra.mxu0 0.0
        %4434 = vmatprep.subr.mxu0 0.0
        %4435 = vmatpush1.msra.mxu0 0.0
        %4436 = vmatprep.subr.mxu0 0.0
        %4437 = vmatpush1.msra.mxu0 0.0
        %4438 = vmatprep.subr.mxu0 0.0
        %4439 = vmatpush1.msra.mxu0 0.0
        %4440 = vmatprep.subr.mxu0 0.0
        %4441 = vmatpush1.msra.mxu0 0.0
        %4442 = vmatprep.subr.mxu0 0.0
        %4443 = vmatpush1.msra.mxu0 0.0
        %4444 = vmatprep.subr.mxu0 0.0
        %4445 = vmatpush1.msra.mxu0 0.0
        %4446 = vmatprep.mubr.f32.mxu0 0.0
        %4447 = vmatmul.mubr.f32.gmra.mrb[0].mxu0 %v4377
        %v4448 = vpop.f32.mrb[0].mxu0
        %v4449 = vadd.f32 0.0, %v4448
        %v4450 = vpop.f32.mrb[0].mxu0
        %4451 = vmatprep.mubr.f32.mxu0 0.0
        %4452 = vmatmul.mubr.f32.gmra.mrb[0].mxu0 %v4380
        %v4453 = vpop.f32.mrb[0].mxu0
        %v4454 = vadd.f32 0.0, %v4453
        %v4455 = vpop.f32.mrb[0].mxu0
        %4456 = vdwg.mxu0
        %v4457 = vadd.f32 %v4363, %v4449
        %v4458 = vadd.f32 %v4364, %v4454
        %s4459 = scalar_lea.vmem %s13, 128
        %v4460 = vld [vmem:[%s4459] sm:$0xff]
        %v4461 = vld [vmem:[%s4459 + $0x8] sm:$0xff]
        %4462 = vrot.lane.b32.xlu0 %v4277, 126
        %v4463 = vpop.permute.xlu0 %4462
        %4464 = vrot.lane.b32.xlu0 %v4278, 126
        %v4465 = vpop.permute.xlu0 %4464
        %v4469 = vsel %vm3742, %v4460, 0
        %v4472 = vsel %vm3742, %v4461, 0
        %4474 = vmatprep.subr.mxu0 0.0
        %4475 = vmatpush1.msra.mxu0 %v4463
        %4476 = vmatprep.subr.mxu0 0.0
        %4477 = vmatpush1.msra.mxu0 %v4465
        %4478 = vmatprep.subr.mxu0 0.0
        %4479 = vmatpush1.msra.mxu0 0.0
        %4480 = vmatprep.subr.mxu0 0.0
        %4481 = vmatpush1.msra.mxu0 0.0
        %4482 = vmatprep.subr.mxu0 0.0
        %4483 = vmatpush1.msra.mxu0 0.0
        %4484 = vmatprep.subr.mxu0 0.0
        %4485 = vmatpush1.msra.mxu0 0.0
        %4486 = vmatprep.subr.mxu0 0.0
        %4487 = vmatpush1.msra.mxu0 0.0
        %4488 = vmatprep.subr.mxu0 0.0
        %4489 = vmatpush1.msra.mxu0 0.0
        %4490 = vmatprep.subr.mxu0 0.0
        %4491 = vmatpush1.msra.mxu0 0.0
        %4492 = vmatprep.subr.mxu0 0.0
        %4493 = vmatpush1.msra.mxu0 0.0
        %4494 = vmatprep.subr.mxu0 0.0
        %4495 = vmatpush1.msra.mxu0 0.0
        %4496 = vmatprep.subr.mxu0 0.0
        %4497 = vmatpush1.msra.mxu0 0.0
        %4498 = vmatprep.subr.mxu0 0.0
        %4499 = vmatpush1.msra.mxu0 0.0
        %4500 = vmatprep.subr.mxu0 0.0
        %4501 = vmatpush1.msra.mxu0 0.0
        %4502 = vmatprep.subr.mxu0 0.0
        %4503 = vmatpush1.msra.mxu0 0.0
        %4504 = vmatprep.subr.mxu0 0.0
        %4505 = vmatpush1.msra.mxu0 0.0
        %4506 = vmatprep.subr.mxu0 0.0
        %4507 = vmatpush1.msra.mxu0 0.0
        %4508 = vmatprep.subr.mxu0 0.0
        %4509 = vmatpush1.msra.mxu0 0.0
        %4510 = vmatprep.subr.mxu0 0.0
        %4511 = vmatpush1.msra.mxu0 0.0
        %4512 = vmatprep.subr.mxu0 0.0
        %4513 = vmatpush1.msra.mxu0 0.0
        %4514 = vmatprep.subr.mxu0 0.0
        %4515 = vmatpush1.msra.mxu0 0.0
        %4516 = vmatprep.subr.mxu0 0.0
        %4517 = vmatpush1.msra.mxu0 0.0
        %4518 = vmatprep.subr.mxu0 0.0
        %4519 = vmatpush1.msra.mxu0 0.0
        %4520 = vmatprep.subr.mxu0 0.0
        %4521 = vmatpush1.msra.mxu0 0.0
        %4522 = vmatprep.subr.mxu0 0.0
        %4523 = vmatpush1.msra.mxu0 0.0
        %4524 = vmatprep.subr.mxu0 0.0
        %4525 = vmatpush1.msra.mxu0 0.0
        %4526 = vmatprep.subr.mxu0 0.0
        %4527 = vmatpush1.msra.mxu0 0.0
        %4528 = vmatprep.subr.mxu0 0.0
        %4529 = vmatpush1.msra.mxu0 0.0
        %4530 = vmatprep.subr.mxu0 0.0
        %4531 = vmatpush1.msra.mxu0 0.0
        %4532 = vmatprep.subr.mxu0 0.0
        %4533 = vmatpush1.msra.mxu0 0.0
        %4534 = vmatprep.subr.mxu0 0.0
        %4535 = vmatpush1.msra.mxu0 0.0
        %4536 = vmatprep.subr.mxu0 0.0
        %4537 = vmatpush1.msra.mxu0 0.0
        %4538 = vmatprep.mubr.f32.mxu0 0.0
        %4539 = vmatmul.mubr.f32.gmra.mrb[0].mxu0 %v4469
        %v4540 = vpop.f32.mrb[0].mxu0
        %v4541 = vadd.f32 0.0, %v4540
        %v4542 = vpop.f32.mrb[0].mxu0
        %4543 = vmatprep.mubr.f32.mxu0 0.0
        %4544 = vmatmul.mubr.f32.gmra.mrb[0].mxu0 %v4472
        %v4545 = vpop.f32.mrb[0].mxu0
        %v4546 = vadd.f32 0.0, %v4545
        %v4547 = vpop.f32.mrb[0].mxu0
        %4548 = vdwg.mxu0
        %v4549 = vadd.f32 %v4457, %v4541
        %v4550 = vadd.f32 %v4458, %v4546
        %v4551 = vld [vmem:[%s14] sm:$0xff]
        %v4552 = vld [vmem:[%s14 + $0x8] sm:$0xff]
        %4554 = vset.pattern.permute.xlu0 0
        %4555 = vperm.xlu0 %4554, %v4551
        %v4556 = vpop.permute.xlu0 %4555
        %4559 = vset.pattern.permute.xlu0 0
        %4560 = vperm.xlu0 %4559, %v4552
        %v4561 = vpop.permute.xlu0 %4560
        %v4563 = vadd.f32 %v4549, %v4556
        %v4564 = vadd.f32 %v4550, %v4561
        %v4565 = vmax.f32 %v4563, 0.0
        %v4566 = vmax.f32 %v4564, 0.0
        %vm4567 = vcmask 48128
        %v4569 = vsel %vm4567, %v4565, 0
        %v4572 = vsel %vm4567, %v4566, 0
        %vm4574 = vcmask 1045504
        %v4576 = vsel %vm4574, %v3701, 0
        %4578 = vmatprep.subr.mxu0 0.0
        %4579 = vmatpush1.msra.mxu0 %v4576
        %4580 = vmatprep.subr.mxu0 0.0
        %4581 = vmatpush1.msra.mxu0 0.0
        %4582 = vmatprep.subr.mxu0 0.0
        %4583 = vmatpush1.msra.mxu0 0.0
        %4584 = vmatprep.subr.mxu0 0.0
        %4585 = vmatpush1.msra.mxu0 0.0
        %4586 = vmatprep.subr.mxu0 0.0
        %4587 = vmatpush1.msra.mxu0 0.0
        %4588 = vmatprep.subr.mxu0 0.0
        %4589 = vmatpush1.msra.mxu0 0.0
        %4590 = vmatprep.subr.mxu0 0.0
        %4591 = vmatpush1.msra.mxu0 0.0
        %4592 = vmatprep.subr.mxu0 0.0
        %4593 = vmatpush1.msra.mxu0 0.0
        %4594 = vmatprep.subr.mxu0 0.0
        %4595 = vmatpush1.msra.mxu0 0.0
        %4596 = vmatprep.subr.mxu0 0.0
        %4597 = vmatpush1.msra.mxu0 0.0
        %4598 = vmatprep.subr.mxu0 0.0
        %4599 = vmatpush1.msra.mxu0 0.0
        %4600 = vmatprep.subr.mxu0 0.0
        %4601 = vmatpush1.msra.mxu0 0.0
        %4602 = vmatprep.subr.mxu0 0.0
        %4603 = vmatpush1.msra.mxu0 0.0
        %4604 = vmatprep.subr.mxu0 0.0
        %4605 = vmatpush1.msra.mxu0 0.0
        %4606 = vmatprep.subr.mxu0 0.0
        %4607 = vmatpush1.msra.mxu0 0.0
        %4608 = vmatprep.subr.mxu0 0.0
        %4609 = vmatpush1.msra.mxu0 0.0
        %4610 = vmatprep.subr.mxu0 0.0
        %4611 = vmatpush1.msra.mxu0 0.0
        %4612 = vmatprep.subr.mxu0 0.0
        %4613 = vmatpush1.msra.mxu0 0.0
        %4614 = vmatprep.subr.mxu0 0.0
        %4615 = vmatpush1.msra.mxu0 0.0
        %4616 = vmatprep.subr.mxu0 0.0
        %4617 = vmatpush1.msra.mxu0 0.0
        %4618 = vmatprep.subr.mxu0 0.0
        %4619 = vmatpush1.msra.mxu0 0.0
        %4620 = vmatprep.subr.mxu0 0.0
        %4621 = vmatpush1.msra.mxu0 0.0
        %4622 = vmatprep.subr.mxu0 0.0
        %4623 = vmatpush1.msra.mxu0 0.0
        %4624 = vmatprep.subr.mxu0 0.0
        %4625 = vmatpush1.msra.mxu0 0.0
        %4626 = vmatprep.subr.mxu0 0.0
        %4627 = vmatpush1.msra.mxu0 0.0
        %4628 = vmatprep.subr.mxu0 0.0
        %4629 = vmatpush1.msra.mxu0 0.0
        %4630 = vmatprep.subr.mxu0 0.0
        %4631 = vmatpush1.msra.mxu0 0.0
        %4632 = vmatprep.subr.mxu0 0.0
        %4633 = vmatpush1.msra.mxu0 0.0
        %4634 = vmatprep.subr.mxu0 0.0
        %4635 = vmatpush1.msra.mxu0 0.0
        %4636 = vmatprep.subr.mxu0 0.0
        %4637 = vmatpush1.msra.mxu0 0.0
        %4638 = vmatprep.subr.mxu0 0.0
        %4639 = vmatpush1.msra.mxu0 0.0
        %4640 = vmatprep.subr.mxu0 0.0
        %4641 = vmatpush1.msra.mxu0 0.0
        %4642 = vmatprep.mubr.f32.mxu0 0.0
        %4643 = vmatmul.mubr.f32.gmra.mrb[0].mxu0 %v4569
        %v4644 = vpop.f32.mrb[0].mxu0
        %v4645 = vadd.f32 0.0, %v4644
        %v4646 = vpop.f32.mrb[0].mxu0
        %4647 = vmatprep.mubr.f32.mxu0 0.0
        %4648 = vmatmul.mubr.f32.gmra.mrb[0].mxu0 %v4572
        %v4649 = vpop.f32.mrb[0].mxu0
        %v4650 = vadd.f32 0.0, %v4649
        %v4651 = vpop.f32.mrb[0].mxu0
        %4652 = vdwg.mxu0
        %s4653 = scalar_lea.vmem [#allocation7], %s3998
        %4654 = vst.msk [vmem:[%s4653] sm:$0xff] %vm3702, %v4645
        %4655 = vst.msk [vmem:[%s4653 + $0x8] sm:$0xff] %vm3702, %v4650
      $region136: #{net8_forward.1} parent=95 // loop_footer
        %s3724 = sadd.s32 1, %s3720
      $region137: #{net8_forward.1} parent=95 // loop_footer_branch
        %3719 = sbr.rel target = $region133
      $region138: #{net8_forward.1} parent=95 // loop_exit
        _
      loop: start=0, step=1, limit=6
      $region139: #{net8_forward.1} parent=95 // loop_pre_header
        _
      $region140: #{net8_forward.1} parent=95 // loop_header
        %s4657 = sphi 0, %s4661
        %p4658 = scmp.ge.s32.totalorder %s4657, 6
      $region141: #{net8_forward.1} parent=95 // loop_header_branch
        %4660 = sbr.rel (%p4658) target = $region145
      $region142: #{net8_forward.1} parent=95 // loop_body
        %s4662 = smul.u32 %s4657, 16
        %s4663 = scalar_lea.vmem [#allocation7], %s4662
        %v4664 = vld [vmem:[%s4663] sm:$0xff]
        %v4665 = vld [vmem:[%s4663 + $0x8] sm:$0xff]
        %v4666 = vld [vmem:[%s15] sm:$0xff]
        %v4667 = vld [vmem:[%s15 + $0x8] sm:$0xff]
        %s4668 = scalar_lea.vmem %s15, 16
        %v4669 = vld [vmem:[%s4668] sm:$0xff]
        %v4670 = vld [vmem:[%s4668 + $0x8] sm:$0xff]
        %4673 = vrot.lane.b32.xlu0 %v4664, 127
        %v4674 = vpop.permute.xlu0 %4673
        %4675 = vrot.lane.b32.xlu0 %v4665, 127
        %v4676 = vpop.permute.xlu0 %4675
        %vm4679 = vcmask 130048
        %v4681 = vsel %vm4679, %v4669, 0
        %v4684 = vsel %vm4679, %v4670, 0
        %4686 = vmatprep.subr.mxu0 0.0
        %4687 = vmatpush1.msra.mxu0 %v4674
        %4688 = vmatprep.subr.mxu0 0.0
        %4689 = vmatpush1.msra.mxu0 %v4676
        %4690 = vmatprep.subr.mxu0 0.0
        %4691 = vmatpush1.msra.mxu0 0.0
        %4692 = vmatprep.subr.mxu0 0.0
        %4693 = vmatpush1.msra.mxu0 0.0
        %4694 = vmatprep.subr.mxu0 0.0
        %4695 = vmatpush1.msra.mxu0 0.0
        %4696 = vmatprep.subr.mxu0 0.0
        %4697 = vmatpush1.msra.mxu0 0.0
        %4698 = vmatprep.subr.mxu0 0.0
        %4699 = vmatpush1.msra.mxu0 0.0
        %4700 = vmatprep.subr.mxu0 0.0
        %4701 = vmatpush1.msra.mxu0 0.0
        %4702 = vmatprep.subr.mxu0 0.0
        %4703 = vmatpush1.msra.mxu0 0.0
        %4704 = vmatprep.subr.mxu0 0.0
        %4705 = vmatpush1.msra.mxu0 0.0
        %4706 = vmatprep.subr.mxu0 0.0
        %4707 = vmatpush1.msra.mxu0 0.0
        %4708 = vmatprep.subr.mxu0 0.0
        %4709 = vmatpush1.msra.mxu0 0.0
        %4710 = vmatprep.subr.mxu0 0.0
        %4711 = vmatpush1.msra.mxu0 0.0
        %4712 = vmatprep.subr.mxu0 0.0
        %4713 = vmatpush1.msra.mxu0 0.0
        %4714 = vmatprep.subr.mxu0 0.0
        %4715 = vmatpush1.msra.mxu0 0.0
        %4716 = vmatprep.subr.mxu0 0.0
        %4717 = vmatpush1.msra.mxu0 0.0
        %4718 = vmatprep.subr.mxu0 0.0
        %4719 = vmatpush1.msra.mxu0 0.0
        %4720 = vmatprep.subr.mxu0 0.0
        %4721 = vmatpush1.msra.mxu0 0.0
        %4722 = vmatprep.subr.mxu0 0.0
        %4723 = vmatpush1.msra.mxu0 0.0
        %4724 = vmatprep.subr.mxu0 0.0
        %4725 = vmatpush1.msra.mxu0 0.0
        %4726 = vmatprep.subr.mxu0 0.0
        %4727 = vmatpush1.msra.mxu0 0.0
        %4728 = vmatprep.subr.mxu0 0.0
        %4729 = vmatpush1.msra.mxu0 0.0
        %4730 = vmatprep.subr.mxu0 0.0
        %4731 = vmatpush1.msra.mxu0 0.0
        %4732 = vmatprep.subr.mxu0 0.0
        %4733 = vmatpush1.msra.mxu0 0.0
        %4734 = vmatprep.subr.mxu0 0.0
        %4735 = vmatpush1.msra.mxu0 0.0
        %4736 = vmatprep.subr.mxu0 0.0
        %4737 = vmatpush1.msra.mxu0 0.0
        %4738 = vmatprep.subr.mxu0 0.0
        %4739 = vmatpush1.msra.mxu0 0.0
        %4740 = vmatprep.subr.mxu0 0.0
        %4741 = vmatpush1.msra.mxu0 0.0
        %4742 = vmatprep.subr.mxu0 0.0
        %4743 = vmatpush1.msra.mxu0 0.0
        %4744 = vmatprep.subr.mxu0 0.0
        %4745 = vmatpush1.msra.mxu0 0.0
        %4746 = vmatprep.subr.mxu0 0.0
        %4747 = vmatpush1.msra.mxu0 0.0
        %4748 = vmatprep.subr.mxu0 0.0
        %4749 = vmatpush1.msra.mxu0 0.0
        %4750 = vmatprep.mubr.f32.mxu0 0.0
        %4751 = vmatmul.mubr.f32.gmra.mrb[0].mxu0 %v4681
        %v4752 = vpop.f32.mrb[0].mxu0
        %v4753 = vadd.f32 0.0, %v4752
        %v4754 = vpop.f32.mrb[0].mxu0
        %4755 = vmatprep.mubr.f32.mxu0 0.0
        %4756 = vmatmul.mubr.f32.gmra.mrb[0].mxu0 %v4684
        %v4757 = vpop.f32.mrb[0].mxu0
        %v4758 = vadd.f32 0.0, %v4757
        %v4759 = vpop.f32.mrb[0].mxu0
        %4760 = vdwg.mxu0
        %v4762 = vsel %vm4679, %v4666, 0
        %v4765 = vsel %vm4679, %v4667, 0
        %4767 = vmatprep.subr.mxu0 0.0
        %4768 = vmatpush1.msra.mxu0 %v4664
        %4769 = vmatprep.subr.mxu0 0.0
        %4770 = vmatpush1.msra.mxu0 %v4665
        %4771 = vmatprep.subr.mxu0 0.0
        %4772 = vmatpush1.msra.mxu0 0.0
        %4773 = vmatprep.subr.mxu0 0.0
        %4774 = vmatpush1.msra.mxu0 0.0
        %4775 = vmatprep.subr.mxu0 0.0
        %4776 = vmatpush1.msra.mxu0 0.0
        %4777 = vmatprep.subr.mxu0 0.0
        %4778 = vmatpush1.msra.mxu0 0.0
        %4779 = vmatprep.subr.mxu0 0.0
        %4780 = vmatpush1.msra.mxu0 0.0
        %4781 = vmatprep.subr.mxu0 0.0
        %4782 = vmatpush1.msra.mxu0 0.0
        %4783 = vmatprep.subr.mxu0 0.0
        %4784 = vmatpush1.msra.mxu0 0.0
        %4785 = vmatprep.subr.mxu0 0.0
        %4786 = vmatpush1.msra.mxu0 0.0
        %4787 = vmatprep.subr.mxu0 0.0
        %4788 = vmatpush1.msra.mxu0 0.0
        %4789 = vmatprep.subr.mxu0 0.0
        %4790 = vmatpush1.msra.mxu0 0.0
        %4791 = vmatprep.subr.mxu0 0.0
        %4792 = vmatpush1.msra.mxu0 0.0
        %4793 = vmatprep.subr.mxu0 0.0
        %4794 = vmatpush1.msra.mxu0 0.0
        %4795 = vmatprep.subr.mxu0 0.0
        %4796 = vmatpush1.msra.mxu0 0.0
        %4797 = vmatprep.subr.mxu0 0.0
        %4798 = vmatpush1.msra.mxu0 0.0
        %4799 = vmatprep.subr.mxu0 0.0
        %4800 = vmatpush1.msra.mxu0 0.0
        %4801 = vmatprep.subr.mxu0 0.0
        %4802 = vmatpush1.msra.mxu0 0.0
        %4803 = vmatprep.subr.mxu0 0.0
        %4804 = vmatpush1.msra.mxu0 0.0
        %4805 = vmatprep.subr.mxu0 0.0
        %4806 = vmatpush1.msra.mxu0 0.0
        %4807 = vmatprep.subr.mxu0 0.0
        %4808 = vmatpush1.msra.mxu0 0.0
        %4809 = vmatprep.subr.mxu0 0.0
        %4810 = vmatpush1.msra.mxu0 0.0
        %4811 = vmatprep.subr.mxu0 0.0
        %4812 = vmatpush1.msra.mxu0 0.0
        %4813 = vmatprep.subr.mxu0 0.0
        %4814 = vmatpush1.msra.mxu0 0.0
        %4815 = vmatprep.subr.mxu0 0.0
        %4816 = vmatpush1.msra.mxu0 0.0
        %4817 = vmatprep.subr.mxu0 0.0
        %4818 = vmatpush1.msra.mxu0 0.0
        %4819 = vmatprep.subr.mxu0 0.0
        %4820 = vmatpush1.msra.mxu0 0.0
        %4821 = vmatprep.subr.mxu0 0.0
        %4822 = vmatpush1.msra.mxu0 0.0
        %4823 = vmatprep.subr.mxu0 0.0
        %4824 = vmatpush1.msra.mxu0 0.0
        %4825 = vmatprep.subr.mxu0 0.0
        %4826 = vmatpush1.msra.mxu0 0.0
        %4827 = vmatprep.subr.mxu0 0.0
        %4828 = vmatpush1.msra.mxu0 0.0
        %4829 = vmatprep.subr.mxu0 0.0
        %4830 = vmatpush1.msra.mxu0 0.0
        %4831 = vmatprep.mubr.f32.mxu0 0.0
        %4832 = vmatmul.mubr.f32.gmra.mrb[0].mxu0 %v4762
        %v4833 = vpop.f32.mrb[0].mxu0
        %v4834 = vadd.f32 %v4753, %v4833
        %v4835 = vpop.f32.mrb[0].mxu0
        %4836 = vmatprep.mubr.f32.mxu0 0.0
        %4837 = vmatmul.mubr.f32.gmra.mrb[0].mxu0 %v4765
        %v4838 = vpop.f32.mrb[0].mxu0
        %v4839 = vadd.f32 %v4758, %v4838
        %v4840 = vpop.f32.mrb[0].mxu0
        %4841 = vdwg.mxu0
        %s4842 = scalar_lea.vmem %s15, 32
        %v4843 = vld [vmem:[%s4842] sm:$0xff]
        %v4844 = vld [vmem:[%s4842 + $0x8] sm:$0xff]
        %4845 = vrot.lane.b32.xlu0 %v4664, 126
        %v4846 = vpop.permute.xlu0 %4845
        %4847 = vrot.lane.b32.xlu0 %v4665, 126
        %v4848 = vpop.permute.xlu0 %4847
        %v4852 = vsel %vm4679, %v4843, 0
        %v4855 = vsel %vm4679, %v4844, 0
        %4857 = vmatprep.subr.mxu0 0.0
        %4858 = vmatpush1.msra.mxu0 %v4846
        %4859 = vmatprep.subr.mxu0 0.0
        %4860 = vmatpush1.msra.mxu0 %v4848
        %4861 = vmatprep.subr.mxu0 0.0
        %4862 = vmatpush1.msra.mxu0 0.0
        %4863 = vmatprep.subr.mxu0 0.0
        %4864 = vmatpush1.msra.mxu0 0.0
        %4865 = vmatprep.subr.mxu0 0.0
        %4866 = vmatpush1.msra.mxu0 0.0
        %4867 = vmatprep.subr.mxu0 0.0
        %4868 = vmatpush1.msra.mxu0 0.0
        %4869 = vmatprep.subr.mxu0 0.0
        %4870 = vmatpush1.msra.mxu0 0.0
        %4871 = vmatprep.subr.mxu0 0.0
        %4872 = vmatpush1.msra.mxu0 0.0
        %4873 = vmatprep.subr.mxu0 0.0
        %4874 = vmatpush1.msra.mxu0 0.0
        %4875 = vmatprep.subr.mxu0 0.0
        %4876 = vmatpush1.msra.mxu0 0.0
        %4877 = vmatprep.subr.mxu0 0.0
        %4878 = vmatpush1.msra.mxu0 0.0
        %4879 = vmatprep.subr.mxu0 0.0
        %4880 = vmatpush1.msra.mxu0 0.0
        %4881 = vmatprep.subr.mxu0 0.0
        %4882 = vmatpush1.msra.mxu0 0.0
        %4883 = vmatprep.subr.mxu0 0.0
        %4884 = vmatpush1.msra.mxu0 0.0
        %4885 = vmatprep.subr.mxu0 0.0
        %4886 = vmatpush1.msra.mxu0 0.0
        %4887 = vmatprep.subr.mxu0 0.0
        %4888 = vmatpush1.msra.mxu0 0.0
        %4889 = vmatprep.subr.mxu0 0.0
        %4890 = vmatpush1.msra.mxu0 0.0
        %4891 = vmatprep.subr.mxu0 0.0
        %4892 = vmatpush1.msra.mxu0 0.0
        %4893 = vmatprep.subr.mxu0 0.0
        %4894 = vmatpush1.msra.mxu0 0.0
        %4895 = vmatprep.subr.mxu0 0.0
        %4896 = vmatpush1.msra.mxu0 0.0
        %4897 = vmatprep.subr.mxu0 0.0
        %4898 = vmatpush1.msra.mxu0 0.0
        %4899 = vmatprep.subr.mxu0 0.0
        %4900 = vmatpush1.msra.mxu0 0.0
        %4901 = vmatprep.subr.mxu0 0.0
        %4902 = vmatpush1.msra.mxu0 0.0
        %4903 = vmatprep.subr.mxu0 0.0
        %4904 = vmatpush1.msra.mxu0 0.0
        %4905 = vmatprep.subr.mxu0 0.0
        %4906 = vmatpush1.msra.mxu0 0.0
        %4907 = vmatprep.subr.mxu0 0.0
        %4908 = vmatpush1.msra.mxu0 0.0
        %4909 = vmatprep.subr.mxu0 0.0
        %4910 = vmatpush1.msra.mxu0 0.0
        %4911 = vmatprep.subr.mxu0 0.0
        %4912 = vmatpush1.msra.mxu0 0.0
        %4913 = vmatprep.subr.mxu0 0.0
        %4914 = vmatpush1.msra.mxu0 0.0
        %4915 = vmatprep.subr.mxu0 0.0
        %4916 = vmatpush1.msra.mxu0 0.0
        %4917 = vmatprep.subr.mxu0 0.0
        %4918 = vmatpush1.msra.mxu0 0.0
        %4919 = vmatprep.subr.mxu0 0.0
        %4920 = vmatpush1.msra.mxu0 0.0
        %4921 = vmatprep.mubr.f32.mxu0 0.0
        %4922 = vmatmul.mubr.f32.gmra.mrb[0].mxu0 %v4852
        %v4923 = vpop.f32.mrb[0].mxu0
        %v4924 = vadd.f32 0.0, %v4923
        %v4925 = vpop.f32.mrb[0].mxu0
        %4926 = vmatprep.mubr.f32.mxu0 0.0
        %4927 = vmatmul.mubr.f32.gmra.mrb[0].mxu0 %v4855
        %v4928 = vpop.f32.mrb[0].mxu0
        %v4929 = vadd.f32 0.0, %v4928
        %v4930 = vpop.f32.mrb[0].mxu0
        %4931 = vdwg.mxu0
        %v4932 = vadd.f32 %v4834, %v4924
        %v4933 = vadd.f32 %v4839, %v4929
        %s4934 = sadd.s32 %s4657, 1
        %s4935 = smul.u32 %s4934, 16
        %s4936 = scalar_lea.vmem [#allocation7], %s4935
        %v4937 = vld [vmem:[%s4936] sm:$0xff]
        %v4938 = vld [vmem:[%s4936 + $0x8] sm:$0xff]
        %s4939 = scalar_lea.vmem %s15, 48
        %v4940 = vld [vmem:[%s4939] sm:$0xff]
        %v4941 = vld [vmem:[%s4939 + $0x8] sm:$0xff]
        %v4943 = vsel %vm4679, %v4940, 0
        %v4946 = vsel %vm4679, %v4941, 0
        %4948 = vmatprep.subr.mxu0 0.0
        %4949 = vmatpush1.msra.mxu0 %v4937
        %4950 = vmatprep.subr.mxu0 0.0
        %4951 = vmatpush1.msra.mxu0 %v4938
        %4952 = vmatprep.subr.mxu0 0.0
        %4953 = vmatpush1.msra.mxu0 0.0
        %4954 = vmatprep.subr.mxu0 0.0
        %4955 = vmatpush1.msra.mxu0 0.0
        %4956 = vmatprep.subr.mxu0 0.0
        %4957 = vmatpush1.msra.mxu0 0.0
        %4958 = vmatprep.subr.mxu0 0.0
        %4959 = vmatpush1.msra.mxu0 0.0
        %4960 = vmatprep.subr.mxu0 0.0
        %4961 = vmatpush1.msra.mxu0 0.0
        %4962 = vmatprep.subr.mxu0 0.0
        %4963 = vmatpush1.msra.mxu0 0.0
        %4964 = vmatprep.subr.mxu0 0.0
        %4965 = vmatpush1.msra.mxu0 0.0
        %4966 = vmatprep.subr.mxu0 0.0
        %4967 = vmatpush1.msra.mxu0 0.0
        %4968 = vmatprep.subr.mxu0 0.0
        %4969 = vmatpush1.msra.mxu0 0.0
        %4970 = vmatprep.subr.mxu0 0.0
        %4971 = vmatpush1.msra.mxu0 0.0
        %4972 = vmatprep.subr.mxu0 0.0
        %4973 = vmatpush1.msra.mxu0 0.0
        %4974 = vmatprep.subr.mxu0 0.0
        %4975 = vmatpush1.msra.mxu0 0.0
        %4976 = vmatprep.subr.mxu0 0.0
        %4977 = vmatpush1.msra.mxu0 0.0
        %4978 = vmatprep.subr.mxu0 0.0
        %4979 = vmatpush1.msra.mxu0 0.0
        %4980 = vmatprep.subr.mxu0 0.0
        %4981 = vmatpush1.msra.mxu0 0.0
        %4982 = vmatprep.subr.mxu0 0.0
        %4983 = vmatpush1.msra.mxu0 0.0
        %4984 = vmatprep.subr.mxu0 0.0
        %4985 = vmatpush1.msra.mxu0 0.0
        %4986 = vmatprep.subr.mxu0 0.0
        %4987 = vmatpush1.msra.mxu0 0.0
        %4988 = vmatprep.subr.mxu0 0.0
        %4989 = vmatpush1.msra.mxu0 0.0
        %4990 = vmatprep.subr.mxu0 0.0
        %4991 = vmatpush1.msra.mxu0 0.0
        %4992 = vmatprep.subr.mxu0 0.0
        %4993 = vmatpush1.msra.mxu0 0.0
        %4994 = vmatprep.subr.mxu0 0.0
        %4995 = vmatpush1.msra.mxu0 0.0
        %4996 = vmatprep.subr.mxu0 0.0
        %4997 = vmatpush1.msra.mxu0 0.0
        %4998 = vmatprep.subr.mxu0 0.0
        %4999 = vmatpush1.msra.mxu0 0.0
        %5000 = vmatprep.subr.mxu0 0.0
        %5001 = vmatpush1.msra.mxu0 0.0
        %5002 = vmatprep.subr.mxu0 0.0
        %5003 = vmatpush1.msra.mxu0 0.0
        %5004 = vmatprep.subr.mxu0 0.0
        %5005 = vmatpush1.msra.mxu0 0.0
        %5006 = vmatprep.subr.mxu0 0.0
        %5007 = vmatpush1.msra.mxu0 0.0
        %5008 = vmatprep.subr.mxu0 0.0
        %5009 = vmatpush1.msra.mxu0 0.0
        %5010 = vmatprep.subr.mxu0 0.0
        %5011 = vmatpush1.msra.mxu0 0.0
        %5012 = vmatprep.mubr.f32.mxu0 0.0
        %5013 = vmatmul.mubr.f32.gmra.mrb[0].mxu0 %v4943
        %v5014 = vpop.f32.mrb[0].mxu0
        %v5015 = vadd.f32 0.0, %v5014
        %v5016 = vpop.f32.mrb[0].mxu0
        %5017 = vmatprep.mubr.f32.mxu0 0.0
        %5018 = vmatmul.mubr.f32.gmra.mrb[0].mxu0 %v4946
        %v5019 = vpop.f32.mrb[0].mxu0
        %v5020 = vadd.f32 0.0, %v5019
        %v5021 = vpop.f32.mrb[0].mxu0
        %5022 = vdwg.mxu0
        %v5023 = vadd.f32 %v4932, %v5015
        %v5024 = vadd.f32 %v4933, %v5020
        %s5025 = scalar_lea.vmem %s15, 64
        %v5026 = vld [vmem:[%s5025] sm:$0xff]
        %v5027 = vld [vmem:[%s5025 + $0x8] sm:$0xff]
        %5030 = vrot.lane.b32.xlu0 %v4937, 127
        %v5031 = vpop.permute.xlu0 %5030
        %5032 = vrot.lane.b32.xlu0 %v4938, 127
        %v5033 = vpop.permute.xlu0 %5032
        %v5037 = vsel %vm4679, %v5026, 0
        %v5040 = vsel %vm4679, %v5027, 0
        %5042 = vmatprep.subr.mxu0 0.0
        %5043 = vmatpush1.msra.mxu0 %v5031
        %5044 = vmatprep.subr.mxu0 0.0
        %5045 = vmatpush1.msra.mxu0 %v5033
        %5046 = vmatprep.subr.mxu0 0.0
        %5047 = vmatpush1.msra.mxu0 0.0
        %5048 = vmatprep.subr.mxu0 0.0
        %5049 = vmatpush1.msra.mxu0 0.0
        %5050 = vmatprep.subr.mxu0 0.0
        %5051 = vmatpush1.msra.mxu0 0.0
        %5052 = vmatprep.subr.mxu0 0.0
        %5053 = vmatpush1.msra.mxu0 0.0
        %5054 = vmatprep.subr.mxu0 0.0
        %5055 = vmatpush1.msra.mxu0 0.0
        %5056 = vmatprep.subr.mxu0 0.0
        %5057 = vmatpush1.msra.mxu0 0.0
        %5058 = vmatprep.subr.mxu0 0.0
        %5059 = vmatpush1.msra.mxu0 0.0
        %5060 = vmatprep.subr.mxu0 0.0
        %5061 = vmatpush1.msra.mxu0 0.0
        %5062 = vmatprep.subr.mxu0 0.0
        %5063 = vmatpush1.msra.mxu0 0.0
        %5064 = vmatprep.subr.mxu0 0.0
        %5065 = vmatpush1.msra.mxu0 0.0
        %5066 = vmatprep.subr.mxu0 0.0
        %5067 = vmatpush1.msra.mxu0 0.0
        %5068 = vmatprep.subr.mxu0 0.0
        %5069 = vmatpush1.msra.mxu0 0.0
        %5070 = vmatprep.subr.mxu0 0.0
        %5071 = vmatpush1.msra.mxu0 0.0
        %5072 = vmatprep.subr.mxu0 0.0
        %5073 = vmatpush1.msra.mxu0 0.0
        %5074 = vmatprep.subr.mxu0 0.0
        %5075 = vmatpush1.msra.mxu0 0.0
        %5076 = vmatprep.subr.mxu0 0.0
        %5077 = vmatpush1.msra.mxu0 0.0
        %5078 = vmatprep.subr.mxu0 0.0
        %5079 = vmatpush1.msra.mxu0 0.0
        %5080 = vmatprep.subr.mxu0 0.0
        %5081 = vmatpush1.msra.mxu0 0.0
        %5082 = vmatprep.subr.mxu0 0.0
        %5083 = vmatpush1.msra.mxu0 0.0
        %5084 = vmatprep.subr.mxu0 0.0
        %5085 = vmatpush1.msra.mxu0 0.0
        %5086 = vmatprep.subr.mxu0 0.0
        %5087 = vmatpush1.msra.mxu0 0.0
        %5088 = vmatprep.subr.mxu0 0.0
        %5089 = vmatpush1.msra.mxu0 0.0
        %5090 = vmatprep.subr.mxu0 0.0
        %5091 = vmatpush1.msra.mxu0 0.0
        %5092 = vmatprep.subr.mxu0 0.0
        %5093 = vmatpush1.msra.mxu0 0.0
        %5094 = vmatprep.subr.mxu0 0.0
        %5095 = vmatpush1.msra.mxu0 0.0
        %5096 = vmatprep.subr.mxu0 0.0
        %5097 = vmatpush1.msra.mxu0 0.0
        %5098 = vmatprep.subr.mxu0 0.0
        %5099 = vmatpush1.msra.mxu0 0.0
        %5100 = vmatprep.subr.mxu0 0.0
        %5101 = vmatpush1.msra.mxu0 0.0
        %5102 = vmatprep.subr.mxu0 0.0
        %5103 = vmatpush1.msra.mxu0 0.0
        %5104 = vmatprep.subr.mxu0 0.0
        %5105 = vmatpush1.msra.mxu0 0.0
        %5106 = vmatprep.mubr.f32.mxu0 0.0
        %5107 = vmatmul.mubr.f32.gmra.mrb[0].mxu0 %v5037
        %v5108 = vpop.f32.mrb[0].mxu0
        %v5109 = vadd.f32 0.0, %v5108
        %v5110 = vpop.f32.mrb[0].mxu0
        %5111 = vmatprep.mubr.f32.mxu0 0.0
        %5112 = vmatmul.mubr.f32.gmra.mrb[0].mxu0 %v5040
        %v5113 = vpop.f32.mrb[0].mxu0
        %v5114 = vadd.f32 0.0, %v5113
        %v5115 = vpop.f32.mrb[0].mxu0
        %5116 = vdwg.mxu0
        %v5117 = vadd.f32 %v5023, %v5109
        %v5118 = vadd.f32 %v5024, %v5114
        %s5119 = scalar_lea.vmem %s15, 80
        %v5120 = vld [vmem:[%s5119] sm:$0xff]
        %v5121 = vld [vmem:[%s5119 + $0x8] sm:$0xff]
        %5122 = vrot.lane.b32.xlu0 %v4937, 126
        %v5123 = vpop.permute.xlu0 %5122
        %5124 = vrot.lane.b32.xlu0 %v4938, 126
        %v5125 = vpop.permute.xlu0 %5124
        %v5129 = vsel %vm4679, %v5120, 0
        %v5132 = vsel %vm4679, %v5121, 0
        %5134 = vmatprep.subr.mxu0 0.0
        %5135 = vmatpush1.msra.mxu0 %v5123
        %5136 = vmatprep.subr.mxu0 0.0
        %5137 = vmatpush1.msra.mxu0 %v5125
        %5138 = vmatprep.subr.mxu0 0.0
        %5139 = vmatpush1.msra.mxu0 0.0
        %5140 = vmatprep.subr.mxu0 0.0
        %5141 = vmatpush1.msra.mxu0 0.0
        %5142 = vmatprep.subr.mxu0 0.0
        %5143 = vmatpush1.msra.mxu0 0.0
        %5144 = vmatprep.subr.mxu0 0.0
        %5145 = vmatpush1.msra.mxu0 0.0
        %5146 = vmatprep.subr.mxu0 0.0
        %5147 = vmatpush1.msra.mxu0 0.0
        %5148 = vmatprep.subr.mxu0 0.0
        %5149 = vmatpush1.msra.mxu0 0.0
        %5150 = vmatprep.subr.mxu0 0.0
        %5151 = vmatpush1.msra.mxu0 0.0
        %5152 = vmatprep.subr.mxu0 0.0
        %5153 = vmatpush1.msra.mxu0 0.0
        %5154 = vmatprep.subr.mxu0 0.0
        %5155 = vmatpush1.msra.mxu0 0.0
        %5156 = vmatprep.subr.mxu0 0.0
        %5157 = vmatpush1.msra.mxu0 0.0
        %5158 = vmatprep.subr.mxu0 0.0
        %5159 = vmatpush1.msra.mxu0 0.0
        %5160 = vmatprep.subr.mxu0 0.0
        %5161 = vmatpush1.msra.mxu0 0.0
        %5162 = vmatprep.subr.mxu0 0.0
        %5163 = vmatpush1.msra.mxu0 0.0
        %5164 = vmatprep.subr.mxu0 0.0
        %5165 = vmatpush1.msra.mxu0 0.0
        %5166 = vmatprep.subr.mxu0 0.0
        %5167 = vmatpush1.msra.mxu0 0.0
        %5168 = vmatprep.subr.mxu0 0.0
        %5169 = vmatpush1.msra.mxu0 0.0
        %5170 = vmatprep.subr.mxu0 0.0
        %5171 = vmatpush1.msra.mxu0 0.0
        %5172 = vmatprep.subr.mxu0 0.0
        %5173 = vmatpush1.msra.mxu0 0.0
        %5174 = vmatprep.subr.mxu0 0.0
        %5175 = vmatpush1.msra.mxu0 0.0
        %5176 = vmatprep.subr.mxu0 0.0
        %5177 = vmatpush1.msra.mxu0 0.0
        %5178 = vmatprep.subr.mxu0 0.0
        %5179 = vmatpush1.msra.mxu0 0.0
        %5180 = vmatprep.subr.mxu0 0.0
        %5181 = vmatpush1.msra.mxu0 0.0
        %5182 = vmatprep.subr.mxu0 0.0
        %5183 = vmatpush1.msra.mxu0 0.0
        %5184 = vmatprep.subr.mxu0 0.0
        %5185 = vmatpush1.msra.mxu0 0.0
        %5186 = vmatprep.subr.mxu0 0.0
        %5187 = vmatpush1.msra.mxu0 0.0
        %5188 = vmatprep.subr.mxu0 0.0
        %5189 = vmatpush1.msra.mxu0 0.0
        %5190 = vmatprep.subr.mxu0 0.0
        %5191 = vmatpush1.msra.mxu0 0.0
        %5192 = vmatprep.subr.mxu0 0.0
        %5193 = vmatpush1.msra.mxu0 0.0
        %5194 = vmatprep.subr.mxu0 0.0
        %5195 = vmatpush1.msra.mxu0 0.0
        %5196 = vmatprep.subr.mxu0 0.0
        %5197 = vmatpush1.msra.mxu0 0.0
        %5198 = vmatprep.mubr.f32.mxu0 0.0
        %5199 = vmatmul.mubr.f32.gmra.mrb[0].mxu0 %v5129
        %v5200 = vpop.f32.mrb[0].mxu0
        %v5201 = vadd.f32 0.0, %v5200
        %v5202 = vpop.f32.mrb[0].mxu0
        %5203 = vmatprep.mubr.f32.mxu0 0.0
        %5204 = vmatmul.mubr.f32.gmra.mrb[0].mxu0 %v5132
        %v5205 = vpop.f32.mrb[0].mxu0
        %v5206 = vadd.f32 0.0, %v5205
        %v5207 = vpop.f32.mrb[0].mxu0
        %5208 = vdwg.mxu0
        %v5209 = vadd.f32 %v5117, %v5201
        %v5210 = vadd.f32 %v5118, %v5206
        %s5211 = sadd.s32 %s4657, 2
        %s5212 = smul.u32 %s5211, 16
        %s5213 = scalar_lea.vmem [#allocation7], %s5212
        %v5214 = vld [vmem:[%s5213] sm:$0xff]
        %v5215 = vld [vmem:[%s5213 + $0x8] sm:$0xff]
        %s5216 = scalar_lea.vmem %s15, 96
        %v5217 = vld [vmem:[%s5216] sm:$0xff]
        %v5218 = vld [vmem:[%s5216 + $0x8] sm:$0xff]
        %v5220 = vsel %vm4679, %v5217, 0
        %v5223 = vsel %vm4679, %v5218, 0
        %5225 = vmatprep.subr.mxu0 0.0
        %5226 = vmatpush1.msra.mxu0 %v5214
        %5227 = vmatprep.subr.mxu0 0.0
        %5228 = vmatpush1.msra.mxu0 %v5215
        %5229 = vmatprep.subr.mxu0 0.0
        %5230 = vmatpush1.msra.mxu0 0.0
        %5231 = vmatprep.subr.mxu0 0.0
        %5232 = vmatpush1.msra.mxu0 0.0
        %5233 = vmatprep.subr.mxu0 0.0
        %5234 = vmatpush1.msra.mxu0 0.0
        %5235 = vmatprep.subr.mxu0 0.0
        %5236 = vmatpush1.msra.mxu0 0.0
        %5237 = vmatprep.subr.mxu0 0.0
        %5238 = vmatpush1.msra.mxu0 0.0
        %5239 = vmatprep.subr.mxu0 0.0
        %5240 = vmatpush1.msra.mxu0 0.0
        %5241 = vmatprep.subr.mxu0 0.0
        %5242 = vmatpush1.msra.mxu0 0.0
        %5243 = vmatprep.subr.mxu0 0.0
        %5244 = vmatpush1.msra.mxu0 0.0
        %5245 = vmatprep.subr.mxu0 0.0
        %5246 = vmatpush1.msra.mxu0 0.0
        %5247 = vmatprep.subr.mxu0 0.0
        %5248 = vmatpush1.msra.mxu0 0.0
        %5249 = vmatprep.subr.mxu0 0.0
        %5250 = vmatpush1.msra.mxu0 0.0
        %5251 = vmatprep.subr.mxu0 0.0
        %5252 = vmatpush1.msra.mxu0 0.0
        %5253 = vmatprep.subr.mxu0 0.0
        %5254 = vmatpush1.msra.mxu0 0.0
        %5255 = vmatprep.subr.mxu0 0.0
        %5256 = vmatpush1.msra.mxu0 0.0
        %5257 = vmatprep.subr.mxu0 0.0
        %5258 = vmatpush1.msra.mxu0 0.0
        %5259 = vmatprep.subr.mxu0 0.0
        %5260 = vmatpush1.msra.mxu0 0.0
        %5261 = vmatprep.subr.mxu0 0.0
        %5262 = vmatpush1.msra.mxu0 0.0
        %5263 = vmatprep.subr.mxu0 0.0
        %5264 = vmatpush1.msra.mxu0 0.0
        %5265 = vmatprep.subr.mxu0 0.0
        %5266 = vmatpush1.msra.mxu0 0.0
        %5267 = vmatprep.subr.mxu0 0.0
        %5268 = vmatpush1.msra.mxu0 0.0
        %5269 = vmatprep.subr.mxu0 0.0
        %5270 = vmatpush1.msra.mxu0 0.0
        %5271 = vmatprep.subr.mxu0 0.0
        %5272 = vmatpush1.msra.mxu0 0.0
        %5273 = vmatprep.subr.mxu0 0.0
        %5274 = vmatpush1.msra.mxu0 0.0
        %5275 = vmatprep.subr.mxu0 0.0
        %5276 = vmatpush1.msra.mxu0 0.0
        %5277 = vmatprep.subr.mxu0 0.0
        %5278 = vmatpush1.msra.mxu0 0.0
        %5279 = vmatprep.subr.mxu0 0.0
        %5280 = vmatpush1.msra.mxu0 0.0
        %5281 = vmatprep.subr.mxu0 0.0
        %5282 = vmatpush1.msra.mxu0 0.0
        %5283 = vmatprep.subr.mxu0 0.0
        %5284 = vmatpush1.msra.mxu0 0.0
        %5285 = vmatprep.subr.mxu0 0.0
        %5286 = vmatpush1.msra.mxu0 0.0
        %5287 = vmatprep.subr.mxu0 0.0
        %5288 = vmatpush1.msra.mxu0 0.0
        %5289 = vmatprep.mubr.f32.mxu0 0.0
        %5290 = vmatmul.mubr.f32.gmra.mrb[0].mxu0 %v5220
        %v5291 = vpop.f32.mrb[0].mxu0
        %v5292 = vadd.f32 0.0, %v5291
        %v5293 = vpop.f32.mrb[0].mxu0
        %5294 = vmatprep.mubr.f32.mxu0 0.0
        %5295 = vmatmul.mubr.f32.gmra.mrb[0].mxu0 %v5223
        %v5296 = vpop.f32.mrb[0].mxu0
        %v5297 = vadd.f32 0.0, %v5296
        %v5298 = vpop.f32.mrb[0].mxu0
        %5299 = vdwg.mxu0
        %v5300 = vadd.f32 %v5209, %v5292
        %v5301 = vadd.f32 %v5210, %v5297
        %s5302 = scalar_lea.vmem %s15, 112
        %v5303 = vld [vmem:[%s5302] sm:$0xff]
        %v5304 = vld [vmem:[%s5302 + $0x8] sm:$0xff]
        %5307 = vrot.lane.b32.xlu0 %v5214, 127
        %v5308 = vpop.permute.xlu0 %5307
        %5309 = vrot.lane.b32.xlu0 %v5215, 127
        %v5310 = vpop.permute.xlu0 %5309
        %v5314 = vsel %vm4679, %v5303, 0
        %v5317 = vsel %vm4679, %v5304, 0
        %5319 = vmatprep.subr.mxu0 0.0
        %5320 = vmatpush1.msra.mxu0 %v5308
        %5321 = vmatprep.subr.mxu0 0.0
        %5322 = vmatpush1.msra.mxu0 %v5310
        %5323 = vmatprep.subr.mxu0 0.0
        %5324 = vmatpush1.msra.mxu0 0.0
        %5325 = vmatprep.subr.mxu0 0.0
        %5326 = vmatpush1.msra.mxu0 0.0
        %5327 = vmatprep.subr.mxu0 0.0
        %5328 = vmatpush1.msra.mxu0 0.0
        %5329 = vmatprep.subr.mxu0 0.0
        %5330 = vmatpush1.msra.mxu0 0.0
        %5331 = vmatprep.subr.mxu0 0.0
        %5332 = vmatpush1.msra.mxu0 0.0
        %5333 = vmatprep.subr.mxu0 0.0
        %5334 = vmatpush1.msra.mxu0 0.0
        %5335 = vmatprep.subr.mxu0 0.0
        %5336 = vmatpush1.msra.mxu0 0.0
        %5337 = vmatprep.subr.mxu0 0.0
        %5338 = vmatpush1.msra.mxu0 0.0
        %5339 = vmatprep.subr.mxu0 0.0
        %5340 = vmatpush1.msra.mxu0 0.0
        %5341 = vmatprep.subr.mxu0 0.0
        %5342 = vmatpush1.msra.mxu0 0.0
        %5343 = vmatprep.subr.mxu0 0.0
        %5344 = vmatpush1.msra.mxu0 0.0
        %5345 = vmatprep.subr.mxu0 0.0
        %5346 = vmatpush1.msra.mxu0 0.0
        %5347 = vmatprep.subr.mxu0 0.0
        %5348 = vmatpush1.msra.mxu0 0.0
        %5349 = vmatprep.subr.mxu0 0.0
        %5350 = vmatpush1.msra.mxu0 0.0
        %5351 = vmatprep.subr.mxu0 0.0
        %5352 = vmatpush1.msra.mxu0 0.0
        %5353 = vmatprep.subr.mxu0 0.0
        %5354 = vmatpush1.msra.mxu0 0.0
        %5355 = vmatprep.subr.mxu0 0.0
        %5356 = vmatpush1.msra.mxu0 0.0
        %5357 = vmatprep.subr.mxu0 0.0
        %5358 = vmatpush1.msra.mxu0 0.0
        %5359 = vmatprep.subr.mxu0 0.0
        %5360 = vmatpush1.msra.mxu0 0.0
        %5361 = vmatprep.subr.mxu0 0.0
        %5362 = vmatpush1.msra.mxu0 0.0
        %5363 = vmatprep.subr.mxu0 0.0
        %5364 = vmatpush1.msra.mxu0 0.0
        %5365 = vmatprep.subr.mxu0 0.0
        %5366 = vmatpush1.msra.mxu0 0.0
        %5367 = vmatprep.subr.mxu0 0.0
        %5368 = vmatpush1.msra.mxu0 0.0
        %5369 = vmatprep.subr.mxu0 0.0
        %5370 = vmatpush1.msra.mxu0 0.0
        %5371 = vmatprep.subr.mxu0 0.0
        %5372 = vmatpush1.msra.mxu0 0.0
        %5373 = vmatprep.subr.mxu0 0.0
        %5374 = vmatpush1.msra.mxu0 0.0
        %5375 = vmatprep.subr.mxu0 0.0
        %5376 = vmatpush1.msra.mxu0 0.0
        %5377 = vmatprep.subr.mxu0 0.0
        %5378 = vmatpush1.msra.mxu0 0.0
        %5379 = vmatprep.subr.mxu0 0.0
        %5380 = vmatpush1.msra.mxu0 0.0
        %5381 = vmatprep.subr.mxu0 0.0
        %5382 = vmatpush1.msra.mxu0 0.0
        %5383 = vmatprep.mubr.f32.mxu0 0.0
        %5384 = vmatmul.mubr.f32.gmra.mrb[0].mxu0 %v5314
        %v5385 = vpop.f32.mrb[0].mxu0
        %v5386 = vadd.f32 0.0, %v5385
        %v5387 = vpop.f32.mrb[0].mxu0
        %5388 = vmatprep.mubr.f32.mxu0 0.0
        %5389 = vmatmul.mubr.f32.gmra.mrb[0].mxu0 %v5317
        %v5390 = vpop.f32.mrb[0].mxu0
        %v5391 = vadd.f32 0.0, %v5390
        %v5392 = vpop.f32.mrb[0].mxu0
        %5393 = vdwg.mxu0
        %v5394 = vadd.f32 %v5300, %v5386
        %v5395 = vadd.f32 %v5301, %v5391
        %s5396 = scalar_lea.vmem %s15, 128
        %v5397 = vld [vmem:[%s5396] sm:$0xff]
        %v5398 = vld [vmem:[%s5396 + $0x8] sm:$0xff]
        %5399 = vrot.lane.b32.xlu0 %v5214, 126
        %v5400 = vpop.permute.xlu0 %5399
        %5401 = vrot.lane.b32.xlu0 %v5215, 126
        %v5402 = vpop.permute.xlu0 %5401
        %v5406 = vsel %vm4679, %v5397, 0
        %v5409 = vsel %vm4679, %v5398, 0
        %5411 = vmatprep.subr.mxu0 0.0
        %5412 = vmatpush1.msra.mxu0 %v5400
        %5413 = vmatprep.subr.mxu0 0.0
        %5414 = vmatpush1.msra.mxu0 %v5402
        %5415 = vmatprep.subr.mxu0 0.0
        %5416 = vmatpush1.msra.mxu0 0.0
        %5417 = vmatprep.subr.mxu0 0.0
        %5418 = vmatpush1.msra.mxu0 0.0
        %5419 = vmatprep.subr.mxu0 0.0
        %5420 = vmatpush1.msra.mxu0 0.0
        %5421 = vmatprep.subr.mxu0 0.0
        %5422 = vmatpush1.msra.mxu0 0.0
        %5423 = vmatprep.subr.mxu0 0.0
        %5424 = vmatpush1.msra.mxu0 0.0
        %5425 = vmatprep.subr.mxu0 0.0
        %5426 = vmatpush1.msra.mxu0 0.0
        %5427 = vmatprep.subr.mxu0 0.0
        %5428 = vmatpush1.msra.mxu0 0.0
        %5429 = vmatprep.subr.mxu0 0.0
        %5430 = vmatpush1.msra.mxu0 0.0
        %5431 = vmatprep.subr.mxu0 0.0
        %5432 = vmatpush1.msra.mxu0 0.0
        %5433 = vmatprep.subr.mxu0 0.0
        %5434 = vmatpush1.msra.mxu0 0.0
        %5435 = vmatprep.subr.mxu0 0.0
        %5436 = vmatpush1.msra.mxu0 0.0
        %5437 = vmatprep.subr.mxu0 0.0
        %5438 = vmatpush1.msra.mxu0 0.0
        %5439 = vmatprep.subr.mxu0 0.0
        %5440 = vmatpush1.msra.mxu0 0.0
        %5441 = vmatprep.subr.mxu0 0.0
        %5442 = vmatpush1.msra.mxu0 0.0
        %5443 = vmatprep.subr.mxu0 0.0
        %5444 = vmatpush1.msra.mxu0 0.0
        %5445 = vmatprep.subr.mxu0 0.0
        %5446 = vmatpush1.msra.mxu0 0.0
        %5447 = vmatprep.subr.mxu0 0.0
        %5448 = vmatpush1.msra.mxu0 0.0
        %5449 = vmatprep.subr.mxu0 0.0
        %5450 = vmatpush1.msra.mxu0 0.0
        %5451 = vmatprep.subr.mxu0 0.0
        %5452 = vmatpush1.msra.mxu0 0.0
        %5453 = vmatprep.subr.mxu0 0.0
        %5454 = vmatpush1.msra.mxu0 0.0
        %5455 = vmatprep.subr.mxu0 0.0
        %5456 = vmatpush1.msra.mxu0 0.0
        %5457 = vmatprep.subr.mxu0 0.0
        %5458 = vmatpush1.msra.mxu0 0.0
        %5459 = vmatprep.subr.mxu0 0.0
        %5460 = vmatpush1.msra.mxu0 0.0
        %5461 = vmatprep.subr.mxu0 0.0
        %5462 = vmatpush1.msra.mxu0 0.0
        %5463 = vmatprep.subr.mxu0 0.0
        %5464 = vmatpush1.msra.mxu0 0.0
        %5465 = vmatprep.subr.mxu0 0.0
        %5466 = vmatpush1.msra.mxu0 0.0
        %5467 = vmatprep.subr.mxu0 0.0
        %5468 = vmatpush1.msra.mxu0 0.0
        %5469 = vmatprep.subr.mxu0 0.0
        %5470 = vmatpush1.msra.mxu0 0.0
        %5471 = vmatprep.subr.mxu0 0.0
        %5472 = vmatpush1.msra.mxu0 0.0
        %5473 = vmatprep.subr.mxu0 0.0
        %5474 = vmatpush1.msra.mxu0 0.0
        %5475 = vmatprep.mubr.f32.mxu0 0.0
        %5476 = vmatmul.mubr.f32.gmra.mrb[0].mxu0 %v5406
        %v5477 = vpop.f32.mrb[0].mxu0
        %v5478 = vadd.f32 0.0, %v5477
        %v5479 = vpop.f32.mrb[0].mxu0
        %5480 = vmatprep.mubr.f32.mxu0 0.0
        %5481 = vmatmul.mubr.f32.gmra.mrb[0].mxu0 %v5409
        %v5482 = vpop.f32.mrb[0].mxu0
        %v5483 = vadd.f32 0.0, %v5482
        %v5484 = vpop.f32.mrb[0].mxu0
        %5485 = vdwg.mxu0
        %v5486 = vadd.f32 %v5394, %v5478
        %v5487 = vadd.f32 %v5395, %v5483
        %v5488 = vld [vmem:[%s16] sm:$0xff]
        %v5489 = vld [vmem:[%s16 + $0x8] sm:$0xff]
        %5491 = vset.pattern.permute.xlu0 0
        %5492 = vperm.xlu0 %5491, %v5488
        %v5493 = vpop.permute.xlu0 %5492
        %5496 = vset.pattern.permute.xlu0 0
        %5497 = vperm.xlu0 %5496, %v5489
        %v5498 = vpop.permute.xlu0 %5497
        %v5500 = vadd.f32 %v5486, %v5493
        %v5501 = vadd.f32 %v5487, %v5498
        %s5502 = scalar_lea.vmem [#allocation8], %s4662
        %vm5503 = vcmask 48128
        %5504 = vst.msk [vmem:[%s5502] sm:$0xff] %vm5503, %v5500
        %5505 = vst.msk [vmem:[%s5502 + $0x8] sm:$0xff] %vm5503, %v5501
      $region143: #{net8_forward.1} parent=95 // loop_footer
        %s4661 = sadd.s32 1, %s4657
      $region144: #{net8_forward.1} parent=95 // loop_footer_branch
        %4656 = sbr.rel target = $region140
      $region145: #{net8_forward.1} parent=95 // loop_exit
        _
      %v5506 = vld [vmem:[#allocation8] sm:$0xff]
      %v5507 = vld [vmem:[#allocation8 + $0x8] sm:$0xff]
      %vm5508 = vcmask 48128
      %v5509 = vsel %vm5508, %v5506, 0.0
      %5510 = vadd.xlane.f32.xlu0 %v5509
      %v5511 = vpop.xlane.xlu0 %5510
      %v5512 = vsel %vm5508, %v5507, 0.0
      %5513 = vadd.xlane.f32.xlu0 %v5512
      %v5514 = vpop.xlane.xlu0 %5513
      %v5515 = vadd.f32 %v5511, 0.0
      %v5516 = vadd.f32 %v5514, 0.0
      %s5517 = scalar_lea.vmem [#allocation8], 16
      %v5518 = vld [vmem:[%s5517] sm:$0xff]
      %v5519 = vld [vmem:[%s5517 + $0x8] sm:$0xff]
      %v5520 = vsel %vm5508, %v5518, 0.0
      %5521 = vadd.xlane.f32.xlu0 %v5520
      %v5522 = vpop.xlane.xlu0 %5521
      %v5523 = vsel %vm5508, %v5519, 0.0
      %5524 = vadd.xlane.f32.xlu0 %v5523
      %v5525 = vpop.xlane.xlu0 %5524
      %v5526 = vadd.f32 %v5515, %v5522
      %v5527 = vadd.f32 %v5516, %v5525
      %s5528 = scalar_lea.vmem [#allocation8], 32
      %v5529 = vld [vmem:[%s5528] sm:$0xff]
      %v5530 = vld [vmem:[%s5528 + $0x8] sm:$0xff]
      %v5531 = vsel %vm5508, %v5529, 0.0
      %5532 = vadd.xlane.f32.xlu0 %v5531
      %v5533 = vpop.xlane.xlu0 %5532
      %v5534 = vsel %vm5508, %v5530, 0.0
      %5535 = vadd.xlane.f32.xlu0 %v5534
      %v5536 = vpop.xlane.xlu0 %5535
      %v5537 = vadd.f32 %v5526, %v5533
      %v5538 = vadd.f32 %v5527, %v5536
      %s5539 = scalar_lea.vmem [#allocation8], 48
      %v5540 = vld [vmem:[%s5539] sm:$0xff]
      %v5541 = vld [vmem:[%s5539 + $0x8] sm:$0xff]
      %v5542 = vsel %vm5508, %v5540, 0.0
      %5543 = vadd.xlane.f32.xlu0 %v5542
      %v5544 = vpop.xlane.xlu0 %5543
      %v5545 = vsel %vm5508, %v5541, 0.0
      %5546 = vadd.xlane.f32.xlu0 %v5545
      %v5547 = vpop.xlane.xlu0 %5546
      %v5548 = vadd.f32 %v5537, %v5544
      %v5549 = vadd.f32 %v5538, %v5547
      %s5550 = scalar_lea.vmem [#allocation8], 64
      %v5551 = vld [vmem:[%s5550] sm:$0xff]
      %v5552 = vld [vmem:[%s5550 + $0x8] sm:$0xff]
      %v5553 = vsel %vm5508, %v5551, 0.0
      %5554 = vadd.xlane.f32.xlu0 %v5553
      %v5555 = vpop.xlane.xlu0 %5554
      %v5556 = vsel %vm5508, %v5552, 0.0
      %5557 = vadd.xlane.f32.xlu0 %v5556
      %v5558 = vpop.xlane.xlu0 %5557
      %v5559 = vadd.f32 %v5548, %v5555
      %v5560 = vadd.f32 %v5549, %v5558
      %s5561 = scalar_lea.vmem [#allocation8], 80
      %v5562 = vld [vmem:[%s5561] sm:$0xff]
      %v5563 = vld [vmem:[%s5561 + $0x8] sm:$0xff]
      %v5564 = vsel %vm5508, %v5562, 0.0
      %5565 = vadd.xlane.f32.xlu0 %v5564
      %v5566 = vpop.xlane.xlu0 %5565
      %v5567 = vsel %vm5508, %v5563, 0.0
      %5568 = vadd.xlane.f32.xlu0 %v5567
      %v5569 = vpop.xlane.xlu0 %5568
      %v5570 = vadd.f32 %v5559, %v5566
      %v5571 = vadd.f32 %v5560, %v5569
      %v5572 = vmul.f32 %v5570, 0.027777778
      %v5573 = vmul.f32 %v5571, 0.027777778
      %v5574 = vld [vmem:[%s17] sm:$0xff]
      %v5575 = vld [vmem:[%s17 + $0x8] sm:$0x3]
      %v5576 = vld [vmem:[%s18] sm:$0xff]
      %v5577 = vld [vmem:[%s18 + $0x8] sm:$0x3]
      %vm5578 = vcmask 130048
      %v5580 = vsel %vm5578, %v5574, 0
      %v5583 = vsel %vm5578, %v5575, 0
      %5585 = vmatprep.subr.mxu0 0.0
      %5586 = vmatpush1.msra.mxu0 %v5572
      %5587 = vmatprep.subr.mxu0 0.0
      %5588 = vmatpush1.msra.mxu0 %v5573
      %5589 = vmatprep.subr.mxu0 0.0
      %5590 = vmatpush1.msra.mxu0 0.0
      %5591 = vmatprep.subr.mxu0 0.0
      %5592 = vmatpush1.msra.mxu0 0.0
      %5593 = vmatprep.subr.mxu0 0.0
      %5594 = vmatpush1.msra.mxu0 0.0
      %5595 = vmatprep.subr.mxu0 0.0
      %5596 = vmatpush1.msra.mxu0 0.0
      %5597 = vmatprep.subr.mxu0 0.0
      %5598 = vmatpush1.msra.mxu0 0.0
      %5599 = vmatprep.subr.mxu0 0.0
      %5600 = vmatpush1.msra.mxu0 0.0
      %5601 = vmatprep.subr.mxu0 0.0
      %5602 = vmatpush1.msra.mxu0 0.0
      %5603 = vmatprep.subr.mxu0 0.0
      %5604 = vmatpush1.msra.mxu0 0.0
      %5605 = vmatprep.subr.mxu0 0.0
      %5606 = vmatpush1.msra.mxu0 0.0
      %5607 = vmatprep.subr.mxu0 0.0
      %5608 = vmatpush1.msra.mxu0 0.0
      %5609 = vmatprep.subr.mxu0 0.0
      %5610 = vmatpush1.msra.mxu0 0.0
      %5611 = vmatprep.subr.mxu0 0.0
      %5612 = vmatpush1.msra.mxu0 0.0
      %5613 = vmatprep.subr.mxu0 0.0
      %5614 = vmatpush1.msra.mxu0 0.0
      %5615 = vmatprep.subr.mxu0 0.0
      %5616 = vmatpush1.msra.mxu0 0.0
      %5617 = vmatprep.subr.mxu0 0.0
      %5618 = vmatpush1.msra.mxu0 0.0
      %5619 = vmatprep.subr.mxu0 0.0
      %5620 = vmatpush1.msra.mxu0 0.0
      %5621 = vmatprep.subr.mxu0 0.0
      %5622 = vmatpush1.msra.mxu0 0.0
      %5623 = vmatprep.subr.mxu0 0.0
      %5624 = vmatpush1.msra.mxu0 0.0
      %5625 = vmatprep.subr.mxu0 0.0
      %5626 = vmatpush1.msra.mxu0 0.0
      %5627 = vmatprep.subr.mxu0 0.0
      %5628 = vmatpush1.msra.mxu0 0.0
      %5629 = vmatprep.subr.mxu0 0.0
      %5630 = vmatpush1.msra.mxu0 0.0
      %5631 = vmatprep.subr.mxu0 0.0
      %5632 = vmatpush1.msra.mxu0 0.0
      %5633 = vmatprep.subr.mxu0 0.0
      %5634 = vmatpush1.msra.mxu0 0.0
      %5635 = vmatprep.subr.mxu0 0.0
      %5636 = vmatpush1.msra.mxu0 0.0
      %5637 = vmatprep.subr.mxu0 0.0
      %5638 = vmatpush1.msra.mxu0 0.0
      %5639 = vmatprep.subr.mxu0 0.0
      %5640 = vmatpush1.msra.mxu0 0.0
      %5641 = vmatprep.subr.mxu0 0.0
      %5642 = vmatpush1.msra.mxu0 0.0
      %5643 = vmatprep.subr.mxu0 0.0
      %5644 = vmatpush1.msra.mxu0 0.0
      %5645 = vmatprep.subr.mxu0 0.0
      %5646 = vmatpush1.msra.mxu0 0.0
      %5647 = vmatprep.subr.mxu0 0.0
      %5648 = vmatpush1.msra.mxu0 0.0
      %5649 = vmatprep.mubr.f32.mxu0 0.0
      %5650 = vmatmul.mubr.f32.gmra.mrb[0].mxu0 %v5580
      %v5651 = vpop.f32.mrb[0].mxu0
      %v5652 = vadd.f32 %v5576, %v5651
      %v5653 = vpop.f32.mrb[0].mxu0
      %5654 = vmatprep.mubr.f32.mxu0 0.0
      %5655 = vmatmul.mubr.f32.gmra.mrb[0].mxu0 %v5583
      %v5656 = vpop.f32.mrb[0].mxu0
      %v5657 = vadd.f32 %v5577, %v5656
      %v5658 = vpop.f32.mrb[0].mxu0
      %5659 = vdwg.mxu0
      %vm5660 = vcmask 7168
      %v5661 = vsel %vm5660, %v5652, -inf
      %vm5662 = vcmask 1024
      %v5663 = vsel %vm5662, %v5657, -inf
      %v5664 = vmax.f32 %v5661, %v5663
      %v5665 = vrot.slane %v5664, 4
      %v5666 = vmax.f32 %v5664, %v5665
      %v5667 = vrot.slane %v5666, 2
      %v5668 = vmax.f32 %v5666, %v5667
      %v5669 = vrot.slane %v5668, 1
      %v5670 = vmax.f32 %v5668, %v5669
      %v5671 = vsub.f32 %v5652, %v5670
      %v5672 = vsub.f32 %v5657, %v5670
      %v5673 = vmul.f32 %v5671, 1.442695
      %v5674 = vpow.pop %v5673
      %v5675 = vmul.f32 %v5672, 1.442695
      %v5676 = vpow.pop %v5675
      %v5677 = vsel %vm5660, %v5674, 0.0
      %v5678 = vsel %vm5662, %v5676, 0.0
      %v5679 = vadd.f32 %v5677, %v5678
      %v5680 = vrot.slane %v5679, 4
      %v5681 = vadd.f32 %v5679, %v5680
      %v5682 = vrot.slane %v5681, 2
      %v5683 = vadd.f32 %v5681, %v5682
      %v5684 = vrot.slane %v5683, 1
      %v5685 = vadd.f32 %v5683, %v5684
      %v5686 = vlog2.pop %v5685
      %v5687 = vmul.f32 %v5686, 0.6931472
      %v5688 = vsub.f32 %v5671, %v5687
      %v5689 = vsub.f32 %v5672, %v5687
      %5690 = vst.msk [vmem:[%s602] sm:$0xff] %vm5660, %v5688
      %5691 = vst.msk [vmem:[%s602 + $0x8] sm:$0x3] %vm5662, %v5689
      %p5692 = scmp.lt.s32.totalorder %s30, 1
      %s5693 = scalar_select %p5692, %s30, 1
      %s5694 = smul.addr %s5693, 2
      %s5695 = smul.addr %s5694, 8
      %s5696 = scalar_lea.vmem %s19, %s5695
      // Predicated region
      $region146: #{net8_forward.1} parent=95 // pred_check
        %p5697 = pneg %p452
      $region147: #{net8_forward.1} parent=95 // pred_check_branch
        %5699 = sbr.rel (%p5697) target = $region149
      $region148: #{net8_forward.1} parent=95 // pred_region
        _
      $region149: #{net8_forward.1} parent=95 // pred_fallthru
        _
    $region96: #{net8_forward.1} parent=5 // pred_fallthru
      _
    %p5700 = scmp.le.s32.totalorder 2, %s25
    // Predicated region
    $region150: #{net8_forward.1} parent=5 // pred_check
      %p5701 = pneg %p5700
    $region151: #{net8_forward.1} parent=5 // pred_check_branch
      %5703 = sbr.rel (%p5701) target = $region153
    $region152: #{net8_forward.1} parent=5 // pred_region
      %s5704 = ssub.s32 %s25, 2
      // Predicated region
      $region154: #{net8_forward.1} parent=152 // pred_check
        %p5705 = pneg %p458
      $region155: #{net8_forward.1} parent=152 // pred_check_branch
        %5707 = sbr.rel (%p5705) target = $region157
      $region156: #{net8_forward.1} parent=152 // pred_region
        %p5708 = scmp.lt.s32.totalorder %s31, 1
        %s5709 = scalar_select %p5708, %s31, 1
        %s5710 = smul.addr %s5709, 2
        %s5711 = smul.addr %s5710, 8
        %s5712 = scalar_lea.vmem %s19, %s5711
      $region157: #{net8_forward.1} parent=152 // pred_fallthru
        _
    $region153: #{net8_forward.1} parent=5 // pred_fallthru
      _
  $region6: #{net8_forward.1} parent=0 // loop_footer
    %s29 = sadd.s32 1, %s25
  $region7: #{net8_forward.1} parent=0 // loop_footer_branch
    %24 = sbr.rel target = $region3
  $region8: #{net8_forward.1} parent=0 // loop_exit
    _

</llo_original>
